<compile_context>
chip_gen: v7x
topology: tpu7x:2x2x1
jax: 0.10.0
libtpu: 0.0.40
codegen_flags: <defaults>
</compile_context>

<pallas_src>
import functools
import math

import jax
import jax.numpy as jnp
from jax.experimental import pallas as pl
from jax.experimental.pallas import tpu as pltpu

_VMEM_LIMIT = 64 * 1024 * 1024


# ---------------------------------------------------------------------------
# Fused conv1 + conv3: Conv3d k=3, pad=1, stride (1,2,2), one matmul per depth
# tap with the two branch weights concatenated along the output-channel axis.
# ---------------------------------------------------------------------------
def _conv_down_kernel(x0_ref, x1_ref, x2_ref, w0_ref, w1_ref, w2_ref,
                      o1_ref, o3_ref, st_ref, *, ho, wo, c1):
    m = ho * wo
    x_refs = (x0_ref, x1_ref, x2_ref)
    w_refs = (w0_ref, w1_ref, w2_ref)
    acc = None
    for kd in range(3):
        xk = x_refs[kd][...]                        # (4, Hh, Wh, Cin) bf16
        cols = []
        for kh in range(3):
            ph, oh = kh % 2, kh // 2
            for kw in range(3):
                pw, ow = kw % 2, kw // 2
                p = ph * 2 + pw
                win = xk[p, oh:oh + ho, ow:ow + wo, :]   # (HO, WO, Cin)
                cols.append(win.reshape(m, -1))
        patch = jnp.concatenate(cols, axis=-1)      # (M, 9*Cin) bf16
        part = jnp.dot(patch, w_refs[kd][...],
                       preferred_element_type=jnp.float32)
        acc = part if acc is None else acc + part
    # Split the fused accumulator into the two branch outputs (bf16) and emit
    # per-slab [sum, sum-of-squares] in f32 for the BN batch statistics.
    o1_ref[...] = acc[:, :c1].astype(o1_ref.dtype)
    o3_ref[...] = acc[:, c1:].astype(o3_ref.dtype)
    st_ref[...] = jnp.concatenate(
        [jnp.sum(acc, axis=0, keepdims=True),
         jnp.sum(acc * acc, axis=0, keepdims=True)], axis=0)


def conv_down_pallas(x, w1, w3):
    """conv1(x) and conv3(x) (k=3, pad=1, stride (1,2,2)), fused.

    x: (N, D, H, W, Cin) bf16.
    Returns (o1 (N,D,M,C1) bf16, o3 (N,D,M,C3) bf16, stats (N,D,2,C1+C3) f32).
    Conv biases intentionally dropped (cancelled by training-mode BN).
    """
    N, D, H, W, Cin = x.shape
    assert H % 2 == 0 and W % 2 == 0, "stride-2 path assumes even H and W"
    HO, WO = H // 2, W // 2
    M = HO * WO
    C1, C3 = int(w1.shape[-1]), int(w3.shape[-1])
    Ctot = C1 + C3

    # One fused weight per depth tap -> one MXU matmul stream.
    wf = jnp.concatenate([w1, w3], axis=-1).reshape(3, 9 * Cin, Ctot)
    wf = wf.astype(jnp.bfloat16)
    w_kd = [wf[kd] for kd in range(3)]

    # Zero-pad D/H/W by 1 and phase-decompose H/W (stride 2) so the kernel
    # only needs static slices + matmuls.
    xp = jnp.pad(x, ((0, 0), (1, 1), (1, 1), (1, 1), (0, 0)))
    Dp, Hp, Wp = D + 2, H + 2, W + 2
    Hh, Wh = Hp // 2, Wp // 2
    xp = xp.reshape(N, Dp, Hh, 2, Wh, 2, Cin)
    xp = jnp.transpose(xp, (0, 1, 3, 5, 2, 4, 6)).reshape(N, Dp, 4, Hh, Wh, Cin)

    # Three depth-shifted views of the same array: each grid step only DMAs
    # its 3-slab depth halo window.
    x_specs = [
        pl.BlockSpec((None, None, 4, Hh, Wh, Cin),
                     lambda n, d, _kd=kd: (n, d + _kd, 0, 0, 0, 0))
        for kd in range(3)
    ]
    w_specs = [pl.BlockSpec((9 * Cin, Ctot), lambda n, d: (0, 0))] * 3

    kernel = functools.partial(_conv_down_kernel, ho=HO, wo=WO, c1=C1)
    o1, o3, st = pl.pallas_call(
        kernel,
        grid=(N, D),
        in_specs=x_specs + w_specs,
        out_specs=(pl.BlockSpec((None, None, M, C1), lambda n, d: (n, d, 0, 0)),
                   pl.BlockSpec((None, None, M, C3), lambda n, d: (n, d, 0, 0)),
                   pl.BlockSpec((None, None, 2, Ctot), lambda n, d: (n, d, 0, 0))),
        out_shape=(jax.ShapeDtypeStruct((N, D, M, C1), jnp.bfloat16),
                   jax.ShapeDtypeStruct((N, D, M, C3), jnp.bfloat16),
                   jax.ShapeDtypeStruct((N, D, 2, Ctot), jnp.float32)),
        compiler_params=pltpu.CompilerParams(
            dimension_semantics=("parallel", "parallel"),
            vmem_limit_bytes=_VMEM_LIMIT),
    )(xp, xp, xp, *w_kd)
    return o1, o3, st


# ---------------------------------------------------------------------------
# conv2: Conv3d k=3, pad=1, stride 1, with BN1 + LeakyReLU fused into the
# input path.  Zero-padding is done in-kernel (VMEM scratch for H/W, clamped
# index maps + masking for the depth halo) -> no XLA pad / activation pass.
# ---------------------------------------------------------------------------
def _conv_s1_kernel(x0_ref, x1_ref, x2_ref, s_ref, t_ref,
                    w0_ref, w1_ref, w2_ref, o_ref, st_ref, pad_ref,
                    *, ho, wo, d_total, slope):
    d = pl.program_id(1)
    m = ho * wo
    x_refs = (x0_ref, x1_ref, x2_ref)
    w_refs = (w0_ref, w1_ref, w2_ref)
    s = s_ref[...]                                   # (1, Cin) f32
    t = t_ref[...]
    pad_ref[...] = jnp.zeros_like(pad_ref)           # halo border stays zero
    acc = None
    for kd in range(3):
        # Fused BatchNorm1 + LeakyReLU on the conv1 output slab (bf16*f32 FMA).
        y = x_refs[kd][...] * s + t                  # (HO, WO, Cin) f32
        y = jnp.where(y >= 0, y, slope * y).astype(jnp.bfloat16)
        pad_ref[1:1 + ho, 1:1 + wo, :] = y           # interior of padded slab
        cols = []
        for kh in range(3):
            for kw in range(3):
                win = pad_ref[kh:kh + ho, kw:kw + wo, :]
                cols.append(win.reshape(m, -1))
        patch = jnp.concatenate(cols, axis=-1)       # (M, 9*Cin) bf16
        part = jnp.dot(patch, w_refs[kd][...],
                       preferred_element_type=jnp.float32)
        # Depth taps that fall outside [0, D) contribute zero (index map was
        # clamped, so mask the whole tap here).
        if kd == 0:
            part = jnp.where(d > 0, part, jnp.zeros_like(part))
        elif kd == 2:
            part = jnp.where(d < d_total - 1, part, jnp.zeros_like(part))
        acc = part if acc is None else acc + part
    o_ref[...] = acc.astype(o_ref.dtype)
    st_ref[...] = jnp.concatenate(
        [jnp.sum(acc, axis=0, keepdims=True),
         jnp.sum(acc * acc, axis=0, keepdims=True)], axis=0)


def conv_s1_pallas(h, s1, t1, w2, slope):
    """conv2(LeakyReLU(BN1(h))) with k=3, pad=1, stride 1.

    h: (N, D, HO, WO, Cin) bf16 (raw conv1 output, pre-BN).
    s1/t1: per-channel scale/shift implementing training-mode BN1.
    Returns (c2 (N,D,M,Cout) bf16, stats (N,D,2,Cout) f32).
    """
    N, D, HO, WO, Cin = h.shape
    Cout = int(w2.shape[-1])
    M = HO * WO

    wk = w2.reshape(3, 9 * Cin, Cout).astype(jnp.bfloat16)
    w_list = [wk[kd] for kd in range(3)]
    s2d = s1.astype(jnp.float32).reshape(1, Cin)
    t2d = t1.astype(jnp.float32).reshape(1, Cin)

    def make_imap(kd):
        def imap(n, d):
            dd = jnp.minimum(jnp.maximum(d + (kd - 1), 0), D - 1)
            return (n, dd, 0, 0, 0)
        return imap

    x_specs = [pl.BlockSpec((None, None, HO, WO, Cin), make_imap(kd))
               for kd in range(3)]
    vec_spec = pl.BlockSpec((1, Cin), lambda n, d: (0, 0))
    w_specs = [pl.BlockSpec((9 * Cin, Cout), lambda n, d: (0, 0))] * 3

    kernel = functools.partial(_conv_s1_kernel, ho=HO, wo=WO, d_total=D,
                               slope=slope)
    c2, st = pl.pallas_call(
        kernel,
        grid=(N, D),
        in_specs=x_specs + [vec_spec, vec_spec] + w_specs,
        out_specs=(pl.BlockSpec((None, None, M, Cout), lambda n, d: (n, d, 0, 0)),
                   pl.BlockSpec((None, None, 2, Cout), lambda n, d: (n, d, 0, 0))),
        out_shape=(jax.ShapeDtypeStruct((N, D, M, Cout), jnp.bfloat16),
                   jax.ShapeDtypeStruct((N, D, 2, Cout), jnp.float32)),
        scratch_shapes=[pltpu.VMEM((HO + 2, WO + 2, Cin), jnp.bfloat16)],
        compiler_params=pltpu.CompilerParams(
            dimension_semantics=("parallel", "parallel"),
            vmem_limit_bytes=_VMEM_LIMIT),
    )(h, h, h, s2d, t2d, *w_list)
    return c2, st


# ---------------------------------------------------------------------------
# BatchNorm (training-mode batch stats) scale/shift from the conv-epilogue
# partial sums, and the fused BN + (optional LeakyReLU) + add elementwise pass.
# ---------------------------------------------------------------------------
def _bn_scale_shift_from_stats(stats, count, gamma, beta, eps=1e-5):
    # stats: (N, D, 2, C) per-(n, d) [sum, sumsq].
    tot = jnp.sum(stats.astype(jnp.float32), axis=(0, 1))      # (2, C)
    mean = tot[0] / count
    var = jnp.maximum(tot[1] / count - mean * mean, 0.0)        # biased, like PyTorch
    scale = gamma * jax.lax.rsqrt(var + eps)
    shift = beta - mean * scale
    return scale, shift


def _bn_layout(shape, min_lanes=512, max_lanes=1 << 15):
    """Fold trailing dims into the lane axis until wide and 128-aligned."""
    c = shape[-1]
    lanes = c
    i = len(shape) - 2
    while i >= 0 and lanes * shape[i] <= max_lanes and (
            lanes < min_lanes or lanes % 128 != 0):
        lanes *= shape[i]
        i -= 1
    rows = math.prod(shape) // lanes
    return rows, lanes, lanes // c


def _row_tile(rows, lanes, budget_bytes=2 << 20):
    """Largest row tile dividing `rows` within budget, multiple of 8 (or full)."""
    cap = max(1, budget_bytes // (lanes * 4))
    if rows <= cap:
        return rows
    t = (min(rows, cap) // 8) * 8
    while t >= 8:
        if rows % t == 0:
            return t
        t -= 8
    return rows  # fallback: shapes used here are powers of two, never hit


def _bn_act_add_kernel(a_ref, b_ref, sa_ref, ta_ref, sb_ref, tb_ref, o_ref,
                       *, act, slope):
    ya = a_ref[...] * sa_ref[...] + ta_ref[...]
    yb = b_ref[...] * sb_ref[...] + tb_ref[...]
    if act:
        ya = jnp.where(ya >= 0, ya, slope * ya)
        yb = jnp.where(yb >= 0, yb, slope * yb)
    o_ref[...] = (ya + yb).astype(o_ref.dtype)


def bn_act_add_pallas(a, sa, ta, b, sb, tb, act, slope=0.2):
    shape = a.shape
    rows, lanes, rep = _bn_layout(shape)
    rt = _row_tile(rows, lanes)
    a2 = a.reshape(rows, lanes)
    b2 = b.reshape(rows, lanes)
    sa2 = jnp.tile(sa.astype(jnp.float32), rep).reshape(1, lanes)
    ta2 = jnp.tile(ta.astype(jnp.float32), rep).reshape(1, lanes)
    sb2 = jnp.tile(sb.astype(jnp.float32), rep).reshape(1, lanes)
    tb2 = jnp.tile(tb.astype(jnp.float32), rep).reshape(1, lanes)
    out = pl.pallas_call(
        functools.partial(_bn_act_add_kernel, act=act, slope=slope),
        out_shape=jax.ShapeDtypeStruct((rows, lanes), jnp.float32),
        grid=(rows // rt,),
        in_specs=[pl.BlockSpec((rt, lanes), lambda i: (i, 0)),
                  pl.BlockSpec((rt, lanes), lambda i: (i, 0)),
                  pl.BlockSpec((1, lanes), lambda i: (0, 0)),
                  pl.BlockSpec((1, lanes), lambda i: (0, 0)),
                  pl.BlockSpec((1, lanes), lambda i: (0, 0)),
                  pl.BlockSpec((1, lanes), lambda i: (0, 0))],
        out_specs=pl.BlockSpec((rt, lanes), lambda i: (i, 0)),
        compiler_params=pltpu.CompilerParams(dimension_semantics=("parallel",)),
    )(a2, b2, sa2, ta2, sb2, tb2)
    return out.reshape(shape)


# ---------------------------------------------------------------------------
# ResBlockDown
# ---------------------------------------------------------------------------
def init_res_block_down_params(key, filters_in, filters_out):
    ks = jax.random.split(key, 12)

    def conv_w(k, cin, cout):
        return 0.1 * jax.random.normal(k, (3, 3, 3, cin, cout), jnp.float32)

    return {
        "w1": conv_w(ks[0], filters_in, filters_in),
        "b1": 0.1 * jax.random.normal(ks[1], (filters_in,), jnp.float32),
        "g1": 1.0 + 0.1 * jax.random.normal(ks[2], (filters_in,), jnp.float32),
        "be1": 0.1 * jax.random.normal(ks[3], (filters_in,), jnp.float32),
        "w2": conv_w(ks[4], filters_in, filters_out),
        "b2": 0.1 * jax.random.normal(ks[5], (filters_out,), jnp.float32),
        "g2": 1.0 + 0.1 * jax.random.normal(ks[6], (filters_out,), jnp.float32),
        "be2": 0.1 * jax.random.normal(ks[7], (filters_out,), jnp.float32),
        "w3": conv_w(ks[8], filters_in, filters_out),
        "b3": 0.1 * jax.random.normal(ks[9], (filters_out,), jnp.float32),
        "g3": 1.0 + 0.1 * jax.random.normal(ks[10], (filters_out,), jnp.float32),
        "be3": 0.1 * jax.random.normal(ks[11], (filters_out,), jnp.float32),
    }


def res_block_down(x_ncdhw, params, act=True):
    # layout: x_ncdhw (N, C, D, H, W) -> output (N, Cout, D, H//2, W//2)
    x = jnp.transpose(x_ncdhw, (0, 2, 3, 4, 1)).astype(jnp.bfloat16)  # NDHWC bf16
    N, D, H, W, Cin = x.shape
    HO, WO = H // 2, W // 2
    Cout = int(params["w2"].shape[-1])
    eps, slope = 1e-5, 0.2

    # conv1 + conv3 fused (one matmul per depth tap), BN stats from epilogue.
    c1, c3, st13 = conv_down_pallas(x, params["w1"], params["w3"])
    cnt = N * D * HO * WO
    s1, t1 = _bn_scale_shift_from_stats(st13[..., :Cin], cnt,
                                        params["g1"], params["be1"], eps)
    s3, t3 = _bn_scale_shift_from_stats(st13[..., Cin:], cnt,
                                        params["g3"], params["be3"], eps)

    # conv2 with BN1 + LeakyReLU fused into its input path (no h1 intermediate).
    h = c1.reshape(N, D, HO, WO, Cin)          # free reshape, bf16
    c2, st2 = conv_s1_pallas(h, s1, t1, params["w2"], slope)
    s2, t2 = _bn_scale_shift_from_stats(st2, cnt, params["g2"], params["be2"], eps)

    # Final BN2(+act) + BN3(+act) + add, lane-dense row-tiled elementwise pass.
    out = bn_act_add_pallas(c2, s2, t2, c3, s3, t3, act=act, slope=slope)
    out = out.reshape(N, D, HO, WO, Cout)
    return jnp.transpose(out, (0, 4, 1, 2, 3))  # back to NCDHW


# ---------------------------------------------------------------------------
# Pure-JAX reference (f32, faithful to the PyTorch module) for validation.
# ---------------------------------------------------------------------------
def res_block_down_ref(x_ncdhw, params, act=True):
    x = jnp.transpose(x_ncdhw, (0, 2, 3, 4, 1)).astype(jnp.float32)

    def conv(v, w, b, s):
        y = jax.lax.conv_general_dilated(
            v, w, window_strides=(1, s, s), padding=[(1, 1)] * 3,
            dimension_numbers=("NDHWC", "DHWIO", "NDHWC"),
            precision=jax.lax.Precision.HIGHEST)
        return y + b

    def bn(v, g, bt):
        m = jnp.mean(v, axis=(0, 1, 2, 3))
        vv = jnp.var(v, axis=(0, 1, 2, 3))
        return (v - m) * (g * jax.lax.rsqrt(vv + 1e-5)) + bt

    lr = lambda v: jnp.where(v >= 0, v, 0.2 * v)

    c1 = lr(bn(conv(x, params["w1"], params["b1"], 2), params["g1"], params["be1"]))
    c2 = bn(conv(c1, params["w2"], params["b2"], 1), params["g2"], params["be2"])
    c3 = bn(conv(x, params["w3"], params["b3"], 2), params["g3"], params["be3"])
    if act:
        c2, c3 = lr(c2), lr(c3)
    return jnp.transpose(c2 + c3, (0, 4, 1, 2, 3))


if __name__ == "__main__":
    key = jax.random.PRNGKey(0)
    kx, kp = jax.random.split(key)

    N, Cin, Cout, D, H, W = 2, 4, 8, 4, 16, 16
    x = jax.random.normal(kx, (N, Cin, D, H, W), jnp.float32)
    params = init_res_block_down_params(kp, Cin, Cout)

    fwd = jax.jit(functools.partial(res_block_down, act=True))
    out = jax.block_until_ready(fwd(x, params))

    assert out.shape == (N, Cout, D, H // 2, W // 2), out.shape
    assert bool(jnp.all(jnp.isfinite(out)))

    ref = res_block_down_ref(x, params, act=True)
    err = float(jnp.max(jnp.abs(out - ref)))
    # bf16 MXU path + bf16 conv-output storage vs f32 HIGHEST reference.
    assert bool(jnp.allclose(out, ref, atol=5e-2, rtol=5e-2)), err

    print("KERNEL_OK")
</pallas_src>

<mosaic_0001>
module attributes {stable_mosaic.version = 11 : i64} {
  func.func @_conv_down_kernel(%arg0: i32, %arg1: i32, %arg2: memref<1x1x4x9x9x4xbf16, #tpu.memory_space<vmem>>, %arg3: memref<1x1x4x9x9x4xbf16, #tpu.memory_space<vmem>>, %arg4: memref<1x1x4x9x9x4xbf16, #tpu.memory_space<vmem>>, %arg5: memref<36x12xbf16, #tpu.memory_space<vmem>>, %arg6: memref<36x12xbf16, #tpu.memory_space<vmem>>, %arg7: memref<36x12xbf16, #tpu.memory_space<vmem>>, %arg8: memref<1x1x64x4xbf16, #tpu.memory_space<vmem>>, %arg9: memref<1x1x64x8xbf16, #tpu.memory_space<vmem>>, %arg10: memref<1x1x2x12xf32, #tpu.memory_space<vmem>>) attributes {dimension_semantics = [#tpu.dimension_semantics<parallel>, #tpu.dimension_semantics<parallel>], iteration_bounds = array<i64: 2, 4>, scalar_prefetch = 0 : i64, scratch_operands = 0 : i64, tpu.core_type = #tpu.core_type<tc>, window_params = [{transform_indices = @transform_0, window_bounds = array<i64: 1, 1, 4, 9, 9, 4>}, {transform_indices = @transform_1, window_bounds = array<i64: 1, 1, 4, 9, 9, 4>}, {transform_indices = @transform_2, window_bounds = array<i64: 1, 1, 4, 9, 9, 4>}, {pipeline_mode = #tpu.pipeline_mode<synchronous>, transform_indices = @transform_3, window_bounds = array<i64: 36, 12>}, {pipeline_mode = #tpu.pipeline_mode<synchronous>, transform_indices = @transform_4, window_bounds = array<i64: 36, 12>}, {pipeline_mode = #tpu.pipeline_mode<synchronous>, transform_indices = @transform_5, window_bounds = array<i64: 36, 12>}, {transform_indices = @transform_6, window_bounds = array<i64: 1, 1, 64, 4>}, {transform_indices = @transform_7, window_bounds = array<i64: 1, 1, 64, 8>}, {transform_indices = @transform_8, window_bounds = array<i64: 1, 1, 2, 12>}]} {
    %c0 = arith.constant 0 : index
    %c0_0 = arith.constant 0 : index
    %c0_1 = arith.constant 0 : index
    %c0_2 = arith.constant 0 : index
    %c0_3 = arith.constant 0 : index
    %c0_4 = arith.constant 0 : index
    %0 = vector.load %arg2[%c0, %c0_0, %c0_1, %c0_2, %c0_3, %c0_4] : memref<1x1x4x9x9x4xbf16, #tpu.memory_space<vmem>>, vector<1x1x4x9x9x4xbf16>
    %1 = vector.shape_cast %0 : vector<1x1x4x9x9x4xbf16> to vector<4x9x9x4xbf16>
    %2 = vector.extract_strided_slice %1 {offsets = [0, 0, 0, 0], sizes = [1, 8, 8, 4], strides = [1, 1, 1, 1]} : vector<4x9x9x4xbf16> to vector<1x8x8x4xbf16>
    %3 = vector.shape_cast %2 : vector<1x8x8x4xbf16> to vector<8x8x4xbf16>
    %4 = vector.shape_cast %3 : vector<8x8x4xbf16> to vector<64x4xbf16>
    %5 = vector.extract_strided_slice %1 {offsets = [1, 0, 0, 0], sizes = [1, 8, 8, 4], strides = [1, 1, 1, 1]} : vector<4x9x9x4xbf16> to vector<1x8x8x4xbf16>
    %6 = vector.shape_cast %5 : vector<1x8x8x4xbf16> to vector<8x8x4xbf16>
    %7 = vector.shape_cast %6 : vector<8x8x4xbf16> to vector<64x4xbf16>
    %8 = vector.extract_strided_slice %1 {offsets = [0, 0, 1, 0], sizes = [1, 8, 8, 4], strides = [1, 1, 1, 1]} : vector<4x9x9x4xbf16> to vector<1x8x8x4xbf16>
    %9 = vector.shape_cast %8 : vector<1x8x8x4xbf16> to vector<8x8x4xbf16>
    %10 = vector.shape_cast %9 : vector<8x8x4xbf16> to vector<64x4xbf16>
    %11 = vector.extract_strided_slice %1 {offsets = [2, 0, 0, 0], sizes = [1, 8, 8, 4], strides = [1, 1, 1, 1]} : vector<4x9x9x4xbf16> to vector<1x8x8x4xbf16>
    %12 = vector.shape_cast %11 : vector<1x8x8x4xbf16> to vector<8x8x4xbf16>
    %13 = vector.shape_cast %12 : vector<8x8x4xbf16> to vector<64x4xbf16>
    %14 = vector.extract_strided_slice %1 {offsets = [3, 0, 0, 0], sizes = [1, 8, 8, 4], strides = [1, 1, 1, 1]} : vector<4x9x9x4xbf16> to vector<1x8x8x4xbf16>
    %15 = vector.shape_cast %14 : vector<1x8x8x4xbf16> to vector<8x8x4xbf16>
    %16 = vector.shape_cast %15 : vector<8x8x4xbf16> to vector<64x4xbf16>
    %17 = vector.extract_strided_slice %1 {offsets = [2, 0, 1, 0], sizes = [1, 8, 8, 4], strides = [1, 1, 1, 1]} : vector<4x9x9x4xbf16> to vector<1x8x8x4xbf16>
    %18 = vector.shape_cast %17 : vector<1x8x8x4xbf16> to vector<8x8x4xbf16>
    %19 = vector.shape_cast %18 : vector<8x8x4xbf16> to vector<64x4xbf16>
    %20 = vector.extract_strided_slice %1 {offsets = [0, 1, 0, 0], sizes = [1, 8, 8, 4], strides = [1, 1, 1, 1]} : vector<4x9x9x4xbf16> to vector<1x8x8x4xbf16>
    %21 = vector.shape_cast %20 : vector<1x8x8x4xbf16> to vector<8x8x4xbf16>
    %22 = vector.shape_cast %21 : vector<8x8x4xbf16> to vector<64x4xbf16>
    %23 = vector.extract_strided_slice %1 {offsets = [1, 1, 0, 0], sizes = [1, 8, 8, 4], strides = [1, 1, 1, 1]} : vector<4x9x9x4xbf16> to vector<1x8x8x4xbf16>
    %24 = vector.shape_cast %23 : vector<1x8x8x4xbf16> to vector<8x8x4xbf16>
    %25 = vector.shape_cast %24 : vector<8x8x4xbf16> to vector<64x4xbf16>
    %26 = vector.extract_strided_slice %1 {offsets = [0, 1, 1, 0], sizes = [1, 8, 8, 4], strides = [1, 1, 1, 1]} : vector<4x9x9x4xbf16> to vector<1x8x8x4xbf16>
    %27 = vector.shape_cast %26 : vector<1x8x8x4xbf16> to vector<8x8x4xbf16>
    %28 = vector.shape_cast %27 : vector<8x8x4xbf16> to vector<64x4xbf16>
    %29 = tpu.concatenate %4, %7, %10, %13, %16, %19, %22, %25, %28 in 1 : vector<64x4xbf16>, vector<64x4xbf16>, vector<64x4xbf16>, vector<64x4xbf16>, vector<64x4xbf16>, vector<64x4xbf16>, vector<64x4xbf16>, vector<64x4xbf16>, vector<64x4xbf16> -> vector<64x36xbf16>
    %c0_5 = arith.constant 0 : index
    %c0_6 = arith.constant 0 : index
    %30 = vector.load %arg5[%c0_5, %c0_6] : memref<36x12xbf16, #tpu.memory_space<vmem>>, vector<36x12xbf16>
    %cst = arith.constant dense<0.000000e+00> : vector<64x12xf32>
    %31 = tpu.matmul %29, %30, %cst {dimension_numbers = #tpu.dot_dimension_numbers<[1], [0], [0], [1], [0, 0, 1, 1], [], []>} : vector<64x36xbf16>, vector<36x12xbf16>, vector<64x12xf32> -> vector<64x12xf32>
    %c0_7 = arith.constant 0 : index
    %c0_8 = arith.constant 0 : index
    %c0_9 = arith.constant 0 : index
    %c0_10 = arith.constant 0 : index
    %c0_11 = arith.constant 0 : index
    %c0_12 = arith.constant 0 : index
    %32 = vector.load %arg3[%c0_7, %c0_8, %c0_9, %c0_10, %c0_11, %c0_12] : memref<1x1x4x9x9x4xbf16, #tpu.memory_space<vmem>>, vector<1x1x4x9x9x4xbf16>
    %33 = vector.shape_cast %32 : vector<1x1x4x9x9x4xbf16> to vector<4x9x9x4xbf16>
    %34 = vector.extract_strided_slice %33 {offsets = [0, 0, 0, 0], sizes = [1, 8, 8, 4], strides = [1, 1, 1, 1]} : vector<4x9x9x4xbf16> to vector<1x8x8x4xbf16>
    %35 = vector.shape_cast %34 : vector<1x8x8x4xbf16> to vector<8x8x4xbf16>
    %36 = vector.shape_cast %35 : vector<8x8x4xbf16> to vector<64x4xbf16>
    %37 = vector.extract_strided_slice %33 {offsets = [1, 0, 0, 0], sizes = [1, 8, 8, 4], strides = [1, 1, 1, 1]} : vector<4x9x9x4xbf16> to vector<1x8x8x4xbf16>
    %38 = vector.shape_cast %37 : vector<1x8x8x4xbf16> to vector<8x8x4xbf16>
    %39 = vector.shape_cast %38 : vector<8x8x4xbf16> to vector<64x4xbf16>
    %40 = vector.extract_strided_slice %33 {offsets = [0, 0, 1, 0], sizes = [1, 8, 8, 4], strides = [1, 1, 1, 1]} : vector<4x9x9x4xbf16> to vector<1x8x8x4xbf16>
    %41 = vector.shape_cast %40 : vector<1x8x8x4xbf16> to vector<8x8x4xbf16>
    %42 = vector.shape_cast %41 : vector<8x8x4xbf16> to vector<64x4xbf16>
    %43 = vector.extract_strided_slice %33 {offsets = [2, 0, 0, 0], sizes = [1, 8, 8, 4], strides = [1, 1, 1, 1]} : vector<4x9x9x4xbf16> to vector<1x8x8x4xbf16>
    %44 = vector.shape_cast %43 : vector<1x8x8x4xbf16> to vector<8x8x4xbf16>
    %45 = vector.shape_cast %44 : vector<8x8x4xbf16> to vector<64x4xbf16>
    %46 = vector.extract_strided_slice %33 {offsets = [3, 0, 0, 0], sizes = [1, 8, 8, 4], strides = [1, 1, 1, 1]} : vector<4x9x9x4xbf16> to vector<1x8x8x4xbf16>
    %47 = vector.shape_cast %46 : vector<1x8x8x4xbf16> to vector<8x8x4xbf16>
    %48 = vector.shape_cast %47 : vector<8x8x4xbf16> to vector<64x4xbf16>
    %49 = vector.extract_strided_slice %33 {offsets = [2, 0, 1, 0], sizes = [1, 8, 8, 4], strides = [1, 1, 1, 1]} : vector<4x9x9x4xbf16> to vector<1x8x8x4xbf16>
    %50 = vector.shape_cast %49 : vector<1x8x8x4xbf16> to vector<8x8x4xbf16>
    %51 = vector.shape_cast %50 : vector<8x8x4xbf16> to vector<64x4xbf16>
    %52 = vector.extract_strided_slice %33 {offsets = [0, 1, 0, 0], sizes = [1, 8, 8, 4], strides = [1, 1, 1, 1]} : vector<4x9x9x4xbf16> to vector<1x8x8x4xbf16>
    %53 = vector.shape_cast %52 : vector<1x8x8x4xbf16> to vector<8x8x4xbf16>
    %54 = vector.shape_cast %53 : vector<8x8x4xbf16> to vector<64x4xbf16>
    %55 = vector.extract_strided_slice %33 {offsets = [1, 1, 0, 0], sizes = [1, 8, 8, 4], strides = [1, 1, 1, 1]} : vector<4x9x9x4xbf16> to vector<1x8x8x4xbf16>
    %56 = vector.shape_cast %55 : vector<1x8x8x4xbf16> to vector<8x8x4xbf16>
    %57 = vector.shape_cast %56 : vector<8x8x4xbf16> to vector<64x4xbf16>
    %58 = vector.extract_strided_slice %33 {offsets = [0, 1, 1, 0], sizes = [1, 8, 8, 4], strides = [1, 1, 1, 1]} : vector<4x9x9x4xbf16> to vector<1x8x8x4xbf16>
    %59 = vector.shape_cast %58 : vector<1x8x8x4xbf16> to vector<8x8x4xbf16>
    %60 = vector.shape_cast %59 : vector<8x8x4xbf16> to vector<64x4xbf16>
    %61 = tpu.concatenate %36, %39, %42, %45, %48, %51, %54, %57, %60 in 1 : vector<64x4xbf16>, vector<64x4xbf16>, vector<64x4xbf16>, vector<64x4xbf16>, vector<64x4xbf16>, vector<64x4xbf16>, vector<64x4xbf16>, vector<64x4xbf16>, vector<64x4xbf16> -> vector<64x36xbf16>
    %c0_13 = arith.constant 0 : index
    %c0_14 = arith.constant 0 : index
    %62 = vector.load %arg6[%c0_13, %c0_14] : memref<36x12xbf16, #tpu.memory_space<vmem>>, vector<36x12xbf16>
    %cst_15 = arith.constant dense<0.000000e+00> : vector<64x12xf32>
    %63 = tpu.matmul %61, %62, %cst_15 {dimension_numbers = #tpu.dot_dimension_numbers<[1], [0], [0], [1], [0, 0, 1, 1], [], []>} : vector<64x36xbf16>, vector<36x12xbf16>, vector<64x12xf32> -> vector<64x12xf32>
    %64 = arith.addf %31, %63 : vector<64x12xf32>
    %c0_16 = arith.constant 0 : index
    %c0_17 = arith.constant 0 : index
    %c0_18 = arith.constant 0 : index
    %c0_19 = arith.constant 0 : index
    %c0_20 = arith.constant 0 : index
    %c0_21 = arith.constant 0 : index
    %65 = vector.load %arg4[%c0_16, %c0_17, %c0_18, %c0_19, %c0_20, %c0_21] : memref<1x1x4x9x9x4xbf16, #tpu.memory_space<vmem>>, vector<1x1x4x9x9x4xbf16>
    %66 = vector.shape_cast %65 : vector<1x1x4x9x9x4xbf16> to vector<4x9x9x4xbf16>
    %67 = vector.extract_strided_slice %66 {offsets = [0, 0, 0, 0], sizes = [1, 8, 8, 4], strides = [1, 1, 1, 1]} : vector<4x9x9x4xbf16> to vector<1x8x8x4xbf16>
    %68 = vector.shape_cast %67 : vector<1x8x8x4xbf16> to vector<8x8x4xbf16>
    %69 = vector.shape_cast %68 : vector<8x8x4xbf16> to vector<64x4xbf16>
    %70 = vector.extract_strided_slice %66 {offsets = [1, 0, 0, 0], sizes = [1, 8, 8, 4], strides = [1, 1, 1, 1]} : vector<4x9x9x4xbf16> to vector<1x8x8x4xbf16>
    %71 = vector.shape_cast %70 : vector<1x8x8x4xbf16> to vector<8x8x4xbf16>
    %72 = vector.shape_cast %71 : vector<8x8x4xbf16> to vector<64x4xbf16>
    %73 = vector.extract_strided_slice %66 {offsets = [0, 0, 1, 0], sizes = [1, 8, 8, 4], strides = [1, 1, 1, 1]} : vector<4x9x9x4xbf16> to vector<1x8x8x4xbf16>
    %74 = vector.shape_cast %73 : vector<1x8x8x4xbf16> to vector<8x8x4xbf16>
    %75 = vector.shape_cast %74 : vector<8x8x4xbf16> to vector<64x4xbf16>
    %76 = vector.extract_strided_slice %66 {offsets = [2, 0, 0, 0], sizes = [1, 8, 8, 4], strides = [1, 1, 1, 1]} : vector<4x9x9x4xbf16> to vector<1x8x8x4xbf16>
    %77 = vector.shape_cast %76 : vector<1x8x8x4xbf16> to vector<8x8x4xbf16>
    %78 = vector.shape_cast %77 : vector<8x8x4xbf16> to vector<64x4xbf16>
    %79 = vector.extract_strided_slice %66 {offsets = [3, 0, 0, 0], sizes = [1, 8, 8, 4], strides = [1, 1, 1, 1]} : vector<4x9x9x4xbf16> to vector<1x8x8x4xbf16>
    %80 = vector.shape_cast %79 : vector<1x8x8x4xbf16> to vector<8x8x4xbf16>
    %81 = vector.shape_cast %80 : vector<8x8x4xbf16> to vector<64x4xbf16>
    %82 = vector.extract_strided_slice %66 {offsets = [2, 0, 1, 0], sizes = [1, 8, 8, 4], strides = [1, 1, 1, 1]} : vector<4x9x9x4xbf16> to vector<1x8x8x4xbf16>
    %83 = vector.shape_cast %82 : vector<1x8x8x4xbf16> to vector<8x8x4xbf16>
    %84 = vector.shape_cast %83 : vector<8x8x4xbf16> to vector<64x4xbf16>
    %85 = vector.extract_strided_slice %66 {offsets = [0, 1, 0, 0], sizes = [1, 8, 8, 4], strides = [1, 1, 1, 1]} : vector<4x9x9x4xbf16> to vector<1x8x8x4xbf16>
    %86 = vector.shape_cast %85 : vector<1x8x8x4xbf16> to vector<8x8x4xbf16>
    %87 = vector.shape_cast %86 : vector<8x8x4xbf16> to vector<64x4xbf16>
    %88 = vector.extract_strided_slice %66 {offsets = [1, 1, 0, 0], sizes = [1, 8, 8, 4], strides = [1, 1, 1, 1]} : vector<4x9x9x4xbf16> to vector<1x8x8x4xbf16>
    %89 = vector.shape_cast %88 : vector<1x8x8x4xbf16> to vector<8x8x4xbf16>
    %90 = vector.shape_cast %89 : vector<8x8x4xbf16> to vector<64x4xbf16>
    %91 = vector.extract_strided_slice %66 {offsets = [0, 1, 1, 0], sizes = [1, 8, 8, 4], strides = [1, 1, 1, 1]} : vector<4x9x9x4xbf16> to vector<1x8x8x4xbf16>
    %92 = vector.shape_cast %91 : vector<1x8x8x4xbf16> to vector<8x8x4xbf16>
    %93 = vector.shape_cast %92 : vector<8x8x4xbf16> to vector<64x4xbf16>
    %94 = tpu.concatenate %69, %72, %75, %78, %81, %84, %87, %90, %93 in 1 : vector<64x4xbf16>, vector<64x4xbf16>, vector<64x4xbf16>, vector<64x4xbf16>, vector<64x4xbf16>, vector<64x4xbf16>, vector<64x4xbf16>, vector<64x4xbf16>, vector<64x4xbf16> -> vector<64x36xbf16>
    %c0_22 = arith.constant 0 : index
    %c0_23 = arith.constant 0 : index
    %95 = vector.load %arg7[%c0_22, %c0_23] : memref<36x12xbf16, #tpu.memory_space<vmem>>, vector<36x12xbf16>
    %cst_24 = arith.constant dense<0.000000e+00> : vector<64x12xf32>
    %96 = tpu.matmul %94, %95, %cst_24 {dimension_numbers = #tpu.dot_dimension_numbers<[1], [0], [0], [1], [0, 0, 1, 1], [], []>} : vector<64x36xbf16>, vector<36x12xbf16>, vector<64x12xf32> -> vector<64x12xf32>
    %97 = arith.addf %64, %96 : vector<64x12xf32>
    %98 = vector.extract_strided_slice %97 {offsets = [0, 0], sizes = [64, 4], strides = [1, 1]} : vector<64x12xf32> to vector<64x4xf32>
    %99 = arith.truncf %98 : vector<64x4xf32> to vector<64x4xbf16>
    %c0_25 = arith.constant 0 : index
    %c0_26 = arith.constant 0 : index
    %c0_27 = arith.constant 0 : index
    %c0_28 = arith.constant 0 : index
    %100 = vector.load %arg8[%c0_25, %c0_26, %c0_27, %c0_28] : memref<1x1x64x4xbf16, #tpu.memory_space<vmem>>, vector<1x1x64x4xbf16>
    %101 = vector.shape_cast %100 : vector<1x1x64x4xbf16> to vector<64x4xbf16>
    %102 = vector.shape_cast %99 : vector<64x4xbf16> to vector<1x1x64x4xbf16>
    tpu.vector_store %arg8[%c0_25, %c0_26, %c0_27, %c0_28], %102 {strides = array<i32>} : memref<1x1x64x4xbf16, #tpu.memory_space<vmem>>, vector<1x1x64x4xbf16>,
    %103 = vector.extract_strided_slice %97 {offsets = [0, 4], sizes = [64, 8], strides = [1, 1]} : vector<64x12xf32> to vector<64x8xf32>
    %104 = arith.truncf %103 : vector<64x8xf32> to vector<64x8xbf16>
    %c0_29 = arith.constant 0 : index
    %c0_30 = arith.constant 0 : index
    %c0_31 = arith.constant 0 : index
    %c0_32 = arith.constant 0 : index
    %105 = vector.load %arg9[%c0_29, %c0_30, %c0_31, %c0_32] : memref<1x1x64x8xbf16, #tpu.memory_space<vmem>>, vector<1x1x64x8xbf16>
    %106 = vector.shape_cast %105 : vector<1x1x64x8xbf16> to vector<64x8xbf16>
    %107 = vector.shape_cast %104 : vector<64x8xbf16> to vector<1x1x64x8xbf16>
    tpu.vector_store %arg9[%c0_29, %c0_30, %c0_31, %c0_32], %107 {strides = array<i32>} : memref<1x1x64x8xbf16, #tpu.memory_space<vmem>>, vector<1x1x64x8xbf16>,
    %cst_33 = arith.constant dense<0.000000e+00> : vector<12xf32>
    %108 = vector.multi_reduction <add>, %97, %cst_33 [0] : vector<64x12xf32> to vector<12xf32>
    %109 = vector.shape_cast %108 : vector<12xf32> to vector<1x12xf32>
    %110 = arith.mulf %97, %97 : vector<64x12xf32>
    %cst_34 = arith.constant dense<0.000000e+00> : vector<12xf32>
    %111 = vector.multi_reduction <add>, %110, %cst_34 [0] : vector<64x12xf32> to vector<12xf32>
    %112 = vector.shape_cast %111 : vector<12xf32> to vector<1x12xf32>
    %113 = tpu.concatenate %109, %112 in 0 : vector<1x12xf32>, vector<1x12xf32> -> vector<2x12xf32>
    %c0_35 = arith.constant 0 : index
    %c0_36 = arith.constant 0 : index
    %c0_37 = arith.constant 0 : index
    %c0_38 = arith.constant 0 : index
    %114 = vector.load %arg10[%c0_35, %c0_36, %c0_37, %c0_38] : memref<1x1x2x12xf32, #tpu.memory_space<vmem>>, vector<1x1x2x12xf32>
    %115 = vector.shape_cast %114 : vector<1x1x2x12xf32> to vector<2x12xf32>
    %116 = vector.shape_cast %113 : vector<2x12xf32> to vector<1x1x2x12xf32>
    tpu.vector_store %arg10[%c0_35, %c0_36, %c0_37, %c0_38], %116 {strides = array<i32>} : memref<1x1x2x12xf32, #tpu.memory_space<vmem>>, vector<1x1x2x12xf32>,
    return
  }
  func.func @transform_0(%arg0: i32, %arg1: i32) -> (i32, i32, i32, i32, i32, i32) {
    %c0_i32 = arith.constant 0 : i32
    %0 = arith.addi %arg1, %c0_i32 : i32
    %c0_i32_0 = arith.constant 0 : i32
    %c0_i32_1 = arith.constant 0 : i32
    %c0_i32_2 = arith.constant 0 : i32
    %c0_i32_3 = arith.constant 0 : i32
    %c0_i32_4 = arith.constant 0 : i32
    return %arg0, %0, %c0_i32_0, %c0_i32_1, %c0_i32_2, %c0_i32_3 : i32, i32, i32, i32, i32, i32
  }
  func.func @transform_1(%arg0: i32, %arg1: i32) -> (i32, i32, i32, i32, i32, i32) {
    %c1_i32 = arith.constant 1 : i32
    %0 = arith.addi %arg1, %c1_i32 : i32
    %c0_i32 = arith.constant 0 : i32
    %c0_i32_0 = arith.constant 0 : i32
    %c0_i32_1 = arith.constant 0 : i32
    %c0_i32_2 = arith.constant 0 : i32
    %c0_i32_3 = arith.constant 0 : i32
    return %arg0, %0, %c0_i32, %c0_i32_0, %c0_i32_1, %c0_i32_2 : i32, i32, i32, i32, i32, i32
  }
  func.func @transform_2(%arg0: i32, %arg1: i32) -> (i32, i32, i32, i32, i32, i32) {
    %c2_i32 = arith.constant 2 : i32
    %0 = arith.addi %arg1, %c2_i32 : i32
    %c0_i32 = arith.constant 0 : i32
    %c0_i32_0 = arith.constant 0 : i32
    %c0_i32_1 = arith.constant 0 : i32
    %c0_i32_2 = arith.constant 0 : i32
    %c0_i32_3 = arith.constant 0 : i32
    return %arg0, %0, %c0_i32, %c0_i32_0, %c0_i32_1, %c0_i32_2 : i32, i32, i32, i32, i32, i32
  }
  func.func @transform_3(%arg0: i32, %arg1: i32) -> (i32, i32) {
    %c0_i32 = arith.constant 0 : i32
    %c0_i32_0 = arith.constant 0 : i32
    %c0_i32_1 = arith.constant 0 : i32
    return %c0_i32, %c0_i32_0 : i32, i32
  }
  func.func @transform_4(%arg0: i32, %arg1: i32) -> (i32, i32) {
    %c0_i32 = arith.constant 0 : i32
    %c0_i32_0 = arith.constant 0 : i32
    %c0_i32_1 = arith.constant 0 : i32
    return %c0_i32, %c0_i32_0 : i32, i32
  }
  func.func @transform_5(%arg0: i32, %arg1: i32) -> (i32, i32) {
    %c0_i32 = arith.constant 0 : i32
    %c0_i32_0 = arith.constant 0 : i32
    %c0_i32_1 = arith.constant 0 : i32
    return %c0_i32, %c0_i32_0 : i32, i32
  }
  func.func @transform_6(%arg0: i32, %arg1: i32) -> (i32, i32, i32, i32) {
    %c0_i32 = arith.constant 0 : i32
    %c0_i32_0 = arith.constant 0 : i32
    %c0_i32_1 = arith.constant 0 : i32
    return %arg0, %arg1, %c0_i32, %c0_i32_0 : i32, i32, i32, i32
  }
  func.func @transform_7(%arg0: i32, %arg1: i32) -> (i32, i32, i32, i32) {
    %c0_i32 = arith.constant 0 : i32
    %c0_i32_0 = arith.constant 0 : i32
    %c0_i32_1 = arith.constant 0 : i32
    return %arg0, %arg1, %c0_i32, %c0_i32_0 : i32, i32, i32, i32
  }
  func.func @transform_8(%arg0: i32, %arg1: i32) -> (i32, i32, i32, i32) {
    %c0_i32 = arith.constant 0 : i32
    %c0_i32_0 = arith.constant 0 : i32
    %c0_i32_1 = arith.constant 0 : i32
    return %arg0, %arg1, %c0_i32, %c0_i32_0 : i32, i32, i32, i32
  }
}

module attributes {stable_mosaic.version = 11 : i64} {
  func.func @_conv_s1_kernel(%arg0: i32, %arg1: i32, %arg2: memref<1x1x8x8x4xbf16, #tpu.memory_space<vmem>>, %arg3: memref<1x1x8x8x4xbf16, #tpu.memory_space<vmem>>, %arg4: memref<1x1x8x8x4xbf16, #tpu.memory_space<vmem>>, %arg5: memref<1x4xf32, #tpu.memory_space<vmem>>, %arg6: memref<1x4xf32, #tpu.memory_space<vmem>>, %arg7: memref<36x8xbf16, #tpu.memory_space<vmem>>, %arg8: memref<36x8xbf16, #tpu.memory_space<vmem>>, %arg9: memref<36x8xbf16, #tpu.memory_space<vmem>>, %arg10: memref<1x1x64x8xbf16, #tpu.memory_space<vmem>>, %arg11: memref<1x1x2x8xf32, #tpu.memory_space<vmem>>, %arg12: memref<10x10x4xbf16, #tpu.memory_space<vmem>>) attributes {dimension_semantics = [#tpu.dimension_semantics<parallel>, #tpu.dimension_semantics<parallel>], iteration_bounds = array<i64: 2, 4>, scalar_prefetch = 0 : i64, scratch_operands = 1 : i64, tpu.core_type = #tpu.core_type<tc>, window_params = [{transform_indices = @transform_0, window_bounds = array<i64: 1, 1, 8, 8, 4>}, {transform_indices = @transform_1, window_bounds = array<i64: 1, 1, 8, 8, 4>}, {transform_indices = @transform_2, window_bounds = array<i64: 1, 1, 8, 8, 4>}, {pipeline_mode = #tpu.pipeline_mode<synchronous>, transform_indices = @transform_3, window_bounds = array<i64: 1, 4>}, {pipeline_mode = #tpu.pipeline_mode<synchronous>, transform_indices = @transform_4, window_bounds = array<i64: 1, 4>}, {pipeline_mode = #tpu.pipeline_mode<synchronous>, transform_indices = @transform_5, window_bounds = array<i64: 36, 8>}, {pipeline_mode = #tpu.pipeline_mode<synchronous>, transform_indices = @transform_6, window_bounds = array<i64: 36, 8>}, {pipeline_mode = #tpu.pipeline_mode<synchronous>, transform_indices = @transform_7, window_bounds = array<i64: 36, 8>}, {transform_indices = @transform_8, window_bounds = array<i64: 1, 1, 64, 8>}, {transform_indices = @transform_9, window_bounds = array<i64: 1, 1, 2, 8>}]} {
    %c0 = arith.constant 0 : index
    %c0_0 = arith.constant 0 : index
    %0 = vector.load %arg5[%c0, %c0_0] : memref<1x4xf32, #tpu.memory_space<vmem>>, vector<1x4xf32>
    %c0_1 = arith.constant 0 : index
    %c0_2 = arith.constant 0 : index
    %1 = vector.load %arg6[%c0_1, %c0_2] : memref<1x4xf32, #tpu.memory_space<vmem>>, vector<1x4xf32>
    %cst = arith.constant 0.000000e+00 : bf16
    %2 = vector.broadcast %cst : bf16 to vector<10x10x4xbf16>
    %c0_3 = arith.constant 0 : index
    %c0_4 = arith.constant 0 : index
    %c0_5 = arith.constant 0 : index
    %3 = vector.load %arg12[%c0_3, %c0_4, %c0_5] : memref<10x10x4xbf16, #tpu.memory_space<vmem>>, vector<10x10x4xbf16>
    tpu.vector_store %arg12[%c0_3, %c0_4, %c0_5], %2 {strides = array<i32>} : memref<10x10x4xbf16, #tpu.memory_space<vmem>>, vector<10x10x4xbf16>,
    %c0_6 = arith.constant 0 : index
    %c0_7 = arith.constant 0 : index
    %c0_8 = arith.constant 0 : index
    %c0_9 = arith.constant 0 : index
    %c0_10 = arith.constant 0 : index
    %4 = vector.load %arg2[%c0_6, %c0_7, %c0_8, %c0_9, %c0_10] : memref<1x1x8x8x4xbf16, #tpu.memory_space<vmem>>, vector<1x1x8x8x4xbf16>
    %5 = vector.shape_cast %4 : vector<1x1x8x8x4xbf16> to vector<8x8x4xbf16>
    %6 = arith.extf %5 : vector<8x8x4xbf16> to vector<8x8x4xf32>
    %7 = vector.shape_cast %0 : vector<1x4xf32> to vector<1x1x4xf32>
    %8 = vector.broadcast %7 : vector<1x1x4xf32> to vector<8x8x4xf32>
    %9 = arith.mulf %6, %8 : vector<8x8x4xf32>
    %10 = vector.shape_cast %1 : vector<1x4xf32> to vector<1x1x4xf32>
    %11 = vector.broadcast %10 : vector<1x1x4xf32> to vector<8x8x4xf32>
    %12 = arith.addf %9, %11 : vector<8x8x4xf32>
    %cst_11 = arith.constant 0.000000e+00 : f32
    %13 = vector.broadcast %cst_11 : f32 to vector<8x8x4xf32>
    %14 = arith.cmpf oge, %12, %13 : vector<8x8x4xf32>
    %cst_12 = arith.constant 2.000000e-01 : f32
    %15 = vector.broadcast %cst_12 : f32 to vector<8x8x4xf32>
    %16 = arith.mulf %15, %12 : vector<8x8x4xf32>
    %17 = arith.select %14, %12, %16 : vector<8x8x4xi1>, vector<8x8x4xf32>
    %18 = arith.truncf %17 : vector<8x8x4xf32> to vector<8x8x4xbf16>
    %c1 = arith.constant 1 : index
    %c1_13 = arith.constant 1 : index
    %c0_14 = arith.constant 0 : index
    %19 = vector.load %arg12[%c1, %c1_13, %c0_14] : memref<10x10x4xbf16, #tpu.memory_space<vmem>>, vector<8x8x4xbf16>
    tpu.vector_store %arg12[%c1, %c1_13, %c0_14], %18 {strides = array<i32>} : memref<10x10x4xbf16, #tpu.memory_space<vmem>>, vector<8x8x4xbf16>,
    %c0_15 = arith.constant 0 : index
    %c0_16 = arith.constant 0 : index
    %c0_17 = arith.constant 0 : index
    %20 = vector.load %arg12[%c0_15, %c0_16, %c0_17] : memref<10x10x4xbf16, #tpu.memory_space<vmem>>, vector<8x8x4xbf16>
    %21 = vector.shape_cast %20 : vector<8x8x4xbf16> to vector<64x4xbf16>
    %c0_18 = arith.constant 0 : index
    %c1_19 = arith.constant 1 : index
    %c0_20 = arith.constant 0 : index
    %22 = vector.load %arg12[%c0_18, %c1_19, %c0_20] : memref<10x10x4xbf16, #tpu.memory_space<vmem>>, vector<8x8x4xbf16>
    %23 = vector.shape_cast %22 : vector<8x8x4xbf16> to vector<64x4xbf16>
    %c0_21 = arith.constant 0 : index
    %c2 = arith.constant 2 : index
    %c0_22 = arith.constant 0 : index
    %24 = vector.load %arg12[%c0_21, %c2, %c0_22] : memref<10x10x4xbf16, #tpu.memory_space<vmem>>, vector<8x8x4xbf16>
    %25 = vector.shape_cast %24 : vector<8x8x4xbf16> to vector<64x4xbf16>
    %c1_23 = arith.constant 1 : index
    %c0_24 = arith.constant 0 : index
    %c0_25 = arith.constant 0 : index
    %26 = vector.load %arg12[%c1_23, %c0_24, %c0_25] : memref<10x10x4xbf16, #tpu.memory_space<vmem>>, vector<8x8x4xbf16>
    %27 = vector.shape_cast %26 : vector<8x8x4xbf16> to vector<64x4xbf16>
    %c1_26 = arith.constant 1 : index
    %c1_27 = arith.constant 1 : index
    %c0_28 = arith.constant 0 : index
    %28 = vector.load %arg12[%c1_26, %c1_27, %c0_28] : memref<10x10x4xbf16, #tpu.memory_space<vmem>>, vector<8x8x4xbf16>
    %29 = vector.shape_cast %28 : vector<8x8x4xbf16> to vector<64x4xbf16>
    %c1_29 = arith.constant 1 : index
    %c2_30 = arith.constant 2 : index
    %c0_31 = arith.constant 0 : index
    %30 = vector.load %arg12[%c1_29, %c2_30, %c0_31] : memref<10x10x4xbf16, #tpu.memory_space<vmem>>, vector<8x8x4xbf16>
    %31 = vector.shape_cast %30 : vector<8x8x4xbf16> to vector<64x4xbf16>
    %c2_32 = arith.constant 2 : index
    %c0_33 = arith.constant 0 : index
    %c0_34 = arith.constant 0 : index
    %32 = vector.load %arg12[%c2_32, %c0_33, %c0_34] : memref<10x10x4xbf16, #tpu.memory_space<vmem>>, vector<8x8x4xbf16>
    %33 = vector.shape_cast %32 : vector<8x8x4xbf16> to vector<64x4xbf16>
    %c2_35 = arith.constant 2 : index
    %c1_36 = arith.constant 1 : index
    %c0_37 = arith.constant 0 : index
    %34 = vector.load %arg12[%c2_35, %c1_36, %c0_37] : memref<10x10x4xbf16, #tpu.memory_space<vmem>>, vector<8x8x4xbf16>
    %35 = vector.shape_cast %34 : vector<8x8x4xbf16> to vector<64x4xbf16>
    %c2_38 = arith.constant 2 : index
    %c2_39 = arith.constant 2 : index
    %c0_40 = arith.constant 0 : index
    %36 = vector.load %arg12[%c2_38, %c2_39, %c0_40] : memref<10x10x4xbf16, #tpu.memory_space<vmem>>, vector<8x8x4xbf16>
    %37 = vector.shape_cast %36 : vector<8x8x4xbf16> to vector<64x4xbf16>
    %38 = tpu.concatenate %21, %23, %25, %27, %29, %31, %33, %35, %37 in 1 : vector<64x4xbf16>, vector<64x4xbf16>, vector<64x4xbf16>, vector<64x4xbf16>, vector<64x4xbf16>, vector<64x4xbf16>, vector<64x4xbf16>, vector<64x4xbf16>, vector<64x4xbf16> -> vector<64x36xbf16>
    %c0_41 = arith.constant 0 : index
    %c0_42 = arith.constant 0 : index
    %39 = vector.load %arg7[%c0_41, %c0_42] : memref<36x8xbf16, #tpu.memory_space<vmem>>, vector<36x8xbf16>
    %cst_43 = arith.constant dense<0.000000e+00> : vector<64x8xf32>
    %40 = tpu.matmul %38, %39, %cst_43 {dimension_numbers = #tpu.dot_dimension_numbers<[1], [0], [0], [1], [0, 0, 1, 1], [], []>} : vector<64x36xbf16>, vector<36x8xbf16>, vector<64x8xf32> -> vector<64x8xf32>
    %c0_i32 = arith.constant 0 : i32
    %41 = arith.cmpi sgt, %arg1, %c0_i32 : i32
    %cst_44 = arith.constant 0.000000e+00 : f32
    %42 = vector.broadcast %cst_44 : f32 to vector<64x8xf32>
    %43 = arith.select %41, %40, %42 : vector<64x8xf32>
    %c0_45 = arith.constant 0 : index
    %c0_46 = arith.constant 0 : index
    %c0_47 = arith.constant 0 : index
    %c0_48 = arith.constant 0 : index
    %c0_49 = arith.constant 0 : index
    %44 = vector.load %arg3[%c0_45, %c0_46, %c0_47, %c0_48, %c0_49] : memref<1x1x8x8x4xbf16, #tpu.memory_space<vmem>>, vector<1x1x8x8x4xbf16>
    %45 = vector.shape_cast %44 : vector<1x1x8x8x4xbf16> to vector<8x8x4xbf16>
    %46 = arith.extf %45 : vector<8x8x4xbf16> to vector<8x8x4xf32>
    %47 = vector.shape_cast %0 : vector<1x4xf32> to vector<1x1x4xf32>
    %48 = vector.broadcast %47 : vector<1x1x4xf32> to vector<8x8x4xf32>
    %49 = arith.mulf %46, %48 : vector<8x8x4xf32>
    %50 = vector.shape_cast %1 : vector<1x4xf32> to vector<1x1x4xf32>
    %51 = vector.broadcast %50 : vector<1x1x4xf32> to vector<8x8x4xf32>
    %52 = arith.addf %49, %51 : vector<8x8x4xf32>
    %cst_50 = arith.constant 0.000000e+00 : f32
    %53 = vector.broadcast %cst_50 : f32 to vector<8x8x4xf32>
    %54 = arith.cmpf oge, %52, %53 : vector<8x8x4xf32>
    %cst_51 = arith.constant 2.000000e-01 : f32
    %55 = vector.broadcast %cst_51 : f32 to vector<8x8x4xf32>
    %56 = arith.mulf %55, %52 : vector<8x8x4xf32>
    %57 = arith.select %54, %52, %56 : vector<8x8x4xi1>, vector<8x8x4xf32>
    %58 = arith.truncf %57 : vector<8x8x4xf32> to vector<8x8x4xbf16>
    %c1_52 = arith.constant 1 : index
    %c1_53 = arith.constant 1 : index
    %c0_54 = arith.constant 0 : index
    %59 = vector.load %arg12[%c1_52, %c1_53, %c0_54] : memref<10x10x4xbf16, #tpu.memory_space<vmem>>, vector<8x8x4xbf16>
    tpu.vector_store %arg12[%c1_52, %c1_53, %c0_54], %58 {strides = array<i32>} : memref<10x10x4xbf16, #tpu.memory_space<vmem>>, vector<8x8x4xbf16>,
    %c0_55 = arith.constant 0 : index
    %c0_56 = arith.constant 0 : index
    %c0_57 = arith.constant 0 : index
    %60 = vector.load %arg12[%c0_55, %c0_56, %c0_57] : memref<10x10x4xbf16, #tpu.memory_space<vmem>>, vector<8x8x4xbf16>
    %61 = vector.shape_cast %60 : vector<8x8x4xbf16> to vector<64x4xbf16>
    %c0_58 = arith.constant 0 : index
    %c1_59 = arith.constant 1 : index
    %c0_60 = arith.constant 0 : index
    %62 = vector.load %arg12[%c0_58, %c1_59, %c0_60] : memref<10x10x4xbf16, #tpu.memory_space<vmem>>, vector<8x8x4xbf16>
    %63 = vector.shape_cast %62 : vector<8x8x4xbf16> to vector<64x4xbf16>
    %c0_61 = arith.constant 0 : index
    %c2_62 = arith.constant 2 : index
    %c0_63 = arith.constant 0 : index
    %64 = vector.load %arg12[%c0_61, %c2_62, %c0_63] : memref<10x10x4xbf16, #tpu.memory_space<vmem>>, vector<8x8x4xbf16>
    %65 = vector.shape_cast %64 : vector<8x8x4xbf16> to vector<64x4xbf16>
    %c1_64 = arith.constant 1 : index
    %c0_65 = arith.constant 0 : index
    %c0_66 = arith.constant 0 : index
    %66 = vector.load %arg12[%c1_64, %c0_65, %c0_66] : memref<10x10x4xbf16, #tpu.memory_space<vmem>>, vector<8x8x4xbf16>
    %67 = vector.shape_cast %66 : vector<8x8x4xbf16> to vector<64x4xbf16>
    %c1_67 = arith.constant 1 : index
    %c1_68 = arith.constant 1 : index
    %c0_69 = arith.constant 0 : index
    %68 = vector.load %arg12[%c1_67, %c1_68, %c0_69] : memref<10x10x4xbf16, #tpu.memory_space<vmem>>, vector<8x8x4xbf16>
    %69 = vector.shape_cast %68 : vector<8x8x4xbf16> to vector<64x4xbf16>
    %c1_70 = arith.constant 1 : index
    %c2_71 = arith.constant 2 : index
    %c0_72 = arith.constant 0 : index
    %70 = vector.load %arg12[%c1_70, %c2_71, %c0_72] : memref<10x10x4xbf16, #tpu.memory_space<vmem>>, vector<8x8x4xbf16>
    %71 = vector.shape_cast %70 : vector<8x8x4xbf16> to vector<64x4xbf16>
    %c2_73 = arith.constant 2 : index
    %c0_74 = arith.constant 0 : index
    %c0_75 = arith.constant 0 : index
    %72 = vector.load %arg12[%c2_73, %c0_74, %c0_75] : memref<10x10x4xbf16, #tpu.memory_space<vmem>>, vector<8x8x4xbf16>
    %73 = vector.shape_cast %72 : vector<8x8x4xbf16> to vector<64x4xbf16>
    %c2_76 = arith.constant 2 : index
    %c1_77 = arith.constant 1 : index
    %c0_78 = arith.constant 0 : index
    %74 = vector.load %arg12[%c2_76, %c1_77, %c0_78] : memref<10x10x4xbf16, #tpu.memory_space<vmem>>, vector<8x8x4xbf16>
    %75 = vector.shape_cast %74 : vector<8x8x4xbf16> to vector<64x4xbf16>
    %c2_79 = arith.constant 2 : index
    %c2_80 = arith.constant 2 : index
    %c0_81 = arith.constant 0 : index
    %76 = vector.load %arg12[%c2_79, %c2_80, %c0_81] : memref<10x10x4xbf16, #tpu.memory_space<vmem>>, vector<8x8x4xbf16>
    %77 = vector.shape_cast %76 : vector<8x8x4xbf16> to vector<64x4xbf16>
    %78 = tpu.concatenate %61, %63, %65, %67, %69, %71, %73, %75, %77 in 1 : vector<64x4xbf16>, vector<64x4xbf16>, vector<64x4xbf16>, vector<64x4xbf16>, vector<64x4xbf16>, vector<64x4xbf16>, vector<64x4xbf16>, vector<64x4xbf16>, vector<64x4xbf16> -> vector<64x36xbf16>
    %c0_82 = arith.constant 0 : index
    %c0_83 = arith.constant 0 : index
    %79 = vector.load %arg8[%c0_82, %c0_83] : memref<36x8xbf16, #tpu.memory_space<vmem>>, vector<36x8xbf16>
    %cst_84 = arith.constant dense<0.000000e+00> : vector<64x8xf32>
    %80 = tpu.matmul %78, %79, %cst_84 {dimension_numbers = #tpu.dot_dimension_numbers<[1], [0], [0], [1], [0, 0, 1, 1], [], []>} : vector<64x36xbf16>, vector<36x8xbf16>, vector<64x8xf32> -> vector<64x8xf32>
    %81 = arith.addf %43, %80 : vector<64x8xf32>
    %c0_85 = arith.constant 0 : index
    %c0_86 = arith.constant 0 : index
    %c0_87 = arith.constant 0 : index
    %c0_88 = arith.constant 0 : index
    %c0_89 = arith.constant 0 : index
    %82 = vector.load %arg4[%c0_85, %c0_86, %c0_87, %c0_88, %c0_89] : memref<1x1x8x8x4xbf16, #tpu.memory_space<vmem>>, vector<1x1x8x8x4xbf16>
    %83 = vector.shape_cast %82 : vector<1x1x8x8x4xbf16> to vector<8x8x4xbf16>
    %84 = arith.extf %83 : vector<8x8x4xbf16> to vector<8x8x4xf32>
    %85 = vector.shape_cast %0 : vector<1x4xf32> to vector<1x1x4xf32>
    %86 = vector.broadcast %85 : vector<1x1x4xf32> to vector<8x8x4xf32>
    %87 = arith.mulf %84, %86 : vector<8x8x4xf32>
    %88 = vector.shape_cast %1 : vector<1x4xf32> to vector<1x1x4xf32>
    %89 = vector.broadcast %88 : vector<1x1x4xf32> to vector<8x8x4xf32>
    %90 = arith.addf %87, %89 : vector<8x8x4xf32>
    %cst_90 = arith.constant 0.000000e+00 : f32
    %91 = vector.broadcast %cst_90 : f32 to vector<8x8x4xf32>
    %92 = arith.cmpf oge, %90, %91 : vector<8x8x4xf32>
    %cst_91 = arith.constant 2.000000e-01 : f32
    %93 = vector.broadcast %cst_91 : f32 to vector<8x8x4xf32>
    %94 = arith.mulf %93, %90 : vector<8x8x4xf32>
    %95 = arith.select %92, %90, %94 : vector<8x8x4xi1>, vector<8x8x4xf32>
    %96 = arith.truncf %95 : vector<8x8x4xf32> to vector<8x8x4xbf16>
    %c1_92 = arith.constant 1 : index
    %c1_93 = arith.constant 1 : index
    %c0_94 = arith.constant 0 : index
    %97 = vector.load %arg12[%c1_92, %c1_93, %c0_94] : memref<10x10x4xbf16, #tpu.memory_space<vmem>>, vector<8x8x4xbf16>
    tpu.vector_store %arg12[%c1_92, %c1_93, %c0_94], %96 {strides = array<i32>} : memref<10x10x4xbf16, #tpu.memory_space<vmem>>, vector<8x8x4xbf16>,
    %c0_95 = arith.constant 0 : index
    %c0_96 = arith.constant 0 : index
    %c0_97 = arith.constant 0 : index
    %98 = vector.load %arg12[%c0_95, %c0_96, %c0_97] : memref<10x10x4xbf16, #tpu.memory_space<vmem>>, vector<8x8x4xbf16>
    %99 = vector.shape_cast %98 : vector<8x8x4xbf16> to vector<64x4xbf16>
    %c0_98 = arith.constant 0 : index
    %c1_99 = arith.constant 1 : index
    %c0_100 = arith.constant 0 : index
    %100 = vector.load %arg12[%c0_98, %c1_99, %c0_100] : memref<10x10x4xbf16, #tpu.memory_space<vmem>>, vector<8x8x4xbf16>
    %101 = vector.shape_cast %100 : vector<8x8x4xbf16> to vector<64x4xbf16>
    %c0_101 = arith.constant 0 : index
    %c2_102 = arith.constant 2 : index
    %c0_103 = arith.constant 0 : index
    %102 = vector.load %arg12[%c0_101, %c2_102, %c0_103] : memref<10x10x4xbf16, #tpu.memory_space<vmem>>, vector<8x8x4xbf16>
    %103 = vector.shape_cast %102 : vector<8x8x4xbf16> to vector<64x4xbf16>
    %c1_104 = arith.constant 1 : index
    %c0_105 = arith.constant 0 : index
    %c0_106 = arith.constant 0 : index
    %104 = vector.load %arg12[%c1_104, %c0_105, %c0_106] : memref<10x10x4xbf16, #tpu.memory_space<vmem>>, vector<8x8x4xbf16>
    %105 = vector.shape_cast %104 : vector<8x8x4xbf16> to vector<64x4xbf16>
    %c1_107 = arith.constant 1 : index
    %c1_108 = arith.constant 1 : index
    %c0_109 = arith.constant 0 : index
    %106 = vector.load %arg12[%c1_107, %c1_108, %c0_109] : memref<10x10x4xbf16, #tpu.memory_space<vmem>>, vector<8x8x4xbf16>
    %107 = vector.shape_cast %106 : vector<8x8x4xbf16> to vector<64x4xbf16>
    %c1_110 = arith.constant 1 : index
    %c2_111 = arith.constant 2 : index
    %c0_112 = arith.constant 0 : index
    %108 = vector.load %arg12[%c1_110, %c2_111, %c0_112] : memref<10x10x4xbf16, #tpu.memory_space<vmem>>, vector<8x8x4xbf16>
    %109 = vector.shape_cast %108 : vector<8x8x4xbf16> to vector<64x4xbf16>
    %c2_113 = arith.constant 2 : index
    %c0_114 = arith.constant 0 : index
    %c0_115 = arith.constant 0 : index
    %110 = vector.load %arg12[%c2_113, %c0_114, %c0_115] : memref<10x10x4xbf16, #tpu.memory_space<vmem>>, vector<8x8x4xbf16>
    %111 = vector.shape_cast %110 : vector<8x8x4xbf16> to vector<64x4xbf16>
    %c2_116 = arith.constant 2 : index
    %c1_117 = arith.constant 1 : index
    %c0_118 = arith.constant 0 : index
    %112 = vector.load %arg12[%c2_116, %c1_117, %c0_118] : memref<10x10x4xbf16, #tpu.memory_space<vmem>>, vector<8x8x4xbf16>
    %113 = vector.shape_cast %112 : vector<8x8x4xbf16> to vector<64x4xbf16>
    %c2_119 = arith.constant 2 : index
    %c2_120 = arith.constant 2 : index
    %c0_121 = arith.constant 0 : index
    %114 = vector.load %arg12[%c2_119, %c2_120, %c0_121] : memref<10x10x4xbf16, #tpu.memory_space<vmem>>, vector<8x8x4xbf16>
    %115 = vector.shape_cast %114 : vector<8x8x4xbf16> to vector<64x4xbf16>
    %116 = tpu.concatenate %99, %101, %103, %105, %107, %109, %111, %113, %115 in 1 : vector<64x4xbf16>, vector<64x4xbf16>, vector<64x4xbf16>, vector<64x4xbf16>, vector<64x4xbf16>, vector<64x4xbf16>, vector<64x4xbf16>, vector<64x4xbf16>, vector<64x4xbf16> -> vector<64x36xbf16>
    %c0_122 = arith.constant 0 : index
    %c0_123 = arith.constant 0 : index
    %117 = vector.load %arg9[%c0_122, %c0_123] : memref<36x8xbf16, #tpu.memory_space<vmem>>, vector<36x8xbf16>
    %cst_124 = arith.constant dense<0.000000e+00> : vector<64x8xf32>
    %118 = tpu.matmul %116, %117, %cst_124 {dimension_numbers = #tpu.dot_dimension_numbers<[1], [0], [0], [1], [0, 0, 1, 1], [], []>} : vector<64x36xbf16>, vector<36x8xbf16>, vector<64x8xf32> -> vector<64x8xf32>
    %c3_i32 = arith.constant 3 : i32
    %119 = arith.cmpi slt, %arg1, %c3_i32 : i32
    %cst_125 = arith.constant 0.000000e+00 : f32
    %120 = vector.broadcast %cst_125 : f32 to vector<64x8xf32>
    %121 = arith.select %119, %118, %120 : vector<64x8xf32>
    %122 = arith.addf %81, %121 : vector<64x8xf32>
    %123 = arith.truncf %122 : vector<64x8xf32> to vector<64x8xbf16>
    %c0_126 = arith.constant 0 : index
    %c0_127 = arith.constant 0 : index
    %c0_128 = arith.constant 0 : index
    %c0_129 = arith.constant 0 : index
    %124 = vector.load %arg10[%c0_126, %c0_127, %c0_128, %c0_129] : memref<1x1x64x8xbf16, #tpu.memory_space<vmem>>, vector<1x1x64x8xbf16>
    %125 = vector.shape_cast %124 : vector<1x1x64x8xbf16> to vector<64x8xbf16>
    %126 = vector.shape_cast %123 : vector<64x8xbf16> to vector<1x1x64x8xbf16>
    tpu.vector_store %arg10[%c0_126, %c0_127, %c0_128, %c0_129], %126 {strides = array<i32>} : memref<1x1x64x8xbf16, #tpu.memory_space<vmem>>, vector<1x1x64x8xbf16>,
    %cst_130 = arith.constant dense<0.000000e+00> : vector<8xf32>
    %127 = vector.multi_reduction <add>, %122, %cst_130 [0] : vector<64x8xf32> to vector<8xf32>
    %128 = vector.shape_cast %127 : vector<8xf32> to vector<1x8xf32>
    %129 = arith.mulf %122, %122 : vector<64x8xf32>
    %cst_131 = arith.constant dense<0.000000e+00> : vector<8xf32>
    %130 = vector.multi_reduction <add>, %129, %cst_131 [0] : vector<64x8xf32> to vector<8xf32>
    %131 = vector.shape_cast %130 : vector<8xf32> to vector<1x8xf32>
    %132 = tpu.concatenate %128, %131 in 0 : vector<1x8xf32>, vector<1x8xf32> -> vector<2x8xf32>
    %c0_132 = arith.constant 0 : index
    %c0_133 = arith.constant 0 : index
    %c0_134 = arith.constant 0 : index
    %c0_135 = arith.constant 0 : index
    %133 = vector.load %arg11[%c0_132, %c0_133, %c0_134, %c0_135] : memref<1x1x2x8xf32, #tpu.memory_space<vmem>>, vector<1x1x2x8xf32>
    %134 = vector.shape_cast %133 : vector<1x1x2x8xf32> to vector<2x8xf32>
    %135 = vector.shape_cast %132 : vector<2x8xf32> to vector<1x1x2x8xf32>
    tpu.vector_store %arg11[%c0_132, %c0_133, %c0_134, %c0_135], %135 {strides = array<i32>} : memref<1x1x2x8xf32, #tpu.memory_space<vmem>>, vector<1x1x2x8xf32>,
    return
  }
  func.func @transform_0(%arg0: i32, %arg1: i32) -> (i32, i32, i32, i32, i32) {
    %c-1_i32 = arith.constant -1 : i32
    %0 = arith.addi %arg1, %c-1_i32 : i32
    %c0_i32 = arith.constant 0 : i32
    %1 = arith.maxsi %0, %c0_i32 : i32
    %c3_i32 = arith.constant 3 : i32
    %2 = arith.minsi %1, %c3_i32 : i32
    %c0_i32_0 = arith.constant 0 : i32
    %c0_i32_1 = arith.constant 0 : i32
    %c0_i32_2 = arith.constant 0 : i32
    %c0_i32_3 = arith.constant 0 : i32
    return %arg0, %2, %c0_i32_0, %c0_i32_1, %c0_i32_2 : i32, i32, i32, i32, i32
  }
  func.func @transform_1(%arg0: i32, %arg1: i32) -> (i32, i32, i32, i32, i32) {
    %c0_i32 = arith.constant 0 : i32
    %0 = arith.addi %arg1, %c0_i32 : i32
    %c0_i32_0 = arith.constant 0 : i32
    %1 = arith.maxsi %0, %c0_i32_0 : i32
    %c3_i32 = arith.constant 3 : i32
    %2 = arith.minsi %1, %c3_i32 : i32
    %c0_i32_1 = arith.constant 0 : i32
    %c0_i32_2 = arith.constant 0 : i32
    %c0_i32_3 = arith.constant 0 : i32
    %c0_i32_4 = arith.constant 0 : i32
    return %arg0, %2, %c0_i32_1, %c0_i32_2, %c0_i32_3 : i32, i32, i32, i32, i32
  }
  func.func @transform_2(%arg0: i32, %arg1: i32) -> (i32, i32, i32, i32, i32) {
    %c1_i32 = arith.constant 1 : i32
    %0 = arith.addi %arg1, %c1_i32 : i32
    %c0_i32 = arith.constant 0 : i32
    %1 = arith.maxsi %0, %c0_i32 : i32
    %c3_i32 = arith.constant 3 : i32
    %2 = arith.minsi %1, %c3_i32 : i32
    %c0_i32_0 = arith.constant 0 : i32
    %c0_i32_1 = arith.constant 0 : i32
    %c0_i32_2 = arith.constant 0 : i32
    %c0_i32_3 = arith.constant 0 : i32
    return %arg0, %2, %c0_i32_0, %c0_i32_1, %c0_i32_2 : i32, i32, i32, i32, i32
  }
  func.func @transform_3(%arg0: i32, %arg1: i32) -> (i32, i32) {
    %c0_i32 = arith.constant 0 : i32
    %c0_i32_0 = arith.constant 0 : i32
    %c0_i32_1 = arith.constant 0 : i32
    return %c0_i32, %c0_i32_0 : i32, i32
  }
  func.func @transform_4(%arg0: i32, %arg1: i32) -> (i32, i32) {
    %c0_i32 = arith.constant 0 : i32
    %c0_i32_0 = arith.constant 0 : i32
    %c0_i32_1 = arith.constant 0 : i32
    return %c0_i32, %c0_i32_0 : i32, i32
  }
  func.func @transform_5(%arg0: i32, %arg1: i32) -> (i32, i32) {
    %c0_i32 = arith.constant 0 : i32
    %c0_i32_0 = arith.constant 0 : i32
    %c0_i32_1 = arith.constant 0 : i32
    return %c0_i32, %c0_i32_0 : i32, i32
  }
  func.func @transform_6(%arg0: i32, %arg1: i32) -> (i32, i32) {
    %c0_i32 = arith.constant 0 : i32
    %c0_i32_0 = arith.constant 0 : i32
    %c0_i32_1 = arith.constant 0 : i32
    return %c0_i32, %c0_i32_0 : i32, i32
  }
  func.func @transform_7(%arg0: i32, %arg1: i32) -> (i32, i32) {
    %c0_i32 = arith.constant 0 : i32
    %c0_i32_0 = arith.constant 0 : i32
    %c0_i32_1 = arith.constant 0 : i32
    return %c0_i32, %c0_i32_0 : i32, i32
  }
  func.func @transform_8(%arg0: i32, %arg1: i32) -> (i32, i32, i32, i32) {
    %c0_i32 = arith.constant 0 : i32
    %c0_i32_0 = arith.constant 0 : i32
    %c0_i32_1 = arith.constant 0 : i32
    return %arg0, %arg1, %c0_i32, %c0_i32_0 : i32, i32, i32, i32
  }
  func.func @transform_9(%arg0: i32, %arg1: i32) -> (i32, i32, i32, i32) {
    %c0_i32 = arith.constant 0 : i32
    %c0_i32_0 = arith.constant 0 : i32
    %c0_i32_1 = arith.constant 0 : i32
    return %arg0, %arg1, %c0_i32, %c0_i32_0 : i32, i32, i32, i32
  }
}

module attributes {stable_mosaic.version = 11 : i64} {
  func.func @_bn_act_add_kernel(%arg0: i32, %arg1: memref<8x512xbf16, #tpu.memory_space<vmem>>, %arg2: memref<8x512xbf16, #tpu.memory_space<vmem>>, %arg3: memref<1x512xf32, #tpu.memory_space<vmem>>, %arg4: memref<1x512xf32, #tpu.memory_space<vmem>>, %arg5: memref<1x512xf32, #tpu.memory_space<vmem>>, %arg6: memref<1x512xf32, #tpu.memory_space<vmem>>, %arg7: memref<8x512xf32, #tpu.memory_space<vmem>>) attributes {dimension_semantics = [#tpu.dimension_semantics<parallel>], iteration_bounds = array<i64: 1>, scalar_prefetch = 0 : i64, scratch_operands = 0 : i64, tpu.core_type = #tpu.core_type<tc>, window_params = [{transform_indices = @transform_0, window_bounds = array<i64: 8, 512>}, {transform_indices = @transform_1, window_bounds = array<i64: 8, 512>}, {pipeline_mode = #tpu.pipeline_mode<synchronous>, transform_indices = @transform_2, window_bounds = array<i64: 1, 512>}, {pipeline_mode = #tpu.pipeline_mode<synchronous>, transform_indices = @transform_3, window_bounds = array<i64: 1, 512>}, {pipeline_mode = #tpu.pipeline_mode<synchronous>, transform_indices = @transform_4, window_bounds = array<i64: 1, 512>}, {pipeline_mode = #tpu.pipeline_mode<synchronous>, transform_indices = @transform_5, window_bounds = array<i64: 1, 512>}, {transform_indices = @transform_6, window_bounds = array<i64: 8, 512>}]} {
    %c0 = arith.constant 0 : index
    %c0_0 = arith.constant 0 : index
    %0 = vector.load %arg1[%c0, %c0_0] : memref<8x512xbf16, #tpu.memory_space<vmem>>, vector<8x512xbf16>
    %c0_1 = arith.constant 0 : index
    %c0_2 = arith.constant 0 : index
    %1 = vector.load %arg3[%c0_1, %c0_2] : memref<1x512xf32, #tpu.memory_space<vmem>>, vector<1x512xf32>
    %2 = arith.extf %0 : vector<8x512xbf16> to vector<8x512xf32>
    %3 = vector.broadcast %1 : vector<1x512xf32> to vector<8x512xf32>
    %4 = arith.mulf %2, %3 : vector<8x512xf32>
    %c0_3 = arith.constant 0 : index
    %c0_4 = arith.constant 0 : index
    %5 = vector.load %arg4[%c0_3, %c0_4] : memref<1x512xf32, #tpu.memory_space<vmem>>, vector<1x512xf32>
    %6 = vector.broadcast %5 : vector<1x512xf32> to vector<8x512xf32>
    %7 = arith.addf %4, %6 : vector<8x512xf32>
    %c0_5 = arith.constant 0 : index
    %c0_6 = arith.constant 0 : index
    %8 = vector.load %arg2[%c0_5, %c0_6] : memref<8x512xbf16, #tpu.memory_space<vmem>>, vector<8x512xbf16>
    %c0_7 = arith.constant 0 : index
    %c0_8 = arith.constant 0 : index
    %9 = vector.load %arg5[%c0_7, %c0_8] : memref<1x512xf32, #tpu.memory_space<vmem>>, vector<1x512xf32>
    %10 = arith.extf %8 : vector<8x512xbf16> to vector<8x512xf32>
    %11 = vector.broadcast %9 : vector<1x512xf32> to vector<8x512xf32>
    %12 = arith.mulf %10, %11 : vector<8x512xf32>
    %c0_9 = arith.constant 0 : index
    %c0_10 = arith.constant 0 : index
    %13 = vector.load %arg6[%c0_9, %c0_10] : memref<1x512xf32, #tpu.memory_space<vmem>>, vector<1x512xf32>
    %14 = vector.broadcast %13 : vector<1x512xf32> to vector<8x512xf32>
    %15 = arith.addf %12, %14 : vector<8x512xf32>
    %cst = arith.constant 0.000000e+00 : f32
    %16 = vector.broadcast %cst : f32 to vector<8x512xf32>
    %17 = arith.cmpf oge, %7, %16 : vector<8x512xf32>
    %cst_11 = arith.constant 2.000000e-01 : f32
    %18 = vector.broadcast %cst_11 : f32 to vector<8x512xf32>
    %19 = arith.mulf %18, %7 : vector<8x512xf32>
    %20 = arith.select %17, %7, %19 : vector<8x512xi1>, vector<8x512xf32>
    %cst_12 = arith.constant 0.000000e+00 : f32
    %21 = vector.broadcast %cst_12 : f32 to vector<8x512xf32>
    %22 = arith.cmpf oge, %15, %21 : vector<8x512xf32>
    %cst_13 = arith.constant 2.000000e-01 : f32
    %23 = vector.broadcast %cst_13 : f32 to vector<8x512xf32>
    %24 = arith.mulf %23, %15 : vector<8x512xf32>
    %25 = arith.select %22, %15, %24 : vector<8x512xi1>, vector<8x512xf32>
    %26 = arith.addf %20, %25 : vector<8x512xf32>
    %c0_14 = arith.constant 0 : index
    %c0_15 = arith.constant 0 : index
    %27 = vector.load %arg7[%c0_14, %c0_15] : memref<8x512xf32, #tpu.memory_space<vmem>>, vector<8x512xf32>
    tpu.vector_store %arg7[%c0_14, %c0_15], %26 {strides = array<i32>} : memref<8x512xf32, #tpu.memory_space<vmem>>, vector<8x512xf32>,
    return
  }
  func.func @transform_0(%arg0: i32) -> (i32, i32) {
    %c0_i32 = arith.constant 0 : i32
    %c0_i32_0 = arith.constant 0 : i32
    return %arg0, %c0_i32 : i32, i32
  }
  func.func @transform_1(%arg0: i32) -> (i32, i32) {
    %c0_i32 = arith.constant 0 : i32
    %c0_i32_0 = arith.constant 0 : i32
    return %arg0, %c0_i32 : i32, i32
  }
  func.func @transform_2(%arg0: i32) -> (i32, i32) {
    %c0_i32 = arith.constant 0 : i32
    %c0_i32_0 = arith.constant 0 : i32
    %c0_i32_1 = arith.constant 0 : i32
    return %c0_i32, %c0_i32_0 : i32, i32
  }
  func.func @transform_3(%arg0: i32) -> (i32, i32) {
    %c0_i32 = arith.constant 0 : i32
    %c0_i32_0 = arith.constant 0 : i32
    %c0_i32_1 = arith.constant 0 : i32
    return %c0_i32, %c0_i32_0 : i32, i32
  }
  func.func @transform_4(%arg0: i32) -> (i32, i32) {
    %c0_i32 = arith.constant 0 : i32
    %c0_i32_0 = arith.constant 0 : i32
    %c0_i32_1 = arith.constant 0 : i32
    return %c0_i32, %c0_i32_0 : i32, i32
  }
  func.func @transform_5(%arg0: i32) -> (i32, i32) {
    %c0_i32 = arith.constant 0 : i32
    %c0_i32_0 = arith.constant 0 : i32
    %c0_i32_1 = arith.constant 0 : i32
    return %c0_i32, %c0_i32_0 : i32, i32
  }
  func.func @transform_6(%arg0: i32) -> (i32, i32) {
    %c0_i32 = arith.constant 0 : i32
    %c0_i32_0 = arith.constant 0 : i32
    return %arg0, %c0_i32 : i32, i32
  }
}

</mosaic_0001>

<llo_original>
// kernel: squeeze.12
$region0: #{squeeze.12}
  %s0 = inlined_call_operand.vmem [shape: bf16[1,3,3,4,12], index: 0, kind: input, shape index: {}]
  %s1 = inlined_call_operand.hbm [shape: bf16[36,12], index: 1, kind: output, shape index: {}]
  $region1: #{squeeze.12} parent=0
    #allocation0 [shape = 'u8[10240]{0}', space=vmem, size = 0x2800, scoped, tag = 'operand span for operand 1']
    #allocation1 [shape = 's32[1]{0}', space=sflag, size = 0x4, scoped, tag = 'scoped memory for squeeze.12']
    #allocation2 [shape = 'u8[20480]{0}', space=vmem, size = 0x5000, scoped, tag = 'scoped mem for output reshape']
    #allocation3 [shape = 'u8[36864]{0}', space=vmem, size = 0x9000, scoped, tag = 'scoped mem for input reshape']
    %2 = vsyncpa [#allocation1], 0
    %s4 = smul.u32 2, 2
    %s5 = sshllo.u32 0, %s4
    %s6 = smul.addr 2, 8
    %s7 = scalar_lea.vmem %s0, %s6
    %s8 = sshrl.u32 %s5, 1
    %s9 = sor.u32 %s5, %s8
    %s10 = sand.u32 %s9, 85
    %s11 = sshrl.u32 %s10, 1
    %s12 = sor.u32 %s10, %s11
    %s13 = sand.u32 51, %s12
    %s14 = sshrl.u32 %s13, 2
    %s15 = sor.u32 %s13, %s14
    %s16 = sand.u32 15, %s15
    %v17 = vld [vmem:[%s7] sm:%s16]
    %v18 = vunpack.c.l.bf16 %v17
    %v19 = vunpack.c.h.bf16 %v17
    %s20 = scalar_lea.vmem [#allocation3], 64
    %21 = vst [vmem:[%s20] sm:%s5] %v18
    %s22 = smul.addr 2, 7
    %s23 = scalar_lea.vmem %s0, %s22
    %s24 = sshrl.u32 %s5, 1
    %s25 = sor.u32 %s5, %s24
    %s26 = sand.u32 %s25, 85
    %s27 = sshrl.u32 %s26, 1
    %s28 = sor.u32 %s26, %s27
    %s29 = sand.u32 51, %s28
    %s30 = sshrl.u32 %s29, 2
    %s31 = sor.u32 %s29, %s30
    %s32 = sand.u32 15, %s31
    %v33 = vld [vmem:[%s23] sm:%s32]
    %v34 = vunpack.c.l.bf16 %v33
    %v35 = vunpack.c.h.bf16 %v33
    %s36 = scalar_lea.vmem [#allocation3], 56
    %37 = vst [vmem:[%s36] sm:%s5] %v34
    %s38 = smul.addr 2, 6
    %s39 = scalar_lea.vmem %s0, %s38
    %s40 = sshrl.u32 %s5, 1
    %s41 = sor.u32 %s5, %s40
    %s42 = sand.u32 %s41, 85
    %s43 = sshrl.u32 %s42, 1
    %s44 = sor.u32 %s42, %s43
    %s45 = sand.u32 51, %s44
    %s46 = sshrl.u32 %s45, 2
    %s47 = sor.u32 %s45, %s46
    %s48 = sand.u32 15, %s47
    %v49 = vld [vmem:[%s39] sm:%s48]
    %v50 = vunpack.c.l.bf16 %v49
    %v51 = vunpack.c.h.bf16 %v49
    %s52 = scalar_lea.vmem [#allocation3], 48
    %53 = vst [vmem:[%s52] sm:%s5] %v50
    %s54 = smul.addr 2, 5
    %s55 = scalar_lea.vmem %s0, %s54
    %s56 = sshrl.u32 %s5, 1
    %s57 = sor.u32 %s5, %s56
    %s58 = sand.u32 %s57, 85
    %s59 = sshrl.u32 %s58, 1
    %s60 = sor.u32 %s58, %s59
    %s61 = sand.u32 51, %s60
    %s62 = sshrl.u32 %s61, 2
    %s63 = sor.u32 %s61, %s62
    %s64 = sand.u32 15, %s63
    %v65 = vld [vmem:[%s55] sm:%s64]
    %v66 = vunpack.c.l.bf16 %v65
    %v67 = vunpack.c.h.bf16 %v65
    %s68 = scalar_lea.vmem [#allocation3], 40
    %69 = vst [vmem:[%s68] sm:%s5] %v66
    %s70 = smul.addr 2, 4
    %s71 = scalar_lea.vmem %s0, %s70
    %s72 = sshrl.u32 %s5, 1
    %s73 = sor.u32 %s5, %s72
    %s74 = sand.u32 %s73, 85
    %s75 = sshrl.u32 %s74, 1
    %s76 = sor.u32 %s74, %s75
    %s77 = sand.u32 51, %s76
    %s78 = sshrl.u32 %s77, 2
    %s79 = sor.u32 %s77, %s78
    %s80 = sand.u32 15, %s79
    %v81 = vld [vmem:[%s71] sm:%s80]
    %v82 = vunpack.c.l.bf16 %v81
    %v83 = vunpack.c.h.bf16 %v81
    %s84 = scalar_lea.vmem [#allocation3], 32
    %85 = vst [vmem:[%s84] sm:%s5] %v82
    %s86 = smul.addr 2, 3
    %s87 = scalar_lea.vmem %s0, %s86
    %s88 = sshrl.u32 %s5, 1
    %s89 = sor.u32 %s5, %s88
    %s90 = sand.u32 %s89, 85
    %s91 = sshrl.u32 %s90, 1
    %s92 = sor.u32 %s90, %s91
    %s93 = sand.u32 51, %s92
    %s94 = sshrl.u32 %s93, 2
    %s95 = sor.u32 %s93, %s94
    %s96 = sand.u32 15, %s95
    %v97 = vld [vmem:[%s87] sm:%s96]
    %v98 = vunpack.c.l.bf16 %v97
    %v99 = vunpack.c.h.bf16 %v97
    %s100 = scalar_lea.vmem [#allocation3], 24
    %101 = vst [vmem:[%s100] sm:%s5] %v98
    %s102 = smul.addr 2, 2
    %s103 = scalar_lea.vmem %s0, %s102
    %s104 = sshrl.u32 %s5, 1
    %s105 = sor.u32 %s5, %s104
    %s106 = sand.u32 %s105, 85
    %s107 = sshrl.u32 %s106, 1
    %s108 = sor.u32 %s106, %s107
    %s109 = sand.u32 51, %s108
    %s110 = sshrl.u32 %s109, 2
    %s111 = sor.u32 %s109, %s110
    %s112 = sand.u32 15, %s111
    %v113 = vld [vmem:[%s103] sm:%s112]
    %v114 = vunpack.c.l.bf16 %v113
    %v115 = vunpack.c.h.bf16 %v113
    %s116 = scalar_lea.vmem [#allocation3], 16
    %117 = vst [vmem:[%s116] sm:%s5] %v114
    %s118 = scalar_lea.vmem %s0, 2
    %s119 = sshrl.u32 %s5, 1
    %s120 = sor.u32 %s5, %s119
    %s121 = sand.u32 %s120, 85
    %s122 = sshrl.u32 %s121, 1
    %s123 = sor.u32 %s121, %s122
    %s124 = sand.u32 51, %s123
    %s125 = sshrl.u32 %s124, 2
    %s126 = sor.u32 %s124, %s125
    %s127 = sand.u32 15, %s126
    %v128 = vld [vmem:[%s118] sm:%s127]
    %v129 = vunpack.c.l.bf16 %v128
    %v130 = vunpack.c.h.bf16 %v128
    %s131 = scalar_lea.vmem [#allocation3], 8
    %132 = vst [vmem:[%s131] sm:%s5] %v129
    %s133 = sshrl.u32 %s5, 1
    %s134 = sor.u32 %s5, %s133
    %s135 = sand.u32 %s134, 85
    %s136 = sshrl.u32 %s135, 1
    %s137 = sor.u32 %s135, %s136
    %s138 = sand.u32 51, %s137
    %s139 = sshrl.u32 %s138, 2
    %s140 = sor.u32 %s138, %s139
    %s141 = sand.u32 15, %s140
    %v142 = vld [vmem:[%s0] sm:%s141]
    %v143 = vunpack.c.l.bf16 %v142
    %v144 = vunpack.c.h.bf16 %v142
    %145 = vst [vmem:[#allocation3] sm:%s5] %v143
    %v146 = vld [vmem:[#allocation3] sm:$0xf]
    %vm147 = vcmask 97280
    %148 = vst.msk [vmem:[#allocation2] sm:$0xf] %vm147, %v146
    %s149 = scalar_lea.vmem [#allocation3], 8
    %v150 = vld [vmem:[%s149] sm:$0xf]
    %vm151 = vcmask 97280
    %s152 = scalar_lea.vmem [#allocation2], 4
    %153 = vst.msk [vmem:[%s152] sm:$0xf] %vm151, %v150
    %s154 = scalar_lea.vmem [#allocation3], 16
    %v155 = vld [vmem:[%s154] sm:$0xf]
    %vm156 = vcmask 97280
    %s157 = scalar_lea.vmem [#allocation2], 8
    %158 = vst.msk [vmem:[%s157] sm:$0xf] %vm156, %v155
    %s159 = scalar_lea.vmem [#allocation3], 24
    %v160 = vld [vmem:[%s159] sm:$0xf]
    %vm161 = vcmask 97280
    %s162 = scalar_lea.vmem [#allocation2], 12
    %163 = vst.msk [vmem:[%s162] sm:$0xf] %vm161, %v160
    %s164 = scalar_lea.vmem [#allocation3], 32
    %v165 = vld [vmem:[%s164] sm:$0xf]
    %vm166 = vcmask 97280
    %s167 = scalar_lea.vmem [#allocation2], 16
    %168 = vst.msk [vmem:[%s167] sm:$0xf] %vm166, %v165
    %s169 = scalar_lea.vmem [#allocation3], 40
    %v170 = vld [vmem:[%s169] sm:$0xf]
    %vm171 = vcmask 97280
    %s172 = scalar_lea.vmem [#allocation2], 20
    %173 = vst.msk [vmem:[%s172] sm:$0xf] %vm171, %v170
    %s174 = scalar_lea.vmem [#allocation3], 48
    %v175 = vld [vmem:[%s174] sm:$0xf]
    %vm176 = vcmask 97280
    %s177 = scalar_lea.vmem [#allocation2], 24
    %178 = vst.msk [vmem:[%s177] sm:$0xf] %vm176, %v175
    %s179 = scalar_lea.vmem [#allocation3], 56
    %v180 = vld [vmem:[%s179] sm:$0xf]
    %vm181 = vcmask 97280
    %s182 = scalar_lea.vmem [#allocation2], 28
    %183 = vst.msk [vmem:[%s182] sm:$0xf] %vm181, %v180
    %s184 = scalar_lea.vmem [#allocation3], 64
    %v185 = vld [vmem:[%s184] sm:$0xf]
    %vm186 = vcmask 97280
    %s187 = scalar_lea.vmem [#allocation2], 32
    %188 = vst.msk [vmem:[%s187] sm:$0xf] %vm186, %v185
    %s190 = smul.u32 4, 2
    %s191 = sshllo.u32 0, %s190
    %s192 = sshrl.u32 %s190, 1
    %v193 = vld [vmem:[#allocation2] sm:%s191]
    %v194 = vpack.c.bf16 0.0, %v193
    %s195 = sshllo.u32 0, %s192
    %196 = vst [vmem:[#allocation0] sm:%s195] %v194
    %s197 = scalar_lea.vmem [#allocation2], 8
    %v198 = vld [vmem:[%s197] sm:%s191]
    %v199 = vpack.c.bf16 0.0, %v198
    %s200 = sshllo.u32 0, %s192
    %s201 = scalar_lea.vmem [#allocation0], 4
    %202 = vst [vmem:[%s201] sm:%s200] %v199
    %s203 = scalar_lea.vmem [#allocation2], 16
    %v204 = vld [vmem:[%s203] sm:%s191]
    %v205 = vpack.c.bf16 0.0, %v204
    %s206 = sshllo.u32 0, %s192
    %s207 = smul.addr 4, 2
    %s208 = scalar_lea.vmem [#allocation0], %s207
    %209 = vst [vmem:[%s208] sm:%s206] %v205
    %s210 = scalar_lea.vmem [#allocation2], 24
    %v211 = vld [vmem:[%s210] sm:%s191]
    %v212 = vpack.c.bf16 0.0, %v211
    %s213 = sshllo.u32 0, %s192
    %s214 = smul.addr 4, 3
    %s215 = scalar_lea.vmem [#allocation0], %s214
    %216 = vst [vmem:[%s215] sm:%s213] %v212
    %s217 = scalar_lea.vmem [#allocation2], 32
    %v218 = vld [vmem:[%s217] sm:%s191]
    %v219 = vpack.c.bf16 0.0, %v218
    %s220 = sshllo.u32 0, %s192
    %s221 = smul.addr 4, 4
    %s222 = scalar_lea.vmem [#allocation0], %s221
    %223 = vst [vmem:[%s222] sm:%s220] %v219
    %s225 = ssub.s32 320, 320
    %226 = vsyncadd [#allocation1], %s225
    %s228 = sshll.u32 [#allocation0], 4
    %s229 = int_to_ptr.vmem [resolvable:$true] %s228
    %231 = dma.vmem_to_hbm [thread:$0]  %s229, 320, %s1, [#allocation1]
    %232 = dma.done [#allocation1], 320
    %233 = vsyncpa [#allocation1], 1

// kernel: res_block_down.3
$region0: #{res_block_down.3}
  #allocation0 [shape = 'u32[]', space=smem, size = 0x4, offset = 0x4, fixed_abs, tag = 'smem constant byte address 0x4 - core index']
  #allocation1 [shape = 'u32[144,128]{1,0:T(1,128)}', space=vmem, size = 0x12000, scoped, tag = 'internal scratch']
  %s0 = inlined_call_operand.hbm [shape: bf16[2,6,4,9,9,4], index: 0, kind: input, shape index: {}, may-alias: {0,1,2}]
  %s1 = inlined_call_operand.hbm [shape: bf16[2,6,4,9,9,4], index: 1, kind: input, shape index: {}, may-alias: {0,1,2}]
  %s2 = inlined_call_operand.hbm [shape: bf16[2,6,4,9,9,4], index: 2, kind: input, shape index: {}, may-alias: {0,1,2}]
  %s3 = inlined_call_operand.hbm [shape: bf16[36,12], index: 3, kind: input, shape index: {}]
  %s4 = inlined_call_operand.hbm [shape: bf16[36,12], index: 4, kind: input, shape index: {}]
  %s5 = inlined_call_operand.hbm [shape: bf16[36,12], index: 5, kind: input, shape index: {}]
  %s6 = inlined_call_operand.hbm [shape: bf16[2,4,64,4], index: 6, kind: output, shape index: {0}]
  %s7 = inlined_call_operand.hbm [shape: bf16[2,4,64,8], index: 7, kind: output, shape index: {1}]
  %s8 = inlined_call_operand.hbm [shape: f32[2,4,2,12], index: 8, kind: output, shape index: {2}]
  %9 = xla_tuple %s6, %s7, %s8
  %s10 = sld [smem:[#allocation0]]
  $region97: #{res_block_down.3} parent=0
    _
  %s12 = ssub.s32 1, %s10
  %s13 = scalar_select 0, %s12, %s10
  $region1: #{res_block_down.3} parent=0
    #allocation2 [shape = 'u8[294912]{0}', space=vmem, size = 0x48000, scoped, tag = 'input window, operand 0']
    #allocation3 [shape = 's32[2]{0}', space=sflag, size = 0x8, scoped, tag = 'scoped memory for res_block_down.3']
    #allocation4 [shape = 's32[2]{0}', space=sflag, size = 0x8, scoped, tag = 'scoped memory for res_block_down.3']
    #allocation5 [shape = 'u8[294912]{0}', space=vmem, size = 0x48000, scoped, tag = 'input window, operand 1']
    #allocation6 [shape = 's32[2]{0}', space=sflag, size = 0x8, scoped, tag = 'scoped memory for res_block_down.3']
    #allocation7 [shape = 'u8[294912]{0}', space=vmem, size = 0x48000, scoped, tag = 'input window, operand 2']
    #allocation8 [shape = 'u8[10240]{0}', space=vmem, size = 0x2800, scoped, tag = 'input window, operand 3, single buffered']
    #allocation9 [shape = 's32[1]{0}', space=sflag, size = 0x4, scoped, tag = 'scoped memory for res_block_down.3']
    #allocation10 [shape = 'u8[10240]{0}', space=vmem, size = 0x2800, scoped, tag = 'input window, operand 4, single buffered']
    #allocation11 [shape = 'u8[10240]{0}', space=vmem, size = 0x2800, scoped, tag = 'input window, operand 5, single buffered']
    #allocation12 [shape = 's32[1]{0}', space=sflag, size = 0x4, scoped, tag = 'scoped memory for res_block_down.3']
    #allocation13 [shape = 'u8[32768]{0}', space=vmem, size = 0x8000, scoped, tag = 'output window, operand 0']
    #allocation14 [shape = 'u8[32768]{0}', space=vmem, size = 0x8000, scoped, tag = 'output window, operand 1']
    #allocation15 [shape = 's32[2]{0}', space=sflag, size = 0x8, scoped, tag = 'scoped memory for res_block_down.3']
    #allocation16 [shape = 'u8[2048]{0}', space=vmem, size = 0x800, scoped, tag = 'output window, operand 2']
    %14 = vsyncpa [#allocation3], 0
    %s15 = scalar_lea.sflag [#allocation3], 1
    %16 = vsyncpa %s15, 0
    %17 = vsyncpa [#allocation6], 0
    %s18 = scalar_lea.sflag [#allocation6], 1
    %19 = vsyncpa %s18, 0
    %20 = vsyncpa [#allocation9], 0
    %21 = vsyncpa [#allocation12], 0
    %22 = vsyncpa [#allocation4], 0
    %s23 = scalar_lea.sflag [#allocation4], 1
    %24 = vsyncpa %s23, 0
    %25 = vsyncpa [#allocation15], 0
    %s26 = scalar_lea.sflag [#allocation15], 1
    %27 = vsyncpa %s26, 0
    loop: start=0, step=1, limit=10
    $region2: #{res_block_down.3} parent=1 // loop_pre_header
      _
    $region3: #{res_block_down.3} parent=1 // loop_header
      %s29 = sphi 0, %s33
      %p30 = scmp.ge.s32.totalorder %s29, 10
      %s36 = sphi 0, %s48
      %s37 = sphi 0, %s44
      %s38 = sphi 0, %s36
      %s39 = sphi 0, %s37
      %s40 = sphi 0, %s38
      %s41 = sphi 0, %s39
      %s53 = sphi 0, %s55
      %s56 = sphi 0, %s53
      %s57 = sphi 0, %s56
      %s73 = sphi 0, %s57
      %s83 = sphi 0, %s85
      %s86 = sphi 0, %s83
      %s87 = sphi 0, %s86
      %s103 = sphi 0, %s87
      %s113 = sphi 0, %s115
      %s116 = sphi 0, %s113
      %s117 = sphi 0, %s116
      %s133 = sphi 0, %s117
      %s137 = sphi 0, %s137
      %s139 = sphi 0, %s137
      %s140 = sphi 0, %s139
      %s154 = sphi 0, %s140
      %s158 = sphi 0, %s158
      %s160 = sphi 0, %s158
      %s161 = sphi 0, %s160
      %s175 = sphi 0, %s161
      %s179 = sphi 0, %s179
      %s181 = sphi 0, %s179
      %s182 = sphi 0, %s181
      %s196 = sphi 0, %s182
      %s204 = sphi 0, %s206
      %s207 = sphi 0, %s204
      %s208 = sphi 0, %s207
      %s224 = sphi 0, %s208
      %s232 = sphi 0, %s234
      %s235 = sphi 0, %s232
      %s236 = sphi 0, %s235
      %s252 = sphi 0, %s236
      %s260 = sphi 0, %s262
      %s263 = sphi 0, %s260
      %s264 = sphi 0, %s263
      %s280 = sphi 0, %s264
    $region4: #{res_block_down.3} parent=1 // loop_header_branch
      %32 = sbr.rel (%p30) target = $region8
    $region5: #{res_block_down.3} parent=1 // loop_body
      %s34 = ssub.s32 %s29, 1
      %s35 = ssub.s32 %s29, 2
      %s42 = sadd.s32 1, %s37
      %p43 = scmp.ge.s32.totalorder %s42, 4
      %s44 = scalar_select %p43, 0, %s42
      %s45 = sadd.s32 1, %s36
      %s46 = scalar_select %p43, %s45, %s36
      %p47 = scmp.ge.s32.totalorder %s46, 2
      %s48 = scalar_select %p47, 0, %s46
      %s49 = ssub.s32 %s36, %s48
      %s50 = ssub.s32 %s37, %s44
      %s51 = sor.u32 %s49, %s50
      %p52 = scmp.eq.s32.totalorder %s51, 0
      %s54 = sadd.s32 %s53, 1
      %s55 = scalar_select %p52, %s53, %s54
      %p58 = pneg %p52
      %p59 = scmp.eq.s32.totalorder %s29, 7
      %p60 = por %p58, %p59
      %p61 = scmp.ne.s32.totalorder %s53, %s56
      %p62 = scmp.eq.s32.totalorder %s29, 0
      %p63 = por %p61, %p62
      %p64 = scmp.ne.s32.totalorder %s53, %s56
      %p65 = scmp.eq.s32.totalorder %s34, 7
      %p66 = por %p64, %p65
      %p67 = scmp.ne.s32.totalorder %s56, %s57
      %p68 = scmp.eq.s32.totalorder %s34, 0
      %p69 = por %p67, %p68
      %p70 = scmp.ne.s32.totalorder %s56, %s57
      %p71 = scmp.eq.s32.totalorder %s35, 7
      %p72 = por %p70, %p71
      %p74 = scmp.ne.s32.totalorder %s57, %s73
      %p75 = scmp.eq.s32.totalorder %s35, 0
      %p76 = por %p74, %p75
      %s77 = sadd.s32 %s37, 1
      %s78 = sadd.s32 %s44, 1
      %s79 = ssub.s32 %s36, %s48
      %s80 = ssub.s32 %s77, %s78
      %s81 = sor.u32 %s79, %s80
      %p82 = scmp.eq.s32.totalorder %s81, 0
      %s84 = sadd.s32 %s83, 1
      %s85 = scalar_select %p82, %s83, %s84
      %p88 = pneg %p82
      %p89 = scmp.eq.s32.totalorder %s29, 7
      %p90 = por %p88, %p89
      %p91 = scmp.ne.s32.totalorder %s83, %s86
      %p92 = scmp.eq.s32.totalorder %s29, 0
      %p93 = por %p91, %p92
      %p94 = scmp.ne.s32.totalorder %s83, %s86
      %p95 = scmp.eq.s32.totalorder %s34, 7
      %p96 = por %p94, %p95
      %p97 = scmp.ne.s32.totalorder %s86, %s87
      %p98 = scmp.eq.s32.totalorder %s34, 0
      %p99 = por %p97, %p98
      %p100 = scmp.ne.s32.totalorder %s86, %s87
      %p101 = scmp.eq.s32.totalorder %s35, 7
      %p102 = por %p100, %p101
      %p104 = scmp.ne.s32.totalorder %s87, %s103
      %p105 = scmp.eq.s32.totalorder %s35, 0
      %p106 = por %p104, %p105
      %s107 = sadd.s32 %s37, 2
      %s108 = sadd.s32 %s44, 2
      %s109 = ssub.s32 %s36, %s48
      %s110 = ssub.s32 %s107, %s108
      %s111 = sor.u32 %s109, %s110
      %p112 = scmp.eq.s32.totalorder %s111, 0
      %s114 = sadd.s32 %s113, 1
      %s115 = scalar_select %p112, %s113, %s114
      %p118 = pneg %p112
      %p119 = scmp.eq.s32.totalorder %s29, 7
      %p120 = por %p118, %p119
      %p121 = scmp.ne.s32.totalorder %s113, %s116
      %p122 = scmp.eq.s32.totalorder %s29, 0
      %p123 = por %p121, %p122
      %p124 = scmp.ne.s32.totalorder %s113, %s116
      %p125 = scmp.eq.s32.totalorder %s34, 7
      %p126 = por %p124, %p125
      %p127 = scmp.ne.s32.totalorder %s116, %s117
      %p128 = scmp.eq.s32.totalorder %s34, 0
      %p129 = por %p127, %p128
      %p130 = scmp.ne.s32.totalorder %s116, %s117
      %p131 = scmp.eq.s32.totalorder %s35, 7
      %p132 = por %p130, %p131
      %p134 = scmp.ne.s32.totalorder %s117, %s133
      %p135 = scmp.eq.s32.totalorder %s35, 0
      %p136 = por %p134, %p135
      %s138 = sadd.s32 %s137, 1
      %p141 = scmp.eq.s32.totalorder %s29, 7
      %p142 = scmp.ne.s32.totalorder %s137, %s139
      %p143 = scmp.eq.s32.totalorder %s29, 0
      %p144 = por %p142, %p143
      %p145 = scmp.ne.s32.totalorder %s137, %s139
      %p146 = scmp.eq.s32.totalorder %s34, 7
      %p147 = por %p145, %p146
      %p148 = scmp.ne.s32.totalorder %s139, %s140
      %p149 = scmp.eq.s32.totalorder %s34, 0
      %p150 = por %p148, %p149
      %p151 = scmp.ne.s32.totalorder %s139, %s140
      %p152 = scmp.eq.s32.totalorder %s35, 7
      %p153 = por %p151, %p152
      %p155 = scmp.ne.s32.totalorder %s140, %s154
      %p156 = scmp.eq.s32.totalorder %s35, 0
      %p157 = por %p155, %p156
      %s159 = sadd.s32 %s158, 1
      %p162 = scmp.eq.s32.totalorder %s29, 7
      %p163 = scmp.ne.s32.totalorder %s158, %s160
      %p164 = scmp.eq.s32.totalorder %s29, 0
      %p165 = por %p163, %p164
      %p166 = scmp.ne.s32.totalorder %s158, %s160
      %p167 = scmp.eq.s32.totalorder %s34, 7
      %p168 = por %p166, %p167
      %p169 = scmp.ne.s32.totalorder %s160, %s161
      %p170 = scmp.eq.s32.totalorder %s34, 0
      %p171 = por %p169, %p170
      %p172 = scmp.ne.s32.totalorder %s160, %s161
      %p173 = scmp.eq.s32.totalorder %s35, 7
      %p174 = por %p172, %p173
      %p176 = scmp.ne.s32.totalorder %s161, %s175
      %p177 = scmp.eq.s32.totalorder %s35, 0
      %p178 = por %p176, %p177
      %s180 = sadd.s32 %s179, 1
      %p183 = scmp.eq.s32.totalorder %s29, 7
      %p184 = scmp.ne.s32.totalorder %s179, %s181
      %p185 = scmp.eq.s32.totalorder %s29, 0
      %p186 = por %p184, %p185
      %p187 = scmp.ne.s32.totalorder %s179, %s181
      %p188 = scmp.eq.s32.totalorder %s34, 7
      %p189 = por %p187, %p188
      %p190 = scmp.ne.s32.totalorder %s181, %s182
      %p191 = scmp.eq.s32.totalorder %s34, 0
      %p192 = por %p190, %p191
      %p193 = scmp.ne.s32.totalorder %s181, %s182
      %p194 = scmp.eq.s32.totalorder %s35, 7
      %p195 = por %p193, %p194
      %p197 = scmp.ne.s32.totalorder %s182, %s196
      %p198 = scmp.eq.s32.totalorder %s35, 0
      %p199 = por %p197, %p198
      %s200 = ssub.s32 %s36, %s48
      %s201 = ssub.s32 %s37, %s44
      %s202 = sor.u32 %s200, %s201
      %p203 = scmp.eq.s32.totalorder %s202, 0
      %s205 = sadd.s32 %s204, 1
      %s206 = scalar_select %p203, %s204, %s205
      %p209 = pneg %p203
      %p210 = scmp.eq.s32.totalorder %s29, 7
      %p211 = por %p209, %p210
      %p212 = scmp.ne.s32.totalorder %s204, %s207
      %p213 = scmp.eq.s32.totalorder %s29, 0
      %p214 = por %p212, %p213
      %p215 = scmp.ne.s32.totalorder %s204, %s207
      %p216 = scmp.eq.s32.totalorder %s34, 7
      %p217 = por %p215, %p216
      %p218 = scmp.ne.s32.totalorder %s207, %s208
      %p219 = scmp.eq.s32.totalorder %s34, 0
      %p220 = por %p218, %p219
      %p221 = scmp.ne.s32.totalorder %s207, %s208
      %p222 = scmp.eq.s32.totalorder %s35, 7
      %p223 = por %p221, %p222
      %p225 = scmp.ne.s32.totalorder %s208, %s224
      %p226 = scmp.eq.s32.totalorder %s35, 0
      %p227 = por %p225, %p226
      %s228 = ssub.s32 %s36, %s48
      %s229 = ssub.s32 %s37, %s44
      %s230 = sor.u32 %s228, %s229
      %p231 = scmp.eq.s32.totalorder %s230, 0
      %s233 = sadd.s32 %s232, 1
      %s234 = scalar_select %p231, %s232, %s233
      %p237 = pneg %p231
      %p238 = scmp.eq.s32.totalorder %s29, 7
      %p239 = por %p237, %p238
      %p240 = scmp.ne.s32.totalorder %s232, %s235
      %p241 = scmp.eq.s32.totalorder %s29, 0
      %p242 = por %p240, %p241
      %p243 = scmp.ne.s32.totalorder %s232, %s235
      %p244 = scmp.eq.s32.totalorder %s34, 7
      %p245 = por %p243, %p244
      %p246 = scmp.ne.s32.totalorder %s235, %s236
      %p247 = scmp.eq.s32.totalorder %s34, 0
      %p248 = por %p246, %p247
      %p249 = scmp.ne.s32.totalorder %s235, %s236
      %p250 = scmp.eq.s32.totalorder %s35, 7
      %p251 = por %p249, %p250
      %p253 = scmp.ne.s32.totalorder %s236, %s252
      %p254 = scmp.eq.s32.totalorder %s35, 0
      %p255 = por %p253, %p254
      %s256 = ssub.s32 %s36, %s48
      %s257 = ssub.s32 %s37, %s44
      %s258 = sor.u32 %s256, %s257
      %p259 = scmp.eq.s32.totalorder %s258, 0
      %s261 = sadd.s32 %s260, 1
      %s262 = scalar_select %p259, %s260, %s261
      %p265 = pneg %p259
      %p266 = scmp.eq.s32.totalorder %s29, 7
      %p267 = por %p265, %p266
      %p268 = scmp.ne.s32.totalorder %s260, %s263
      %p269 = scmp.eq.s32.totalorder %s29, 0
      %p270 = por %p268, %p269
      %p271 = scmp.ne.s32.totalorder %s260, %s263
      %p272 = scmp.eq.s32.totalorder %s34, 7
      %p273 = por %p271, %p272
      %p274 = scmp.ne.s32.totalorder %s263, %s264
      %p275 = scmp.eq.s32.totalorder %s34, 0
      %p276 = por %p274, %p275
      %p277 = scmp.ne.s32.totalorder %s263, %s264
      %p278 = scmp.eq.s32.totalorder %s35, 7
      %p279 = por %p277, %p278
      %p281 = scmp.ne.s32.totalorder %s264, %s280
      %p282 = scmp.eq.s32.totalorder %s35, 0
      %p283 = por %p281, %p282
      %p284 = scmp.le.s32.totalorder 1, %s29
      %p285 = scmp.lt.s32.totalorder %s29, 9
      %p286 = pnand %p284, %p285
      %p287 = pneg %p286
      // Predicated region
      $region9: #{res_block_down.3} parent=5 // pred_check
        _
      $region10: #{res_block_down.3} parent=5 // pred_check_branch
        %289 = sbr.rel (%p286) target = $region12
      $region11: #{res_block_down.3} parent=5 // pred_region
        %s290 = ssub.s32 %s29, 1
        // Predicated region
        $region13: #{res_block_down.3} parent=11 // pred_check
          %p291 = pneg %p150
        $region14: #{res_block_down.3} parent=11 // pred_check_branch
          %293 = sbr.rel (%p291) target = $region16
        $region15: #{res_block_down.3} parent=11 // pred_region
          %s295 = ssub.s32 320, 320
          %296 = vsyncadd [#allocation9], %s295
          %s297 = sshll.u32 [#allocation8], 4
          %s298 = int_to_ptr.vmem [resolvable:$true] %s297
          %303 = dma.hbm_to_vmem [thread:$0]  %s3, 320, %s298, [#allocation9], 64, 64, 4
        $region16: #{res_block_down.3} parent=11 // pred_fallthru
          _
        // Predicated region
        $region17: #{res_block_down.3} parent=11 // pred_check
          %p304 = pneg %p171
        $region18: #{res_block_down.3} parent=11 // pred_check_branch
          %306 = sbr.rel (%p304) target = $region20
        $region19: #{res_block_down.3} parent=11 // pred_region
          %s308 = ssub.s32 320, 320
          %309 = vsyncadd [#allocation9], %s308
          %s310 = sshll.u32 [#allocation10], 4
          %s311 = int_to_ptr.vmem [resolvable:$true] %s310
          %316 = dma.hbm_to_vmem [thread:$0]  %s4, 320, %s311, [#allocation9], 64, 64, 4
        $region20: #{res_block_down.3} parent=11 // pred_fallthru
          _
        // Predicated region
        $region21: #{res_block_down.3} parent=11 // pred_check
          %p317 = pneg %p192
        $region22: #{res_block_down.3} parent=11 // pred_check_branch
          %319 = sbr.rel (%p317) target = $region24
        $region23: #{res_block_down.3} parent=11 // pred_region
          %s321 = ssub.s32 320, 320
          %322 = vsyncadd [#allocation12], %s321
          %s323 = sshll.u32 [#allocation11], 4
          %s324 = int_to_ptr.vmem [resolvable:$true] %s323
          %329 = dma.hbm_to_vmem [thread:$0]  %s5, 320, %s324, [#allocation12], 64, 64, 4
        $region24: #{res_block_down.3} parent=11 // pred_fallthru
          _
      $region12: #{res_block_down.3} parent=5 // pred_fallthru
        _
      %p330 = scmp.lt.s32.totalorder %s29, 8
      // Predicated region
      $region25: #{res_block_down.3} parent=5 // pred_check
        %p331 = pneg %p330
      $region26: #{res_block_down.3} parent=5 // pred_check_branch
        %333 = sbr.rel (%p331) target = $region28
      $region27: #{res_block_down.3} parent=5 // pred_region
        // Predicated region
        $region29: #{res_block_down.3} parent=27 // pred_check
          %p334 = pneg %p63
        $region30: #{res_block_down.3} parent=27 // pred_check_branch
          %336 = sbr.rel (%p334) target = $region32
        $region31: #{res_block_down.3} parent=27 // pred_region
          %s337 = sand.u32 %s53, 1
          %s338 = scalar_lea.sflag [#allocation3], %s337
          %s339 = sand.u32 %s53, 1
          %s340 = smul.addr %s339, 288
          %s341 = scalar_lea.vmem [#allocation2], %s340
          %s343 = ssub.s32 4608, 4608
          %344 = vsyncadd %s338, %s343
          %s345 = smul.addr %s37, 72
          %s346 = smul.addr %s36, 432
          %s347 = sadd.s32 %s345, %s346
          %s348 = smul.addr %s347, 64
          %s349 = scalar_lea.hbm %s0, %s348
          %s350 = sshll.u32 %s341, 4
          %s351 = int_to_ptr.vmem [resolvable:$true] %s350
          %356 = dma.hbm_to_vmem [thread:$0]  %s349, 4608, %s351, %s338, 64, 64, 4
        $region32: #{res_block_down.3} parent=27 // pred_fallthru
          _
        // Predicated region
        $region33: #{res_block_down.3} parent=27 // pred_check
          %p357 = pneg %p93
        $region34: #{res_block_down.3} parent=27 // pred_check_branch
          %359 = sbr.rel (%p357) target = $region36
        $region35: #{res_block_down.3} parent=27 // pred_region
          %s360 = sand.u32 %s29, 1
          %s361 = scalar_lea.sflag [#allocation6], %s360
          %s362 = sand.u32 %s83, 1
          %s363 = smul.addr %s362, 288
          %s364 = scalar_lea.vmem [#allocation5], %s363
          %s365 = sadd.s32 %s37, 1
          %s367 = ssub.s32 4608, 4608
          %368 = vsyncadd %s361, %s367
          %s369 = smul.addr %s365, 72
          %s370 = smul.addr %s36, 432
          %s371 = sadd.s32 %s369, %s370
          %s372 = smul.addr %s371, 64
          %s373 = scalar_lea.hbm %s1, %s372
          %s374 = sshll.u32 %s364, 4
          %s375 = int_to_ptr.vmem [resolvable:$true] %s374
          %380 = dma.hbm_to_vmem [thread:$0]  %s373, 4608, %s375, %s361, 64, 64, 4
        $region36: #{res_block_down.3} parent=27 // pred_fallthru
          _
        // Predicated region
        $region37: #{res_block_down.3} parent=27 // pred_check
          %p381 = pneg %p123
        $region38: #{res_block_down.3} parent=27 // pred_check_branch
          %383 = sbr.rel (%p381) target = $region40
        $region39: #{res_block_down.3} parent=27 // pred_region
          %s384 = sand.u32 %s29, 1
          %s385 = scalar_lea.sflag [#allocation6], %s384
          %s386 = sand.u32 %s113, 1
          %s387 = smul.addr %s386, 288
          %s388 = scalar_lea.vmem [#allocation7], %s387
          %s389 = sadd.s32 %s37, 2
          %s391 = ssub.s32 4608, 4608
          %392 = vsyncadd %s385, %s391
          %s393 = smul.addr %s389, 72
          %s394 = smul.addr %s36, 432
          %s395 = sadd.s32 %s393, %s394
          %s396 = smul.addr %s395, 64
          %s397 = scalar_lea.hbm %s2, %s396
          %s398 = sshll.u32 %s388, 4
          %s399 = int_to_ptr.vmem [resolvable:$true] %s398
          %404 = dma.hbm_to_vmem [thread:$0]  %s397, 4608, %s399, %s385, 64, 64, 4
        $region40: #{res_block_down.3} parent=27 // pred_fallthru
          _
      $region28: #{res_block_down.3} parent=5 // pred_fallthru
        _
      %p405 = scmp.le.s32.totalorder 1, %s29
      %p406 = scmp.lt.s32.totalorder %s29, 9
      %p407 = pnand %p405, %p406
      %p408 = pneg %p407
      // Predicated region
      $region41: #{res_block_down.3} parent=5 // pred_check
        _
      $region42: #{res_block_down.3} parent=5 // pred_check_branch
        %410 = sbr.rel (%p407) target = $region44
      $region43: #{res_block_down.3} parent=5 // pred_region
        %s411 = ssub.s32 %s29, 1
        %s412 = sand.u32 %s56, 1
        %s413 = scalar_lea.sflag [#allocation3], %s412
        %s414 = sand.u32 %s56, 1
        %s415 = smul.addr %s414, 288
        %s416 = scalar_lea.vmem [#allocation2], %s415
        // Predicated region
        $region45: #{res_block_down.3} parent=43 // pred_check
          %p417 = pneg %p69
        $region46: #{res_block_down.3} parent=43 // pred_check_branch
          %419 = sbr.rel (%p417) target = $region48
        $region47: #{res_block_down.3} parent=43 // pred_region
          %420 = dma.done %s413, 4608
        $region48: #{res_block_down.3} parent=43 // pred_fallthru
          _
        %s421 = sand.u32 %s34, 1
        %s422 = scalar_lea.sflag [#allocation6], %s421
        %s423 = sand.u32 %s86, 1
        %s424 = smul.addr %s423, 288
        %s425 = scalar_lea.vmem [#allocation5], %s424
        // Predicated region
        $region49: #{res_block_down.3} parent=43 // pred_check
          %p426 = pneg %p99
        $region50: #{res_block_down.3} parent=43 // pred_check_branch
          %428 = sbr.rel (%p426) target = $region52
        $region51: #{res_block_down.3} parent=43 // pred_region
          %429 = dma.done %s422, 4608
        $region52: #{res_block_down.3} parent=43 // pred_fallthru
          _
        %s430 = sand.u32 %s34, 1
        %s431 = scalar_lea.sflag [#allocation6], %s430
        %s432 = sand.u32 %s116, 1
        %s433 = smul.addr %s432, 288
        %s434 = scalar_lea.vmem [#allocation7], %s433
        // Predicated region
        $region53: #{res_block_down.3} parent=43 // pred_check
          %p435 = pneg %p129
        $region54: #{res_block_down.3} parent=43 // pred_check_branch
          %437 = sbr.rel (%p435) target = $region56
        $region55: #{res_block_down.3} parent=43 // pred_region
          %438 = dma.done %s431, 4608
        $region56: #{res_block_down.3} parent=43 // pred_fallthru
          _
        // Predicated region
        $region57: #{res_block_down.3} parent=43 // pred_check
          %p439 = pneg %p150
        $region58: #{res_block_down.3} parent=43 // pred_check_branch
          %441 = sbr.rel (%p439) target = $region60
        $region59: #{res_block_down.3} parent=43 // pred_region
          %442 = dma.done [#allocation9], 320
        $region60: #{res_block_down.3} parent=43 // pred_fallthru
          _
        // Predicated region
        $region61: #{res_block_down.3} parent=43 // pred_check
          %p443 = pneg %p171
        $region62: #{res_block_down.3} parent=43 // pred_check_branch
          %445 = sbr.rel (%p443) target = $region64
        $region63: #{res_block_down.3} parent=43 // pred_region
          %446 = dma.done [#allocation9], 320
        $region64: #{res_block_down.3} parent=43 // pred_fallthru
          _
        // Predicated region
        $region65: #{res_block_down.3} parent=43 // pred_check
          %p447 = pneg %p192
        $region66: #{res_block_down.3} parent=43 // pred_check_branch
          %449 = sbr.rel (%p447) target = $region68
        $region67: #{res_block_down.3} parent=43 // pred_region
          %450 = dma.done [#allocation12], 320
        $region68: #{res_block_down.3} parent=43 // pred_fallthru
          _
        %s451 = sand.u32 %s56, 1
        %s452 = scalar_lea.sflag [#allocation3], %s451
        %s453 = sand.u32 %s56, 1
        %s454 = smul.addr %s453, 288
        %s455 = scalar_lea.vmem [#allocation2], %s454
        %p456 = pneg %p69
        %p457 = pneg %p66
        %s458 = sand.u32 %s34, 1
        %s459 = scalar_lea.sflag [#allocation6], %s458
        %s460 = sand.u32 %s86, 1
        %s461 = smul.addr %s460, 288
        %s462 = scalar_lea.vmem [#allocation5], %s461
        %p463 = pneg %p99
        %p464 = pneg %p96
        %s465 = sand.u32 %s34, 1
        %s466 = scalar_lea.sflag [#allocation6], %s465
        %s467 = sand.u32 %s116, 1
        %s468 = smul.addr %s467, 288
        %s469 = scalar_lea.vmem [#allocation7], %s468
        %p470 = pneg %p129
        %p471 = pneg %p126
        %p472 = pneg %p150
        %p473 = pneg %p147
        %p474 = pneg %p171
        %p475 = pneg %p168
        %p476 = pneg %p192
        %p477 = pneg %p189
        %p478 = pneg %p220
        %p479 = pneg %p217
        %s480 = sand.u32 %s207, 1
        %s481 = scalar_lea.sflag [#allocation4], %s480
        %s482 = sand.u32 %s207, 1
        %s483 = smul.addr %s482, 32
        %s484 = scalar_lea.vmem [#allocation13], %s483
        %p485 = pneg %p248
        %p486 = pneg %p245
        %s487 = sand.u32 %s34, 1
        %s488 = scalar_lea.sflag [#allocation15], %s487
        %s489 = sand.u32 %s235, 1
        %s490 = smul.addr %s489, 32
        %s491 = scalar_lea.vmem [#allocation14], %s490
        %p492 = pneg %p276
        %p493 = pneg %p273
        %s494 = sand.u32 %s34, 1
        %s495 = scalar_lea.sflag [#allocation15], %s494
        %s496 = sand.u32 %s263, 1
        %s497 = smul.addr %s496, 2
        %s498 = scalar_lea.vmem [#allocation16], %s497
        %s499 = sadd.s32 %s39, 1
        %s500 = sadd.s32 %s39, 2
        %v502 = vld [vmem:[%s416] sm:$0xf]
        %v503 = vld [vmem:[%s416 + $0x4] sm:$0x1]
        %v504 = vld [vmem:[%s416 + $0x8] sm:$0xf]
        %v505 = vld [vmem:[%s416 + $0xc] sm:$0x1]
        %v506 = vld [vmem:[%s416 + $0x10] sm:$0xf]
        %v507 = vld [vmem:[%s416 + $0x14] sm:$0x1]
        %v508 = vld [vmem:[%s416 + $0x18] sm:$0xf]
        %v509 = vld [vmem:[%s416 + $0x1c] sm:$0x1]
        %v510 = vld [vmem:[%s416 + $0x20] sm:$0xf]
        %v511 = vld [vmem:[%s416 + $0x24] sm:$0x1]
        %v512 = vld [vmem:[%s416 + $0x28] sm:$0xf]
        %v513 = vld [vmem:[%s416 + $0x2c] sm:$0x1]
        %v514 = vld [vmem:[%s416 + $0x30] sm:$0xf]
        %v515 = vld [vmem:[%s416 + $0x34] sm:$0x1]
        %v516 = vld [vmem:[%s416 + $0x38] sm:$0xf]
        %v517 = vld [vmem:[%s416 + $0x3c] sm:$0x1]
        %v518 = vld [vmem:[%s416 + $0x40] sm:$0xf]
        %v519 = vld [vmem:[%s416 + $0x44] sm:$0x1]
        %v520 = vld [vmem:[%s416 + $0x48] sm:$0xf]
        %v521 = vld [vmem:[%s416 + $0x50] sm:$0xf]
        %v522 = vld [vmem:[%s416 + $0x58] sm:$0xf]
        %v523 = vld [vmem:[%s416 + $0x60] sm:$0xf]
        %v524 = vld [vmem:[%s416 + $0x68] sm:$0xf]
        %v525 = vld [vmem:[%s416 + $0x70] sm:$0xf]
        %v526 = vld [vmem:[%s416 + $0x78] sm:$0xf]
        %v527 = vld [vmem:[%s416 + $0x80] sm:$0xf]
        %v528 = vld [vmem:[%s416 + $0x88] sm:$0xf]
        %v529 = vld [vmem:[%s416 + $0x90] sm:$0xf]
        %v530 = vld [vmem:[%s416 + $0x94] sm:$0x1]
        %v531 = vld [vmem:[%s416 + $0x98] sm:$0xf]
        %v532 = vld [vmem:[%s416 + $0x9c] sm:$0x1]
        %v533 = vld [vmem:[%s416 + $0xa0] sm:$0xf]
        %v534 = vld [vmem:[%s416 + $0xa4] sm:$0x1]
        %v535 = vld [vmem:[%s416 + $0xa8] sm:$0xf]
        %v536 = vld [vmem:[%s416 + $0xac] sm:$0x1]
        %v537 = vld [vmem:[%s416 + $0xb0] sm:$0xf]
        %v538 = vld [vmem:[%s416 + $0xb4] sm:$0x1]
        %v539 = vld [vmem:[%s416 + $0xb8] sm:$0xf]
        %v540 = vld [vmem:[%s416 + $0xbc] sm:$0x1]
        %v541 = vld [vmem:[%s416 + $0xc0] sm:$0xf]
        %v542 = vld [vmem:[%s416 + $0xc4] sm:$0x1]
        %v543 = vld [vmem:[%s416 + $0xc8] sm:$0xf]
        %v544 = vld [vmem:[%s416 + $0xcc] sm:$0x1]
        %v545 = vld [vmem:[%s416 + $0xd8] sm:$0xf]
        %v546 = vld [vmem:[%s416 + $0xe0] sm:$0xf]
        %v547 = vld [vmem:[%s416 + $0xe8] sm:$0xf]
        %v548 = vld [vmem:[%s416 + $0xf0] sm:$0xf]
        %v549 = vld [vmem:[%s416 + $0xf8] sm:$0xf]
        %v550 = vld [vmem:[%s416 + $0x100] sm:$0xf]
        %v551 = vld [vmem:[%s416 + $0x108] sm:$0xf]
        %v552 = vld [vmem:[%s416 + $0x110] sm:$0xf]
        %vm553 = vsmask.f32 3328
        %vm554 = vsmask.f32 7440
        %vm555 = vmor %vm553, %vm554
        %v557 = vshrl.u32 %v502, 16
        %v559 = vrot.slane %v557, 4
        %v560 = vshll.u32 %v502, 16
        %v562 = vrot.slane %v560, 5
        %v563 = vor.u32 %v559, %v562
        %v564 = vrot.slane %v563, 4
        %v566 = vshll.u32 %v503, 16
        %v568 = vrot.slane %v566, 5
        %v569 = vsel %vm555, %v564, %v568
        %v571 = vshrl.u32 %v504, 16
        %v573 = vrot.slane %v571, 4
        %v574 = vshll.u32 %v504, 16
        %v576 = vrot.slane %v574, 5
        %v577 = vor.u32 %v573, %v576
        %v578 = vrot.slane %v577, 4
        %v580 = vshll.u32 %v505, 16
        %v582 = vrot.slane %v580, 5
        %v583 = vsel %vm555, %v578, %v582
        %v585 = vshrl.u32 %v506, 16
        %v587 = vrot.slane %v585, 4
        %v588 = vshll.u32 %v506, 16
        %v590 = vrot.slane %v588, 5
        %v591 = vor.u32 %v587, %v590
        %v592 = vrot.slane %v591, 4
        %v594 = vshll.u32 %v507, 16
        %v596 = vrot.slane %v594, 5
        %v597 = vsel %vm555, %v592, %v596
        %v599 = vshrl.u32 %v508, 16
        %v601 = vrot.slane %v599, 4
        %v602 = vshll.u32 %v508, 16
        %v604 = vrot.slane %v602, 5
        %v605 = vor.u32 %v601, %v604
        %v606 = vrot.slane %v605, 4
        %v608 = vshll.u32 %v509, 16
        %v610 = vrot.slane %v608, 5
        %v611 = vsel %vm555, %v606, %v610
        %v613 = vshrl.u32 %v510, 16
        %v615 = vrot.slane %v613, 4
        %v616 = vshll.u32 %v510, 16
        %v618 = vrot.slane %v616, 5
        %v619 = vor.u32 %v615, %v618
        %v620 = vrot.slane %v619, 4
        %v622 = vshll.u32 %v511, 16
        %v624 = vrot.slane %v622, 5
        %v625 = vsel %vm555, %v620, %v624
        %v627 = vshrl.u32 %v512, 16
        %v629 = vrot.slane %v627, 4
        %v630 = vshll.u32 %v512, 16
        %v632 = vrot.slane %v630, 5
        %v633 = vor.u32 %v629, %v632
        %v634 = vrot.slane %v633, 4
        %v636 = vshll.u32 %v513, 16
        %v638 = vrot.slane %v636, 5
        %v639 = vsel %vm555, %v634, %v638
        %v641 = vshrl.u32 %v514, 16
        %v643 = vrot.slane %v641, 4
        %v644 = vshll.u32 %v514, 16
        %v646 = vrot.slane %v644, 5
        %v647 = vor.u32 %v643, %v646
        %v648 = vrot.slane %v647, 4
        %v650 = vshll.u32 %v515, 16
        %v652 = vrot.slane %v650, 5
        %v653 = vsel %vm555, %v648, %v652
        %v655 = vshrl.u32 %v516, 16
        %v657 = vrot.slane %v655, 4
        %v658 = vshll.u32 %v516, 16
        %v660 = vrot.slane %v658, 5
        %v661 = vor.u32 %v657, %v660
        %v662 = vrot.slane %v661, 4
        %v664 = vshll.u32 %v517, 16
        %v666 = vrot.slane %v664, 5
        %v667 = vsel %vm555, %v662, %v666
        %v669 = vshrl.u32 %v529, 16
        %v671 = vrot.slane %v669, 4
        %v672 = vshll.u32 %v529, 16
        %v674 = vrot.slane %v672, 5
        %v675 = vor.u32 %v671, %v674
        %v676 = vrot.slane %v675, 4
        %v678 = vshll.u32 %v530, 16
        %v680 = vrot.slane %v678, 5
        %v681 = vsel %vm555, %v676, %v680
        %v683 = vshrl.u32 %v531, 16
        %v685 = vrot.slane %v683, 4
        %v686 = vshll.u32 %v531, 16
        %v688 = vrot.slane %v686, 5
        %v689 = vor.u32 %v685, %v688
        %v690 = vrot.slane %v689, 4
        %v692 = vshll.u32 %v532, 16
        %v694 = vrot.slane %v692, 5
        %v695 = vsel %vm555, %v690, %v694
        %v697 = vshrl.u32 %v533, 16
        %v699 = vrot.slane %v697, 4
        %v700 = vshll.u32 %v533, 16
        %v702 = vrot.slane %v700, 5
        %v703 = vor.u32 %v699, %v702
        %v704 = vrot.slane %v703, 4
        %v706 = vshll.u32 %v534, 16
        %v708 = vrot.slane %v706, 5
        %v709 = vsel %vm555, %v704, %v708
        %v711 = vshrl.u32 %v535, 16
        %v713 = vrot.slane %v711, 4
        %v714 = vshll.u32 %v535, 16
        %v716 = vrot.slane %v714, 5
        %v717 = vor.u32 %v713, %v716
        %v718 = vrot.slane %v717, 4
        %v720 = vshll.u32 %v536, 16
        %v722 = vrot.slane %v720, 5
        %v723 = vsel %vm555, %v718, %v722
        %v725 = vshrl.u32 %v537, 16
        %v727 = vrot.slane %v725, 4
        %v728 = vshll.u32 %v537, 16
        %v730 = vrot.slane %v728, 5
        %v731 = vor.u32 %v727, %v730
        %v732 = vrot.slane %v731, 4
        %v734 = vshll.u32 %v538, 16
        %v736 = vrot.slane %v734, 5
        %v737 = vsel %vm555, %v732, %v736
        %v739 = vshrl.u32 %v539, 16
        %v741 = vrot.slane %v739, 4
        %v742 = vshll.u32 %v539, 16
        %v744 = vrot.slane %v742, 5
        %v745 = vor.u32 %v741, %v744
        %v746 = vrot.slane %v745, 4
        %v748 = vshll.u32 %v540, 16
        %v750 = vrot.slane %v748, 5
        %v751 = vsel %vm555, %v746, %v750
        %v753 = vshrl.u32 %v541, 16
        %v755 = vrot.slane %v753, 4
        %v756 = vshll.u32 %v541, 16
        %v758 = vrot.slane %v756, 5
        %v759 = vor.u32 %v755, %v758
        %v760 = vrot.slane %v759, 4
        %v762 = vshll.u32 %v542, 16
        %v764 = vrot.slane %v762, 5
        %v765 = vsel %vm555, %v760, %v764
        %v767 = vshrl.u32 %v543, 16
        %v769 = vrot.slane %v767, 4
        %v770 = vshll.u32 %v543, 16
        %v772 = vrot.slane %v770, 5
        %v773 = vor.u32 %v769, %v772
        %v774 = vrot.slane %v773, 4
        %v776 = vshll.u32 %v544, 16
        %v778 = vrot.slane %v776, 5
        %v779 = vsel %vm555, %v774, %v778
        %v781 = vshrl.u32 %v518, 16
        %v783 = vrot.slane %v781, 4
        %v784 = vshll.u32 %v518, 16
        %v786 = vrot.slane %v784, 5
        %v787 = vor.u32 %v783, %v786
        %v788 = vrot.slane %v787, 4
        %v790 = vshll.u32 %v519, 16
        %v792 = vrot.slane %v790, 5
        %v793 = vsel %vm555, %v788, %v792
        %v802 = vunpack.c.l.b16 %v502
        %v803 = vunpack.c.l.b16 %v504
        %v804 = vunpack.c.l.b16 %v506
        %v805 = vunpack.c.l.b16 %v508
        %v806 = vunpack.c.l.b16 %v510
        %v807 = vunpack.c.l.b16 %v512
        %v808 = vunpack.c.l.b16 %v514
        %v809 = vunpack.c.l.b16 %v516
        %v810 = vpack.c.b16 %v803, %v802
        %v811 = vpack.c.b16 %v805, %v804
        %v812 = vpack.c.b16 %v807, %v806
        %v813 = vpack.c.b16 %v809, %v808
        %v822 = vunpack.c.l.b16 %v520
        %v823 = vunpack.c.l.b16 %v521
        %v824 = vunpack.c.l.b16 %v522
        %v825 = vunpack.c.l.b16 %v523
        %v826 = vunpack.c.l.b16 %v524
        %v827 = vunpack.c.l.b16 %v525
        %v828 = vunpack.c.l.b16 %v526
        %v829 = vunpack.c.l.b16 %v527
        %v830 = vpack.c.b16 %v823, %v822
        %v831 = vpack.c.b16 %v825, %v824
        %v832 = vpack.c.b16 %v827, %v826
        %v833 = vpack.c.b16 %v829, %v828
        %834 = vrot.lane.b32.xlu0 %v830, 4
        %v835 = vpop.permute.xlu0 %834
        %836 = vrot.lane.b32.xlu0 %v831, 4
        %v837 = vpop.permute.xlu0 %836
        %838 = vrot.lane.b32.xlu0 %v832, 4
        %v839 = vpop.permute.xlu0 %838
        %840 = vrot.lane.b32.xlu0 %v833, 4
        %v841 = vpop.permute.xlu0 %840
        %v842 = vunpack.c.l.b16 %v569
        %v843 = vunpack.c.l.b16 %v583
        %v844 = vunpack.c.l.b16 %v597
        %v845 = vunpack.c.l.b16 %v611
        %v846 = vunpack.c.l.b16 %v625
        %v847 = vunpack.c.l.b16 %v639
        %v848 = vunpack.c.l.b16 %v653
        %v849 = vunpack.c.l.b16 %v667
        %v850 = vpack.c.b16 %v843, %v842
        %v851 = vpack.c.b16 %v845, %v844
        %v852 = vpack.c.b16 %v847, %v846
        %v853 = vpack.c.b16 %v849, %v848
        %854 = vrot.lane.b32.xlu0 %v850, 8
        %v855 = vpop.permute.xlu0 %854
        %856 = vrot.lane.b32.xlu0 %v851, 8
        %v857 = vpop.permute.xlu0 %856
        %858 = vrot.lane.b32.xlu0 %v852, 8
        %v859 = vpop.permute.xlu0 %858
        %860 = vrot.lane.b32.xlu0 %v853, 8
        %v861 = vpop.permute.xlu0 %860
        %v870 = vunpack.c.l.b16 %v529
        %v871 = vunpack.c.l.b16 %v531
        %v872 = vunpack.c.l.b16 %v533
        %v873 = vunpack.c.l.b16 %v535
        %v874 = vunpack.c.l.b16 %v537
        %v875 = vunpack.c.l.b16 %v539
        %v876 = vunpack.c.l.b16 %v541
        %v877 = vunpack.c.l.b16 %v543
        %v878 = vpack.c.b16 %v871, %v870
        %v879 = vpack.c.b16 %v873, %v872
        %v880 = vpack.c.b16 %v875, %v874
        %v881 = vpack.c.b16 %v877, %v876
        %882 = vrot.lane.b32.xlu0 %v878, 12
        %v883 = vpop.permute.xlu0 %882
        %884 = vrot.lane.b32.xlu0 %v879, 12
        %v885 = vpop.permute.xlu0 %884
        %886 = vrot.lane.b32.xlu0 %v880, 12
        %v887 = vpop.permute.xlu0 %886
        %888 = vrot.lane.b32.xlu0 %v881, 12
        %v889 = vpop.permute.xlu0 %888
        %v898 = vunpack.c.l.b16 %v545
        %v899 = vunpack.c.l.b16 %v546
        %v900 = vunpack.c.l.b16 %v547
        %v901 = vunpack.c.l.b16 %v548
        %v902 = vunpack.c.l.b16 %v549
        %v903 = vunpack.c.l.b16 %v550
        %v904 = vunpack.c.l.b16 %v551
        %v905 = vunpack.c.l.b16 %v552
        %v906 = vpack.c.b16 %v899, %v898
        %v907 = vpack.c.b16 %v901, %v900
        %v908 = vpack.c.b16 %v903, %v902
        %v909 = vpack.c.b16 %v905, %v904
        %910 = vrot.lane.b32.xlu0 %v906, 16
        %v911 = vpop.permute.xlu0 %910
        %912 = vrot.lane.b32.xlu0 %v907, 16
        %v913 = vpop.permute.xlu0 %912
        %914 = vrot.lane.b32.xlu0 %v908, 16
        %v915 = vpop.permute.xlu0 %914
        %916 = vrot.lane.b32.xlu0 %v909, 16
        %v917 = vpop.permute.xlu0 %916
        %v918 = vunpack.c.l.b16 %v681
        %v919 = vunpack.c.l.b16 %v695
        %v920 = vunpack.c.l.b16 %v709
        %v921 = vunpack.c.l.b16 %v723
        %v922 = vunpack.c.l.b16 %v737
        %v923 = vunpack.c.l.b16 %v751
        %v924 = vunpack.c.l.b16 %v765
        %v925 = vunpack.c.l.b16 %v779
        %v926 = vpack.c.b16 %v919, %v918
        %v927 = vpack.c.b16 %v921, %v920
        %v928 = vpack.c.b16 %v923, %v922
        %v929 = vpack.c.b16 %v925, %v924
        %930 = vrot.lane.b32.xlu0 %v926, 20
        %v931 = vpop.permute.xlu0 %930
        %932 = vrot.lane.b32.xlu0 %v927, 20
        %v933 = vpop.permute.xlu0 %932
        %934 = vrot.lane.b32.xlu0 %v928, 20
        %v935 = vpop.permute.xlu0 %934
        %936 = vrot.lane.b32.xlu0 %v929, 20
        %v937 = vpop.permute.xlu0 %936
        %v939 = vunpack.c.l.b16 %v518
        %v940 = vpack.c.b16 %v804, %v803
        %v941 = vpack.c.b16 %v806, %v805
        %v942 = vpack.c.b16 %v808, %v807
        %v943 = vpack.c.b16 %v939, %v809
        %944 = vrot.lane.b32.xlu0 %v940, 24
        %v945 = vpop.permute.xlu0 %944
        %946 = vrot.lane.b32.xlu0 %v941, 24
        %v947 = vpop.permute.xlu0 %946
        %948 = vrot.lane.b32.xlu0 %v942, 24
        %v949 = vpop.permute.xlu0 %948
        %950 = vrot.lane.b32.xlu0 %v943, 24
        %v951 = vpop.permute.xlu0 %950
        %v953 = vunpack.c.l.b16 %v528
        %v954 = vpack.c.b16 %v824, %v823
        %v955 = vpack.c.b16 %v826, %v825
        %v956 = vpack.c.b16 %v828, %v827
        %v957 = vpack.c.b16 %v953, %v829
        %958 = vrot.lane.b32.xlu0 %v954, 28
        %v959 = vpop.permute.xlu0 %958
        %960 = vrot.lane.b32.xlu0 %v955, 28
        %v961 = vpop.permute.xlu0 %960
        %962 = vrot.lane.b32.xlu0 %v956, 28
        %v963 = vpop.permute.xlu0 %962
        %964 = vrot.lane.b32.xlu0 %v957, 28
        %v965 = vpop.permute.xlu0 %964
        %v966 = vunpack.c.l.b16 %v793
        %v967 = vpack.c.b16 %v844, %v843
        %v968 = vpack.c.b16 %v846, %v845
        %v969 = vpack.c.b16 %v848, %v847
        %v970 = vpack.c.b16 %v966, %v849
        %971 = vrot.lane.b32.xlu0 %v967, 32
        %v972 = vpop.permute.xlu0 %971
        %973 = vrot.lane.b32.xlu0 %v968, 32
        %v974 = vpop.permute.xlu0 %973
        %975 = vrot.lane.b32.xlu0 %v969, 32
        %v976 = vpop.permute.xlu0 %975
        %977 = vrot.lane.b32.xlu0 %v970, 32
        %v978 = vpop.permute.xlu0 %977
        %vm979 = vcmask 31744
        %v982 = vsel %vm979, %v810, %v835
        %v985 = vsel %vm979, %v811, %v837
        %v988 = vsel %vm979, %v812, %v839
        %v991 = vsel %vm979, %v813, %v841
        %vm992 = vcmask 64512
        %v994 = vsel %vm992, %v982, %v855
        %v996 = vsel %vm992, %v985, %v857
        %v998 = vsel %vm992, %v988, %v859
        %v1000 = vsel %vm992, %v991, %v861
        %vm1001 = vcmask 97280
        %v1003 = vsel %vm1001, %v994, %v883
        %v1005 = vsel %vm1001, %v996, %v885
        %v1007 = vsel %vm1001, %v998, %v887
        %v1009 = vsel %vm1001, %v1000, %v889
        %vm1010 = vcmask 130048
        %v1012 = vsel %vm1010, %v1003, %v911
        %v1014 = vsel %vm1010, %v1005, %v913
        %v1016 = vsel %vm1010, %v1007, %v915
        %v1018 = vsel %vm1010, %v1009, %v917
        %vm1019 = vcmask 162816
        %v1021 = vsel %vm1019, %v1012, %v931
        %v1023 = vsel %vm1019, %v1014, %v933
        %v1025 = vsel %vm1019, %v1016, %v935
        %v1027 = vsel %vm1019, %v1018, %v937
        %vm1028 = vcmask 195584
        %v1030 = vsel %vm1028, %v1021, %v945
        %v1032 = vsel %vm1028, %v1023, %v947
        %v1034 = vsel %vm1028, %v1025, %v949
        %v1036 = vsel %vm1028, %v1027, %v951
        %vm1037 = vcmask 228352
        %v1039 = vsel %vm1037, %v1030, %v959
        %v1041 = vsel %vm1037, %v1032, %v961
        %v1043 = vsel %vm1037, %v1034, %v963
        %v1045 = vsel %vm1037, %v1036, %v965
        %vm1046 = vcmask 261120
        %v1048 = vsel %vm1046, %v1039, %v972
        %v1050 = vsel %vm1046, %v1041, %v974
        %v1052 = vsel %vm1046, %v1043, %v976
        %v1054 = vsel %vm1046, %v1045, %v978
        %v1055 = vld [vmem:[#allocation8] sm:$0xf]
        %v1056 = vld [vmem:[#allocation8 + $0x4] sm:$0xf]
        %v1057 = vld [vmem:[#allocation8 + $0x8] sm:$0xf]
        %v1058 = vld [vmem:[#allocation8 + $0xc] sm:$0xf]
        %v1059 = vld [vmem:[#allocation8 + $0x10] sm:$0x3]
        %v1060 = vld [vmem:[%s425] sm:$0xf]
        %v1061 = vld [vmem:[%s425 + $0x4] sm:$0x1]
        %v1062 = vld [vmem:[%s425 + $0x8] sm:$0xf]
        %v1063 = vld [vmem:[%s425 + $0xc] sm:$0x1]
        %v1064 = vld [vmem:[%s425 + $0x10] sm:$0xf]
        %v1065 = vld [vmem:[%s425 + $0x14] sm:$0x1]
        %v1066 = vld [vmem:[%s425 + $0x18] sm:$0xf]
        %v1067 = vld [vmem:[%s425 + $0x1c] sm:$0x1]
        %v1068 = vld [vmem:[%s425 + $0x20] sm:$0xf]
        %v1069 = vld [vmem:[%s425 + $0x24] sm:$0x1]
        %v1070 = vld [vmem:[%s425 + $0x28] sm:$0xf]
        %v1071 = vld [vmem:[%s425 + $0x2c] sm:$0x1]
        %v1072 = vld [vmem:[%s425 + $0x30] sm:$0xf]
        %v1073 = vld [vmem:[%s425 + $0x34] sm:$0x1]
        %v1074 = vld [vmem:[%s425 + $0x38] sm:$0xf]
        %v1075 = vld [vmem:[%s425 + $0x3c] sm:$0x1]
        %v1076 = vld [vmem:[%s425 + $0x40] sm:$0xf]
        %v1077 = vld [vmem:[%s425 + $0x44] sm:$0x1]
        %v1078 = vld [vmem:[%s425 + $0x48] sm:$0xf]
        %v1079 = vld [vmem:[%s425 + $0x50] sm:$0xf]
        %v1080 = vld [vmem:[%s425 + $0x58] sm:$0xf]
        %v1081 = vld [vmem:[%s425 + $0x60] sm:$0xf]
        %v1082 = vld [vmem:[%s425 + $0x68] sm:$0xf]
        %v1083 = vld [vmem:[%s425 + $0x70] sm:$0xf]
        %v1084 = vld [vmem:[%s425 + $0x78] sm:$0xf]
        %v1085 = vld [vmem:[%s425 + $0x80] sm:$0xf]
        %v1086 = vld [vmem:[%s425 + $0x88] sm:$0xf]
        %v1087 = vld [vmem:[%s425 + $0x90] sm:$0xf]
        %v1088 = vld [vmem:[%s425 + $0x94] sm:$0x1]
        %v1089 = vld [vmem:[%s425 + $0x98] sm:$0xf]
        %v1090 = vld [vmem:[%s425 + $0x9c] sm:$0x1]
        %v1091 = vld [vmem:[%s425 + $0xa0] sm:$0xf]
        %v1092 = vld [vmem:[%s425 + $0xa4] sm:$0x1]
        %v1093 = vld [vmem:[%s425 + $0xa8] sm:$0xf]
        %v1094 = vld [vmem:[%s425 + $0xac] sm:$0x1]
        %v1095 = vld [vmem:[%s425 + $0xb0] sm:$0xf]
        %v1096 = vld [vmem:[%s425 + $0xb4] sm:$0x1]
        %v1097 = vld [vmem:[%s425 + $0xb8] sm:$0xf]
        %v1098 = vld [vmem:[%s425 + $0xbc] sm:$0x1]
        %v1099 = vld [vmem:[%s425 + $0xc0] sm:$0xf]
        %v1100 = vld [vmem:[%s425 + $0xc4] sm:$0x1]
        %v1101 = vld [vmem:[%s425 + $0xc8] sm:$0xf]
        %v1102 = vld [vmem:[%s425 + $0xcc] sm:$0x1]
        %v1103 = vld [vmem:[%s425 + $0xd8] sm:$0xf]
        %v1104 = vld [vmem:[%s425 + $0xe0] sm:$0xf]
        %v1105 = vld [vmem:[%s425 + $0xe8] sm:$0xf]
        %v1106 = vld [vmem:[%s425 + $0xf0] sm:$0xf]
        %v1107 = vld [vmem:[%s425 + $0xf8] sm:$0xf]
        %v1108 = vld [vmem:[%s425 + $0x100] sm:$0xf]
        %v1109 = vld [vmem:[%s425 + $0x108] sm:$0xf]
        %v1110 = vld [vmem:[%s425 + $0x110] sm:$0xf]
        %v1112 = vshrl.u32 %v1060, 16
        %v1114 = vrot.slane %v1112, 4
        %v1115 = vshll.u32 %v1060, 16
        %v1117 = vrot.slane %v1115, 5
        %v1118 = vor.u32 %v1114, %v1117
        %v1119 = vrot.slane %v1118, 4
        %v1121 = vshll.u32 %v1061, 16
        %v1123 = vrot.slane %v1121, 5
        %v1124 = vsel %vm555, %v1119, %v1123
        %v1126 = vshrl.u32 %v1062, 16
        %v1128 = vrot.slane %v1126, 4
        %v1129 = vshll.u32 %v1062, 16
        %v1131 = vrot.slane %v1129, 5
        %v1132 = vor.u32 %v1128, %v1131
        %v1133 = vrot.slane %v1132, 4
        %v1135 = vshll.u32 %v1063, 16
        %v1137 = vrot.slane %v1135, 5
        %v1138 = vsel %vm555, %v1133, %v1137
        %v1140 = vshrl.u32 %v1064, 16
        %v1142 = vrot.slane %v1140, 4
        %v1143 = vshll.u32 %v1064, 16
        %v1145 = vrot.slane %v1143, 5
        %v1146 = vor.u32 %v1142, %v1145
        %v1147 = vrot.slane %v1146, 4
        %v1149 = vshll.u32 %v1065, 16
        %v1151 = vrot.slane %v1149, 5
        %v1152 = vsel %vm555, %v1147, %v1151
        %v1154 = vshrl.u32 %v1066, 16
        %v1156 = vrot.slane %v1154, 4
        %v1157 = vshll.u32 %v1066, 16
        %v1159 = vrot.slane %v1157, 5
        %v1160 = vor.u32 %v1156, %v1159
        %v1161 = vrot.slane %v1160, 4
        %v1163 = vshll.u32 %v1067, 16
        %v1165 = vrot.slane %v1163, 5
        %v1166 = vsel %vm555, %v1161, %v1165
        %v1168 = vshrl.u32 %v1068, 16
        %v1170 = vrot.slane %v1168, 4
        %v1171 = vshll.u32 %v1068, 16
        %v1173 = vrot.slane %v1171, 5
        %v1174 = vor.u32 %v1170, %v1173
        %v1175 = vrot.slane %v1174, 4
        %v1177 = vshll.u32 %v1069, 16
        %v1179 = vrot.slane %v1177, 5
        %v1180 = vsel %vm555, %v1175, %v1179
        %v1182 = vshrl.u32 %v1070, 16
        %v1184 = vrot.slane %v1182, 4
        %v1185 = vshll.u32 %v1070, 16
        %v1187 = vrot.slane %v1185, 5
        %v1188 = vor.u32 %v1184, %v1187
        %v1189 = vrot.slane %v1188, 4
        %v1191 = vshll.u32 %v1071, 16
        %v1193 = vrot.slane %v1191, 5
        %v1194 = vsel %vm555, %v1189, %v1193
        %v1196 = vshrl.u32 %v1072, 16
        %v1198 = vrot.slane %v1196, 4
        %v1199 = vshll.u32 %v1072, 16
        %v1201 = vrot.slane %v1199, 5
        %v1202 = vor.u32 %v1198, %v1201
        %v1203 = vrot.slane %v1202, 4
        %v1205 = vshll.u32 %v1073, 16
        %v1207 = vrot.slane %v1205, 5
        %v1208 = vsel %vm555, %v1203, %v1207
        %v1210 = vshrl.u32 %v1074, 16
        %v1212 = vrot.slane %v1210, 4
        %v1213 = vshll.u32 %v1074, 16
        %v1215 = vrot.slane %v1213, 5
        %v1216 = vor.u32 %v1212, %v1215
        %v1217 = vrot.slane %v1216, 4
        %v1219 = vshll.u32 %v1075, 16
        %v1221 = vrot.slane %v1219, 5
        %v1222 = vsel %vm555, %v1217, %v1221
        %v1224 = vshrl.u32 %v1087, 16
        %v1226 = vrot.slane %v1224, 4
        %v1227 = vshll.u32 %v1087, 16
        %v1229 = vrot.slane %v1227, 5
        %v1230 = vor.u32 %v1226, %v1229
        %v1231 = vrot.slane %v1230, 4
        %v1233 = vshll.u32 %v1088, 16
        %v1235 = vrot.slane %v1233, 5
        %v1236 = vsel %vm555, %v1231, %v1235
        %v1238 = vshrl.u32 %v1089, 16
        %v1240 = vrot.slane %v1238, 4
        %v1241 = vshll.u32 %v1089, 16
        %v1243 = vrot.slane %v1241, 5
        %v1244 = vor.u32 %v1240, %v1243
        %v1245 = vrot.slane %v1244, 4
        %v1247 = vshll.u32 %v1090, 16
        %v1249 = vrot.slane %v1247, 5
        %v1250 = vsel %vm555, %v1245, %v1249
        %v1252 = vshrl.u32 %v1091, 16
        %v1254 = vrot.slane %v1252, 4
        %v1255 = vshll.u32 %v1091, 16
        %v1257 = vrot.slane %v1255, 5
        %v1258 = vor.u32 %v1254, %v1257
        %v1259 = vrot.slane %v1258, 4
        %v1261 = vshll.u32 %v1092, 16
        %v1263 = vrot.slane %v1261, 5
        %v1264 = vsel %vm555, %v1259, %v1263
        %v1266 = vshrl.u32 %v1093, 16
        %v1268 = vrot.slane %v1266, 4
        %v1269 = vshll.u32 %v1093, 16
        %v1271 = vrot.slane %v1269, 5
        %v1272 = vor.u32 %v1268, %v1271
        %v1273 = vrot.slane %v1272, 4
        %v1275 = vshll.u32 %v1094, 16
        %v1277 = vrot.slane %v1275, 5
        %v1278 = vsel %vm555, %v1273, %v1277
        %v1280 = vshrl.u32 %v1095, 16
        %v1282 = vrot.slane %v1280, 4
        %v1283 = vshll.u32 %v1095, 16
        %v1285 = vrot.slane %v1283, 5
        %v1286 = vor.u32 %v1282, %v1285
        %v1287 = vrot.slane %v1286, 4
        %v1289 = vshll.u32 %v1096, 16
        %v1291 = vrot.slane %v1289, 5
        %v1292 = vsel %vm555, %v1287, %v1291
        %v1294 = vshrl.u32 %v1097, 16
        %v1296 = vrot.slane %v1294, 4
        %v1297 = vshll.u32 %v1097, 16
        %v1299 = vrot.slane %v1297, 5
        %v1300 = vor.u32 %v1296, %v1299
        %v1301 = vrot.slane %v1300, 4
        %v1303 = vshll.u32 %v1098, 16
        %v1305 = vrot.slane %v1303, 5
        %v1306 = vsel %vm555, %v1301, %v1305
        %v1308 = vshrl.u32 %v1099, 16
        %v1310 = vrot.slane %v1308, 4
        %v1311 = vshll.u32 %v1099, 16
        %v1313 = vrot.slane %v1311, 5
        %v1314 = vor.u32 %v1310, %v1313
        %v1315 = vrot.slane %v1314, 4
        %v1317 = vshll.u32 %v1100, 16
        %v1319 = vrot.slane %v1317, 5
        %v1320 = vsel %vm555, %v1315, %v1319
        %v1322 = vshrl.u32 %v1101, 16
        %v1324 = vrot.slane %v1322, 4
        %v1325 = vshll.u32 %v1101, 16
        %v1327 = vrot.slane %v1325, 5
        %v1328 = vor.u32 %v1324, %v1327
        %v1329 = vrot.slane %v1328, 4
        %v1331 = vshll.u32 %v1102, 16
        %v1333 = vrot.slane %v1331, 5
        %v1334 = vsel %vm555, %v1329, %v1333
        %v1336 = vshrl.u32 %v1076, 16
        %v1338 = vrot.slane %v1336, 4
        %v1339 = vshll.u32 %v1076, 16
        %v1341 = vrot.slane %v1339, 5
        %v1342 = vor.u32 %v1338, %v1341
        %v1343 = vrot.slane %v1342, 4
        %v1345 = vshll.u32 %v1077, 16
        %v1347 = vrot.slane %v1345, 5
        %v1348 = vsel %vm555, %v1343, %v1347
        %v1357 = vunpack.c.l.b16 %v1060
        %v1358 = vunpack.c.l.b16 %v1062
        %v1359 = vunpack.c.l.b16 %v1064
        %v1360 = vunpack.c.l.b16 %v1066
        %v1361 = vunpack.c.l.b16 %v1068
        %v1362 = vunpack.c.l.b16 %v1070
        %v1363 = vunpack.c.l.b16 %v1072
        %v1364 = vunpack.c.l.b16 %v1074
        %v1365 = vpack.c.b16 %v1358, %v1357
        %v1366 = vpack.c.b16 %v1360, %v1359
        %v1367 = vpack.c.b16 %v1362, %v1361
        %v1368 = vpack.c.b16 %v1364, %v1363
        %v1377 = vunpack.c.l.b16 %v1078
        %v1378 = vunpack.c.l.b16 %v1079
        %v1379 = vunpack.c.l.b16 %v1080
        %v1380 = vunpack.c.l.b16 %v1081
        %v1381 = vunpack.c.l.b16 %v1082
        %v1382 = vunpack.c.l.b16 %v1083
        %v1383 = vunpack.c.l.b16 %v1084
        %v1384 = vunpack.c.l.b16 %v1085
        %v1385 = vpack.c.b16 %v1378, %v1377
        %v1386 = vpack.c.b16 %v1380, %v1379
        %v1387 = vpack.c.b16 %v1382, %v1381
        %v1388 = vpack.c.b16 %v1384, %v1383
        %1389 = vrot.lane.b32.xlu0 %v1385, 4
        %v1390 = vpop.permute.xlu0 %1389
        %1391 = vrot.lane.b32.xlu0 %v1386, 4
        %v1392 = vpop.permute.xlu0 %1391
        %1393 = vrot.lane.b32.xlu0 %v1387, 4
        %v1394 = vpop.permute.xlu0 %1393
        %1395 = vrot.lane.b32.xlu0 %v1388, 4
        %v1396 = vpop.permute.xlu0 %1395
        %v1397 = vunpack.c.l.b16 %v1124
        %v1398 = vunpack.c.l.b16 %v1138
        %v1399 = vunpack.c.l.b16 %v1152
        %v1400 = vunpack.c.l.b16 %v1166
        %v1401 = vunpack.c.l.b16 %v1180
        %v1402 = vunpack.c.l.b16 %v1194
        %v1403 = vunpack.c.l.b16 %v1208
        %v1404 = vunpack.c.l.b16 %v1222
        %v1405 = vpack.c.b16 %v1398, %v1397
        %v1406 = vpack.c.b16 %v1400, %v1399
        %v1407 = vpack.c.b16 %v1402, %v1401
        %v1408 = vpack.c.b16 %v1404, %v1403
        %1409 = vrot.lane.b32.xlu0 %v1405, 8
        %v1410 = vpop.permute.xlu0 %1409
        %1411 = vrot.lane.b32.xlu0 %v1406, 8
        %v1412 = vpop.permute.xlu0 %1411
        %1413 = vrot.lane.b32.xlu0 %v1407, 8
        %v1414 = vpop.permute.xlu0 %1413
        %1415 = vrot.lane.b32.xlu0 %v1408, 8
        %v1416 = vpop.permute.xlu0 %1415
        %v1425 = vunpack.c.l.b16 %v1087
        %v1426 = vunpack.c.l.b16 %v1089
        %v1427 = vunpack.c.l.b16 %v1091
        %v1428 = vunpack.c.l.b16 %v1093
        %v1429 = vunpack.c.l.b16 %v1095
        %v1430 = vunpack.c.l.b16 %v1097
        %v1431 = vunpack.c.l.b16 %v1099
        %v1432 = vunpack.c.l.b16 %v1101
        %v1433 = vpack.c.b16 %v1426, %v1425
        %v1434 = vpack.c.b16 %v1428, %v1427
        %v1435 = vpack.c.b16 %v1430, %v1429
        %v1436 = vpack.c.b16 %v1432, %v1431
        %1437 = vrot.lane.b32.xlu0 %v1433, 12
        %v1438 = vpop.permute.xlu0 %1437
        %1439 = vrot.lane.b32.xlu0 %v1434, 12
        %v1440 = vpop.permute.xlu0 %1439
        %1441 = vrot.lane.b32.xlu0 %v1435, 12
        %v1442 = vpop.permute.xlu0 %1441
        %1443 = vrot.lane.b32.xlu0 %v1436, 12
        %v1444 = vpop.permute.xlu0 %1443
        %v1453 = vunpack.c.l.b16 %v1103
        %v1454 = vunpack.c.l.b16 %v1104
        %v1455 = vunpack.c.l.b16 %v1105
        %v1456 = vunpack.c.l.b16 %v1106
        %v1457 = vunpack.c.l.b16 %v1107
        %v1458 = vunpack.c.l.b16 %v1108
        %v1459 = vunpack.c.l.b16 %v1109
        %v1460 = vunpack.c.l.b16 %v1110
        %v1461 = vpack.c.b16 %v1454, %v1453
        %v1462 = vpack.c.b16 %v1456, %v1455
        %v1463 = vpack.c.b16 %v1458, %v1457
        %v1464 = vpack.c.b16 %v1460, %v1459
        %1465 = vrot.lane.b32.xlu0 %v1461, 16
        %v1466 = vpop.permute.xlu0 %1465
        %1467 = vrot.lane.b32.xlu0 %v1462, 16
        %v1468 = vpop.permute.xlu0 %1467
        %1469 = vrot.lane.b32.xlu0 %v1463, 16
        %v1470 = vpop.permute.xlu0 %1469
        %1471 = vrot.lane.b32.xlu0 %v1464, 16
        %v1472 = vpop.permute.xlu0 %1471
        %v1473 = vunpack.c.l.b16 %v1236
        %v1474 = vunpack.c.l.b16 %v1250
        %v1475 = vunpack.c.l.b16 %v1264
        %v1476 = vunpack.c.l.b16 %v1278
        %v1477 = vunpack.c.l.b16 %v1292
        %v1478 = vunpack.c.l.b16 %v1306
        %v1479 = vunpack.c.l.b16 %v1320
        %v1480 = vunpack.c.l.b16 %v1334
        %v1481 = vpack.c.b16 %v1474, %v1473
        %v1482 = vpack.c.b16 %v1476, %v1475
        %v1483 = vpack.c.b16 %v1478, %v1477
        %v1484 = vpack.c.b16 %v1480, %v1479
        %1485 = vrot.lane.b32.xlu0 %v1481, 20
        %v1486 = vpop.permute.xlu0 %1485
        %1487 = vrot.lane.b32.xlu0 %v1482, 20
        %v1488 = vpop.permute.xlu0 %1487
        %1489 = vrot.lane.b32.xlu0 %v1483, 20
        %v1490 = vpop.permute.xlu0 %1489
        %1491 = vrot.lane.b32.xlu0 %v1484, 20
        %v1492 = vpop.permute.xlu0 %1491
        %v1494 = vunpack.c.l.b16 %v1076
        %v1495 = vpack.c.b16 %v1359, %v1358
        %v1496 = vpack.c.b16 %v1361, %v1360
        %v1497 = vpack.c.b16 %v1363, %v1362
        %v1498 = vpack.c.b16 %v1494, %v1364
        %1499 = vrot.lane.b32.xlu0 %v1495, 24
        %v1500 = vpop.permute.xlu0 %1499
        %1501 = vrot.lane.b32.xlu0 %v1496, 24
        %v1502 = vpop.permute.xlu0 %1501
        %1503 = vrot.lane.b32.xlu0 %v1497, 24
        %v1504 = vpop.permute.xlu0 %1503
        %1505 = vrot.lane.b32.xlu0 %v1498, 24
        %v1506 = vpop.permute.xlu0 %1505
        %v1508 = vunpack.c.l.b16 %v1086
        %v1509 = vpack.c.b16 %v1379, %v1378
        %v1510 = vpack.c.b16 %v1381, %v1380
        %v1511 = vpack.c.b16 %v1383, %v1382
        %v1512 = vpack.c.b16 %v1508, %v1384
        %1513 = vrot.lane.b32.xlu0 %v1509, 28
        %v1514 = vpop.permute.xlu0 %1513
        %1515 = vrot.lane.b32.xlu0 %v1510, 28
        %v1516 = vpop.permute.xlu0 %1515
        %1517 = vrot.lane.b32.xlu0 %v1511, 28
        %v1518 = vpop.permute.xlu0 %1517
        %1519 = vrot.lane.b32.xlu0 %v1512, 28
        %v1520 = vpop.permute.xlu0 %1519
        %v1521 = vunpack.c.l.b16 %v1348
        %v1522 = vpack.c.b16 %v1399, %v1398
        %v1523 = vpack.c.b16 %v1401, %v1400
        %v1524 = vpack.c.b16 %v1403, %v1402
        %v1525 = vpack.c.b16 %v1521, %v1404
        %1526 = vrot.lane.b32.xlu0 %v1522, 32
        %v1527 = vpop.permute.xlu0 %1526
        %1528 = vrot.lane.b32.xlu0 %v1523, 32
        %v1529 = vpop.permute.xlu0 %1528
        %1530 = vrot.lane.b32.xlu0 %v1524, 32
        %v1531 = vpop.permute.xlu0 %1530
        %1532 = vrot.lane.b32.xlu0 %v1525, 32
        %v1533 = vpop.permute.xlu0 %1532
        %v1536 = vsel %vm979, %v1365, %v1390
        %v1539 = vsel %vm979, %v1366, %v1392
        %v1542 = vsel %vm979, %v1367, %v1394
        %v1545 = vsel %vm979, %v1368, %v1396
        %v1547 = vsel %vm992, %v1536, %v1410
        %v1549 = vsel %vm992, %v1539, %v1412
        %v1551 = vsel %vm992, %v1542, %v1414
        %v1553 = vsel %vm992, %v1545, %v1416
        %v1555 = vsel %vm1001, %v1547, %v1438
        %v1557 = vsel %vm1001, %v1549, %v1440
        %v1559 = vsel %vm1001, %v1551, %v1442
        %v1561 = vsel %vm1001, %v1553, %v1444
        %v1563 = vsel %vm1010, %v1555, %v1466
        %v1565 = vsel %vm1010, %v1557, %v1468
        %v1567 = vsel %vm1010, %v1559, %v1470
        %v1569 = vsel %vm1010, %v1561, %v1472
        %v1571 = vsel %vm1019, %v1563, %v1486
        %v1573 = vsel %vm1019, %v1565, %v1488
        %v1575 = vsel %vm1019, %v1567, %v1490
        %v1577 = vsel %vm1019, %v1569, %v1492
        %v1579 = vsel %vm1028, %v1571, %v1500
        %v1581 = vsel %vm1028, %v1573, %v1502
        %v1583 = vsel %vm1028, %v1575, %v1504
        %v1585 = vsel %vm1028, %v1577, %v1506
        %v1587 = vsel %vm1037, %v1579, %v1514
        %v1589 = vsel %vm1037, %v1581, %v1516
        %v1591 = vsel %vm1037, %v1583, %v1518
        %v1593 = vsel %vm1037, %v1585, %v1520
        %v1595 = vsel %vm1046, %v1587, %v1527
        %v1597 = vsel %vm1046, %v1589, %v1529
        %v1599 = vsel %vm1046, %v1591, %v1531
        %v1601 = vsel %vm1046, %v1593, %v1533
        %v1602 = vld [vmem:[#allocation10] sm:$0xf]
        %v1603 = vld [vmem:[#allocation10 + $0x4] sm:$0xf]
        %v1604 = vld [vmem:[#allocation10 + $0x8] sm:$0xf]
        %v1605 = vld [vmem:[#allocation10 + $0xc] sm:$0xf]
        %v1606 = vld [vmem:[#allocation10 + $0x10] sm:$0x3]
        %v1612 = vunpack.c.l.b16 %v1602
        %v1613 = vunpack.c.l.b16 %v1603
        %v1614 = vunpack.c.l.b16 %v1604
        %v1615 = vunpack.c.l.b16 %v1605
        %v1616 = vunpack.c.l.b16 %v1606
        %v1617 = vpack.c.b16 %v1613, %v1612
        %v1618 = vpack.c.b16 %v1615, %v1614
        %v1619 = vpack.c.b16 %v1616, %v1616
        %vm1622 = vcmask 293888
        %v1623 = vsel %vm1622, %v1595, 0
        %v1625 = vsel %vm1622, %v1597, 0
        %v1627 = vsel %vm1622, %v1599, 0
        %v1629 = vsel %vm1622, %v1601, 0
        %vm1631 = vcmask 1041408
        %v1633 = vsel %vm1631, %v1619, 0
        %1635 = vmatprep.subr.bf16.mxu0 0
        %1636 = vmatpush1.bf16.msra.mxu0 %v1617
        %1637 = vmatprep.subr.bf16.mxu0 0
        %1638 = vmatpush1.bf16.msra.mxu0 %v1618
        %1639 = vmatprep.subr.bf16.mxu0 0
        %1640 = vmatpush1.bf16.msra.mxu0 %v1633
        %1641 = vmatprep.subr.bf16.mxu0 0
        %1642 = vmatpush1.bf16.msra.mxu0 0
        %1643 = vmatprep.subr.bf16.mxu0 0
        %1644 = vmatpush1.bf16.msra.mxu0 0
        %1645 = vmatprep.subr.bf16.mxu0 0
        %1646 = vmatpush1.bf16.msra.mxu0 0
        %1647 = vmatprep.subr.bf16.mxu0 0
        %1648 = vmatpush1.bf16.msra.mxu0 0
        %1649 = vmatprep.subr.bf16.mxu0 0
        %1650 = vmatpush1.bf16.msra.mxu0 0
        %1651 = vmatprep.subr.bf16.mxu0 0
        %1652 = vmatpush1.bf16.msra.mxu0 0
        %1653 = vmatprep.subr.bf16.mxu0 0
        %1654 = vmatpush1.bf16.msra.mxu0 0
        %1655 = vmatprep.subr.bf16.mxu0 0
        %1656 = vmatpush1.bf16.msra.mxu0 0
        %1657 = vmatprep.subr.bf16.mxu0 0
        %1658 = vmatpush1.bf16.msra.mxu0 0
        %1659 = vmatprep.subr.bf16.mxu0 0
        %1660 = vmatpush1.bf16.msra.mxu0 0
        %1661 = vmatprep.subr.bf16.mxu0 0
        %1662 = vmatpush1.bf16.msra.mxu0 0
        %1663 = vmatprep.subr.bf16.mxu0 0
        %1664 = vmatpush1.bf16.msra.mxu0 0
        %1665 = vmatprep.subr.bf16.mxu0 0
        %1666 = vmatpush1.bf16.msra.mxu0 0
        %1667 = vmatprep.mubr.bf16.mxu0 0
        %1668 = vmatmul.mubr.bf16.gmra.mrb[0].mxu0 %v1623
        %v1669 = vpop.f32.mrb[0].mxu0
        %v1670 = vadd.f32 0.0, %v1669
        %v1671 = vpop.f32.mrb[0].mxu0
        %v1672 = vpop.f32.mrb[0].mxu0
        %v1673 = vadd.f32 0.0, %v1672
        %v1674 = vpop.f32.mrb[0].mxu0
        %1675 = vmatprep.mubr.bf16.mxu0 0
        %1676 = vmatmul.mubr.bf16.gmra.mrb[0].mxu0 %v1625
        %v1677 = vpop.f32.mrb[0].mxu0
        %v1678 = vadd.f32 0.0, %v1677
        %v1679 = vpop.f32.mrb[0].mxu0
        %v1680 = vpop.f32.mrb[0].mxu0
        %v1681 = vadd.f32 0.0, %v1680
        %v1682 = vpop.f32.mrb[0].mxu0
        %1683 = vmatprep.mubr.bf16.mxu0 0
        %1684 = vmatmul.mubr.bf16.gmra.mrb[0].mxu0 %v1627
        %v1685 = vpop.f32.mrb[0].mxu0
        %v1686 = vadd.f32 0.0, %v1685
        %v1687 = vpop.f32.mrb[0].mxu0
        %v1688 = vpop.f32.mrb[0].mxu0
        %v1689 = vadd.f32 0.0, %v1688
        %v1690 = vpop.f32.mrb[0].mxu0
        %1691 = vmatprep.mubr.bf16.mxu0 0
        %1692 = vmatmul.mubr.bf16.gmra.mrb[0].mxu0 %v1629
        %v1693 = vpop.f32.mrb[0].mxu0
        %v1694 = vadd.f32 0.0, %v1693
        %v1695 = vpop.f32.mrb[0].mxu0
        %v1696 = vpop.f32.mrb[0].mxu0
        %v1697 = vadd.f32 0.0, %v1696
        %v1698 = vpop.f32.mrb[0].mxu0
        %1699 = vdwg.mxu0
        %v1705 = vunpack.c.l.b16 %v1055
        %v1706 = vunpack.c.l.b16 %v1056
        %v1707 = vunpack.c.l.b16 %v1057
        %v1708 = vunpack.c.l.b16 %v1058
        %v1709 = vunpack.c.l.b16 %v1059
        %v1710 = vpack.c.b16 %v1706, %v1705
        %v1711 = vpack.c.b16 %v1708, %v1707
        %v1712 = vpack.c.b16 %v1709, %v1709
        %v1715 = vsel %vm1622, %v1048, 0
        %v1717 = vsel %vm1622, %v1050, 0
        %v1719 = vsel %vm1622, %v1052, 0
        %v1721 = vsel %vm1622, %v1054, 0
        %v1724 = vsel %vm1631, %v1712, 0
        %1726 = vmatprep.subr.bf16.mxu0 0
        %1727 = vmatpush1.bf16.msra.mxu0 %v1710
        %1728 = vmatprep.subr.bf16.mxu0 0
        %1729 = vmatpush1.bf16.msra.mxu0 %v1711
        %1730 = vmatprep.subr.bf16.mxu0 0
        %1731 = vmatpush1.bf16.msra.mxu0 %v1724
        %1732 = vmatprep.subr.bf16.mxu0 0
        %1733 = vmatpush1.bf16.msra.mxu0 0
        %1734 = vmatprep.subr.bf16.mxu0 0
        %1735 = vmatpush1.bf16.msra.mxu0 0
        %1736 = vmatprep.subr.bf16.mxu0 0
        %1737 = vmatpush1.bf16.msra.mxu0 0
        %1738 = vmatprep.subr.bf16.mxu0 0
        %1739 = vmatpush1.bf16.msra.mxu0 0
        %1740 = vmatprep.subr.bf16.mxu0 0
        %1741 = vmatpush1.bf16.msra.mxu0 0
        %1742 = vmatprep.subr.bf16.mxu0 0
        %1743 = vmatpush1.bf16.msra.mxu0 0
        %1744 = vmatprep.subr.bf16.mxu0 0
        %1745 = vmatpush1.bf16.msra.mxu0 0
        %1746 = vmatprep.subr.bf16.mxu0 0
        %1747 = vmatpush1.bf16.msra.mxu0 0
        %1748 = vmatprep.subr.bf16.mxu0 0
        %1749 = vmatpush1.bf16.msra.mxu0 0
        %1750 = vmatprep.subr.bf16.mxu0 0
        %1751 = vmatpush1.bf16.msra.mxu0 0
        %1752 = vmatprep.subr.bf16.mxu0 0
        %1753 = vmatpush1.bf16.msra.mxu0 0
        %1754 = vmatprep.subr.bf16.mxu0 0
        %1755 = vmatpush1.bf16.msra.mxu0 0
        %1756 = vmatprep.subr.bf16.mxu0 0
        %1757 = vmatpush1.bf16.msra.mxu0 0
        %1758 = vmatprep.mubr.bf16.mxu0 0
        %1759 = vmatmul.mubr.bf16.gmra.mrb[0].mxu0 %v1715
        %v1760 = vpop.f32.mrb[0].mxu0
        %v1761 = vadd.f32 %v1670, %v1760
        %v1762 = vpop.f32.mrb[0].mxu0
        %v1763 = vpop.f32.mrb[0].mxu0
        %v1764 = vadd.f32 %v1673, %v1763
        %v1765 = vpop.f32.mrb[0].mxu0
        %1766 = vmatprep.mubr.bf16.mxu0 0
        %1767 = vmatmul.mubr.bf16.gmra.mrb[0].mxu0 %v1717
        %v1768 = vpop.f32.mrb[0].mxu0
        %v1769 = vadd.f32 %v1678, %v1768
        %v1770 = vpop.f32.mrb[0].mxu0
        %v1771 = vpop.f32.mrb[0].mxu0
        %v1772 = vadd.f32 %v1681, %v1771
        %v1773 = vpop.f32.mrb[0].mxu0
        %1774 = vmatprep.mubr.bf16.mxu0 0
        %1775 = vmatmul.mubr.bf16.gmra.mrb[0].mxu0 %v1719
        %v1776 = vpop.f32.mrb[0].mxu0
        %v1777 = vadd.f32 %v1686, %v1776
        %v1778 = vpop.f32.mrb[0].mxu0
        %v1779 = vpop.f32.mrb[0].mxu0
        %v1780 = vadd.f32 %v1689, %v1779
        %v1781 = vpop.f32.mrb[0].mxu0
        %1782 = vmatprep.mubr.bf16.mxu0 0
        %1783 = vmatmul.mubr.bf16.gmra.mrb[0].mxu0 %v1721
        %v1784 = vpop.f32.mrb[0].mxu0
        %v1785 = vadd.f32 %v1694, %v1784
        %v1786 = vpop.f32.mrb[0].mxu0
        %v1787 = vpop.f32.mrb[0].mxu0
        %v1788 = vadd.f32 %v1697, %v1787
        %v1789 = vpop.f32.mrb[0].mxu0
        %1790 = vdwg.mxu0
        %v1791 = vld [vmem:[%s434] sm:$0xf]
        %v1792 = vld [vmem:[%s434 + $0x4] sm:$0x1]
        %v1793 = vld [vmem:[%s434 + $0x8] sm:$0xf]
        %v1794 = vld [vmem:[%s434 + $0xc] sm:$0x1]
        %v1795 = vld [vmem:[%s434 + $0x10] sm:$0xf]
        %v1796 = vld [vmem:[%s434 + $0x14] sm:$0x1]
        %v1797 = vld [vmem:[%s434 + $0x18] sm:$0xf]
        %v1798 = vld [vmem:[%s434 + $0x1c] sm:$0x1]
        %v1799 = vld [vmem:[%s434 + $0x20] sm:$0xf]
        %v1800 = vld [vmem:[%s434 + $0x24] sm:$0x1]
        %v1801 = vld [vmem:[%s434 + $0x28] sm:$0xf]
        %v1802 = vld [vmem:[%s434 + $0x2c] sm:$0x1]
        %v1803 = vld [vmem:[%s434 + $0x30] sm:$0xf]
        %v1804 = vld [vmem:[%s434 + $0x34] sm:$0x1]
        %v1805 = vld [vmem:[%s434 + $0x38] sm:$0xf]
        %v1806 = vld [vmem:[%s434 + $0x3c] sm:$0x1]
        %v1807 = vld [vmem:[%s434 + $0x40] sm:$0xf]
        %v1808 = vld [vmem:[%s434 + $0x44] sm:$0x1]
        %v1809 = vld [vmem:[%s434 + $0x48] sm:$0xf]
        %v1810 = vld [vmem:[%s434 + $0x50] sm:$0xf]
        %v1811 = vld [vmem:[%s434 + $0x58] sm:$0xf]
        %v1812 = vld [vmem:[%s434 + $0x60] sm:$0xf]
        %v1813 = vld [vmem:[%s434 + $0x68] sm:$0xf]
        %v1814 = vld [vmem:[%s434 + $0x70] sm:$0xf]
        %v1815 = vld [vmem:[%s434 + $0x78] sm:$0xf]
        %v1816 = vld [vmem:[%s434 + $0x80] sm:$0xf]
        %v1817 = vld [vmem:[%s434 + $0x88] sm:$0xf]
        %v1818 = vld [vmem:[%s434 + $0x90] sm:$0xf]
        %v1819 = vld [vmem:[%s434 + $0x94] sm:$0x1]
        %v1820 = vld [vmem:[%s434 + $0x98] sm:$0xf]
        %v1821 = vld [vmem:[%s434 + $0x9c] sm:$0x1]
        %v1822 = vld [vmem:[%s434 + $0xa0] sm:$0xf]
        %v1823 = vld [vmem:[%s434 + $0xa4] sm:$0x1]
        %v1824 = vld [vmem:[%s434 + $0xa8] sm:$0xf]
        %v1825 = vld [vmem:[%s434 + $0xac] sm:$0x1]
        %v1826 = vld [vmem:[%s434 + $0xb0] sm:$0xf]
        %v1827 = vld [vmem:[%s434 + $0xb4] sm:$0x1]
        %v1828 = vld [vmem:[%s434 + $0xb8] sm:$0xf]
        %v1829 = vld [vmem:[%s434 + $0xbc] sm:$0x1]
        %v1830 = vld [vmem:[%s434 + $0xc0] sm:$0xf]
        %v1831 = vld [vmem:[%s434 + $0xc4] sm:$0x1]
        %v1832 = vld [vmem:[%s434 + $0xc8] sm:$0xf]
        %v1833 = vld [vmem:[%s434 + $0xcc] sm:$0x1]
        %v1834 = vld [vmem:[%s434 + $0xd8] sm:$0xf]
        %v1835 = vld [vmem:[%s434 + $0xe0] sm:$0xf]
        %v1836 = vld [vmem:[%s434 + $0xe8] sm:$0xf]
        %v1837 = vld [vmem:[%s434 + $0xf0] sm:$0xf]
        %v1838 = vld [vmem:[%s434 + $0xf8] sm:$0xf]
        %v1839 = vld [vmem:[%s434 + $0x100] sm:$0xf]
        %v1840 = vld [vmem:[%s434 + $0x108] sm:$0xf]
        %v1841 = vld [vmem:[%s434 + $0x110] sm:$0xf]
        %v1843 = vshrl.u32 %v1791, 16
        %v1845 = vrot.slane %v1843, 4
        %v1846 = vshll.u32 %v1791, 16
        %v1848 = vrot.slane %v1846, 5
        %v1849 = vor.u32 %v1845, %v1848
        %v1850 = vrot.slane %v1849, 4
        %v1852 = vshll.u32 %v1792, 16
        %v1854 = vrot.slane %v1852, 5
        %v1855 = vsel %vm555, %v1850, %v1854
        %v1857 = vshrl.u32 %v1793, 16
        %v1859 = vrot.slane %v1857, 4
        %v1860 = vshll.u32 %v1793, 16
        %v1862 = vrot.slane %v1860, 5
        %v1863 = vor.u32 %v1859, %v1862
        %v1864 = vrot.slane %v1863, 4
        %v1866 = vshll.u32 %v1794, 16
        %v1868 = vrot.slane %v1866, 5
        %v1869 = vsel %vm555, %v1864, %v1868
        %v1871 = vshrl.u32 %v1795, 16
        %v1873 = vrot.slane %v1871, 4
        %v1874 = vshll.u32 %v1795, 16
        %v1876 = vrot.slane %v1874, 5
        %v1877 = vor.u32 %v1873, %v1876
        %v1878 = vrot.slane %v1877, 4
        %v1880 = vshll.u32 %v1796, 16
        %v1882 = vrot.slane %v1880, 5
        %v1883 = vsel %vm555, %v1878, %v1882
        %v1885 = vshrl.u32 %v1797, 16
        %v1887 = vrot.slane %v1885, 4
        %v1888 = vshll.u32 %v1797, 16
        %v1890 = vrot.slane %v1888, 5
        %v1891 = vor.u32 %v1887, %v1890
        %v1892 = vrot.slane %v1891, 4
        %v1894 = vshll.u32 %v1798, 16
        %v1896 = vrot.slane %v1894, 5
        %v1897 = vsel %vm555, %v1892, %v1896
        %v1899 = vshrl.u32 %v1799, 16
        %v1901 = vrot.slane %v1899, 4
        %v1902 = vshll.u32 %v1799, 16
        %v1904 = vrot.slane %v1902, 5
        %v1905 = vor.u32 %v1901, %v1904
        %v1906 = vrot.slane %v1905, 4
        %v1908 = vshll.u32 %v1800, 16
        %v1910 = vrot.slane %v1908, 5
        %v1911 = vsel %vm555, %v1906, %v1910
        %v1913 = vshrl.u32 %v1801, 16
        %v1915 = vrot.slane %v1913, 4
        %v1916 = vshll.u32 %v1801, 16
        %v1918 = vrot.slane %v1916, 5
        %v1919 = vor.u32 %v1915, %v1918
        %v1920 = vrot.slane %v1919, 4
        %v1922 = vshll.u32 %v1802, 16
        %v1924 = vrot.slane %v1922, 5
        %v1925 = vsel %vm555, %v1920, %v1924
        %v1927 = vshrl.u32 %v1803, 16
        %v1929 = vrot.slane %v1927, 4
        %v1930 = vshll.u32 %v1803, 16
        %v1932 = vrot.slane %v1930, 5
        %v1933 = vor.u32 %v1929, %v1932
        %v1934 = vrot.slane %v1933, 4
        %v1936 = vshll.u32 %v1804, 16
        %v1938 = vrot.slane %v1936, 5
        %v1939 = vsel %vm555, %v1934, %v1938
        %v1941 = vshrl.u32 %v1805, 16
        %v1943 = vrot.slane %v1941, 4
        %v1944 = vshll.u32 %v1805, 16
        %v1946 = vrot.slane %v1944, 5
        %v1947 = vor.u32 %v1943, %v1946
        %v1948 = vrot.slane %v1947, 4
        %v1950 = vshll.u32 %v1806, 16
        %v1952 = vrot.slane %v1950, 5
        %v1953 = vsel %vm555, %v1948, %v1952
        %v1955 = vshrl.u32 %v1818, 16
        %v1957 = vrot.slane %v1955, 4
        %v1958 = vshll.u32 %v1818, 16
        %v1960 = vrot.slane %v1958, 5
        %v1961 = vor.u32 %v1957, %v1960
        %v1962 = vrot.slane %v1961, 4
        %v1964 = vshll.u32 %v1819, 16
        %v1966 = vrot.slane %v1964, 5
        %v1967 = vsel %vm555, %v1962, %v1966
        %v1969 = vshrl.u32 %v1820, 16
        %v1971 = vrot.slane %v1969, 4
        %v1972 = vshll.u32 %v1820, 16
        %v1974 = vrot.slane %v1972, 5
        %v1975 = vor.u32 %v1971, %v1974
        %v1976 = vrot.slane %v1975, 4
        %v1978 = vshll.u32 %v1821, 16
        %v1980 = vrot.slane %v1978, 5
        %v1981 = vsel %vm555, %v1976, %v1980
        %v1983 = vshrl.u32 %v1822, 16
        %v1985 = vrot.slane %v1983, 4
        %v1986 = vshll.u32 %v1822, 16
        %v1988 = vrot.slane %v1986, 5
        %v1989 = vor.u32 %v1985, %v1988
        %v1990 = vrot.slane %v1989, 4
        %v1992 = vshll.u32 %v1823, 16
        %v1994 = vrot.slane %v1992, 5
        %v1995 = vsel %vm555, %v1990, %v1994
        %v1997 = vshrl.u32 %v1824, 16
        %v1999 = vrot.slane %v1997, 4
        %v2000 = vshll.u32 %v1824, 16
        %v2002 = vrot.slane %v2000, 5
        %v2003 = vor.u32 %v1999, %v2002
        %v2004 = vrot.slane %v2003, 4
        %v2006 = vshll.u32 %v1825, 16
        %v2008 = vrot.slane %v2006, 5
        %v2009 = vsel %vm555, %v2004, %v2008
        %v2011 = vshrl.u32 %v1826, 16
        %v2013 = vrot.slane %v2011, 4
        %v2014 = vshll.u32 %v1826, 16
        %v2016 = vrot.slane %v2014, 5
        %v2017 = vor.u32 %v2013, %v2016
        %v2018 = vrot.slane %v2017, 4
        %v2020 = vshll.u32 %v1827, 16
        %v2022 = vrot.slane %v2020, 5
        %v2023 = vsel %vm555, %v2018, %v2022
        %v2025 = vshrl.u32 %v1828, 16
        %v2027 = vrot.slane %v2025, 4
        %v2028 = vshll.u32 %v1828, 16
        %v2030 = vrot.slane %v2028, 5
        %v2031 = vor.u32 %v2027, %v2030
        %v2032 = vrot.slane %v2031, 4
        %v2034 = vshll.u32 %v1829, 16
        %v2036 = vrot.slane %v2034, 5
        %v2037 = vsel %vm555, %v2032, %v2036
        %v2039 = vshrl.u32 %v1830, 16
        %v2041 = vrot.slane %v2039, 4
        %v2042 = vshll.u32 %v1830, 16
        %v2044 = vrot.slane %v2042, 5
        %v2045 = vor.u32 %v2041, %v2044
        %v2046 = vrot.slane %v2045, 4
        %v2048 = vshll.u32 %v1831, 16
        %v2050 = vrot.slane %v2048, 5
        %v2051 = vsel %vm555, %v2046, %v2050
        %v2053 = vshrl.u32 %v1832, 16
        %v2055 = vrot.slane %v2053, 4
        %v2056 = vshll.u32 %v1832, 16
        %v2058 = vrot.slane %v2056, 5
        %v2059 = vor.u32 %v2055, %v2058
        %v2060 = vrot.slane %v2059, 4
        %v2062 = vshll.u32 %v1833, 16
        %v2064 = vrot.slane %v2062, 5
        %v2065 = vsel %vm555, %v2060, %v2064
        %v2067 = vshrl.u32 %v1807, 16
        %v2069 = vrot.slane %v2067, 4
        %v2070 = vshll.u32 %v1807, 16
        %v2072 = vrot.slane %v2070, 5
        %v2073 = vor.u32 %v2069, %v2072
        %v2074 = vrot.slane %v2073, 4
        %v2076 = vshll.u32 %v1808, 16
        %v2078 = vrot.slane %v2076, 5
        %v2079 = vsel %vm555, %v2074, %v2078
        %v2088 = vunpack.c.l.b16 %v1791
        %v2089 = vunpack.c.l.b16 %v1793
        %v2090 = vunpack.c.l.b16 %v1795
        %v2091 = vunpack.c.l.b16 %v1797
        %v2092 = vunpack.c.l.b16 %v1799
        %v2093 = vunpack.c.l.b16 %v1801
        %v2094 = vunpack.c.l.b16 %v1803
        %v2095 = vunpack.c.l.b16 %v1805
        %v2096 = vpack.c.b16 %v2089, %v2088
        %v2097 = vpack.c.b16 %v2091, %v2090
        %v2098 = vpack.c.b16 %v2093, %v2092
        %v2099 = vpack.c.b16 %v2095, %v2094
        %v2108 = vunpack.c.l.b16 %v1809
        %v2109 = vunpack.c.l.b16 %v1810
        %v2110 = vunpack.c.l.b16 %v1811
        %v2111 = vunpack.c.l.b16 %v1812
        %v2112 = vunpack.c.l.b16 %v1813
        %v2113 = vunpack.c.l.b16 %v1814
        %v2114 = vunpack.c.l.b16 %v1815
        %v2115 = vunpack.c.l.b16 %v1816
        %v2116 = vpack.c.b16 %v2109, %v2108
        %v2117 = vpack.c.b16 %v2111, %v2110
        %v2118 = vpack.c.b16 %v2113, %v2112
        %v2119 = vpack.c.b16 %v2115, %v2114
        %2120 = vrot.lane.b32.xlu0 %v2116, 4
        %v2121 = vpop.permute.xlu0 %2120
        %2122 = vrot.lane.b32.xlu0 %v2117, 4
        %v2123 = vpop.permute.xlu0 %2122
        %2124 = vrot.lane.b32.xlu0 %v2118, 4
        %v2125 = vpop.permute.xlu0 %2124
        %2126 = vrot.lane.b32.xlu0 %v2119, 4
        %v2127 = vpop.permute.xlu0 %2126
        %v2128 = vunpack.c.l.b16 %v1855
        %v2129 = vunpack.c.l.b16 %v1869
        %v2130 = vunpack.c.l.b16 %v1883
        %v2131 = vunpack.c.l.b16 %v1897
        %v2132 = vunpack.c.l.b16 %v1911
        %v2133 = vunpack.c.l.b16 %v1925
        %v2134 = vunpack.c.l.b16 %v1939
        %v2135 = vunpack.c.l.b16 %v1953
        %v2136 = vpack.c.b16 %v2129, %v2128
        %v2137 = vpack.c.b16 %v2131, %v2130
        %v2138 = vpack.c.b16 %v2133, %v2132
        %v2139 = vpack.c.b16 %v2135, %v2134
        %2140 = vrot.lane.b32.xlu0 %v2136, 8
        %v2141 = vpop.permute.xlu0 %2140
        %2142 = vrot.lane.b32.xlu0 %v2137, 8
        %v2143 = vpop.permute.xlu0 %2142
        %2144 = vrot.lane.b32.xlu0 %v2138, 8
        %v2145 = vpop.permute.xlu0 %2144
        %2146 = vrot.lane.b32.xlu0 %v2139, 8
        %v2147 = vpop.permute.xlu0 %2146
        %v2156 = vunpack.c.l.b16 %v1818
        %v2157 = vunpack.c.l.b16 %v1820
        %v2158 = vunpack.c.l.b16 %v1822
        %v2159 = vunpack.c.l.b16 %v1824
        %v2160 = vunpack.c.l.b16 %v1826
        %v2161 = vunpack.c.l.b16 %v1828
        %v2162 = vunpack.c.l.b16 %v1830
        %v2163 = vunpack.c.l.b16 %v1832
        %v2164 = vpack.c.b16 %v2157, %v2156
        %v2165 = vpack.c.b16 %v2159, %v2158
        %v2166 = vpack.c.b16 %v2161, %v2160
        %v2167 = vpack.c.b16 %v2163, %v2162
        %2168 = vrot.lane.b32.xlu0 %v2164, 12
        %v2169 = vpop.permute.xlu0 %2168
        %2170 = vrot.lane.b32.xlu0 %v2165, 12
        %v2171 = vpop.permute.xlu0 %2170
        %2172 = vrot.lane.b32.xlu0 %v2166, 12
        %v2173 = vpop.permute.xlu0 %2172
        %2174 = vrot.lane.b32.xlu0 %v2167, 12
        %v2175 = vpop.permute.xlu0 %2174
        %v2184 = vunpack.c.l.b16 %v1834
        %v2185 = vunpack.c.l.b16 %v1835
        %v2186 = vunpack.c.l.b16 %v1836
        %v2187 = vunpack.c.l.b16 %v1837
        %v2188 = vunpack.c.l.b16 %v1838
        %v2189 = vunpack.c.l.b16 %v1839
        %v2190 = vunpack.c.l.b16 %v1840
        %v2191 = vunpack.c.l.b16 %v1841
        %v2192 = vpack.c.b16 %v2185, %v2184
        %v2193 = vpack.c.b16 %v2187, %v2186
        %v2194 = vpack.c.b16 %v2189, %v2188
        %v2195 = vpack.c.b16 %v2191, %v2190
        %2196 = vrot.lane.b32.xlu0 %v2192, 16
        %v2197 = vpop.permute.xlu0 %2196
        %2198 = vrot.lane.b32.xlu0 %v2193, 16
        %v2199 = vpop.permute.xlu0 %2198
        %2200 = vrot.lane.b32.xlu0 %v2194, 16
        %v2201 = vpop.permute.xlu0 %2200
        %2202 = vrot.lane.b32.xlu0 %v2195, 16
        %v2203 = vpop.permute.xlu0 %2202
        %v2204 = vunpack.c.l.b16 %v1967
        %v2205 = vunpack.c.l.b16 %v1981
        %v2206 = vunpack.c.l.b16 %v1995
        %v2207 = vunpack.c.l.b16 %v2009
        %v2208 = vunpack.c.l.b16 %v2023
        %v2209 = vunpack.c.l.b16 %v2037
        %v2210 = vunpack.c.l.b16 %v2051
        %v2211 = vunpack.c.l.b16 %v2065
        %v2212 = vpack.c.b16 %v2205, %v2204
        %v2213 = vpack.c.b16 %v2207, %v2206
        %v2214 = vpack.c.b16 %v2209, %v2208
        %v2215 = vpack.c.b16 %v2211, %v2210
        %2216 = vrot.lane.b32.xlu0 %v2212, 20
        %v2217 = vpop.permute.xlu0 %2216
        %2218 = vrot.lane.b32.xlu0 %v2213, 20
        %v2219 = vpop.permute.xlu0 %2218
        %2220 = vrot.lane.b32.xlu0 %v2214, 20
        %v2221 = vpop.permute.xlu0 %2220
        %2222 = vrot.lane.b32.xlu0 %v2215, 20
        %v2223 = vpop.permute.xlu0 %2222
        %v2225 = vunpack.c.l.b16 %v1807
        %v2226 = vpack.c.b16 %v2090, %v2089
        %v2227 = vpack.c.b16 %v2092, %v2091
        %v2228 = vpack.c.b16 %v2094, %v2093
        %v2229 = vpack.c.b16 %v2225, %v2095
        %2230 = vrot.lane.b32.xlu0 %v2226, 24
        %v2231 = vpop.permute.xlu0 %2230
        %2232 = vrot.lane.b32.xlu0 %v2227, 24
        %v2233 = vpop.permute.xlu0 %2232
        %2234 = vrot.lane.b32.xlu0 %v2228, 24
        %v2235 = vpop.permute.xlu0 %2234
        %2236 = vrot.lane.b32.xlu0 %v2229, 24
        %v2237 = vpop.permute.xlu0 %2236
        %v2239 = vunpack.c.l.b16 %v1817
        %v2240 = vpack.c.b16 %v2110, %v2109
        %v2241 = vpack.c.b16 %v2112, %v2111
        %v2242 = vpack.c.b16 %v2114, %v2113
        %v2243 = vpack.c.b16 %v2239, %v2115
        %2244 = vrot.lane.b32.xlu0 %v2240, 28
        %v2245 = vpop.permute.xlu0 %2244
        %2246 = vrot.lane.b32.xlu0 %v2241, 28
        %v2247 = vpop.permute.xlu0 %2246
        %2248 = vrot.lane.b32.xlu0 %v2242, 28
        %v2249 = vpop.permute.xlu0 %2248
        %2250 = vrot.lane.b32.xlu0 %v2243, 28
        %v2251 = vpop.permute.xlu0 %2250
        %v2252 = vunpack.c.l.b16 %v2079
        %v2253 = vpack.c.b16 %v2130, %v2129
        %v2254 = vpack.c.b16 %v2132, %v2131
        %v2255 = vpack.c.b16 %v2134, %v2133
        %v2256 = vpack.c.b16 %v2252, %v2135
        %2257 = vrot.lane.b32.xlu0 %v2253, 32
        %v2258 = vpop.permute.xlu0 %2257
        %2259 = vrot.lane.b32.xlu0 %v2254, 32
        %v2260 = vpop.permute.xlu0 %2259
        %2261 = vrot.lane.b32.xlu0 %v2255, 32
        %v2262 = vpop.permute.xlu0 %2261
        %2263 = vrot.lane.b32.xlu0 %v2256, 32
        %v2264 = vpop.permute.xlu0 %2263
        %v2267 = vsel %vm979, %v2096, %v2121
        %v2270 = vsel %vm979, %v2097, %v2123
        %v2273 = vsel %vm979, %v2098, %v2125
        %v2276 = vsel %vm979, %v2099, %v2127
        %v2278 = vsel %vm992, %v2267, %v2141
        %v2280 = vsel %vm992, %v2270, %v2143
        %v2282 = vsel %vm992, %v2273, %v2145
        %v2284 = vsel %vm992, %v2276, %v2147
        %v2286 = vsel %vm1001, %v2278, %v2169
        %v2288 = vsel %vm1001, %v2280, %v2171
        %v2290 = vsel %vm1001, %v2282, %v2173
        %v2292 = vsel %vm1001, %v2284, %v2175
        %v2294 = vsel %vm1010, %v2286, %v2197
        %v2296 = vsel %vm1010, %v2288, %v2199
        %v2298 = vsel %vm1010, %v2290, %v2201
        %v2300 = vsel %vm1010, %v2292, %v2203
        %v2302 = vsel %vm1019, %v2294, %v2217
        %v2304 = vsel %vm1019, %v2296, %v2219
        %v2306 = vsel %vm1019, %v2298, %v2221
        %v2308 = vsel %vm1019, %v2300, %v2223
        %v2310 = vsel %vm1028, %v2302, %v2231
        %v2312 = vsel %vm1028, %v2304, %v2233
        %v2314 = vsel %vm1028, %v2306, %v2235
        %v2316 = vsel %vm1028, %v2308, %v2237
        %v2318 = vsel %vm1037, %v2310, %v2245
        %v2320 = vsel %vm1037, %v2312, %v2247
        %v2322 = vsel %vm1037, %v2314, %v2249
        %v2324 = vsel %vm1037, %v2316, %v2251
        %v2326 = vsel %vm1046, %v2318, %v2258
        %v2328 = vsel %vm1046, %v2320, %v2260
        %v2330 = vsel %vm1046, %v2322, %v2262
        %v2332 = vsel %vm1046, %v2324, %v2264
        %v2333 = vld [vmem:[#allocation11] sm:$0xf]
        %v2334 = vld [vmem:[#allocation11 + $0x4] sm:$0xf]
        %v2335 = vld [vmem:[#allocation11 + $0x8] sm:$0xf]
        %v2336 = vld [vmem:[#allocation11 + $0xc] sm:$0xf]
        %v2337 = vld [vmem:[#allocation11 + $0x10] sm:$0x3]
        %v2343 = vunpack.c.l.b16 %v2333
        %v2344 = vunpack.c.l.b16 %v2334
        %v2345 = vunpack.c.l.b16 %v2335
        %v2346 = vunpack.c.l.b16 %v2336
        %v2347 = vunpack.c.l.b16 %v2337
        %v2348 = vpack.c.b16 %v2344, %v2343
        %v2349 = vpack.c.b16 %v2346, %v2345
        %v2350 = vpack.c.b16 %v2347, %v2347
        %v2353 = vsel %vm1622, %v2326, 0
        %v2355 = vsel %vm1622, %v2328, 0
        %v2357 = vsel %vm1622, %v2330, 0
        %v2359 = vsel %vm1622, %v2332, 0
        %v2362 = vsel %vm1631, %v2350, 0
        %2364 = vmatprep.subr.bf16.mxu0 0
        %2365 = vmatpush1.bf16.msra.mxu0 %v2348
        %2366 = vmatprep.subr.bf16.mxu0 0
        %2367 = vmatpush1.bf16.msra.mxu0 %v2349
        %2368 = vmatprep.subr.bf16.mxu0 0
        %2369 = vmatpush1.bf16.msra.mxu0 %v2362
        %2370 = vmatprep.subr.bf16.mxu0 0
        %2371 = vmatpush1.bf16.msra.mxu0 0
        %2372 = vmatprep.subr.bf16.mxu0 0
        %2373 = vmatpush1.bf16.msra.mxu0 0
        %2374 = vmatprep.subr.bf16.mxu0 0
        %2375 = vmatpush1.bf16.msra.mxu0 0
        %2376 = vmatprep.subr.bf16.mxu0 0
        %2377 = vmatpush1.bf16.msra.mxu0 0
        %2378 = vmatprep.subr.bf16.mxu0 0
        %2379 = vmatpush1.bf16.msra.mxu0 0
        %2380 = vmatprep.subr.bf16.mxu0 0
        %2381 = vmatpush1.bf16.msra.mxu0 0
        %2382 = vmatprep.subr.bf16.mxu0 0
        %2383 = vmatpush1.bf16.msra.mxu0 0
        %2384 = vmatprep.subr.bf16.mxu0 0
        %2385 = vmatpush1.bf16.msra.mxu0 0
        %2386 = vmatprep.subr.bf16.mxu0 0
        %2387 = vmatpush1.bf16.msra.mxu0 0
        %2388 = vmatprep.subr.bf16.mxu0 0
        %2389 = vmatpush1.bf16.msra.mxu0 0
        %2390 = vmatprep.subr.bf16.mxu0 0
        %2391 = vmatpush1.bf16.msra.mxu0 0
        %2392 = vmatprep.subr.bf16.mxu0 0
        %2393 = vmatpush1.bf16.msra.mxu0 0
        %2394 = vmatprep.subr.bf16.mxu0 0
        %2395 = vmatpush1.bf16.msra.mxu0 0
        %2396 = vmatprep.mubr.bf16.mxu0 0
        %2397 = vmatmul.mubr.bf16.gmra.mrb[0].mxu0 %v2353
        %v2398 = vpop.f32.mrb[0].mxu0
        %v2399 = vadd.f32 0.0, %v2398
        %v2400 = vpop.f32.mrb[0].mxu0
        %v2401 = vpop.f32.mrb[0].mxu0
        %v2402 = vadd.f32 0.0, %v2401
        %v2403 = vpop.f32.mrb[0].mxu0
        %2404 = vmatprep.mubr.bf16.mxu0 0
        %2405 = vmatmul.mubr.bf16.gmra.mrb[0].mxu0 %v2355
        %v2406 = vpop.f32.mrb[0].mxu0
        %v2407 = vadd.f32 0.0, %v2406
        %v2408 = vpop.f32.mrb[0].mxu0
        %v2409 = vpop.f32.mrb[0].mxu0
        %v2410 = vadd.f32 0.0, %v2409
        %v2411 = vpop.f32.mrb[0].mxu0
        %2412 = vmatprep.mubr.bf16.mxu0 0
        %2413 = vmatmul.mubr.bf16.gmra.mrb[0].mxu0 %v2357
        %v2414 = vpop.f32.mrb[0].mxu0
        %v2415 = vadd.f32 0.0, %v2414
        %v2416 = vpop.f32.mrb[0].mxu0
        %v2417 = vpop.f32.mrb[0].mxu0
        %v2418 = vadd.f32 0.0, %v2417
        %v2419 = vpop.f32.mrb[0].mxu0
        %2420 = vmatprep.mubr.bf16.mxu0 0
        %2421 = vmatmul.mubr.bf16.gmra.mrb[0].mxu0 %v2359
        %v2422 = vpop.f32.mrb[0].mxu0
        %v2423 = vadd.f32 0.0, %v2422
        %v2424 = vpop.f32.mrb[0].mxu0
        %v2425 = vpop.f32.mrb[0].mxu0
        %v2426 = vadd.f32 0.0, %v2425
        %v2427 = vpop.f32.mrb[0].mxu0
        %2428 = vdwg.mxu0
        %v2429 = vadd.f32 %v1761, %v2399
        %v2430 = vadd.f32 %v1764, %v2402
        %v2431 = vadd.f32 %v1769, %v2407
        %v2432 = vadd.f32 %v1772, %v2410
        %v2433 = vadd.f32 %v1777, %v2415
        %v2434 = vadd.f32 %v1780, %v2418
        %v2435 = vadd.f32 %v1785, %v2423
        %v2436 = vadd.f32 %v1788, %v2426
        %v2437 = vpack.c.bf16 %v2430, %v2429
        %v2438 = vpack.c.bf16 %v2432, %v2431
        %v2439 = vpack.c.bf16 %v2434, %v2433
        %v2440 = vpack.c.bf16 %v2436, %v2435
        %v2445 = vunpack.c.l.b16 %v2437
        %v2446 = vunpack.c.h.b16 %v2437
        %v2447 = vunpack.c.l.b16 %v2438
        %v2448 = vunpack.c.h.b16 %v2438
        %v2449 = vunpack.c.l.b16 %v2439
        %v2450 = vunpack.c.h.b16 %v2439
        %v2451 = vunpack.c.l.b16 %v2440
        %v2452 = vunpack.c.h.b16 %v2440
        %v2453 = vpack.c.b16 %v2445, %v2445
        %v2454 = vpack.c.b16 %v2446, %v2446
        %v2455 = vpack.c.b16 %v2447, %v2447
        %v2456 = vpack.c.b16 %v2448, %v2448
        %v2457 = vpack.c.b16 %v2449, %v2449
        %v2458 = vpack.c.b16 %v2450, %v2450
        %v2459 = vpack.c.b16 %v2451, %v2451
        %v2460 = vpack.c.b16 %v2452, %v2452
        %vm2469 = vcmask 27648
        %2470 = vst.msk [vmem:[%s484] sm:$0xf] %vm2469, %v2453
        %2471 = vst.msk [vmem:[%s484 + $0x4] sm:$0xf] %vm2469, %v2454
        %2472 = vst.msk [vmem:[%s484 + $0x8] sm:$0xf] %vm2469, %v2455
        %2473 = vst.msk [vmem:[%s484 + $0xc] sm:$0xf] %vm2469, %v2456
        %2474 = vst.msk [vmem:[%s484 + $0x10] sm:$0xf] %vm2469, %v2457
        %2475 = vst.msk [vmem:[%s484 + $0x14] sm:$0xf] %vm2469, %v2458
        %2476 = vst.msk [vmem:[%s484 + $0x18] sm:$0xf] %vm2469, %v2459
        %2477 = vst.msk [vmem:[%s484 + $0x1c] sm:$0xf] %vm2469, %v2460
        %2478 = vrot.lane.b32.xlu0 %v2453, 124
        %v2479 = vpop.permute.xlu0 %2478
        %2480 = vrot.lane.b32.xlu0 %v2454, 124
        %v2481 = vpop.permute.xlu0 %2480
        %2482 = vrot.lane.b32.xlu0 %v2455, 124
        %v2483 = vpop.permute.xlu0 %2482
        %2484 = vrot.lane.b32.xlu0 %v2456, 124
        %v2485 = vpop.permute.xlu0 %2484
        %2486 = vrot.lane.b32.xlu0 %v2457, 124
        %v2487 = vpop.permute.xlu0 %2486
        %2488 = vrot.lane.b32.xlu0 %v2458, 124
        %v2489 = vpop.permute.xlu0 %2488
        %2490 = vrot.lane.b32.xlu0 %v2459, 124
        %v2491 = vpop.permute.xlu0 %2490
        %2492 = vrot.lane.b32.xlu0 %v2460, 124
        %v2493 = vpop.permute.xlu0 %2492
        %vm2502 = vcmask 60416
        %2503 = vst.msk [vmem:[%s491] sm:$0xf] %vm2502, %v2479
        %2504 = vst.msk [vmem:[%s491 + $0x4] sm:$0xf] %vm2502, %v2481
        %2505 = vst.msk [vmem:[%s491 + $0x8] sm:$0xf] %vm2502, %v2483
        %2506 = vst.msk [vmem:[%s491 + $0xc] sm:$0xf] %vm2502, %v2485
        %2507 = vst.msk [vmem:[%s491 + $0x10] sm:$0xf] %vm2502, %v2487
        %2508 = vst.msk [vmem:[%s491 + $0x14] sm:$0xf] %vm2502, %v2489
        %2509 = vst.msk [vmem:[%s491 + $0x18] sm:$0xf] %vm2502, %v2491
        %2510 = vst.msk [vmem:[%s491 + $0x1c] sm:$0xf] %vm2502, %v2493
        %v2511 = vsel %vm1001, %v2429, 0.0
        %v2512 = vsel %vm1001, %v2430, 0.0
        %v2513 = vadd.f32 %v2511, %v2512
        %v2514 = vsel %vm1001, %v2431, 0.0
        %v2515 = vadd.f32 %v2513, %v2514
        %v2516 = vsel %vm1001, %v2432, 0.0
        %v2517 = vadd.f32 %v2515, %v2516
        %v2518 = vsel %vm1001, %v2433, 0.0
        %v2519 = vadd.f32 %v2517, %v2518
        %v2520 = vsel %vm1001, %v2434, 0.0
        %v2521 = vadd.f32 %v2519, %v2520
        %v2522 = vsel %vm1001, %v2435, 0.0
        %v2523 = vadd.f32 %v2521, %v2522
        %v2524 = vsel %vm1001, %v2436, 0.0
        %v2525 = vadd.f32 %v2523, %v2524
        %v2526 = vrot.slane %v2525, 4
        %v2527 = vadd.f32 %v2525, %v2526
        %v2528 = vrot.slane %v2527, 2
        %v2529 = vadd.f32 %v2527, %v2528
        %v2530 = vrot.slane %v2529, 1
        %v2531 = vadd.f32 %v2529, %v2530
        %v2532 = vmul.f32 %v2429, %v2429
        %v2533 = vmul.f32 %v2430, %v2430
        %v2534 = vmul.f32 %v2431, %v2431
        %v2535 = vmul.f32 %v2432, %v2432
        %v2536 = vmul.f32 %v2433, %v2433
        %v2537 = vmul.f32 %v2434, %v2434
        %v2538 = vmul.f32 %v2435, %v2435
        %v2539 = vmul.f32 %v2436, %v2436
        %v2540 = vsel %vm1001, %v2532, 0.0
        %v2541 = vsel %vm1001, %v2533, 0.0
        %v2542 = vadd.f32 %v2540, %v2541
        %v2543 = vsel %vm1001, %v2534, 0.0
        %v2544 = vadd.f32 %v2542, %v2543
        %v2545 = vsel %vm1001, %v2535, 0.0
        %v2546 = vadd.f32 %v2544, %v2545
        %v2547 = vsel %vm1001, %v2536, 0.0
        %v2548 = vadd.f32 %v2546, %v2547
        %v2549 = vsel %vm1001, %v2537, 0.0
        %v2550 = vadd.f32 %v2548, %v2549
        %v2551 = vsel %vm1001, %v2538, 0.0
        %v2552 = vadd.f32 %v2550, %v2551
        %v2553 = vsel %vm1001, %v2539, 0.0
        %v2554 = vadd.f32 %v2552, %v2553
        %v2555 = vrot.slane %v2554, 4
        %v2556 = vadd.f32 %v2554, %v2555
        %v2557 = vrot.slane %v2556, 2
        %v2558 = vadd.f32 %v2556, %v2557
        %v2559 = vrot.slane %v2558, 1
        %v2560 = vadd.f32 %v2558, %v2559
        %vm2561 = vcmask 1040384
        %v2562 = vsel %vm2561, %v2531, %v2560
        %vm2563 = vcmask 91136
        %2564 = vst.msk [vmem:[%s498] sm:$0x3] %vm2563, %v2562
        %s2565 = sand.u32 %s207, 1
        %s2566 = scalar_lea.sflag [#allocation4], %s2565
        %s2567 = sand.u32 %s207, 1
        %s2568 = smul.addr %s2567, 32
        %s2569 = scalar_lea.vmem [#allocation13], %s2568
        %s2570 = sand.u32 %s34, 1
        %s2571 = scalar_lea.sflag [#allocation15], %s2570
        %s2572 = sand.u32 %s235, 1
        %s2573 = smul.addr %s2572, 32
        %s2574 = scalar_lea.vmem [#allocation14], %s2573
        %s2575 = sand.u32 %s34, 1
        %s2576 = scalar_lea.sflag [#allocation15], %s2575
        %s2577 = sand.u32 %s263, 1
        %s2578 = smul.addr %s2577, 2
        %s2579 = scalar_lea.vmem [#allocation16], %s2578
        // Predicated region
        $region69: #{res_block_down.3} parent=43 // pred_check
          %p2580 = pneg %p217
        $region70: #{res_block_down.3} parent=43 // pred_check_branch
          %2582 = sbr.rel (%p2580) target = $region72
        $region71: #{res_block_down.3} parent=43 // pred_region
          %s2584 = ssub.s32 512, 512
          %2585 = vsyncadd %s2566, %s2584
          %s2586 = smul.addr %s39, 8
          %s2587 = smul.addr %s38, 32
          %s2588 = sadd.s32 %s2586, %s2587
          %s2589 = smul.addr %s2588, 64
          %s2590 = scalar_lea.hbm %s6, %s2589
          %s2591 = sshll.u32 %s2569, 4
          %s2592 = int_to_ptr.vmem [resolvable:$true] %s2591
          %2597 = dma.vmem_to_hbm [thread:$0]  %s2592, 512, %s2590, %s2566, 64, 64, 4
        $region72: #{res_block_down.3} parent=43 // pred_fallthru
          _
        // Predicated region
        $region73: #{res_block_down.3} parent=43 // pred_check
          %p2598 = pneg %p245
        $region74: #{res_block_down.3} parent=43 // pred_check_branch
          %2600 = sbr.rel (%p2598) target = $region76
        $region75: #{res_block_down.3} parent=43 // pred_region
          %s2602 = ssub.s32 512, 512
          %2603 = vsyncadd %s2571, %s2602
          %s2604 = smul.addr %s39, 8
          %s2605 = smul.addr %s38, 32
          %s2606 = sadd.s32 %s2604, %s2605
          %s2607 = smul.addr %s2606, 64
          %s2608 = scalar_lea.hbm %s7, %s2607
          %s2609 = sshll.u32 %s2574, 4
          %s2610 = int_to_ptr.vmem [resolvable:$true] %s2609
          %2615 = dma.vmem_to_hbm [thread:$0]  %s2610, 512, %s2608, %s2571, 64, 64, 4
        $region76: #{res_block_down.3} parent=43 // pred_fallthru
          _
        // Predicated region
        $region77: #{res_block_down.3} parent=43 // pred_check
          %p2616 = pneg %p273
        $region78: #{res_block_down.3} parent=43 // pred_check_branch
          %2618 = sbr.rel (%p2616) target = $region80
        $region79: #{res_block_down.3} parent=43 // pred_region
          %s2620 = ssub.s32 32, 32
          %2621 = vsyncadd %s2576, %s2620
          %s2622 = smul.addr %s38, 4
          %s2623 = sadd.s32 %s39, %s2622
          %s2624 = smul.addr %s2623, 32
          %s2625 = scalar_lea.hbm %s8, %s2624
          %s2627 = sshll.u32 %s2579, 4
          %s2628 = int_to_ptr.vmem [resolvable:$true] %s2627
          %2630 = dma.vmem_to_hbm [thread:$0]  %s2628, 32, %s2625, %s2576
        $region80: #{res_block_down.3} parent=43 // pred_fallthru
          _
      $region44: #{res_block_down.3} parent=5 // pred_fallthru
        _
      %p2631 = scmp.le.s32.totalorder 2, %s29
      // Predicated region
      $region81: #{res_block_down.3} parent=5 // pred_check
        %p2632 = pneg %p2631
      $region82: #{res_block_down.3} parent=5 // pred_check_branch
        %2634 = sbr.rel (%p2632) target = $region84
      $region83: #{res_block_down.3} parent=5 // pred_region
        %s2635 = ssub.s32 %s29, 2
        // Predicated region
        $region85: #{res_block_down.3} parent=83 // pred_check
          %p2636 = pneg %p223
        $region86: #{res_block_down.3} parent=83 // pred_check_branch
          %2638 = sbr.rel (%p2636) target = $region88
        $region87: #{res_block_down.3} parent=83 // pred_region
          %s2639 = sand.u32 %s208, 1
          %s2640 = scalar_lea.sflag [#allocation4], %s2639
          %s2641 = sand.u32 %s208, 1
          %s2642 = smul.addr %s2641, 32
          %s2643 = scalar_lea.vmem [#allocation13], %s2642
          %2644 = dma.done %s2640, 512
        $region88: #{res_block_down.3} parent=83 // pred_fallthru
          _
        // Predicated region
        $region89: #{res_block_down.3} parent=83 // pred_check
          %p2645 = pneg %p251
        $region90: #{res_block_down.3} parent=83 // pred_check_branch
          %2647 = sbr.rel (%p2645) target = $region92
        $region91: #{res_block_down.3} parent=83 // pred_region
          %s2648 = sand.u32 %s35, 1
          %s2649 = scalar_lea.sflag [#allocation15], %s2648
          %s2650 = sand.u32 %s236, 1
          %s2651 = smul.addr %s2650, 32
          %s2652 = scalar_lea.vmem [#allocation14], %s2651
          %2653 = dma.done %s2649, 512
        $region92: #{res_block_down.3} parent=83 // pred_fallthru
          _
        // Predicated region
        $region93: #{res_block_down.3} parent=83 // pred_check
          %p2654 = pneg %p279
        $region94: #{res_block_down.3} parent=83 // pred_check_branch
          %2656 = sbr.rel (%p2654) target = $region96
        $region95: #{res_block_down.3} parent=83 // pred_region
          %s2657 = sand.u32 %s35, 1
          %s2658 = scalar_lea.sflag [#allocation15], %s2657
          %s2659 = sand.u32 %s264, 1
          %s2660 = smul.addr %s2659, 2
          %s2661 = scalar_lea.vmem [#allocation16], %s2660
          %2662 = dma.done %s2658, 32
        $region96: #{res_block_down.3} parent=83 // pred_fallthru
          _
      $region84: #{res_block_down.3} parent=5 // pred_fallthru
        _
    $region6: #{res_block_down.3} parent=1 // loop_footer
      %s33 = sadd.s32 1, %s29
    $region7: #{res_block_down.3} parent=1 // loop_footer_branch
      %28 = sbr.rel target = $region3
    $region8: #{res_block_down.3} parent=1 // loop_exit
      _
    %2663 = vsyncpa [#allocation3], 1
    %s2664 = scalar_lea.sflag [#allocation3], 1
    %2665 = vsyncpa %s2664, 1
    %2666 = vsyncpa [#allocation6], 1
    %s2667 = scalar_lea.sflag [#allocation6], 1
    %2668 = vsyncpa %s2667, 1
    %2669 = vsyncpa [#allocation9], 1
    %2670 = vsyncpa [#allocation12], 1
    %2671 = vsyncpa [#allocation4], 1
    %s2672 = scalar_lea.sflag [#allocation4], 1
    %2673 = vsyncpa %s2672, 1
    %2674 = vsyncpa [#allocation15], 1
    %s2675 = scalar_lea.sflag [#allocation15], 1
    %2676 = vsyncpa %s2675, 1

// kernel: squeeze.19
$region0: #{squeeze.19}
  %s0 = inlined_call_operand.vmem [shape: bf16[1,3,3,4,8], index: 0, kind: input, shape index: {}]
  %s1 = inlined_call_operand.hbm [shape: bf16[36,8], index: 1, kind: output, shape index: {}]
  $region1: #{squeeze.19} parent=0
    #allocation0 [shape = 'u8[10240]{0}', space=vmem, size = 0x2800, scoped, tag = 'operand span for operand 1']
    #allocation1 [shape = 's32[1]{0}', space=sflag, size = 0x4, scoped, tag = 'scoped memory for squeeze.19']
    #allocation2 [shape = 'u8[20480]{0}', space=vmem, size = 0x5000, scoped, tag = 'scoped mem for output reshape']
    #allocation3 [shape = 'u8[36864]{0}', space=vmem, size = 0x9000, scoped, tag = 'scoped mem for input reshape']
    %2 = vsyncpa [#allocation1], 0
    %s4 = smul.u32 2, 2
    %s5 = sshllo.u32 0, %s4
    %s6 = smul.addr 2, 8
    %s7 = scalar_lea.vmem %s0, %s6
    %s8 = sshrl.u32 %s5, 1
    %s9 = sor.u32 %s5, %s8
    %s10 = sand.u32 %s9, 85
    %s11 = sshrl.u32 %s10, 1
    %s12 = sor.u32 %s10, %s11
    %s13 = sand.u32 51, %s12
    %s14 = sshrl.u32 %s13, 2
    %s15 = sor.u32 %s13, %s14
    %s16 = sand.u32 15, %s15
    %v17 = vld [vmem:[%s7] sm:%s16]
    %v18 = vunpack.c.l.bf16 %v17
    %v19 = vunpack.c.h.bf16 %v17
    %s20 = scalar_lea.vmem [#allocation3], 64
    %21 = vst [vmem:[%s20] sm:%s5] %v18
    %s22 = smul.addr 2, 7
    %s23 = scalar_lea.vmem %s0, %s22
    %s24 = sshrl.u32 %s5, 1
    %s25 = sor.u32 %s5, %s24
    %s26 = sand.u32 %s25, 85
    %s27 = sshrl.u32 %s26, 1
    %s28 = sor.u32 %s26, %s27
    %s29 = sand.u32 51, %s28
    %s30 = sshrl.u32 %s29, 2
    %s31 = sor.u32 %s29, %s30
    %s32 = sand.u32 15, %s31
    %v33 = vld [vmem:[%s23] sm:%s32]
    %v34 = vunpack.c.l.bf16 %v33
    %v35 = vunpack.c.h.bf16 %v33
    %s36 = scalar_lea.vmem [#allocation3], 56
    %37 = vst [vmem:[%s36] sm:%s5] %v34
    %s38 = smul.addr 2, 6
    %s39 = scalar_lea.vmem %s0, %s38
    %s40 = sshrl.u32 %s5, 1
    %s41 = sor.u32 %s5, %s40
    %s42 = sand.u32 %s41, 85
    %s43 = sshrl.u32 %s42, 1
    %s44 = sor.u32 %s42, %s43
    %s45 = sand.u32 51, %s44
    %s46 = sshrl.u32 %s45, 2
    %s47 = sor.u32 %s45, %s46
    %s48 = sand.u32 15, %s47
    %v49 = vld [vmem:[%s39] sm:%s48]
    %v50 = vunpack.c.l.bf16 %v49
    %v51 = vunpack.c.h.bf16 %v49
    %s52 = scalar_lea.vmem [#allocation3], 48
    %53 = vst [vmem:[%s52] sm:%s5] %v50
    %s54 = smul.addr 2, 5
    %s55 = scalar_lea.vmem %s0, %s54
    %s56 = sshrl.u32 %s5, 1
    %s57 = sor.u32 %s5, %s56
    %s58 = sand.u32 %s57, 85
    %s59 = sshrl.u32 %s58, 1
    %s60 = sor.u32 %s58, %s59
    %s61 = sand.u32 51, %s60
    %s62 = sshrl.u32 %s61, 2
    %s63 = sor.u32 %s61, %s62
    %s64 = sand.u32 15, %s63
    %v65 = vld [vmem:[%s55] sm:%s64]
    %v66 = vunpack.c.l.bf16 %v65
    %v67 = vunpack.c.h.bf16 %v65
    %s68 = scalar_lea.vmem [#allocation3], 40
    %69 = vst [vmem:[%s68] sm:%s5] %v66
    %s70 = smul.addr 2, 4
    %s71 = scalar_lea.vmem %s0, %s70
    %s72 = sshrl.u32 %s5, 1
    %s73 = sor.u32 %s5, %s72
    %s74 = sand.u32 %s73, 85
    %s75 = sshrl.u32 %s74, 1
    %s76 = sor.u32 %s74, %s75
    %s77 = sand.u32 51, %s76
    %s78 = sshrl.u32 %s77, 2
    %s79 = sor.u32 %s77, %s78
    %s80 = sand.u32 15, %s79
    %v81 = vld [vmem:[%s71] sm:%s80]
    %v82 = vunpack.c.l.bf16 %v81
    %v83 = vunpack.c.h.bf16 %v81
    %s84 = scalar_lea.vmem [#allocation3], 32
    %85 = vst [vmem:[%s84] sm:%s5] %v82
    %s86 = smul.addr 2, 3
    %s87 = scalar_lea.vmem %s0, %s86
    %s88 = sshrl.u32 %s5, 1
    %s89 = sor.u32 %s5, %s88
    %s90 = sand.u32 %s89, 85
    %s91 = sshrl.u32 %s90, 1
    %s92 = sor.u32 %s90, %s91
    %s93 = sand.u32 51, %s92
    %s94 = sshrl.u32 %s93, 2
    %s95 = sor.u32 %s93, %s94
    %s96 = sand.u32 15, %s95
    %v97 = vld [vmem:[%s87] sm:%s96]
    %v98 = vunpack.c.l.bf16 %v97
    %v99 = vunpack.c.h.bf16 %v97
    %s100 = scalar_lea.vmem [#allocation3], 24
    %101 = vst [vmem:[%s100] sm:%s5] %v98
    %s102 = smul.addr 2, 2
    %s103 = scalar_lea.vmem %s0, %s102
    %s104 = sshrl.u32 %s5, 1
    %s105 = sor.u32 %s5, %s104
    %s106 = sand.u32 %s105, 85
    %s107 = sshrl.u32 %s106, 1
    %s108 = sor.u32 %s106, %s107
    %s109 = sand.u32 51, %s108
    %s110 = sshrl.u32 %s109, 2
    %s111 = sor.u32 %s109, %s110
    %s112 = sand.u32 15, %s111
    %v113 = vld [vmem:[%s103] sm:%s112]
    %v114 = vunpack.c.l.bf16 %v113
    %v115 = vunpack.c.h.bf16 %v113
    %s116 = scalar_lea.vmem [#allocation3], 16
    %117 = vst [vmem:[%s116] sm:%s5] %v114
    %s118 = scalar_lea.vmem %s0, 2
    %s119 = sshrl.u32 %s5, 1
    %s120 = sor.u32 %s5, %s119
    %s121 = sand.u32 %s120, 85
    %s122 = sshrl.u32 %s121, 1
    %s123 = sor.u32 %s121, %s122
    %s124 = sand.u32 51, %s123
    %s125 = sshrl.u32 %s124, 2
    %s126 = sor.u32 %s124, %s125
    %s127 = sand.u32 15, %s126
    %v128 = vld [vmem:[%s118] sm:%s127]
    %v129 = vunpack.c.l.bf16 %v128
    %v130 = vunpack.c.h.bf16 %v128
    %s131 = scalar_lea.vmem [#allocation3], 8
    %132 = vst [vmem:[%s131] sm:%s5] %v129
    %s133 = sshrl.u32 %s5, 1
    %s134 = sor.u32 %s5, %s133
    %s135 = sand.u32 %s134, 85
    %s136 = sshrl.u32 %s135, 1
    %s137 = sor.u32 %s135, %s136
    %s138 = sand.u32 51, %s137
    %s139 = sshrl.u32 %s138, 2
    %s140 = sor.u32 %s138, %s139
    %s141 = sand.u32 15, %s140
    %v142 = vld [vmem:[%s0] sm:%s141]
    %v143 = vunpack.c.l.bf16 %v142
    %v144 = vunpack.c.h.bf16 %v142
    %145 = vst [vmem:[#allocation3] sm:%s5] %v143
    %v146 = vld [vmem:[#allocation3] sm:$0xf]
    %vm147 = vcmask 64512
    %148 = vst.msk [vmem:[#allocation2] sm:$0xf] %vm147, %v146
    %s149 = scalar_lea.vmem [#allocation3], 8
    %v150 = vld [vmem:[%s149] sm:$0xf]
    %vm151 = vcmask 64512
    %s152 = scalar_lea.vmem [#allocation2], 4
    %153 = vst.msk [vmem:[%s152] sm:$0xf] %vm151, %v150
    %s154 = scalar_lea.vmem [#allocation3], 16
    %v155 = vld [vmem:[%s154] sm:$0xf]
    %vm156 = vcmask 64512
    %s157 = scalar_lea.vmem [#allocation2], 8
    %158 = vst.msk [vmem:[%s157] sm:$0xf] %vm156, %v155
    %s159 = scalar_lea.vmem [#allocation3], 24
    %v160 = vld [vmem:[%s159] sm:$0xf]
    %vm161 = vcmask 64512
    %s162 = scalar_lea.vmem [#allocation2], 12
    %163 = vst.msk [vmem:[%s162] sm:$0xf] %vm161, %v160
    %s164 = scalar_lea.vmem [#allocation3], 32
    %v165 = vld [vmem:[%s164] sm:$0xf]
    %vm166 = vcmask 64512
    %s167 = scalar_lea.vmem [#allocation2], 16
    %168 = vst.msk [vmem:[%s167] sm:$0xf] %vm166, %v165
    %s169 = scalar_lea.vmem [#allocation3], 40
    %v170 = vld [vmem:[%s169] sm:$0xf]
    %vm171 = vcmask 64512
    %s172 = scalar_lea.vmem [#allocation2], 20
    %173 = vst.msk [vmem:[%s172] sm:$0xf] %vm171, %v170
    %s174 = scalar_lea.vmem [#allocation3], 48
    %v175 = vld [vmem:[%s174] sm:$0xf]
    %vm176 = vcmask 64512
    %s177 = scalar_lea.vmem [#allocation2], 24
    %178 = vst.msk [vmem:[%s177] sm:$0xf] %vm176, %v175
    %s179 = scalar_lea.vmem [#allocation3], 56
    %v180 = vld [vmem:[%s179] sm:$0xf]
    %vm181 = vcmask 64512
    %s182 = scalar_lea.vmem [#allocation2], 28
    %183 = vst.msk [vmem:[%s182] sm:$0xf] %vm181, %v180
    %s184 = scalar_lea.vmem [#allocation3], 64
    %v185 = vld [vmem:[%s184] sm:$0xf]
    %vm186 = vcmask 64512
    %s187 = scalar_lea.vmem [#allocation2], 32
    %188 = vst.msk [vmem:[%s187] sm:$0xf] %vm186, %v185
    %s190 = smul.u32 4, 2
    %s191 = sshllo.u32 0, %s190
    %s192 = sshrl.u32 %s190, 1
    %v193 = vld [vmem:[#allocation2] sm:%s191]
    %v194 = vpack.c.bf16 0.0, %v193
    %s195 = sshllo.u32 0, %s192
    %196 = vst [vmem:[#allocation0] sm:%s195] %v194
    %s197 = scalar_lea.vmem [#allocation2], 8
    %v198 = vld [vmem:[%s197] sm:%s191]
    %v199 = vpack.c.bf16 0.0, %v198
    %s200 = sshllo.u32 0, %s192
    %s201 = scalar_lea.vmem [#allocation0], 4
    %202 = vst [vmem:[%s201] sm:%s200] %v199
    %s203 = scalar_lea.vmem [#allocation2], 16
    %v204 = vld [vmem:[%s203] sm:%s191]
    %v205 = vpack.c.bf16 0.0, %v204
    %s206 = sshllo.u32 0, %s192
    %s207 = smul.addr 4, 2
    %s208 = scalar_lea.vmem [#allocation0], %s207
    %209 = vst [vmem:[%s208] sm:%s206] %v205
    %s210 = scalar_lea.vmem [#allocation2], 24
    %v211 = vld [vmem:[%s210] sm:%s191]
    %v212 = vpack.c.bf16 0.0, %v211
    %s213 = sshllo.u32 0, %s192
    %s214 = smul.addr 4, 3
    %s215 = scalar_lea.vmem [#allocation0], %s214
    %216 = vst [vmem:[%s215] sm:%s213] %v212
    %s217 = scalar_lea.vmem [#allocation2], 32
    %v218 = vld [vmem:[%s217] sm:%s191]
    %v219 = vpack.c.bf16 0.0, %v218
    %s220 = sshllo.u32 0, %s192
    %s221 = smul.addr 4, 4
    %s222 = scalar_lea.vmem [#allocation0], %s221
    %223 = vst [vmem:[%s222] sm:%s220] %v219
    %s225 = ssub.s32 320, 320
    %226 = vsyncadd [#allocation1], %s225
    %s228 = sshll.u32 [#allocation0], 4
    %s229 = int_to_ptr.vmem [resolvable:$true] %s228
    %231 = dma.vmem_to_hbm [thread:$0]  %s229, 320, %s1, [#allocation1]
    %232 = dma.done [#allocation1], 320
    %233 = vsyncpa [#allocation1], 1

// kernel: tile.23
$region0: #{tile.23}
  #allocation0 [shape = 's32[1]{0}', space=sflag, size = 0x4, scoped, tag = 'scoped memory for tile.23']
  %s0 = inlined_call_operand.vmem [shape: f32[8], index: 0, kind: input, shape index: {}]
  %s1 = inlined_call_operand.vmem [shape: f32[64,8], index: 1, kind: output, shape index: {}]
  // Predicated region
  $region2: #{tile.23} parent=0 // pred_check
    _
  $region3: #{tile.23} parent=0 // pred_check_branch
    %3 = sbr.rel (0) target = $region5
  $region4: #{tile.23} parent=0 // pred_region
    _
  $region5: #{tile.23} parent=0 // pred_fallthru
    _
  %v4 = vld [vmem:[%s0] ss:$0 sm:$0xff]
  %5 = vst [vmem:[%s1] sm:$0xff] %v4
  %s6 = scalar_lea.vmem %s1, 8
  %7 = vst [vmem:[%s6] sm:$0xff] %v4
  %s8 = scalar_lea.vmem %s1, 16
  %9 = vst [vmem:[%s8] sm:$0xff] %v4
  %s10 = scalar_lea.vmem %s1, 24
  %11 = vst [vmem:[%s10] sm:$0xff] %v4
  %s12 = scalar_lea.vmem %s1, 32
  %13 = vst [vmem:[%s12] sm:$0xff] %v4
  %s14 = scalar_lea.vmem %s1, 40
  %15 = vst [vmem:[%s14] sm:$0xff] %v4
  %s16 = scalar_lea.vmem %s1, 48
  %17 = vst [vmem:[%s16] sm:$0xff] %v4
  %s18 = scalar_lea.vmem %s1, 56
  %19 = vst [vmem:[%s18] sm:$0xff] %v4

// kernel: tile.24
$region0: #{tile.24}
  %s0 = inlined_call_operand.vmem [shape: f32[64,8], index: 0, kind: input, shape index: {}]
  %s1 = inlined_call_operand.vmem [shape: f32[1,512], index: 1, kind: output, shape index: {}]
  $region1: #{tile.24} parent=0
    #allocation0 [shape = 'u8[16384]{0}', space=vmem, size = 0x4000, scoped, tag = 'scoped mem for output reshape']
    %s2 = smov 3
    %v3 = vld [vmem:[%s0] ss:$16 sm:%s2]
    %s4 = smov 12
    %v5 = vld [vmem:[%s0] ss:$16 sm:%s4]
    %vm6 = vcmask 1043458
    %v7 = vsel %vm6, %v5, %v3
    %vm8 = vcmask 64512
    %9 = vst.msk [vmem:[#allocation0] ss:$8 sm:$0xf] %vm8, %v7
    %s10 = scalar_lea.vmem %s0, 15
    %s11 = smov 3
    %v12 = vld [vmem:[%s10] ss:$16 sm:%s11]
    %s13 = scalar_lea.vmem %s0, 15
    %s14 = smov 12
    %v15 = vld [vmem:[%s13] ss:$16 sm:%s14]
    %vm16 = vcmask 1043458
    %v17 = vsel %vm16, %v15, %v12
    %18 = vrot.lane.b32.xlu0 %v17, 120
    %v19 = vpop.permute.xlu0 %18
    %vm20 = vcmask 1048512
    %21 = vst.msk [vmem:[#allocation0] ss:$8 sm:$0xf] %vm20, %v19
    %s22 = scalar_lea.vmem %s0, 14
    %s23 = smov 3
    %v24 = vld [vmem:[%s22] ss:$16 sm:%s23]
    %s25 = scalar_lea.vmem %s0, 14
    %s26 = smov 12
    %v27 = vld [vmem:[%s25] ss:$16 sm:%s26]
    %vm28 = vcmask 1043458
    %v29 = vsel %vm28, %v27, %v24
    %30 = vrot.lane.b32.xlu0 %v29, 112
    %v31 = vpop.permute.xlu0 %30
    %vm32 = vcmask 982912
    %33 = vst.msk [vmem:[#allocation0] ss:$8 sm:$0xf] %vm32, %v31
    %s34 = scalar_lea.vmem %s0, 13
    %s35 = smov 3
    %v36 = vld [vmem:[%s34] ss:$16 sm:%s35]
    %s37 = scalar_lea.vmem %s0, 13
    %s38 = smov 12
    %v39 = vld [vmem:[%s37] ss:$16 sm:%s38]
    %vm40 = vcmask 1043458
    %v41 = vsel %vm40, %v39, %v36
    %42 = vrot.lane.b32.xlu0 %v41, 104
    %v43 = vpop.permute.xlu0 %42
    %vm44 = vcmask 917312
    %45 = vst.msk [vmem:[#allocation0] ss:$8 sm:$0xf] %vm44, %v43
    %s46 = scalar_lea.vmem %s0, 12
    %s47 = smov 3
    %v48 = vld [vmem:[%s46] ss:$16 sm:%s47]
    %s49 = scalar_lea.vmem %s0, 12
    %s50 = smov 12
    %v51 = vld [vmem:[%s49] ss:$16 sm:%s50]
    %vm52 = vcmask 1043458
    %v53 = vsel %vm52, %v51, %v48
    %54 = vrot.lane.b32.xlu0 %v53, 96
    %v55 = vpop.permute.xlu0 %54
    %vm56 = vcmask 851712
    %57 = vst.msk [vmem:[#allocation0] ss:$8 sm:$0xf] %vm56, %v55
    %s58 = scalar_lea.vmem %s0, 11
    %s59 = smov 3
    %v60 = vld [vmem:[%s58] ss:$16 sm:%s59]
    %s61 = scalar_lea.vmem %s0, 11
    %s62 = smov 12
    %v63 = vld [vmem:[%s61] ss:$16 sm:%s62]
    %vm64 = vcmask 1043458
    %v65 = vsel %vm64, %v63, %v60
    %66 = vrot.lane.b32.xlu0 %v65, 88
    %v67 = vpop.permute.xlu0 %66
    %vm68 = vcmask 786112
    %69 = vst.msk [vmem:[#allocation0] ss:$8 sm:$0xf] %vm68, %v67
    %s70 = scalar_lea.vmem %s0, 10
    %s71 = smov 3
    %v72 = vld [vmem:[%s70] ss:$16 sm:%s71]
    %s73 = scalar_lea.vmem %s0, 10
    %s74 = smov 12
    %v75 = vld [vmem:[%s73] ss:$16 sm:%s74]
    %vm76 = vcmask 1043458
    %v77 = vsel %vm76, %v75, %v72
    %78 = vrot.lane.b32.xlu0 %v77, 80
    %v79 = vpop.permute.xlu0 %78
    %vm80 = vcmask 720512
    %81 = vst.msk [vmem:[#allocation0] ss:$8 sm:$0xf] %vm80, %v79
    %s82 = scalar_lea.vmem %s0, 9
    %s83 = smov 3
    %v84 = vld [vmem:[%s82] ss:$16 sm:%s83]
    %s85 = scalar_lea.vmem %s0, 9
    %s86 = smov 12
    %v87 = vld [vmem:[%s85] ss:$16 sm:%s86]
    %vm88 = vcmask 1043458
    %v89 = vsel %vm88, %v87, %v84
    %90 = vrot.lane.b32.xlu0 %v89, 72
    %v91 = vpop.permute.xlu0 %90
    %vm92 = vcmask 654912
    %93 = vst.msk [vmem:[#allocation0] ss:$8 sm:$0xf] %vm92, %v91
    %s94 = scalar_lea.vmem %s0, 8
    %s95 = smov 3
    %v96 = vld [vmem:[%s94] ss:$16 sm:%s95]
    %s97 = scalar_lea.vmem %s0, 8
    %s98 = smov 12
    %v99 = vld [vmem:[%s97] ss:$16 sm:%s98]
    %vm100 = vcmask 1043458
    %v101 = vsel %vm100, %v99, %v96
    %102 = vrot.lane.b32.xlu0 %v101, 64
    %v103 = vpop.permute.xlu0 %102
    %vm104 = vcmask 589312
    %105 = vst.msk [vmem:[#allocation0] ss:$8 sm:$0xf] %vm104, %v103
    %s106 = scalar_lea.vmem %s0, 7
    %s107 = smov 3
    %v108 = vld [vmem:[%s106] ss:$16 sm:%s107]
    %s109 = scalar_lea.vmem %s0, 7
    %s110 = smov 12
    %v111 = vld [vmem:[%s109] ss:$16 sm:%s110]
    %vm112 = vcmask 1043458
    %v113 = vsel %vm112, %v111, %v108
    %114 = vrot.lane.b32.xlu0 %v113, 56
    %v115 = vpop.permute.xlu0 %114
    %vm116 = vcmask 523712
    %117 = vst.msk [vmem:[#allocation0] ss:$8 sm:$0xf] %vm116, %v115
    %s118 = scalar_lea.vmem %s0, 6
    %s119 = smov 3
    %v120 = vld [vmem:[%s118] ss:$16 sm:%s119]
    %s121 = scalar_lea.vmem %s0, 6
    %s122 = smov 12
    %v123 = vld [vmem:[%s121] ss:$16 sm:%s122]
    %vm124 = vcmask 1043458
    %v125 = vsel %vm124, %v123, %v120
    %126 = vrot.lane.b32.xlu0 %v125, 48
    %v127 = vpop.permute.xlu0 %126
    %vm128 = vcmask 458112
    %129 = vst.msk [vmem:[#allocation0] ss:$8 sm:$0xf] %vm128, %v127
    %s130 = scalar_lea.vmem %s0, 5
    %s131 = smov 3
    %v132 = vld [vmem:[%s130] ss:$16 sm:%s131]
    %s133 = scalar_lea.vmem %s0, 5
    %s134 = smov 12
    %v135 = vld [vmem:[%s133] ss:$16 sm:%s134]
    %vm136 = vcmask 1043458
    %v137 = vsel %vm136, %v135, %v132
    %138 = vrot.lane.b32.xlu0 %v137, 40
    %v139 = vpop.permute.xlu0 %138
    %vm140 = vcmask 392512
    %141 = vst.msk [vmem:[#allocation0] ss:$8 sm:$0xf] %vm140, %v139
    %s142 = scalar_lea.vmem %s0, 4
    %s143 = smov 3
    %v144 = vld [vmem:[%s142] ss:$16 sm:%s143]
    %s145 = scalar_lea.vmem %s0, 4
    %s146 = smov 12
    %v147 = vld [vmem:[%s145] ss:$16 sm:%s146]
    %vm148 = vcmask 1043458
    %v149 = vsel %vm148, %v147, %v144
    %150 = vrot.lane.b32.xlu0 %v149, 32
    %v151 = vpop.permute.xlu0 %150
    %vm152 = vcmask 326912
    %153 = vst.msk [vmem:[#allocation0] ss:$8 sm:$0xf] %vm152, %v151
    %s154 = scalar_lea.vmem %s0, 3
    %s155 = smov 3
    %v156 = vld [vmem:[%s154] ss:$16 sm:%s155]
    %s157 = scalar_lea.vmem %s0, 3
    %s158 = smov 12
    %v159 = vld [vmem:[%s157] ss:$16 sm:%s158]
    %vm160 = vcmask 1043458
    %v161 = vsel %vm160, %v159, %v156
    %162 = vrot.lane.b32.xlu0 %v161, 24
    %v163 = vpop.permute.xlu0 %162
    %vm164 = vcmask 261312
    %165 = vst.msk [vmem:[#allocation0] ss:$8 sm:$0xf] %vm164, %v163
    %s166 = scalar_lea.vmem %s0, 2
    %s167 = smov 3
    %v168 = vld [vmem:[%s166] ss:$16 sm:%s167]
    %s169 = scalar_lea.vmem %s0, 2
    %s170 = smov 12
    %v171 = vld [vmem:[%s169] ss:$16 sm:%s170]
    %vm172 = vcmask 1043458
    %v173 = vsel %vm172, %v171, %v168
    %174 = vrot.lane.b32.xlu0 %v173, 16
    %v175 = vpop.permute.xlu0 %174
    %vm176 = vcmask 195712
    %177 = vst.msk [vmem:[#allocation0] ss:$8 sm:$0xf] %vm176, %v175
    %s178 = scalar_lea.vmem %s0, 1
    %s179 = smov 3
    %v180 = vld [vmem:[%s178] ss:$16 sm:%s179]
    %s181 = scalar_lea.vmem %s0, 1
    %s182 = smov 12
    %v183 = vld [vmem:[%s181] ss:$16 sm:%s182]
    %vm184 = vcmask 1043458
    %v185 = vsel %vm184, %v183, %v180
    %186 = vrot.lane.b32.xlu0 %v185, 8
    %v187 = vpop.permute.xlu0 %186
    %vm188 = vcmask 130112
    %189 = vst.msk [vmem:[#allocation0] ss:$8 sm:$0xf] %vm188, %v187
    %s191 = sshllo.u32 0, 1
    %v193 = vld [vmem:[#allocation0] sm:%s191]
    %s194 = sshllo.u32 0, 1
    %195 = vst [vmem:[%s1] sm:%s194] %v193
    %s196 = scalar_lea.vmem [#allocation0], 8
    %v197 = vld [vmem:[%s196] sm:%s191]
    %s198 = sshllo.u32 0, 1
    %s199 = scalar_lea.vmem %s1, 1
    %200 = vst [vmem:[%s199] sm:%s198] %v197
    %s201 = scalar_lea.vmem [#allocation0], 16
    %v202 = vld [vmem:[%s201] sm:%s191]
    %s203 = sshllo.u32 0, 1
    %s204 = smul.addr 1, 2
    %s205 = scalar_lea.vmem %s1, %s204
    %206 = vst [vmem:[%s205] sm:%s203] %v202
    %s207 = scalar_lea.vmem [#allocation0], 24
    %v208 = vld [vmem:[%s207] sm:%s191]
    %s209 = sshllo.u32 0, 1
    %s210 = smul.addr 1, 3
    %s211 = scalar_lea.vmem %s1, %s210
    %212 = vst [vmem:[%s211] sm:%s209] %v208

// kernel: res_block_down.5
$region0: #{res_block_down.5}
  #allocation0 [shape = 'u32[]', space=smem, size = 0x4, offset = 0x4, fixed_abs, tag = 'smem constant byte address 0x4 - core index']
  #allocation1 [shape = 'u32[144,128]{1,0:T(1,128)}', space=vmem, size = 0x12000, scoped, tag = 'internal scratch']
  %s0 = inlined_call_operand.vmem [shape: bf16[8,512], index: 0, kind: input, shape index: {}]
  %s1 = inlined_call_operand.vmem [shape: bf16[8,512], index: 1, kind: input, shape index: {}]
  %s2 = inlined_call_operand.vmem [shape: f32[1,512], index: 2, kind: input, shape index: {}]
  %s3 = inlined_call_operand.vmem [shape: f32[1,512], index: 3, kind: input, shape index: {}]
  %s4 = inlined_call_operand.vmem [shape: f32[1,512], index: 4, kind: input, shape index: {}]
  %s5 = inlined_call_operand.vmem [shape: f32[1,512], index: 5, kind: input, shape index: {}]
  %s6 = inlined_call_operand.vmem [shape: f32[8,512], index: 6, kind: output, shape index: {}]
  %s7 = sld [smem:[#allocation0]]
  $region34: #{res_block_down.5} parent=0
    _
  %s9 = ssub.s32 1, %s7
  %s10 = scalar_select 0, %s9, %s7
  // Predicated region
  $region2: #{res_block_down.5} parent=0 // pred_check
    _
  $region3: #{res_block_down.5} parent=0 // pred_check_branch
    %12 = sbr.rel (0) target = $region5
  $region4: #{res_block_down.5} parent=0 // pred_region
    _
  $region5: #{res_block_down.5} parent=0 // pred_fallthru
    _
  // Predicated region
  $region6: #{res_block_down.5} parent=0 // pred_check
    _
  $region7: #{res_block_down.5} parent=0 // pred_check_branch
    %14 = sbr.rel (0) target = $region9
  $region8: #{res_block_down.5} parent=0 // pred_region
    _
  $region9: #{res_block_down.5} parent=0 // pred_fallthru
    _
  // Predicated region
  $region10: #{res_block_down.5} parent=0 // pred_check
    _
  $region11: #{res_block_down.5} parent=0 // pred_check_branch
    %16 = sbr.rel (0) target = $region13
  $region12: #{res_block_down.5} parent=0 // pred_region
    _
  $region13: #{res_block_down.5} parent=0 // pred_fallthru
    _
  // Predicated region
  $region14: #{res_block_down.5} parent=0 // pred_check
    _
  $region15: #{res_block_down.5} parent=0 // pred_check_branch
    %18 = sbr.rel (0) target = $region17
  $region16: #{res_block_down.5} parent=0 // pred_region
    _
  $region17: #{res_block_down.5} parent=0 // pred_fallthru
    _
  // Predicated region
  $region18: #{res_block_down.5} parent=0 // pred_check
    _
  $region19: #{res_block_down.5} parent=0 // pred_check_branch
    %20 = sbr.rel (0) target = $region21
  $region20: #{res_block_down.5} parent=0 // pred_region
    _
  $region21: #{res_block_down.5} parent=0 // pred_fallthru
    _
  // Predicated region
  $region22: #{res_block_down.5} parent=0 // pred_check
    _
  $region23: #{res_block_down.5} parent=0 // pred_check_branch
    %22 = sbr.rel (0) target = $region25
  $region24: #{res_block_down.5} parent=0 // pred_region
    _
  $region25: #{res_block_down.5} parent=0 // pred_fallthru
    _
  %v23 = vld [vmem:[%s0] sm:$0xff]
  %v24 = vld [vmem:[%s0 + $0x8] sm:$0xff]
  %v25 = vld [vmem:[%s2] sm:$0xf]
  %v26 = vunpack.c.l.bf16 %v23
  %v27 = vunpack.c.h.bf16 %v23
  %v28 = vunpack.c.l.bf16 %v24
  %v29 = vunpack.c.h.bf16 %v24
  %v31 = vlaneseq
  %v32 = vshrl.u32 %v31, 7
  %v33 = vsub.s32 0, %v32
  %v34 = vrot.slane %v25, %v33
  %v35 = vlaneseq
  %v36 = vshrl.u32 %v35, 7
  %v37 = vsub.s32 1, %v36
  %v38 = vrot.slane %v25, %v37
  %v39 = vlaneseq
  %v40 = vshrl.u32 %v39, 7
  %v41 = vsub.s32 2, %v40
  %v42 = vrot.slane %v25, %v41
  %v43 = vlaneseq
  %v44 = vshrl.u32 %v43, 7
  %v45 = vsub.s32 3, %v44
  %v46 = vrot.slane %v25, %v45
  %v51 = vmul.f32 %v26, %v34
  %v52 = vmul.f32 %v27, %v38
  %v53 = vmul.f32 %v28, %v42
  %v54 = vmul.f32 %v29, %v46
  %v55 = vld [vmem:[%s3] sm:$0xf]
  %v57 = vlaneseq
  %v58 = vshrl.u32 %v57, 7
  %v59 = vsub.s32 0, %v58
  %v60 = vrot.slane %v55, %v59
  %v61 = vlaneseq
  %v62 = vshrl.u32 %v61, 7
  %v63 = vsub.s32 1, %v62
  %v64 = vrot.slane %v55, %v63
  %v65 = vlaneseq
  %v66 = vshrl.u32 %v65, 7
  %v67 = vsub.s32 2, %v66
  %v68 = vrot.slane %v55, %v67
  %v69 = vlaneseq
  %v70 = vshrl.u32 %v69, 7
  %v71 = vsub.s32 3, %v70
  %v72 = vrot.slane %v55, %v71
  %v77 = vadd.f32 %v51, %v60
  %v78 = vadd.f32 %v52, %v64
  %v79 = vadd.f32 %v53, %v68
  %v80 = vadd.f32 %v54, %v72
  %v81 = vld [vmem:[%s1] sm:$0xff]
  %v82 = vld [vmem:[%s1 + $0x8] sm:$0xff]
  %v83 = vld [vmem:[%s4] sm:$0xf]
  %v84 = vunpack.c.l.bf16 %v81
  %v85 = vunpack.c.h.bf16 %v81
  %v86 = vunpack.c.l.bf16 %v82
  %v87 = vunpack.c.h.bf16 %v82
  %v89 = vlaneseq
  %v90 = vshrl.u32 %v89, 7
  %v91 = vsub.s32 0, %v90
  %v92 = vrot.slane %v83, %v91
  %v93 = vlaneseq
  %v94 = vshrl.u32 %v93, 7
  %v95 = vsub.s32 1, %v94
  %v96 = vrot.slane %v83, %v95
  %v97 = vlaneseq
  %v98 = vshrl.u32 %v97, 7
  %v99 = vsub.s32 2, %v98
  %v100 = vrot.slane %v83, %v99
  %v101 = vlaneseq
  %v102 = vshrl.u32 %v101, 7
  %v103 = vsub.s32 3, %v102
  %v104 = vrot.slane %v83, %v103
  %v109 = vmul.f32 %v84, %v92
  %v110 = vmul.f32 %v85, %v96
  %v111 = vmul.f32 %v86, %v100
  %v112 = vmul.f32 %v87, %v104
  %v113 = vld [vmem:[%s5] sm:$0xf]
  %v115 = vlaneseq
  %v116 = vshrl.u32 %v115, 7
  %v117 = vsub.s32 0, %v116
  %v118 = vrot.slane %v113, %v117
  %v119 = vlaneseq
  %v120 = vshrl.u32 %v119, 7
  %v121 = vsub.s32 1, %v120
  %v122 = vrot.slane %v113, %v121
  %v123 = vlaneseq
  %v124 = vshrl.u32 %v123, 7
  %v125 = vsub.s32 2, %v124
  %v126 = vrot.slane %v113, %v125
  %v127 = vlaneseq
  %v128 = vshrl.u32 %v127, 7
  %v129 = vsub.s32 3, %v128
  %v130 = vrot.slane %v113, %v129
  %v135 = vadd.f32 %v109, %v118
  %v136 = vadd.f32 %v110, %v122
  %v137 = vadd.f32 %v111, %v126
  %v138 = vadd.f32 %v112, %v130
  %vm139 = vcmp.ge.f32.partialorder %v77, 0.0
  %vm140 = vcmp.ge.f32.partialorder %v78, 0.0
  %vm141 = vcmp.ge.f32.partialorder %v79, 0.0
  %vm142 = vcmp.ge.f32.partialorder %v80, 0.0
  %v143 = vmul.f32 %v77, 0.2
  %v144 = vmul.f32 %v78, 0.2
  %v145 = vmul.f32 %v79, 0.2
  %v146 = vmul.f32 %v80, 0.2
  %v147 = vsel %vm139, %v77, %v143
  %v148 = vsel %vm140, %v78, %v144
  %v149 = vsel %vm141, %v79, %v145
  %v150 = vsel %vm142, %v80, %v146
  %vm151 = vcmp.ge.f32.partialorder %v135, 0.0
  %vm152 = vcmp.ge.f32.partialorder %v136, 0.0
  %vm153 = vcmp.ge.f32.partialorder %v137, 0.0
  %vm154 = vcmp.ge.f32.partialorder %v138, 0.0
  %v155 = vmul.f32 %v135, 0.2
  %v156 = vmul.f32 %v136, 0.2
  %v157 = vmul.f32 %v137, 0.2
  %v158 = vmul.f32 %v138, 0.2
  %v159 = vsel %vm151, %v135, %v155
  %v160 = vsel %vm152, %v136, %v156
  %v161 = vsel %vm153, %v137, %v157
  %v162 = vsel %vm154, %v138, %v158
  %v163 = vadd.f32 %v147, %v159
  %v164 = vadd.f32 %v148, %v160
  %v165 = vadd.f32 %v149, %v161
  %v166 = vadd.f32 %v150, %v162
  %167 = vst [vmem:[%s6] sm:$0xff] %v163
  %168 = vst [vmem:[%s6 + $0x8] sm:$0xff] %v164
  %169 = vst [vmem:[%s6 + $0x10] sm:$0xff] %v165
  %170 = vst [vmem:[%s6 + $0x18] sm:$0xff] %v166
  // Predicated region
  $region26: #{res_block_down.5} parent=0 // pred_check
    _
  $region27: #{res_block_down.5} parent=0 // pred_check_branch
    %172 = sbr.rel (0) target = $region29
  $region28: #{res_block_down.5} parent=0 // pred_region
    _
  $region29: #{res_block_down.5} parent=0 // pred_fallthru
    _
  // Predicated region
  $region30: #{res_block_down.5} parent=0 // pred_check
    _
  $region31: #{res_block_down.5} parent=0 // pred_check_branch
    %174 = sbr.rel (0) target = $region33
  $region32: #{res_block_down.5} parent=0 // pred_region
    _
  $region33: #{res_block_down.5} parent=0 // pred_fallthru
    _

// kernel: res_block_down.4
$region0: #{res_block_down.4}
  #allocation0 [shape = 'u32[]', space=smem, size = 0x4, offset = 0x4, fixed_abs, tag = 'smem constant byte address 0x4 - core index']
  #allocation1 [shape = 'u32[144,128]{1,0:T(1,128)}', space=vmem, size = 0x12000, scoped, tag = 'internal scratch']
  #allocation2 [shape = 'bf16[10,10,4]{2,1,0:T(8,128)(2,1)}', space=vmem, size = 0xa000, scoped, tag = 'scratch operand']
  %s0 = inlined_call_operand.hbm [shape: bf16[2,4,8,8,4], index: 0, kind: input, shape index: {}, may-alias: {0,1,2}]
  %s1 = inlined_call_operand.hbm [shape: bf16[2,4,8,8,4], index: 1, kind: input, shape index: {}, may-alias: {0,1,2}]
  %s2 = inlined_call_operand.hbm [shape: bf16[2,4,8,8,4], index: 2, kind: input, shape index: {}, may-alias: {0,1,2}]
  %s3 = inlined_call_operand.hbm [shape: f32[1,4], index: 3, kind: input, shape index: {}]
  %s4 = inlined_call_operand.hbm [shape: f32[1,4], index: 4, kind: input, shape index: {}]
  %s5 = inlined_call_operand.hbm [shape: bf16[36,8], index: 5, kind: input, shape index: {}]
  %s6 = inlined_call_operand.hbm [shape: bf16[36,8], index: 6, kind: input, shape index: {}]
  %s7 = inlined_call_operand.hbm [shape: bf16[36,8], index: 7, kind: input, shape index: {}]
  %s8 = inlined_call_operand.hbm [shape: bf16[2,4,64,8], index: 8, kind: output, shape index: {0}]
  %s9 = inlined_call_operand.hbm [shape: f32[2,4,2,8], index: 9, kind: output, shape index: {1}]
  %10 = xla_tuple %s8, %s9
  %s11 = sld [smem:[#allocation0]]
  $region105: #{res_block_down.4} parent=0
    _
  %s13 = ssub.s32 1, %s11
  %s14 = scalar_select 0, %s13, %s11
  $region1: #{res_block_down.4} parent=0
    #allocation3 [shape = 'u8[32768]{0}', space=vmem, size = 0x8000, scoped, tag = 'input window, operand 0']
    #allocation4 [shape = 's32[2]{0}', space=sflag, size = 0x8, scoped, tag = 'scoped memory for res_block_down.4']
    #allocation5 [shape = 's32[2]{0}', space=sflag, size = 0x8, scoped, tag = 'scoped memory for res_block_down.4']
    #allocation6 [shape = 'u8[32768]{0}', space=vmem, size = 0x8000, scoped, tag = 'input window, operand 1']
    #allocation7 [shape = 's32[2]{0}', space=sflag, size = 0x8, scoped, tag = 'scoped memory for res_block_down.4']
    #allocation8 [shape = 'u8[32768]{0}', space=vmem, size = 0x8000, scoped, tag = 'input window, operand 2']
    #allocation9 [shape = 'u8[512]{0}', space=vmem, size = 0x400, scoped, tag = 'input window, operand 3, single buffered']
    #allocation10 [shape = 's32[1]{0}', space=sflag, size = 0x4, scoped, tag = 'scoped memory for res_block_down.4']
    #allocation11 [shape = 'u8[512]{0}', space=vmem, size = 0x400, scoped, tag = 'input window, operand 4, single buffered']
    #allocation12 [shape = 'u8[10240]{0}', space=vmem, size = 0x2800, scoped, tag = 'input window, operand 5, single buffered']
    #allocation13 [shape = 's32[1]{0}', space=sflag, size = 0x4, scoped, tag = 'scoped memory for res_block_down.4']
    #allocation14 [shape = 'u8[10240]{0}', space=vmem, size = 0x2800, scoped, tag = 'input window, operand 6, single buffered']
    #allocation15 [shape = 'u8[10240]{0}', space=vmem, size = 0x2800, scoped, tag = 'input window, operand 7, single buffered']
    #allocation16 [shape = 's32[1]{0}', space=sflag, size = 0x4, scoped, tag = 'scoped memory for res_block_down.4']
    #allocation17 [shape = 'u8[32768]{0}', space=vmem, size = 0x8000, scoped, tag = 'output window, operand 0']
    #allocation18 [shape = 'u8[2048]{0}', space=vmem, size = 0x800, scoped, tag = 'output window, operand 1']
    #allocation19 [shape = 's32[2]{0}', space=sflag, size = 0x8, scoped, tag = 'scoped memory for res_block_down.4']
    %15 = vsyncpa [#allocation4], 0
    %s16 = scalar_lea.sflag [#allocation4], 1
    %17 = vsyncpa %s16, 0
    %18 = vsyncpa [#allocation7], 0
    %s19 = scalar_lea.sflag [#allocation7], 1
    %20 = vsyncpa %s19, 0
    %21 = vsyncpa [#allocation10], 0
    %22 = vsyncpa [#allocation13], 0
    %23 = vsyncpa [#allocation16], 0
    %24 = vsyncpa [#allocation5], 0
    %s25 = scalar_lea.sflag [#allocation5], 1
    %26 = vsyncpa %s25, 0
    %27 = vsyncpa [#allocation19], 0
    %s28 = scalar_lea.sflag [#allocation19], 1
    %29 = vsyncpa %s28, 0
    loop: start=0, step=1, limit=10
    $region2: #{res_block_down.4} parent=1 // loop_pre_header
      _
    $region3: #{res_block_down.4} parent=1 // loop_header
      %s31 = sphi 0, %s35
      %p32 = scmp.ge.s32.totalorder %s31, 10
      %s38 = sphi 0, %s50
      %s39 = sphi 0, %s46
      %s40 = sphi 0, %s38
      %s41 = sphi 0, %s39
      %s42 = sphi 0, %s40
      %s43 = sphi 0, %s41
      %s65 = sphi 0, %s67
      %s68 = sphi 0, %s65
      %s69 = sphi 0, %s68
      %s85 = sphi 0, %s69
      %s101 = sphi 0, %s103
      %s104 = sphi 0, %s101
      %s105 = sphi 0, %s104
      %s121 = sphi 0, %s105
      %s139 = sphi 0, %s141
      %s142 = sphi 0, %s139
      %s143 = sphi 0, %s142
      %s159 = sphi 0, %s143
      %s163 = sphi 0, %s163
      %s165 = sphi 0, %s163
      %s166 = sphi 0, %s165
      %s180 = sphi 0, %s166
      %s184 = sphi 0, %s184
      %s186 = sphi 0, %s184
      %s187 = sphi 0, %s186
      %s201 = sphi 0, %s187
      %s205 = sphi 0, %s205
      %s207 = sphi 0, %s205
      %s208 = sphi 0, %s207
      %s222 = sphi 0, %s208
      %s226 = sphi 0, %s226
      %s228 = sphi 0, %s226
      %s229 = sphi 0, %s228
      %s243 = sphi 0, %s229
      %s247 = sphi 0, %s247
      %s249 = sphi 0, %s247
      %s250 = sphi 0, %s249
      %s264 = sphi 0, %s250
      %s272 = sphi 0, %s274
      %s275 = sphi 0, %s272
      %s276 = sphi 0, %s275
      %s292 = sphi 0, %s276
      %s300 = sphi 0, %s302
      %s303 = sphi 0, %s300
      %s304 = sphi 0, %s303
      %s320 = sphi 0, %s304
    $region4: #{res_block_down.4} parent=1 // loop_header_branch
      %34 = sbr.rel (%p32) target = $region8
    $region5: #{res_block_down.4} parent=1 // loop_body
      %s36 = ssub.s32 %s31, 1
      %s37 = ssub.s32 %s31, 2
      %s44 = sadd.s32 1, %s39
      %p45 = scmp.ge.s32.totalorder %s44, 4
      %s46 = scalar_select %p45, 0, %s44
      %s47 = sadd.s32 1, %s38
      %s48 = scalar_select %p45, %s47, %s38
      %p49 = scmp.ge.s32.totalorder %s48, 2
      %s50 = scalar_select %p49, 0, %s48
      %s51 = sadd.s32 %s39, 4294967295
      %p52 = scmp.gt.s32.totalorder %s51, 0
      %s53 = scalar_select %p52, %s51, 0
      %p54 = scmp.lt.s32.totalorder %s53, 3
      %s55 = scalar_select %p54, %s53, 3
      %s56 = sadd.s32 %s46, 4294967295
      %p57 = scmp.gt.s32.totalorder %s56, 0
      %s58 = scalar_select %p57, %s56, 0
      %p59 = scmp.lt.s32.totalorder %s58, 3
      %s60 = scalar_select %p59, %s58, 3
      %s61 = ssub.s32 %s38, %s50
      %s62 = ssub.s32 %s55, %s60
      %s63 = sor.u32 %s61, %s62
      %p64 = scmp.eq.s32.totalorder %s63, 0
      %s66 = sadd.s32 %s65, 1
      %s67 = scalar_select %p64, %s65, %s66
      %p70 = pneg %p64
      %p71 = scmp.eq.s32.totalorder %s31, 7
      %p72 = por %p70, %p71
      %p73 = scmp.ne.s32.totalorder %s65, %s68
      %p74 = scmp.eq.s32.totalorder %s31, 0
      %p75 = por %p73, %p74
      %p76 = scmp.ne.s32.totalorder %s65, %s68
      %p77 = scmp.eq.s32.totalorder %s36, 7
      %p78 = por %p76, %p77
      %p79 = scmp.ne.s32.totalorder %s68, %s69
      %p80 = scmp.eq.s32.totalorder %s36, 0
      %p81 = por %p79, %p80
      %p82 = scmp.ne.s32.totalorder %s68, %s69
      %p83 = scmp.eq.s32.totalorder %s37, 7
      %p84 = por %p82, %p83
      %p86 = scmp.ne.s32.totalorder %s69, %s85
      %p87 = scmp.eq.s32.totalorder %s37, 0
      %p88 = por %p86, %p87
      %p89 = scmp.gt.s32.totalorder %s39, 0
      %s90 = scalar_select %p89, %s39, 0
      %p91 = scmp.lt.s32.totalorder %s90, 3
      %s92 = scalar_select %p91, %s90, 3
      %p93 = scmp.gt.s32.totalorder %s46, 0
      %s94 = scalar_select %p93, %s46, 0
      %p95 = scmp.lt.s32.totalorder %s94, 3
      %s96 = scalar_select %p95, %s94, 3
      %s97 = ssub.s32 %s38, %s50
      %s98 = ssub.s32 %s92, %s96
      %s99 = sor.u32 %s97, %s98
      %p100 = scmp.eq.s32.totalorder %s99, 0
      %s102 = sadd.s32 %s101, 1
      %s103 = scalar_select %p100, %s101, %s102
      %p106 = pneg %p100
      %p107 = scmp.eq.s32.totalorder %s31, 7
      %p108 = por %p106, %p107
      %p109 = scmp.ne.s32.totalorder %s101, %s104
      %p110 = scmp.eq.s32.totalorder %s31, 0
      %p111 = por %p109, %p110
      %p112 = scmp.ne.s32.totalorder %s101, %s104
      %p113 = scmp.eq.s32.totalorder %s36, 7
      %p114 = por %p112, %p113
      %p115 = scmp.ne.s32.totalorder %s104, %s105
      %p116 = scmp.eq.s32.totalorder %s36, 0
      %p117 = por %p115, %p116
      %p118 = scmp.ne.s32.totalorder %s104, %s105
      %p119 = scmp.eq.s32.totalorder %s37, 7
      %p120 = por %p118, %p119
      %p122 = scmp.ne.s32.totalorder %s105, %s121
      %p123 = scmp.eq.s32.totalorder %s37, 0
      %p124 = por %p122, %p123
      %s125 = sadd.s32 %s39, 1
      %p126 = scmp.gt.s32.totalorder %s125, 0
      %s127 = scalar_select %p126, %s125, 0
      %p128 = scmp.lt.s32.totalorder %s127, 3
      %s129 = scalar_select %p128, %s127, 3
      %s130 = sadd.s32 %s46, 1
      %p131 = scmp.gt.s32.totalorder %s130, 0
      %s132 = scalar_select %p131, %s130, 0
      %p133 = scmp.lt.s32.totalorder %s132, 3
      %s134 = scalar_select %p133, %s132, 3
      %s135 = ssub.s32 %s38, %s50
      %s136 = ssub.s32 %s129, %s134
      %s137 = sor.u32 %s135, %s136
      %p138 = scmp.eq.s32.totalorder %s137, 0
      %s140 = sadd.s32 %s139, 1
      %s141 = scalar_select %p138, %s139, %s140
      %p144 = pneg %p138
      %p145 = scmp.eq.s32.totalorder %s31, 7
      %p146 = por %p144, %p145
      %p147 = scmp.ne.s32.totalorder %s139, %s142
      %p148 = scmp.eq.s32.totalorder %s31, 0
      %p149 = por %p147, %p148
      %p150 = scmp.ne.s32.totalorder %s139, %s142
      %p151 = scmp.eq.s32.totalorder %s36, 7
      %p152 = por %p150, %p151
      %p153 = scmp.ne.s32.totalorder %s142, %s143
      %p154 = scmp.eq.s32.totalorder %s36, 0
      %p155 = por %p153, %p154
      %p156 = scmp.ne.s32.totalorder %s142, %s143
      %p157 = scmp.eq.s32.totalorder %s37, 7
      %p158 = por %p156, %p157
      %p160 = scmp.ne.s32.totalorder %s143, %s159
      %p161 = scmp.eq.s32.totalorder %s37, 0
      %p162 = por %p160, %p161
      %s164 = sadd.s32 %s163, 1
      %p167 = scmp.eq.s32.totalorder %s31, 7
      %p168 = scmp.ne.s32.totalorder %s163, %s165
      %p169 = scmp.eq.s32.totalorder %s31, 0
      %p170 = por %p168, %p169
      %p171 = scmp.ne.s32.totalorder %s163, %s165
      %p172 = scmp.eq.s32.totalorder %s36, 7
      %p173 = por %p171, %p172
      %p174 = scmp.ne.s32.totalorder %s165, %s166
      %p175 = scmp.eq.s32.totalorder %s36, 0
      %p176 = por %p174, %p175
      %p177 = scmp.ne.s32.totalorder %s165, %s166
      %p178 = scmp.eq.s32.totalorder %s37, 7
      %p179 = por %p177, %p178
      %p181 = scmp.ne.s32.totalorder %s166, %s180
      %p182 = scmp.eq.s32.totalorder %s37, 0
      %p183 = por %p181, %p182
      %s185 = sadd.s32 %s184, 1
      %p188 = scmp.eq.s32.totalorder %s31, 7
      %p189 = scmp.ne.s32.totalorder %s184, %s186
      %p190 = scmp.eq.s32.totalorder %s31, 0
      %p191 = por %p189, %p190
      %p192 = scmp.ne.s32.totalorder %s184, %s186
      %p193 = scmp.eq.s32.totalorder %s36, 7
      %p194 = por %p192, %p193
      %p195 = scmp.ne.s32.totalorder %s186, %s187
      %p196 = scmp.eq.s32.totalorder %s36, 0
      %p197 = por %p195, %p196
      %p198 = scmp.ne.s32.totalorder %s186, %s187
      %p199 = scmp.eq.s32.totalorder %s37, 7
      %p200 = por %p198, %p199
      %p202 = scmp.ne.s32.totalorder %s187, %s201
      %p203 = scmp.eq.s32.totalorder %s37, 0
      %p204 = por %p202, %p203
      %s206 = sadd.s32 %s205, 1
      %p209 = scmp.eq.s32.totalorder %s31, 7
      %p210 = scmp.ne.s32.totalorder %s205, %s207
      %p211 = scmp.eq.s32.totalorder %s31, 0
      %p212 = por %p210, %p211
      %p213 = scmp.ne.s32.totalorder %s205, %s207
      %p214 = scmp.eq.s32.totalorder %s36, 7
      %p215 = por %p213, %p214
      %p216 = scmp.ne.s32.totalorder %s207, %s208
      %p217 = scmp.eq.s32.totalorder %s36, 0
      %p218 = por %p216, %p217
      %p219 = scmp.ne.s32.totalorder %s207, %s208
      %p220 = scmp.eq.s32.totalorder %s37, 7
      %p221 = por %p219, %p220
      %p223 = scmp.ne.s32.totalorder %s208, %s222
      %p224 = scmp.eq.s32.totalorder %s37, 0
      %p225 = por %p223, %p224
      %s227 = sadd.s32 %s226, 1
      %p230 = scmp.eq.s32.totalorder %s31, 7
      %p231 = scmp.ne.s32.totalorder %s226, %s228
      %p232 = scmp.eq.s32.totalorder %s31, 0
      %p233 = por %p231, %p232
      %p234 = scmp.ne.s32.totalorder %s226, %s228
      %p235 = scmp.eq.s32.totalorder %s36, 7
      %p236 = por %p234, %p235
      %p237 = scmp.ne.s32.totalorder %s228, %s229
      %p238 = scmp.eq.s32.totalorder %s36, 0
      %p239 = por %p237, %p238
      %p240 = scmp.ne.s32.totalorder %s228, %s229
      %p241 = scmp.eq.s32.totalorder %s37, 7
      %p242 = por %p240, %p241
      %p244 = scmp.ne.s32.totalorder %s229, %s243
      %p245 = scmp.eq.s32.totalorder %s37, 0
      %p246 = por %p244, %p245
      %s248 = sadd.s32 %s247, 1
      %p251 = scmp.eq.s32.totalorder %s31, 7
      %p252 = scmp.ne.s32.totalorder %s247, %s249
      %p253 = scmp.eq.s32.totalorder %s31, 0
      %p254 = por %p252, %p253
      %p255 = scmp.ne.s32.totalorder %s247, %s249
      %p256 = scmp.eq.s32.totalorder %s36, 7
      %p257 = por %p255, %p256
      %p258 = scmp.ne.s32.totalorder %s249, %s250
      %p259 = scmp.eq.s32.totalorder %s36, 0
      %p260 = por %p258, %p259
      %p261 = scmp.ne.s32.totalorder %s249, %s250
      %p262 = scmp.eq.s32.totalorder %s37, 7
      %p263 = por %p261, %p262
      %p265 = scmp.ne.s32.totalorder %s250, %s264
      %p266 = scmp.eq.s32.totalorder %s37, 0
      %p267 = por %p265, %p266
      %s268 = ssub.s32 %s38, %s50
      %s269 = ssub.s32 %s39, %s46
      %s270 = sor.u32 %s268, %s269
      %p271 = scmp.eq.s32.totalorder %s270, 0
      %s273 = sadd.s32 %s272, 1
      %s274 = scalar_select %p271, %s272, %s273
      %p277 = pneg %p271
      %p278 = scmp.eq.s32.totalorder %s31, 7
      %p279 = por %p277, %p278
      %p280 = scmp.ne.s32.totalorder %s272, %s275
      %p281 = scmp.eq.s32.totalorder %s31, 0
      %p282 = por %p280, %p281
      %p283 = scmp.ne.s32.totalorder %s272, %s275
      %p284 = scmp.eq.s32.totalorder %s36, 7
      %p285 = por %p283, %p284
      %p286 = scmp.ne.s32.totalorder %s275, %s276
      %p287 = scmp.eq.s32.totalorder %s36, 0
      %p288 = por %p286, %p287
      %p289 = scmp.ne.s32.totalorder %s275, %s276
      %p290 = scmp.eq.s32.totalorder %s37, 7
      %p291 = por %p289, %p290
      %p293 = scmp.ne.s32.totalorder %s276, %s292
      %p294 = scmp.eq.s32.totalorder %s37, 0
      %p295 = por %p293, %p294
      %s296 = ssub.s32 %s38, %s50
      %s297 = ssub.s32 %s39, %s46
      %s298 = sor.u32 %s296, %s297
      %p299 = scmp.eq.s32.totalorder %s298, 0
      %s301 = sadd.s32 %s300, 1
      %s302 = scalar_select %p299, %s300, %s301
      %p305 = pneg %p299
      %p306 = scmp.eq.s32.totalorder %s31, 7
      %p307 = por %p305, %p306
      %p308 = scmp.ne.s32.totalorder %s300, %s303
      %p309 = scmp.eq.s32.totalorder %s31, 0
      %p310 = por %p308, %p309
      %p311 = scmp.ne.s32.totalorder %s300, %s303
      %p312 = scmp.eq.s32.totalorder %s36, 7
      %p313 = por %p311, %p312
      %p314 = scmp.ne.s32.totalorder %s303, %s304
      %p315 = scmp.eq.s32.totalorder %s36, 0
      %p316 = por %p314, %p315
      %p317 = scmp.ne.s32.totalorder %s303, %s304
      %p318 = scmp.eq.s32.totalorder %s37, 7
      %p319 = por %p317, %p318
      %p321 = scmp.ne.s32.totalorder %s304, %s320
      %p322 = scmp.eq.s32.totalorder %s37, 0
      %p323 = por %p321, %p322
      %p324 = scmp.le.s32.totalorder 1, %s31
      %p325 = scmp.lt.s32.totalorder %s31, 9
      %p326 = pnand %p324, %p325
      %p327 = pneg %p326
      // Predicated region
      $region9: #{res_block_down.4} parent=5 // pred_check
        _
      $region10: #{res_block_down.4} parent=5 // pred_check_branch
        %329 = sbr.rel (%p326) target = $region12
      $region11: #{res_block_down.4} parent=5 // pred_region
        %s330 = ssub.s32 %s31, 1
        // Predicated region
        $region13: #{res_block_down.4} parent=11 // pred_check
          %p331 = pneg %p176
        $region14: #{res_block_down.4} parent=11 // pred_check_branch
          %333 = sbr.rel (%p331) target = $region16
        $region15: #{res_block_down.4} parent=11 // pred_region
          %s335 = ssub.s32 16, 16
          %336 = vsyncadd [#allocation10], %s335
          %s338 = sshll.u32 [#allocation9], 4
          %s339 = int_to_ptr.vmem [resolvable:$true] %s338
          %341 = dma.hbm_to_vmem [thread:$0]  %s3, 16, %s339, [#allocation10]
        $region16: #{res_block_down.4} parent=11 // pred_fallthru
          _
        // Predicated region
        $region17: #{res_block_down.4} parent=11 // pred_check
          %p342 = pneg %p197
        $region18: #{res_block_down.4} parent=11 // pred_check_branch
          %344 = sbr.rel (%p342) target = $region20
        $region19: #{res_block_down.4} parent=11 // pred_region
          %s346 = ssub.s32 16, 16
          %347 = vsyncadd [#allocation10], %s346
          %s349 = sshll.u32 [#allocation11], 4
          %s350 = int_to_ptr.vmem [resolvable:$true] %s349
          %352 = dma.hbm_to_vmem [thread:$0]  %s4, 16, %s350, [#allocation10]
        $region20: #{res_block_down.4} parent=11 // pred_fallthru
          _
        // Predicated region
        $region21: #{res_block_down.4} parent=11 // pred_check
          %p353 = pneg %p218
        $region22: #{res_block_down.4} parent=11 // pred_check_branch
          %355 = sbr.rel (%p353) target = $region24
        $region23: #{res_block_down.4} parent=11 // pred_region
          %s357 = ssub.s32 320, 320
          %358 = vsyncadd [#allocation13], %s357
          %s359 = sshll.u32 [#allocation12], 4
          %s360 = int_to_ptr.vmem [resolvable:$true] %s359
          %365 = dma.hbm_to_vmem [thread:$0]  %s5, 320, %s360, [#allocation13], 64, 64, 4
        $region24: #{res_block_down.4} parent=11 // pred_fallthru
          _
        // Predicated region
        $region25: #{res_block_down.4} parent=11 // pred_check
          %p366 = pneg %p239
        $region26: #{res_block_down.4} parent=11 // pred_check_branch
          %368 = sbr.rel (%p366) target = $region28
        $region27: #{res_block_down.4} parent=11 // pred_region
          %s370 = ssub.s32 320, 320
          %371 = vsyncadd [#allocation13], %s370
          %s372 = sshll.u32 [#allocation14], 4
          %s373 = int_to_ptr.vmem [resolvable:$true] %s372
          %378 = dma.hbm_to_vmem [thread:$0]  %s6, 320, %s373, [#allocation13], 64, 64, 4
        $region28: #{res_block_down.4} parent=11 // pred_fallthru
          _
        // Predicated region
        $region29: #{res_block_down.4} parent=11 // pred_check
          %p379 = pneg %p260
        $region30: #{res_block_down.4} parent=11 // pred_check_branch
          %381 = sbr.rel (%p379) target = $region32
        $region31: #{res_block_down.4} parent=11 // pred_region
          %s383 = ssub.s32 320, 320
          %384 = vsyncadd [#allocation16], %s383
          %s385 = sshll.u32 [#allocation15], 4
          %s386 = int_to_ptr.vmem [resolvable:$true] %s385
          %391 = dma.hbm_to_vmem [thread:$0]  %s7, 320, %s386, [#allocation16], 64, 64, 4
        $region32: #{res_block_down.4} parent=11 // pred_fallthru
          _
      $region12: #{res_block_down.4} parent=5 // pred_fallthru
        _
      %p392 = scmp.lt.s32.totalorder %s31, 8
      // Predicated region
      $region33: #{res_block_down.4} parent=5 // pred_check
        %p393 = pneg %p392
      $region34: #{res_block_down.4} parent=5 // pred_check_branch
        %395 = sbr.rel (%p393) target = $region36
      $region35: #{res_block_down.4} parent=5 // pred_region
        // Predicated region
        $region37: #{res_block_down.4} parent=35 // pred_check
          %p396 = pneg %p75
        $region38: #{res_block_down.4} parent=35 // pred_check_branch
          %398 = sbr.rel (%p396) target = $region40
        $region39: #{res_block_down.4} parent=35 // pred_region
          %s399 = sand.u32 %s65, 1
          %s400 = scalar_lea.sflag [#allocation4], %s399
          %s401 = sand.u32 %s65, 1
          %s402 = smul.addr %s401, 32
          %s403 = scalar_lea.vmem [#allocation3], %s402
          %s404 = sadd.s32 %s39, 4294967295
          %p405 = scmp.gt.s32.totalorder %s404, 0
          %s406 = scalar_select %p405, %s404, 0
          %p407 = scmp.lt.s32.totalorder %s406, 3
          %s408 = scalar_select %p407, %s406, 3
          %s410 = ssub.s32 512, 512
          %411 = vsyncadd %s400, %s410
          %s412 = smul.addr %s408, 8
          %s413 = smul.addr %s38, 32
          %s414 = sadd.s32 %s412, %s413
          %s415 = smul.addr %s414, 64
          %s416 = scalar_lea.hbm %s0, %s415
          %s417 = sshll.u32 %s403, 4
          %s418 = int_to_ptr.vmem [resolvable:$true] %s417
          %423 = dma.hbm_to_vmem [thread:$0]  %s416, 512, %s418, %s400, 64, 64, 4
        $region40: #{res_block_down.4} parent=35 // pred_fallthru
          _
        // Predicated region
        $region41: #{res_block_down.4} parent=35 // pred_check
          %p424 = pneg %p111
        $region42: #{res_block_down.4} parent=35 // pred_check_branch
          %426 = sbr.rel (%p424) target = $region44
        $region43: #{res_block_down.4} parent=35 // pred_region
          %s427 = sand.u32 %s31, 1
          %s428 = scalar_lea.sflag [#allocation7], %s427
          %s429 = sand.u32 %s101, 1
          %s430 = smul.addr %s429, 32
          %s431 = scalar_lea.vmem [#allocation6], %s430
          %p432 = scmp.gt.s32.totalorder %s39, 0
          %s433 = scalar_select %p432, %s39, 0
          %p434 = scmp.lt.s32.totalorder %s433, 3
          %s435 = scalar_select %p434, %s433, 3
          %s437 = ssub.s32 512, 512
          %438 = vsyncadd %s428, %s437
          %s439 = smul.addr %s435, 8
          %s440 = smul.addr %s38, 32
          %s441 = sadd.s32 %s439, %s440
          %s442 = smul.addr %s441, 64
          %s443 = scalar_lea.hbm %s1, %s442
          %s444 = sshll.u32 %s431, 4
          %s445 = int_to_ptr.vmem [resolvable:$true] %s444
          %450 = dma.hbm_to_vmem [thread:$0]  %s443, 512, %s445, %s428, 64, 64, 4
        $region44: #{res_block_down.4} parent=35 // pred_fallthru
          _
        // Predicated region
        $region45: #{res_block_down.4} parent=35 // pred_check
          %p451 = pneg %p149
        $region46: #{res_block_down.4} parent=35 // pred_check_branch
          %453 = sbr.rel (%p451) target = $region48
        $region47: #{res_block_down.4} parent=35 // pred_region
          %s454 = sand.u32 %s31, 1
          %s455 = scalar_lea.sflag [#allocation7], %s454
          %s456 = sand.u32 %s139, 1
          %s457 = smul.addr %s456, 32
          %s458 = scalar_lea.vmem [#allocation8], %s457
          %s459 = sadd.s32 %s39, 1
          %p460 = scmp.gt.s32.totalorder %s459, 0
          %s461 = scalar_select %p460, %s459, 0
          %p462 = scmp.lt.s32.totalorder %s461, 3
          %s463 = scalar_select %p462, %s461, 3
          %s465 = ssub.s32 512, 512
          %466 = vsyncadd %s455, %s465
          %s467 = smul.addr %s463, 8
          %s468 = smul.addr %s38, 32
          %s469 = sadd.s32 %s467, %s468
          %s470 = smul.addr %s469, 64
          %s471 = scalar_lea.hbm %s2, %s470
          %s472 = sshll.u32 %s458, 4
          %s473 = int_to_ptr.vmem [resolvable:$true] %s472
          %478 = dma.hbm_to_vmem [thread:$0]  %s471, 512, %s473, %s455, 64, 64, 4
        $region48: #{res_block_down.4} parent=35 // pred_fallthru
          _
      $region36: #{res_block_down.4} parent=5 // pred_fallthru
        _
      %p479 = scmp.le.s32.totalorder 1, %s31
      %p480 = scmp.lt.s32.totalorder %s31, 9
      %p481 = pnand %p479, %p480
      %p482 = pneg %p481
      // Predicated region
      $region49: #{res_block_down.4} parent=5 // pred_check
        _
      $region50: #{res_block_down.4} parent=5 // pred_check_branch
        %484 = sbr.rel (%p481) target = $region52
      $region51: #{res_block_down.4} parent=5 // pred_region
        %s485 = ssub.s32 %s31, 1
        %s486 = sand.u32 %s68, 1
        %s487 = scalar_lea.sflag [#allocation4], %s486
        %s488 = sand.u32 %s68, 1
        %s489 = smul.addr %s488, 32
        %s490 = scalar_lea.vmem [#allocation3], %s489
        // Predicated region
        $region53: #{res_block_down.4} parent=51 // pred_check
          %p491 = pneg %p81
        $region54: #{res_block_down.4} parent=51 // pred_check_branch
          %493 = sbr.rel (%p491) target = $region56
        $region55: #{res_block_down.4} parent=51 // pred_region
          %494 = dma.done %s487, 512
        $region56: #{res_block_down.4} parent=51 // pred_fallthru
          _
        %s495 = sand.u32 %s36, 1
        %s496 = scalar_lea.sflag [#allocation7], %s495
        %s497 = sand.u32 %s104, 1
        %s498 = smul.addr %s497, 32
        %s499 = scalar_lea.vmem [#allocation6], %s498
        // Predicated region
        $region57: #{res_block_down.4} parent=51 // pred_check
          %p500 = pneg %p117
        $region58: #{res_block_down.4} parent=51 // pred_check_branch
          %502 = sbr.rel (%p500) target = $region60
        $region59: #{res_block_down.4} parent=51 // pred_region
          %503 = dma.done %s496, 512
        $region60: #{res_block_down.4} parent=51 // pred_fallthru
          _
        %s504 = sand.u32 %s36, 1
        %s505 = scalar_lea.sflag [#allocation7], %s504
        %s506 = sand.u32 %s142, 1
        %s507 = smul.addr %s506, 32
        %s508 = scalar_lea.vmem [#allocation8], %s507
        // Predicated region
        $region61: #{res_block_down.4} parent=51 // pred_check
          %p509 = pneg %p155
        $region62: #{res_block_down.4} parent=51 // pred_check_branch
          %511 = sbr.rel (%p509) target = $region64
        $region63: #{res_block_down.4} parent=51 // pred_region
          %512 = dma.done %s505, 512
        $region64: #{res_block_down.4} parent=51 // pred_fallthru
          _
        // Predicated region
        $region65: #{res_block_down.4} parent=51 // pred_check
          %p513 = pneg %p176
        $region66: #{res_block_down.4} parent=51 // pred_check_branch
          %515 = sbr.rel (%p513) target = $region68
        $region67: #{res_block_down.4} parent=51 // pred_region
          %516 = dma.done [#allocation10], 16
        $region68: #{res_block_down.4} parent=51 // pred_fallthru
          _
        // Predicated region
        $region69: #{res_block_down.4} parent=51 // pred_check
          %p517 = pneg %p197
        $region70: #{res_block_down.4} parent=51 // pred_check_branch
          %519 = sbr.rel (%p517) target = $region72
        $region71: #{res_block_down.4} parent=51 // pred_region
          %520 = dma.done [#allocation10], 16
        $region72: #{res_block_down.4} parent=51 // pred_fallthru
          _
        // Predicated region
        $region73: #{res_block_down.4} parent=51 // pred_check
          %p521 = pneg %p218
        $region74: #{res_block_down.4} parent=51 // pred_check_branch
          %523 = sbr.rel (%p521) target = $region76
        $region75: #{res_block_down.4} parent=51 // pred_region
          %524 = dma.done [#allocation13], 320
        $region76: #{res_block_down.4} parent=51 // pred_fallthru
          _
        // Predicated region
        $region77: #{res_block_down.4} parent=51 // pred_check
          %p525 = pneg %p239
        $region78: #{res_block_down.4} parent=51 // pred_check_branch
          %527 = sbr.rel (%p525) target = $region80
        $region79: #{res_block_down.4} parent=51 // pred_region
          %528 = dma.done [#allocation13], 320
        $region80: #{res_block_down.4} parent=51 // pred_fallthru
          _
        // Predicated region
        $region81: #{res_block_down.4} parent=51 // pred_check
          %p529 = pneg %p260
        $region82: #{res_block_down.4} parent=51 // pred_check_branch
          %531 = sbr.rel (%p529) target = $region84
        $region83: #{res_block_down.4} parent=51 // pred_region
          %532 = dma.done [#allocation16], 320
        $region84: #{res_block_down.4} parent=51 // pred_fallthru
          _
        %s533 = sand.u32 %s68, 1
        %s534 = scalar_lea.sflag [#allocation4], %s533
        %s535 = sand.u32 %s68, 1
        %s536 = smul.addr %s535, 32
        %s537 = scalar_lea.vmem [#allocation3], %s536
        %p538 = pneg %p81
        %p539 = pneg %p78
        %s540 = sand.u32 %s36, 1
        %s541 = scalar_lea.sflag [#allocation7], %s540
        %s542 = sand.u32 %s104, 1
        %s543 = smul.addr %s542, 32
        %s544 = scalar_lea.vmem [#allocation6], %s543
        %p545 = pneg %p117
        %p546 = pneg %p114
        %s547 = sand.u32 %s36, 1
        %s548 = scalar_lea.sflag [#allocation7], %s547
        %s549 = sand.u32 %s142, 1
        %s550 = smul.addr %s549, 32
        %s551 = scalar_lea.vmem [#allocation8], %s550
        %p552 = pneg %p155
        %p553 = pneg %p152
        %p554 = pneg %p176
        %p555 = pneg %p173
        %p556 = pneg %p197
        %p557 = pneg %p194
        %p558 = pneg %p218
        %p559 = pneg %p215
        %p560 = pneg %p239
        %p561 = pneg %p236
        %p562 = pneg %p260
        %p563 = pneg %p257
        %p564 = pneg %p288
        %p565 = pneg %p285
        %s566 = sand.u32 %s275, 1
        %s567 = scalar_lea.sflag [#allocation5], %s566
        %s568 = sand.u32 %s275, 1
        %s569 = smul.addr %s568, 32
        %s570 = scalar_lea.vmem [#allocation17], %s569
        %p571 = pneg %p316
        %p572 = pneg %p313
        %s573 = sand.u32 %s303, 1
        %s574 = scalar_lea.sflag [#allocation19], %s573
        %s575 = sand.u32 %s303, 1
        %s576 = smul.addr %s575, 2
        %s577 = scalar_lea.vmem [#allocation18], %s576
        %s578 = sadd.s32 %s41, 4294967295
        %p579 = scmp.gt.s32.totalorder %s578, 0
        %s580 = scalar_select %p579, %s578, 0
        %p581 = scmp.lt.s32.totalorder %s580, 3
        %s582 = scalar_select %p581, %s580, 3
        %p583 = scmp.gt.s32.totalorder %s41, 0
        %s584 = scalar_select %p583, %s41, 0
        %p585 = scmp.lt.s32.totalorder %s584, 3
        %s586 = scalar_select %p585, %s584, 3
        %s587 = sadd.s32 %s41, 1
        %p588 = scmp.gt.s32.totalorder %s587, 0
        %s589 = scalar_select %p588, %s587, 0
        %p590 = scmp.lt.s32.totalorder %s589, 3
        %s591 = scalar_select %p590, %s589, 3
        %v593 = vld [vmem:[#allocation9] sm:$0x1]
        %v594 = vld [vmem:[#allocation11] sm:$0x1]
        %vm595 = vcmask 27648
        %596 = vst.msk [vmem:[#allocation2] sm:$0xf] %vm595, 0
        %vm597 = vcmask 24576
        %598 = vst.msk [vmem:[#allocation2 + $0x4] sm:$0x1] %vm597, 0
        %599 = vst.msk [vmem:[#allocation2 + $0x8] sm:$0xf] %vm595, 0
        %600 = vst.msk [vmem:[#allocation2 + $0xc] sm:$0x1] %vm597, 0
        %601 = vst.msk [vmem:[#allocation2 + $0x10] sm:$0xf] %vm595, 0
        %602 = vst.msk [vmem:[#allocation2 + $0x14] sm:$0x1] %vm597, 0
        %603 = vst.msk [vmem:[#allocation2 + $0x18] sm:$0xf] %vm595, 0
        %604 = vst.msk [vmem:[#allocation2 + $0x1c] sm:$0x1] %vm597, 0
        %605 = vst.msk [vmem:[#allocation2 + $0x20] sm:$0xf] %vm595, 0
        %606 = vst.msk [vmem:[#allocation2 + $0x24] sm:$0x1] %vm597, 0
        %607 = vst.msk [vmem:[#allocation2 + $0x28] sm:$0xf] %vm595, 0
        %608 = vst.msk [vmem:[#allocation2 + $0x2c] sm:$0x1] %vm597, 0
        %609 = vst.msk [vmem:[#allocation2 + $0x30] sm:$0xf] %vm595, 0
        %610 = vst.msk [vmem:[#allocation2 + $0x34] sm:$0x1] %vm597, 0
        %611 = vst.msk [vmem:[#allocation2 + $0x38] sm:$0xf] %vm595, 0
        %612 = vst.msk [vmem:[#allocation2 + $0x3c] sm:$0x1] %vm597, 0
        %613 = vst.msk [vmem:[#allocation2 + $0x40] sm:$0xf] %vm595, 0
        %614 = vst.msk [vmem:[#allocation2 + $0x44] sm:$0x1] %vm597, 0
        %615 = vst.msk [vmem:[#allocation2 + $0x48] sm:$0xf] %vm595, 0
        %616 = vst.msk [vmem:[#allocation2 + $0x4c] sm:$0x1] %vm597, 0
        %v617 = vld [vmem:[%s490] sm:$0xf]
        %v618 = vld [vmem:[%s490 + $0x4] sm:$0xf]
        %v619 = vld [vmem:[%s490 + $0x8] sm:$0xf]
        %v620 = vld [vmem:[%s490 + $0xc] sm:$0xf]
        %v621 = vld [vmem:[%s490 + $0x10] sm:$0xf]
        %v622 = vld [vmem:[%s490 + $0x14] sm:$0xf]
        %v623 = vld [vmem:[%s490 + $0x18] sm:$0xf]
        %v624 = vld [vmem:[%s490 + $0x1c] sm:$0xf]
        %v625 = vunpack.c.l.bf16 %v617
        %v626 = vunpack.c.l.bf16 %v618
        %v627 = vunpack.c.l.bf16 %v619
        %v628 = vunpack.c.l.bf16 %v620
        %v629 = vunpack.c.l.bf16 %v621
        %v630 = vunpack.c.l.bf16 %v622
        %v631 = vunpack.c.l.bf16 %v623
        %v632 = vunpack.c.l.bf16 %v624
        %v634 = vlaneseq
        %v635 = vshrl.u32 %v634, 7
        %v636 = vsub.s32 0, %v635
        %v637 = vrot.slane %v593, %v636
        %v639 = vmul.f32 %v625, %v637
        %v640 = vmul.f32 %v626, %v637
        %v641 = vmul.f32 %v627, %v637
        %v642 = vmul.f32 %v628, %v637
        %v643 = vmul.f32 %v629, %v637
        %v644 = vmul.f32 %v630, %v637
        %v645 = vmul.f32 %v631, %v637
        %v646 = vmul.f32 %v632, %v637
        %v648 = vlaneseq
        %v649 = vshrl.u32 %v648, 7
        %v650 = vsub.s32 0, %v649
        %v651 = vrot.slane %v594, %v650
        %v653 = vadd.f32 %v639, %v651
        %v654 = vadd.f32 %v640, %v651
        %v655 = vadd.f32 %v641, %v651
        %v656 = vadd.f32 %v642, %v651
        %v657 = vadd.f32 %v643, %v651
        %v658 = vadd.f32 %v644, %v651
        %v659 = vadd.f32 %v645, %v651
        %v660 = vadd.f32 %v646, %v651
        %vm661 = vcmp.ge.f32.partialorder %v653, 0.0
        %vm662 = vcmp.ge.f32.partialorder %v654, 0.0
        %vm663 = vcmp.ge.f32.partialorder %v655, 0.0
        %vm664 = vcmp.ge.f32.partialorder %v656, 0.0
        %vm665 = vcmp.ge.f32.partialorder %v657, 0.0
        %vm666 = vcmp.ge.f32.partialorder %v658, 0.0
        %vm667 = vcmp.ge.f32.partialorder %v659, 0.0
        %vm668 = vcmp.ge.f32.partialorder %v660, 0.0
        %v669 = vmul.f32 %v653, 0.2
        %v670 = vmul.f32 %v654, 0.2
        %v671 = vmul.f32 %v655, 0.2
        %v672 = vmul.f32 %v656, 0.2
        %v673 = vmul.f32 %v657, 0.2
        %v674 = vmul.f32 %v658, 0.2
        %v675 = vmul.f32 %v659, 0.2
        %v676 = vmul.f32 %v660, 0.2
        %v677 = vsel %vm661, %v653, %v669
        %v678 = vsel %vm662, %v654, %v670
        %v679 = vsel %vm663, %v655, %v671
        %v680 = vsel %vm664, %v656, %v672
        %v681 = vsel %vm665, %v657, %v673
        %v682 = vsel %vm666, %v658, %v674
        %v683 = vsel %vm667, %v659, %v675
        %v684 = vsel %vm668, %v660, %v676
        %v685 = vpack.c.bf16 %v677, %v677
        %v686 = vpack.c.bf16 %v678, %v678
        %v687 = vpack.c.bf16 %v679, %v679
        %v688 = vpack.c.bf16 %v680, %v680
        %v689 = vpack.c.bf16 %v681, %v681
        %v690 = vpack.c.bf16 %v682, %v682
        %v691 = vpack.c.bf16 %v683, %v683
        %v692 = vpack.c.bf16 %v684, %v684
        %v701 = vunpack.c.l.b16 %v685
        %v702 = vunpack.c.l.b16 %v686
        %v703 = vunpack.c.l.b16 %v687
        %v704 = vunpack.c.l.b16 %v688
        %v705 = vunpack.c.l.b16 %v689
        %v706 = vunpack.c.l.b16 %v690
        %v707 = vunpack.c.l.b16 %v691
        %v708 = vunpack.c.l.b16 %v692
        %v709 = vpack.c.b16 %v701, %v701
        %v710 = vpack.c.b16 %v702, %v702
        %v711 = vpack.c.b16 %v703, %v703
        %v712 = vpack.c.b16 %v704, %v704
        %v713 = vpack.c.b16 %v705, %v705
        %v714 = vpack.c.b16 %v706, %v706
        %v715 = vpack.c.b16 %v707, %v707
        %v716 = vpack.c.b16 %v708, %v708
        %v718 = vshrl.u32 %v709, 16
        %v720 = vrot.slane %v718, 7
        %v721 = vshll.u32 %v709, 16
        %v723 = vor.u32 %v720, %v721
        %v724 = vrot.slane %v720, 4
        %v726 = vshrl.u32 %v710, 16
        %v728 = vrot.slane %v726, 7
        %v729 = vshll.u32 %v710, 16
        %v731 = vor.u32 %v728, %v729
        %v732 = vrot.slane %v728, 4
        %v734 = vshrl.u32 %v711, 16
        %v736 = vrot.slane %v734, 7
        %v737 = vshll.u32 %v711, 16
        %v739 = vor.u32 %v736, %v737
        %v740 = vrot.slane %v736, 4
        %v742 = vshrl.u32 %v712, 16
        %v744 = vrot.slane %v742, 7
        %v745 = vshll.u32 %v712, 16
        %v747 = vor.u32 %v744, %v745
        %v748 = vrot.slane %v744, 4
        %v750 = vshrl.u32 %v713, 16
        %v752 = vrot.slane %v750, 7
        %v753 = vshll.u32 %v713, 16
        %v755 = vor.u32 %v752, %v753
        %v756 = vrot.slane %v752, 4
        %v758 = vshrl.u32 %v714, 16
        %v760 = vrot.slane %v758, 7
        %v761 = vshll.u32 %v714, 16
        %v763 = vor.u32 %v760, %v761
        %v764 = vrot.slane %v760, 4
        %v766 = vshrl.u32 %v715, 16
        %v768 = vrot.slane %v766, 7
        %v769 = vshll.u32 %v715, 16
        %v771 = vor.u32 %v768, %v769
        %v772 = vrot.slane %v768, 4
        %v774 = vshrl.u32 %v716, 16
        %v776 = vrot.slane %v774, 7
        %v777 = vshll.u32 %v716, 16
        %v779 = vor.u32 %v776, %v777
        %v780 = vrot.slane %v776, 4
        %s797 = scalar_lea.vmem [#allocation2], 8
        %vm798 = vcmask 27648
        %vm799 = vsmask.f32 7938
        %vm800 = vmand %vm798, %vm799
        %v801 = vld [vmem:[%s797] sm:$0xf]
        %v802 = vsel %vm800, %v723, %v801
        %803 = vst [vmem:[%s797] sm:$0xf] %v802
        %vm804 = vcmask 24576
        %vm805 = vsmask.f32 256
        %vm806 = vmand %vm804, %vm805
        %v807 = vld [vmem:[%s797 + $0x4] sm:$0x1]
        %v808 = vsel %vm806, %v724, %v807
        %809 = vst [vmem:[%s797 + $0x4] sm:$0x1] %v808
        %v810 = vld [vmem:[%s797 + $0x8] sm:$0xf]
        %v811 = vsel %vm800, %v731, %v810
        %812 = vst [vmem:[%s797 + $0x8] sm:$0xf] %v811
        %v813 = vld [vmem:[%s797 + $0xc] sm:$0x1]
        %v814 = vsel %vm806, %v732, %v813
        %815 = vst [vmem:[%s797 + $0xc] sm:$0x1] %v814
        %v816 = vld [vmem:[%s797 + $0x10] sm:$0xf]
        %v817 = vsel %vm800, %v739, %v816
        %818 = vst [vmem:[%s797 + $0x10] sm:$0xf] %v817
        %v819 = vld [vmem:[%s797 + $0x14] sm:$0x1]
        %v820 = vsel %vm806, %v740, %v819
        %821 = vst [vmem:[%s797 + $0x14] sm:$0x1] %v820
        %v822 = vld [vmem:[%s797 + $0x18] sm:$0xf]
        %v823 = vsel %vm800, %v747, %v822
        %824 = vst [vmem:[%s797 + $0x18] sm:$0xf] %v823
        %v825 = vld [vmem:[%s797 + $0x1c] sm:$0x1]
        %v826 = vsel %vm806, %v748, %v825
        %827 = vst [vmem:[%s797 + $0x1c] sm:$0x1] %v826
        %v828 = vld [vmem:[%s797 + $0x20] sm:$0xf]
        %v829 = vsel %vm800, %v755, %v828
        %830 = vst [vmem:[%s797 + $0x20] sm:$0xf] %v829
        %v831 = vld [vmem:[%s797 + $0x24] sm:$0x1]
        %v832 = vsel %vm806, %v756, %v831
        %833 = vst [vmem:[%s797 + $0x24] sm:$0x1] %v832
        %v834 = vld [vmem:[%s797 + $0x28] sm:$0xf]
        %v835 = vsel %vm800, %v763, %v834
        %836 = vst [vmem:[%s797 + $0x28] sm:$0xf] %v835
        %v837 = vld [vmem:[%s797 + $0x2c] sm:$0x1]
        %v838 = vsel %vm806, %v764, %v837
        %839 = vst [vmem:[%s797 + $0x2c] sm:$0x1] %v838
        %v840 = vld [vmem:[%s797 + $0x30] sm:$0xf]
        %v841 = vsel %vm800, %v771, %v840
        %842 = vst [vmem:[%s797 + $0x30] sm:$0xf] %v841
        %v843 = vld [vmem:[%s797 + $0x34] sm:$0x1]
        %v844 = vsel %vm806, %v772, %v843
        %845 = vst [vmem:[%s797 + $0x34] sm:$0x1] %v844
        %v846 = vld [vmem:[%s797 + $0x38] sm:$0xf]
        %v847 = vsel %vm800, %v779, %v846
        %848 = vst [vmem:[%s797 + $0x38] sm:$0xf] %v847
        %v849 = vld [vmem:[%s797 + $0x3c] sm:$0x1]
        %v850 = vsel %vm806, %v780, %v849
        %851 = vst [vmem:[%s797 + $0x3c] sm:$0x1] %v850
        %v852 = vld [vmem:[#allocation2] sm:$0xf]
        %v853 = vld [vmem:[#allocation2 + $0x8] sm:$0xf]
        %v854 = vld [vmem:[#allocation2 + $0x10] sm:$0xf]
        %v855 = vld [vmem:[#allocation2 + $0x18] sm:$0xf]
        %v856 = vld [vmem:[#allocation2 + $0x20] sm:$0xf]
        %v857 = vld [vmem:[#allocation2 + $0x28] sm:$0xf]
        %v858 = vld [vmem:[#allocation2 + $0x30] sm:$0xf]
        %v859 = vld [vmem:[#allocation2 + $0x38] sm:$0xf]
        %v860 = vld [vmem:[#allocation2 + $0x4] sm:$0x1]
        %v861 = vld [vmem:[#allocation2 + $0xc] sm:$0x1]
        %v862 = vld [vmem:[#allocation2 + $0x14] sm:$0x1]
        %v863 = vld [vmem:[#allocation2 + $0x1c] sm:$0x1]
        %v864 = vld [vmem:[#allocation2 + $0x24] sm:$0x1]
        %v865 = vld [vmem:[#allocation2 + $0x2c] sm:$0x1]
        %v866 = vld [vmem:[#allocation2 + $0x34] sm:$0x1]
        %v867 = vld [vmem:[#allocation2 + $0x3c] sm:$0x1]
        %vm868 = vsmask.f32 3328
        %vm869 = vsmask.f32 7440
        %vm870 = vmor %vm868, %vm869
        %v872 = vshrl.u32 %v852, 16
        %v874 = vrot.slane %v872, 4
        %v875 = vshll.u32 %v852, 16
        %v877 = vrot.slane %v875, 5
        %v878 = vor.u32 %v874, %v877
        %v879 = vrot.slane %v878, 4
        %v881 = vshll.u32 %v860, 16
        %v883 = vrot.slane %v881, 5
        %v884 = vsel %vm870, %v879, %v883
        %v886 = vshrl.u32 %v853, 16
        %v888 = vrot.slane %v886, 4
        %v889 = vshll.u32 %v853, 16
        %v891 = vrot.slane %v889, 5
        %v892 = vor.u32 %v888, %v891
        %v893 = vrot.slane %v892, 4
        %v895 = vshll.u32 %v861, 16
        %v897 = vrot.slane %v895, 5
        %v898 = vsel %vm870, %v893, %v897
        %v900 = vshrl.u32 %v854, 16
        %v902 = vrot.slane %v900, 4
        %v903 = vshll.u32 %v854, 16
        %v905 = vrot.slane %v903, 5
        %v906 = vor.u32 %v902, %v905
        %v907 = vrot.slane %v906, 4
        %v909 = vshll.u32 %v862, 16
        %v911 = vrot.slane %v909, 5
        %v912 = vsel %vm870, %v907, %v911
        %v914 = vshrl.u32 %v855, 16
        %v916 = vrot.slane %v914, 4
        %v917 = vshll.u32 %v855, 16
        %v919 = vrot.slane %v917, 5
        %v920 = vor.u32 %v916, %v919
        %v921 = vrot.slane %v920, 4
        %v923 = vshll.u32 %v863, 16
        %v925 = vrot.slane %v923, 5
        %v926 = vsel %vm870, %v921, %v925
        %v928 = vshrl.u32 %v856, 16
        %v930 = vrot.slane %v928, 4
        %v931 = vshll.u32 %v856, 16
        %v933 = vrot.slane %v931, 5
        %v934 = vor.u32 %v930, %v933
        %v935 = vrot.slane %v934, 4
        %v937 = vshll.u32 %v864, 16
        %v939 = vrot.slane %v937, 5
        %v940 = vsel %vm870, %v935, %v939
        %v942 = vshrl.u32 %v857, 16
        %v944 = vrot.slane %v942, 4
        %v945 = vshll.u32 %v857, 16
        %v947 = vrot.slane %v945, 5
        %v948 = vor.u32 %v944, %v947
        %v949 = vrot.slane %v948, 4
        %v951 = vshll.u32 %v865, 16
        %v953 = vrot.slane %v951, 5
        %v954 = vsel %vm870, %v949, %v953
        %v956 = vshrl.u32 %v858, 16
        %v958 = vrot.slane %v956, 4
        %v959 = vshll.u32 %v858, 16
        %v961 = vrot.slane %v959, 5
        %v962 = vor.u32 %v958, %v961
        %v963 = vrot.slane %v962, 4
        %v965 = vshll.u32 %v866, 16
        %v967 = vrot.slane %v965, 5
        %v968 = vsel %vm870, %v963, %v967
        %v970 = vshrl.u32 %v859, 16
        %v972 = vrot.slane %v970, 4
        %v973 = vshll.u32 %v859, 16
        %v975 = vrot.slane %v973, 5
        %v976 = vor.u32 %v972, %v975
        %v977 = vrot.slane %v976, 4
        %v979 = vshll.u32 %v867, 16
        %v981 = vrot.slane %v979, 5
        %v982 = vsel %vm870, %v977, %v981
        %v983 = vld [vmem:[#allocation2] sm:$0xe]
        %v984 = vld [vmem:[#allocation2 + $0x8] sm:$0xe]
        %v985 = vld [vmem:[#allocation2 + $0x10] sm:$0xe]
        %v986 = vld [vmem:[#allocation2 + $0x18] sm:$0xe]
        %v987 = vld [vmem:[#allocation2 + $0x20] sm:$0xe]
        %v988 = vld [vmem:[#allocation2 + $0x28] sm:$0xe]
        %v989 = vld [vmem:[#allocation2 + $0x30] sm:$0xe]
        %v990 = vld [vmem:[#allocation2 + $0x38] sm:$0xe]
        %vm1007 = vcmask 1042432
        %vm1008 = vcmask 1046532
        %vm1009 = vmor %vm1007, %vm1008
        %v1010 = vrot.slane %v983, 5
        %v1011 = vrot.slane %v1010, 4
        %v1012 = vrot.slane %v860, 5
        %v1013 = vsel %vm1009, %v1011, %v1012
        %v1014 = vrot.slane %v984, 5
        %v1015 = vrot.slane %v1014, 4
        %v1016 = vrot.slane %v861, 5
        %v1017 = vsel %vm1009, %v1015, %v1016
        %v1018 = vrot.slane %v985, 5
        %v1019 = vrot.slane %v1018, 4
        %v1020 = vrot.slane %v862, 5
        %v1021 = vsel %vm1009, %v1019, %v1020
        %v1022 = vrot.slane %v986, 5
        %v1023 = vrot.slane %v1022, 4
        %v1024 = vrot.slane %v863, 5
        %v1025 = vsel %vm1009, %v1023, %v1024
        %v1026 = vrot.slane %v987, 5
        %v1027 = vrot.slane %v1026, 4
        %v1028 = vrot.slane %v864, 5
        %v1029 = vsel %vm1009, %v1027, %v1028
        %v1030 = vrot.slane %v988, 5
        %v1031 = vrot.slane %v1030, 4
        %v1032 = vrot.slane %v865, 5
        %v1033 = vsel %vm1009, %v1031, %v1032
        %v1034 = vrot.slane %v989, 5
        %v1035 = vrot.slane %v1034, 4
        %v1036 = vrot.slane %v866, 5
        %v1037 = vsel %vm1009, %v1035, %v1036
        %v1038 = vrot.slane %v990, 5
        %v1039 = vrot.slane %v1038, 4
        %v1040 = vrot.slane %v867, 5
        %v1041 = vsel %vm1009, %v1039, %v1040
        %v1042 = vld [vmem:[%s797] sm:$0xf]
        %v1043 = vld [vmem:[%s797 + $0x8] sm:$0xf]
        %v1044 = vld [vmem:[%s797 + $0x10] sm:$0xf]
        %v1045 = vld [vmem:[%s797 + $0x18] sm:$0xf]
        %v1046 = vld [vmem:[%s797 + $0x20] sm:$0xf]
        %v1047 = vld [vmem:[%s797 + $0x28] sm:$0xf]
        %v1048 = vld [vmem:[%s797 + $0x30] sm:$0xf]
        %v1049 = vld [vmem:[%s797 + $0x38] sm:$0xf]
        %v1050 = vld [vmem:[%s797 + $0x4] sm:$0x1]
        %v1051 = vld [vmem:[%s797 + $0xc] sm:$0x1]
        %v1052 = vld [vmem:[%s797 + $0x14] sm:$0x1]
        %v1053 = vld [vmem:[%s797 + $0x1c] sm:$0x1]
        %v1054 = vld [vmem:[%s797 + $0x24] sm:$0x1]
        %v1055 = vld [vmem:[%s797 + $0x2c] sm:$0x1]
        %v1056 = vld [vmem:[%s797 + $0x34] sm:$0x1]
        %v1057 = vld [vmem:[%s797 + $0x3c] sm:$0x1]
        %v1059 = vshrl.u32 %v1042, 16
        %v1061 = vrot.slane %v1059, 4
        %v1062 = vshll.u32 %v1042, 16
        %v1064 = vrot.slane %v1062, 5
        %v1065 = vor.u32 %v1061, %v1064
        %v1066 = vrot.slane %v1065, 4
        %v1068 = vshll.u32 %v1050, 16
        %v1070 = vrot.slane %v1068, 5
        %v1071 = vsel %vm870, %v1066, %v1070
        %v1073 = vshrl.u32 %v1043, 16
        %v1075 = vrot.slane %v1073, 4
        %v1076 = vshll.u32 %v1043, 16
        %v1078 = vrot.slane %v1076, 5
        %v1079 = vor.u32 %v1075, %v1078
        %v1080 = vrot.slane %v1079, 4
        %v1082 = vshll.u32 %v1051, 16
        %v1084 = vrot.slane %v1082, 5
        %v1085 = vsel %vm870, %v1080, %v1084
        %v1087 = vshrl.u32 %v1044, 16
        %v1089 = vrot.slane %v1087, 4
        %v1090 = vshll.u32 %v1044, 16
        %v1092 = vrot.slane %v1090, 5
        %v1093 = vor.u32 %v1089, %v1092
        %v1094 = vrot.slane %v1093, 4
        %v1096 = vshll.u32 %v1052, 16
        %v1098 = vrot.slane %v1096, 5
        %v1099 = vsel %vm870, %v1094, %v1098
        %v1101 = vshrl.u32 %v1045, 16
        %v1103 = vrot.slane %v1101, 4
        %v1104 = vshll.u32 %v1045, 16
        %v1106 = vrot.slane %v1104, 5
        %v1107 = vor.u32 %v1103, %v1106
        %v1108 = vrot.slane %v1107, 4
        %v1110 = vshll.u32 %v1053, 16
        %v1112 = vrot.slane %v1110, 5
        %v1113 = vsel %vm870, %v1108, %v1112
        %v1115 = vshrl.u32 %v1046, 16
        %v1117 = vrot.slane %v1115, 4
        %v1118 = vshll.u32 %v1046, 16
        %v1120 = vrot.slane %v1118, 5
        %v1121 = vor.u32 %v1117, %v1120
        %v1122 = vrot.slane %v1121, 4
        %v1124 = vshll.u32 %v1054, 16
        %v1126 = vrot.slane %v1124, 5
        %v1127 = vsel %vm870, %v1122, %v1126
        %v1129 = vshrl.u32 %v1047, 16
        %v1131 = vrot.slane %v1129, 4
        %v1132 = vshll.u32 %v1047, 16
        %v1134 = vrot.slane %v1132, 5
        %v1135 = vor.u32 %v1131, %v1134
        %v1136 = vrot.slane %v1135, 4
        %v1138 = vshll.u32 %v1055, 16
        %v1140 = vrot.slane %v1138, 5
        %v1141 = vsel %vm870, %v1136, %v1140
        %v1143 = vshrl.u32 %v1048, 16
        %v1145 = vrot.slane %v1143, 4
        %v1146 = vshll.u32 %v1048, 16
        %v1148 = vrot.slane %v1146, 5
        %v1149 = vor.u32 %v1145, %v1148
        %v1150 = vrot.slane %v1149, 4
        %v1152 = vshll.u32 %v1056, 16
        %v1154 = vrot.slane %v1152, 5
        %v1155 = vsel %vm870, %v1150, %v1154
        %v1157 = vshrl.u32 %v1049, 16
        %v1159 = vrot.slane %v1157, 4
        %v1160 = vshll.u32 %v1049, 16
        %v1162 = vrot.slane %v1160, 5
        %v1163 = vor.u32 %v1159, %v1162
        %v1164 = vrot.slane %v1163, 4
        %v1166 = vshll.u32 %v1057, 16
        %v1168 = vrot.slane %v1166, 5
        %v1169 = vsel %vm870, %v1164, %v1168
        %v1170 = vld [vmem:[%s797] sm:$0xe]
        %v1171 = vld [vmem:[%s797 + $0x8] sm:$0xe]
        %v1172 = vld [vmem:[%s797 + $0x10] sm:$0xe]
        %v1173 = vld [vmem:[%s797 + $0x18] sm:$0xe]
        %v1174 = vld [vmem:[%s797 + $0x20] sm:$0xe]
        %v1175 = vld [vmem:[%s797 + $0x28] sm:$0xe]
        %v1176 = vld [vmem:[%s797 + $0x30] sm:$0xe]
        %v1177 = vld [vmem:[%s797 + $0x38] sm:$0xe]
        %v1194 = vrot.slane %v1170, 5
        %v1195 = vrot.slane %v1194, 4
        %v1196 = vrot.slane %v1050, 5
        %v1197 = vsel %vm1009, %v1195, %v1196
        %v1198 = vrot.slane %v1171, 5
        %v1199 = vrot.slane %v1198, 4
        %v1200 = vrot.slane %v1051, 5
        %v1201 = vsel %vm1009, %v1199, %v1200
        %v1202 = vrot.slane %v1172, 5
        %v1203 = vrot.slane %v1202, 4
        %v1204 = vrot.slane %v1052, 5
        %v1205 = vsel %vm1009, %v1203, %v1204
        %v1206 = vrot.slane %v1173, 5
        %v1207 = vrot.slane %v1206, 4
        %v1208 = vrot.slane %v1053, 5
        %v1209 = vsel %vm1009, %v1207, %v1208
        %v1210 = vrot.slane %v1174, 5
        %v1211 = vrot.slane %v1210, 4
        %v1212 = vrot.slane %v1054, 5
        %v1213 = vsel %vm1009, %v1211, %v1212
        %v1214 = vrot.slane %v1175, 5
        %v1215 = vrot.slane %v1214, 4
        %v1216 = vrot.slane %v1055, 5
        %v1217 = vsel %vm1009, %v1215, %v1216
        %v1218 = vrot.slane %v1176, 5
        %v1219 = vrot.slane %v1218, 4
        %v1220 = vrot.slane %v1056, 5
        %v1221 = vsel %vm1009, %v1219, %v1220
        %v1222 = vrot.slane %v1177, 5
        %v1223 = vrot.slane %v1222, 4
        %v1224 = vrot.slane %v1057, 5
        %v1225 = vsel %vm1009, %v1223, %v1224
        %s1226 = scalar_lea.vmem [#allocation2], 16
        %v1227 = vld [vmem:[%s1226] sm:$0xf]
        %v1228 = vld [vmem:[%s1226 + $0x8] sm:$0xf]
        %v1229 = vld [vmem:[%s1226 + $0x10] sm:$0xf]
        %v1230 = vld [vmem:[%s1226 + $0x18] sm:$0xf]
        %v1231 = vld [vmem:[%s1226 + $0x20] sm:$0xf]
        %v1232 = vld [vmem:[%s1226 + $0x28] sm:$0xf]
        %v1233 = vld [vmem:[%s1226 + $0x30] sm:$0xf]
        %v1234 = vld [vmem:[%s1226 + $0x38] sm:$0xf]
        %v1235 = vld [vmem:[%s1226 + $0x4] sm:$0x1]
        %v1236 = vld [vmem:[%s1226 + $0xc] sm:$0x1]
        %v1237 = vld [vmem:[%s1226 + $0x14] sm:$0x1]
        %v1238 = vld [vmem:[%s1226 + $0x1c] sm:$0x1]
        %v1239 = vld [vmem:[%s1226 + $0x24] sm:$0x1]
        %v1240 = vld [vmem:[%s1226 + $0x2c] sm:$0x1]
        %v1241 = vld [vmem:[%s1226 + $0x34] sm:$0x1]
        %v1242 = vld [vmem:[%s1226 + $0x3c] sm:$0x1]
        %v1244 = vshrl.u32 %v1227, 16
        %v1246 = vrot.slane %v1244, 4
        %v1247 = vshll.u32 %v1227, 16
        %v1249 = vrot.slane %v1247, 5
        %v1250 = vor.u32 %v1246, %v1249
        %v1251 = vrot.slane %v1250, 4
        %v1253 = vshll.u32 %v1235, 16
        %v1255 = vrot.slane %v1253, 5
        %v1256 = vsel %vm870, %v1251, %v1255
        %v1258 = vshrl.u32 %v1228, 16
        %v1260 = vrot.slane %v1258, 4
        %v1261 = vshll.u32 %v1228, 16
        %v1263 = vrot.slane %v1261, 5
        %v1264 = vor.u32 %v1260, %v1263
        %v1265 = vrot.slane %v1264, 4
        %v1267 = vshll.u32 %v1236, 16
        %v1269 = vrot.slane %v1267, 5
        %v1270 = vsel %vm870, %v1265, %v1269
        %v1272 = vshrl.u32 %v1229, 16
        %v1274 = vrot.slane %v1272, 4
        %v1275 = vshll.u32 %v1229, 16
        %v1277 = vrot.slane %v1275, 5
        %v1278 = vor.u32 %v1274, %v1277
        %v1279 = vrot.slane %v1278, 4
        %v1281 = vshll.u32 %v1237, 16
        %v1283 = vrot.slane %v1281, 5
        %v1284 = vsel %vm870, %v1279, %v1283
        %v1286 = vshrl.u32 %v1230, 16
        %v1288 = vrot.slane %v1286, 4
        %v1289 = vshll.u32 %v1230, 16
        %v1291 = vrot.slane %v1289, 5
        %v1292 = vor.u32 %v1288, %v1291
        %v1293 = vrot.slane %v1292, 4
        %v1295 = vshll.u32 %v1238, 16
        %v1297 = vrot.slane %v1295, 5
        %v1298 = vsel %vm870, %v1293, %v1297
        %v1300 = vshrl.u32 %v1231, 16
        %v1302 = vrot.slane %v1300, 4
        %v1303 = vshll.u32 %v1231, 16
        %v1305 = vrot.slane %v1303, 5
        %v1306 = vor.u32 %v1302, %v1305
        %v1307 = vrot.slane %v1306, 4
        %v1309 = vshll.u32 %v1239, 16
        %v1311 = vrot.slane %v1309, 5
        %v1312 = vsel %vm870, %v1307, %v1311
        %v1314 = vshrl.u32 %v1232, 16
        %v1316 = vrot.slane %v1314, 4
        %v1317 = vshll.u32 %v1232, 16
        %v1319 = vrot.slane %v1317, 5
        %v1320 = vor.u32 %v1316, %v1319
        %v1321 = vrot.slane %v1320, 4
        %v1323 = vshll.u32 %v1240, 16
        %v1325 = vrot.slane %v1323, 5
        %v1326 = vsel %vm870, %v1321, %v1325
        %v1328 = vshrl.u32 %v1233, 16
        %v1330 = vrot.slane %v1328, 4
        %v1331 = vshll.u32 %v1233, 16
        %v1333 = vrot.slane %v1331, 5
        %v1334 = vor.u32 %v1330, %v1333
        %v1335 = vrot.slane %v1334, 4
        %v1337 = vshll.u32 %v1241, 16
        %v1339 = vrot.slane %v1337, 5
        %v1340 = vsel %vm870, %v1335, %v1339
        %v1342 = vshrl.u32 %v1234, 16
        %v1344 = vrot.slane %v1342, 4
        %v1345 = vshll.u32 %v1234, 16
        %v1347 = vrot.slane %v1345, 5
        %v1348 = vor.u32 %v1344, %v1347
        %v1349 = vrot.slane %v1348, 4
        %v1351 = vshll.u32 %v1242, 16
        %v1353 = vrot.slane %v1351, 5
        %v1354 = vsel %vm870, %v1349, %v1353
        %v1355 = vld [vmem:[%s1226] sm:$0xe]
        %v1356 = vld [vmem:[%s1226 + $0x8] sm:$0xe]
        %v1357 = vld [vmem:[%s1226 + $0x10] sm:$0xe]
        %v1358 = vld [vmem:[%s1226 + $0x18] sm:$0xe]
        %v1359 = vld [vmem:[%s1226 + $0x20] sm:$0xe]
        %v1360 = vld [vmem:[%s1226 + $0x28] sm:$0xe]
        %v1361 = vld [vmem:[%s1226 + $0x30] sm:$0xe]
        %v1362 = vld [vmem:[%s1226 + $0x38] sm:$0xe]
        %v1379 = vrot.slane %v1355, 5
        %v1380 = vrot.slane %v1379, 4
        %v1381 = vrot.slane %v1235, 5
        %v1382 = vsel %vm1009, %v1380, %v1381
        %v1383 = vrot.slane %v1356, 5
        %v1384 = vrot.slane %v1383, 4
        %v1385 = vrot.slane %v1236, 5
        %v1386 = vsel %vm1009, %v1384, %v1385
        %v1387 = vrot.slane %v1357, 5
        %v1388 = vrot.slane %v1387, 4
        %v1389 = vrot.slane %v1237, 5
        %v1390 = vsel %vm1009, %v1388, %v1389
        %v1391 = vrot.slane %v1358, 5
        %v1392 = vrot.slane %v1391, 4
        %v1393 = vrot.slane %v1238, 5
        %v1394 = vsel %vm1009, %v1392, %v1393
        %v1395 = vrot.slane %v1359, 5
        %v1396 = vrot.slane %v1395, 4
        %v1397 = vrot.slane %v1239, 5
        %v1398 = vsel %vm1009, %v1396, %v1397
        %v1399 = vrot.slane %v1360, 5
        %v1400 = vrot.slane %v1399, 4
        %v1401 = vrot.slane %v1240, 5
        %v1402 = vsel %vm1009, %v1400, %v1401
        %v1403 = vrot.slane %v1361, 5
        %v1404 = vrot.slane %v1403, 4
        %v1405 = vrot.slane %v1241, 5
        %v1406 = vsel %vm1009, %v1404, %v1405
        %v1407 = vrot.slane %v1362, 5
        %v1408 = vrot.slane %v1407, 4
        %v1409 = vrot.slane %v1242, 5
        %v1410 = vsel %vm1009, %v1408, %v1409
        %v1419 = vunpack.c.l.b16 %v852
        %v1420 = vunpack.c.l.b16 %v853
        %v1421 = vunpack.c.l.b16 %v854
        %v1422 = vunpack.c.l.b16 %v855
        %v1423 = vunpack.c.l.b16 %v856
        %v1424 = vunpack.c.l.b16 %v857
        %v1425 = vunpack.c.l.b16 %v858
        %v1426 = vunpack.c.l.b16 %v859
        %v1427 = vpack.c.b16 %v1420, %v1419
        %v1428 = vpack.c.b16 %v1422, %v1421
        %v1429 = vpack.c.b16 %v1424, %v1423
        %v1430 = vpack.c.b16 %v1426, %v1425
        %v1431 = vunpack.c.l.b16 %v884
        %v1432 = vunpack.c.l.b16 %v898
        %v1433 = vunpack.c.l.b16 %v912
        %v1434 = vunpack.c.l.b16 %v926
        %v1435 = vunpack.c.l.b16 %v940
        %v1436 = vunpack.c.l.b16 %v954
        %v1437 = vunpack.c.l.b16 %v968
        %v1438 = vunpack.c.l.b16 %v982
        %v1439 = vpack.c.b16 %v1432, %v1431
        %v1440 = vpack.c.b16 %v1434, %v1433
        %v1441 = vpack.c.b16 %v1436, %v1435
        %v1442 = vpack.c.b16 %v1438, %v1437
        %1443 = vrot.lane.b32.xlu0 %v1439, 4
        %v1444 = vpop.permute.xlu0 %1443
        %1445 = vrot.lane.b32.xlu0 %v1440, 4
        %v1446 = vpop.permute.xlu0 %1445
        %1447 = vrot.lane.b32.xlu0 %v1441, 4
        %v1448 = vpop.permute.xlu0 %1447
        %1449 = vrot.lane.b32.xlu0 %v1442, 4
        %v1450 = vpop.permute.xlu0 %1449
        %v1451 = vunpack.c.l.b16 %v1013
        %v1452 = vunpack.c.l.b16 %v1017
        %v1453 = vunpack.c.l.b16 %v1021
        %v1454 = vunpack.c.l.b16 %v1025
        %v1455 = vunpack.c.l.b16 %v1029
        %v1456 = vunpack.c.l.b16 %v1033
        %v1457 = vunpack.c.l.b16 %v1037
        %v1458 = vunpack.c.l.b16 %v1041
        %v1459 = vpack.c.b16 %v1452, %v1451
        %v1460 = vpack.c.b16 %v1454, %v1453
        %v1461 = vpack.c.b16 %v1456, %v1455
        %v1462 = vpack.c.b16 %v1458, %v1457
        %1463 = vrot.lane.b32.xlu0 %v1459, 8
        %v1464 = vpop.permute.xlu0 %1463
        %1465 = vrot.lane.b32.xlu0 %v1460, 8
        %v1466 = vpop.permute.xlu0 %1465
        %1467 = vrot.lane.b32.xlu0 %v1461, 8
        %v1468 = vpop.permute.xlu0 %1467
        %1469 = vrot.lane.b32.xlu0 %v1462, 8
        %v1470 = vpop.permute.xlu0 %1469
        %v1479 = vunpack.c.l.b16 %v1042
        %v1480 = vunpack.c.l.b16 %v1043
        %v1481 = vunpack.c.l.b16 %v1044
        %v1482 = vunpack.c.l.b16 %v1045
        %v1483 = vunpack.c.l.b16 %v1046
        %v1484 = vunpack.c.l.b16 %v1047
        %v1485 = vunpack.c.l.b16 %v1048
        %v1486 = vunpack.c.l.b16 %v1049
        %v1487 = vpack.c.b16 %v1480, %v1479
        %v1488 = vpack.c.b16 %v1482, %v1481
        %v1489 = vpack.c.b16 %v1484, %v1483
        %v1490 = vpack.c.b16 %v1486, %v1485
        %1491 = vrot.lane.b32.xlu0 %v1487, 12
        %v1492 = vpop.permute.xlu0 %1491
        %1493 = vrot.lane.b32.xlu0 %v1488, 12
        %v1494 = vpop.permute.xlu0 %1493
        %1495 = vrot.lane.b32.xlu0 %v1489, 12
        %v1496 = vpop.permute.xlu0 %1495
        %1497 = vrot.lane.b32.xlu0 %v1490, 12
        %v1498 = vpop.permute.xlu0 %1497
        %v1499 = vunpack.c.l.b16 %v1071
        %v1500 = vunpack.c.l.b16 %v1085
        %v1501 = vunpack.c.l.b16 %v1099
        %v1502 = vunpack.c.l.b16 %v1113
        %v1503 = vunpack.c.l.b16 %v1127
        %v1504 = vunpack.c.l.b16 %v1141
        %v1505 = vunpack.c.l.b16 %v1155
        %v1506 = vunpack.c.l.b16 %v1169
        %v1507 = vpack.c.b16 %v1500, %v1499
        %v1508 = vpack.c.b16 %v1502, %v1501
        %v1509 = vpack.c.b16 %v1504, %v1503
        %v1510 = vpack.c.b16 %v1506, %v1505
        %1511 = vrot.lane.b32.xlu0 %v1507, 16
        %v1512 = vpop.permute.xlu0 %1511
        %1513 = vrot.lane.b32.xlu0 %v1508, 16
        %v1514 = vpop.permute.xlu0 %1513
        %1515 = vrot.lane.b32.xlu0 %v1509, 16
        %v1516 = vpop.permute.xlu0 %1515
        %1517 = vrot.lane.b32.xlu0 %v1510, 16
        %v1518 = vpop.permute.xlu0 %1517
        %v1519 = vunpack.c.l.b16 %v1197
        %v1520 = vunpack.c.l.b16 %v1201
        %v1521 = vunpack.c.l.b16 %v1205
        %v1522 = vunpack.c.l.b16 %v1209
        %v1523 = vunpack.c.l.b16 %v1213
        %v1524 = vunpack.c.l.b16 %v1217
        %v1525 = vunpack.c.l.b16 %v1221
        %v1526 = vunpack.c.l.b16 %v1225
        %v1527 = vpack.c.b16 %v1520, %v1519
        %v1528 = vpack.c.b16 %v1522, %v1521
        %v1529 = vpack.c.b16 %v1524, %v1523
        %v1530 = vpack.c.b16 %v1526, %v1525
        %1531 = vrot.lane.b32.xlu0 %v1527, 20
        %v1532 = vpop.permute.xlu0 %1531
        %1533 = vrot.lane.b32.xlu0 %v1528, 20
        %v1534 = vpop.permute.xlu0 %1533
        %1535 = vrot.lane.b32.xlu0 %v1529, 20
        %v1536 = vpop.permute.xlu0 %1535
        %1537 = vrot.lane.b32.xlu0 %v1530, 20
        %v1538 = vpop.permute.xlu0 %1537
        %v1547 = vunpack.c.l.b16 %v1227
        %v1548 = vunpack.c.l.b16 %v1228
        %v1549 = vunpack.c.l.b16 %v1229
        %v1550 = vunpack.c.l.b16 %v1230
        %v1551 = vunpack.c.l.b16 %v1231
        %v1552 = vunpack.c.l.b16 %v1232
        %v1553 = vunpack.c.l.b16 %v1233
        %v1554 = vunpack.c.l.b16 %v1234
        %v1555 = vpack.c.b16 %v1548, %v1547
        %v1556 = vpack.c.b16 %v1550, %v1549
        %v1557 = vpack.c.b16 %v1552, %v1551
        %v1558 = vpack.c.b16 %v1554, %v1553
        %1559 = vrot.lane.b32.xlu0 %v1555, 24
        %v1560 = vpop.permute.xlu0 %1559
        %1561 = vrot.lane.b32.xlu0 %v1556, 24
        %v1562 = vpop.permute.xlu0 %1561
        %1563 = vrot.lane.b32.xlu0 %v1557, 24
        %v1564 = vpop.permute.xlu0 %1563
        %1565 = vrot.lane.b32.xlu0 %v1558, 24
        %v1566 = vpop.permute.xlu0 %1565
        %v1567 = vunpack.c.l.b16 %v1256
        %v1568 = vunpack.c.l.b16 %v1270
        %v1569 = vunpack.c.l.b16 %v1284
        %v1570 = vunpack.c.l.b16 %v1298
        %v1571 = vunpack.c.l.b16 %v1312
        %v1572 = vunpack.c.l.b16 %v1326
        %v1573 = vunpack.c.l.b16 %v1340
        %v1574 = vunpack.c.l.b16 %v1354
        %v1575 = vpack.c.b16 %v1568, %v1567
        %v1576 = vpack.c.b16 %v1570, %v1569
        %v1577 = vpack.c.b16 %v1572, %v1571
        %v1578 = vpack.c.b16 %v1574, %v1573
        %1579 = vrot.lane.b32.xlu0 %v1575, 28
        %v1580 = vpop.permute.xlu0 %1579
        %1581 = vrot.lane.b32.xlu0 %v1576, 28
        %v1582 = vpop.permute.xlu0 %1581
        %1583 = vrot.lane.b32.xlu0 %v1577, 28
        %v1584 = vpop.permute.xlu0 %1583
        %1585 = vrot.lane.b32.xlu0 %v1578, 28
        %v1586 = vpop.permute.xlu0 %1585
        %v1587 = vunpack.c.l.b16 %v1382
        %v1588 = vunpack.c.l.b16 %v1386
        %v1589 = vunpack.c.l.b16 %v1390
        %v1590 = vunpack.c.l.b16 %v1394
        %v1591 = vunpack.c.l.b16 %v1398
        %v1592 = vunpack.c.l.b16 %v1402
        %v1593 = vunpack.c.l.b16 %v1406
        %v1594 = vunpack.c.l.b16 %v1410
        %v1595 = vpack.c.b16 %v1588, %v1587
        %v1596 = vpack.c.b16 %v1590, %v1589
        %v1597 = vpack.c.b16 %v1592, %v1591
        %v1598 = vpack.c.b16 %v1594, %v1593
        %1599 = vrot.lane.b32.xlu0 %v1595, 32
        %v1600 = vpop.permute.xlu0 %1599
        %1601 = vrot.lane.b32.xlu0 %v1596, 32
        %v1602 = vpop.permute.xlu0 %1601
        %1603 = vrot.lane.b32.xlu0 %v1597, 32
        %v1604 = vpop.permute.xlu0 %1603
        %1605 = vrot.lane.b32.xlu0 %v1598, 32
        %v1606 = vpop.permute.xlu0 %1605
        %vm1607 = vcmask 31744
        %v1610 = vsel %vm1607, %v1427, %v1444
        %v1613 = vsel %vm1607, %v1428, %v1446
        %v1616 = vsel %vm1607, %v1429, %v1448
        %v1619 = vsel %vm1607, %v1430, %v1450
        %vm1620 = vcmask 64512
        %v1622 = vsel %vm1620, %v1610, %v1464
        %v1624 = vsel %vm1620, %v1613, %v1466
        %v1626 = vsel %vm1620, %v1616, %v1468
        %v1628 = vsel %vm1620, %v1619, %v1470
        %vm1629 = vcmask 97280
        %v1631 = vsel %vm1629, %v1622, %v1492
        %v1633 = vsel %vm1629, %v1624, %v1494
        %v1635 = vsel %vm1629, %v1626, %v1496
        %v1637 = vsel %vm1629, %v1628, %v1498
        %vm1638 = vcmask 130048
        %v1640 = vsel %vm1638, %v1631, %v1512
        %v1642 = vsel %vm1638, %v1633, %v1514
        %v1644 = vsel %vm1638, %v1635, %v1516
        %v1646 = vsel %vm1638, %v1637, %v1518
        %vm1647 = vcmask 162816
        %v1649 = vsel %vm1647, %v1640, %v1532
        %v1651 = vsel %vm1647, %v1642, %v1534
        %v1653 = vsel %vm1647, %v1644, %v1536
        %v1655 = vsel %vm1647, %v1646, %v1538
        %vm1656 = vcmask 195584
        %v1658 = vsel %vm1656, %v1649, %v1560
        %v1660 = vsel %vm1656, %v1651, %v1562
        %v1662 = vsel %vm1656, %v1653, %v1564
        %v1664 = vsel %vm1656, %v1655, %v1566
        %vm1665 = vcmask 228352
        %v1667 = vsel %vm1665, %v1658, %v1580
        %v1669 = vsel %vm1665, %v1660, %v1582
        %v1671 = vsel %vm1665, %v1662, %v1584
        %v1673 = vsel %vm1665, %v1664, %v1586
        %vm1674 = vcmask 261120
        %v1676 = vsel %vm1674, %v1667, %v1600
        %v1678 = vsel %vm1674, %v1669, %v1602
        %v1680 = vsel %vm1674, %v1671, %v1604
        %v1682 = vsel %vm1674, %v1673, %v1606
        %v1683 = vld [vmem:[#allocation12] sm:$0xf]
        %v1684 = vld [vmem:[#allocation12 + $0x4] sm:$0xf]
        %v1685 = vld [vmem:[#allocation12 + $0x8] sm:$0xf]
        %v1686 = vld [vmem:[#allocation12 + $0xc] sm:$0xf]
        %v1687 = vld [vmem:[#allocation12 + $0x10] sm:$0x3]
        %v1693 = vunpack.c.l.b16 %v1683
        %v1694 = vunpack.c.l.b16 %v1684
        %v1695 = vunpack.c.l.b16 %v1685
        %v1696 = vunpack.c.l.b16 %v1686
        %v1697 = vunpack.c.l.b16 %v1687
        %v1698 = vpack.c.b16 %v1694, %v1693
        %v1699 = vpack.c.b16 %v1696, %v1695
        %v1700 = vpack.c.b16 %v1697, %v1697
        %vm1703 = vcmask 293888
        %v1704 = vsel %vm1703, %v1676, 0
        %v1706 = vsel %vm1703, %v1678, 0
        %v1708 = vsel %vm1703, %v1680, 0
        %v1710 = vsel %vm1703, %v1682, 0
        %vm1712 = vcmask 1041408
        %v1714 = vsel %vm1712, %v1700, 0
        %1716 = vmatprep.subr.bf16.mxu0 0
        %1717 = vmatpush1.bf16.msra.mxu0 %v1698
        %1718 = vmatprep.subr.bf16.mxu0 0
        %1719 = vmatpush1.bf16.msra.mxu0 %v1699
        %1720 = vmatprep.subr.bf16.mxu0 0
        %1721 = vmatpush1.bf16.msra.mxu0 %v1714
        %1722 = vmatprep.subr.bf16.mxu0 0
        %1723 = vmatpush1.bf16.msra.mxu0 0
        %1724 = vmatprep.subr.bf16.mxu0 0
        %1725 = vmatpush1.bf16.msra.mxu0 0
        %1726 = vmatprep.subr.bf16.mxu0 0
        %1727 = vmatpush1.bf16.msra.mxu0 0
        %1728 = vmatprep.subr.bf16.mxu0 0
        %1729 = vmatpush1.bf16.msra.mxu0 0
        %1730 = vmatprep.subr.bf16.mxu0 0
        %1731 = vmatpush1.bf16.msra.mxu0 0
        %1732 = vmatprep.subr.bf16.mxu0 0
        %1733 = vmatpush1.bf16.msra.mxu0 0
        %1734 = vmatprep.subr.bf16.mxu0 0
        %1735 = vmatpush1.bf16.msra.mxu0 0
        %1736 = vmatprep.subr.bf16.mxu0 0
        %1737 = vmatpush1.bf16.msra.mxu0 0
        %1738 = vmatprep.subr.bf16.mxu0 0
        %1739 = vmatpush1.bf16.msra.mxu0 0
        %1740 = vmatprep.subr.bf16.mxu0 0
        %1741 = vmatpush1.bf16.msra.mxu0 0
        %1742 = vmatprep.subr.bf16.mxu0 0
        %1743 = vmatpush1.bf16.msra.mxu0 0
        %1744 = vmatprep.subr.bf16.mxu0 0
        %1745 = vmatpush1.bf16.msra.mxu0 0
        %1746 = vmatprep.subr.bf16.mxu0 0
        %1747 = vmatpush1.bf16.msra.mxu0 0
        %1748 = vmatprep.mubr.bf16.mxu0 0
        %1749 = vmatmul.mubr.bf16.gmra.mrb[0].mxu0 %v1704
        %v1750 = vpop.f32.mrb[0].mxu0
        %v1751 = vadd.f32 0.0, %v1750
        %v1752 = vpop.f32.mrb[0].mxu0
        %v1753 = vpop.f32.mrb[0].mxu0
        %v1754 = vadd.f32 0.0, %v1753
        %v1755 = vpop.f32.mrb[0].mxu0
        %1756 = vmatprep.mubr.bf16.mxu0 0
        %1757 = vmatmul.mubr.bf16.gmra.mrb[0].mxu0 %v1706
        %v1758 = vpop.f32.mrb[0].mxu0
        %v1759 = vadd.f32 0.0, %v1758
        %v1760 = vpop.f32.mrb[0].mxu0
        %v1761 = vpop.f32.mrb[0].mxu0
        %v1762 = vadd.f32 0.0, %v1761
        %v1763 = vpop.f32.mrb[0].mxu0
        %1764 = vmatprep.mubr.bf16.mxu0 0
        %1765 = vmatmul.mubr.bf16.gmra.mrb[0].mxu0 %v1708
        %v1766 = vpop.f32.mrb[0].mxu0
        %v1767 = vadd.f32 0.0, %v1766
        %v1768 = vpop.f32.mrb[0].mxu0
        %v1769 = vpop.f32.mrb[0].mxu0
        %v1770 = vadd.f32 0.0, %v1769
        %v1771 = vpop.f32.mrb[0].mxu0
        %1772 = vmatprep.mubr.bf16.mxu0 0
        %1773 = vmatmul.mubr.bf16.gmra.mrb[0].mxu0 %v1710
        %v1774 = vpop.f32.mrb[0].mxu0
        %v1775 = vadd.f32 0.0, %v1774
        %v1776 = vpop.f32.mrb[0].mxu0
        %v1777 = vpop.f32.mrb[0].mxu0
        %v1778 = vadd.f32 0.0, %v1777
        %v1779 = vpop.f32.mrb[0].mxu0
        %1780 = vdwg.mxu0
        %p1781 = scmp.gt.s32.totalorder %s41, 0
        %s1782 = scalar_select %p1781, 1, 0
        %v1783 = vstv %s1782
        %vm1784 = vcmp.eq.s32.totalorder %v1783, 1
        %v1785 = vsel %vm1784, %v1751, 0.0
        %v1786 = vsel %vm1784, %v1754, 0.0
        %v1787 = vsel %vm1784, %v1759, 0.0
        %v1788 = vsel %vm1784, %v1762, 0.0
        %v1789 = vsel %vm1784, %v1767, 0.0
        %v1790 = vsel %vm1784, %v1770, 0.0
        %v1791 = vsel %vm1784, %v1775, 0.0
        %v1792 = vsel %vm1784, %v1778, 0.0
        %v1793 = vld [vmem:[%s499] sm:$0xf]
        %v1794 = vld [vmem:[%s499 + $0x4] sm:$0xf]
        %v1795 = vld [vmem:[%s499 + $0x8] sm:$0xf]
        %v1796 = vld [vmem:[%s499 + $0xc] sm:$0xf]
        %v1797 = vld [vmem:[%s499 + $0x10] sm:$0xf]
        %v1798 = vld [vmem:[%s499 + $0x14] sm:$0xf]
        %v1799 = vld [vmem:[%s499 + $0x18] sm:$0xf]
        %v1800 = vld [vmem:[%s499 + $0x1c] sm:$0xf]
        %v1801 = vunpack.c.l.bf16 %v1793
        %v1802 = vunpack.c.l.bf16 %v1794
        %v1803 = vunpack.c.l.bf16 %v1795
        %v1804 = vunpack.c.l.bf16 %v1796
        %v1805 = vunpack.c.l.bf16 %v1797
        %v1806 = vunpack.c.l.bf16 %v1798
        %v1807 = vunpack.c.l.bf16 %v1799
        %v1808 = vunpack.c.l.bf16 %v1800
        %v1809 = vmul.f32 %v1801, %v637
        %v1810 = vmul.f32 %v1802, %v637
        %v1811 = vmul.f32 %v1803, %v637
        %v1812 = vmul.f32 %v1804, %v637
        %v1813 = vmul.f32 %v1805, %v637
        %v1814 = vmul.f32 %v1806, %v637
        %v1815 = vmul.f32 %v1807, %v637
        %v1816 = vmul.f32 %v1808, %v637
        %v1817 = vadd.f32 %v1809, %v651
        %v1818 = vadd.f32 %v1810, %v651
        %v1819 = vadd.f32 %v1811, %v651
        %v1820 = vadd.f32 %v1812, %v651
        %v1821 = vadd.f32 %v1813, %v651
        %v1822 = vadd.f32 %v1814, %v651
        %v1823 = vadd.f32 %v1815, %v651
        %v1824 = vadd.f32 %v1816, %v651
        %vm1825 = vcmp.ge.f32.partialorder %v1817, 0.0
        %vm1826 = vcmp.ge.f32.partialorder %v1818, 0.0
        %vm1827 = vcmp.ge.f32.partialorder %v1819, 0.0
        %vm1828 = vcmp.ge.f32.partialorder %v1820, 0.0
        %vm1829 = vcmp.ge.f32.partialorder %v1821, 0.0
        %vm1830 = vcmp.ge.f32.partialorder %v1822, 0.0
        %vm1831 = vcmp.ge.f32.partialorder %v1823, 0.0
        %vm1832 = vcmp.ge.f32.partialorder %v1824, 0.0
        %v1833 = vmul.f32 %v1817, 0.2
        %v1834 = vmul.f32 %v1818, 0.2
        %v1835 = vmul.f32 %v1819, 0.2
        %v1836 = vmul.f32 %v1820, 0.2
        %v1837 = vmul.f32 %v1821, 0.2
        %v1838 = vmul.f32 %v1822, 0.2
        %v1839 = vmul.f32 %v1823, 0.2
        %v1840 = vmul.f32 %v1824, 0.2
        %v1841 = vsel %vm1825, %v1817, %v1833
        %v1842 = vsel %vm1826, %v1818, %v1834
        %v1843 = vsel %vm1827, %v1819, %v1835
        %v1844 = vsel %vm1828, %v1820, %v1836
        %v1845 = vsel %vm1829, %v1821, %v1837
        %v1846 = vsel %vm1830, %v1822, %v1838
        %v1847 = vsel %vm1831, %v1823, %v1839
        %v1848 = vsel %vm1832, %v1824, %v1840
        %v1849 = vpack.c.bf16 %v1841, %v1841
        %v1850 = vpack.c.bf16 %v1842, %v1842
        %v1851 = vpack.c.bf16 %v1843, %v1843
        %v1852 = vpack.c.bf16 %v1844, %v1844
        %v1853 = vpack.c.bf16 %v1845, %v1845
        %v1854 = vpack.c.bf16 %v1846, %v1846
        %v1855 = vpack.c.bf16 %v1847, %v1847
        %v1856 = vpack.c.bf16 %v1848, %v1848
        %v1865 = vunpack.c.l.b16 %v1849
        %v1866 = vunpack.c.l.b16 %v1850
        %v1867 = vunpack.c.l.b16 %v1851
        %v1868 = vunpack.c.l.b16 %v1852
        %v1869 = vunpack.c.l.b16 %v1853
        %v1870 = vunpack.c.l.b16 %v1854
        %v1871 = vunpack.c.l.b16 %v1855
        %v1872 = vunpack.c.l.b16 %v1856
        %v1873 = vpack.c.b16 %v1865, %v1865
        %v1874 = vpack.c.b16 %v1866, %v1866
        %v1875 = vpack.c.b16 %v1867, %v1867
        %v1876 = vpack.c.b16 %v1868, %v1868
        %v1877 = vpack.c.b16 %v1869, %v1869
        %v1878 = vpack.c.b16 %v1870, %v1870
        %v1879 = vpack.c.b16 %v1871, %v1871
        %v1880 = vpack.c.b16 %v1872, %v1872
        %v1882 = vshrl.u32 %v1873, 16
        %v1884 = vrot.slane %v1882, 7
        %v1885 = vshll.u32 %v1873, 16
        %v1887 = vor.u32 %v1884, %v1885
        %v1888 = vrot.slane %v1884, 4
        %v1890 = vshrl.u32 %v1874, 16
        %v1892 = vrot.slane %v1890, 7
        %v1893 = vshll.u32 %v1874, 16
        %v1895 = vor.u32 %v1892, %v1893
        %v1896 = vrot.slane %v1892, 4
        %v1898 = vshrl.u32 %v1875, 16
        %v1900 = vrot.slane %v1898, 7
        %v1901 = vshll.u32 %v1875, 16
        %v1903 = vor.u32 %v1900, %v1901
        %v1904 = vrot.slane %v1900, 4
        %v1906 = vshrl.u32 %v1876, 16
        %v1908 = vrot.slane %v1906, 7
        %v1909 = vshll.u32 %v1876, 16
        %v1911 = vor.u32 %v1908, %v1909
        %v1912 = vrot.slane %v1908, 4
        %v1914 = vshrl.u32 %v1877, 16
        %v1916 = vrot.slane %v1914, 7
        %v1917 = vshll.u32 %v1877, 16
        %v1919 = vor.u32 %v1916, %v1917
        %v1920 = vrot.slane %v1916, 4
        %v1922 = vshrl.u32 %v1878, 16
        %v1924 = vrot.slane %v1922, 7
        %v1925 = vshll.u32 %v1878, 16
        %v1927 = vor.u32 %v1924, %v1925
        %v1928 = vrot.slane %v1924, 4
        %v1930 = vshrl.u32 %v1879, 16
        %v1932 = vrot.slane %v1930, 7
        %v1933 = vshll.u32 %v1879, 16
        %v1935 = vor.u32 %v1932, %v1933
        %v1936 = vrot.slane %v1932, 4
        %v1938 = vshrl.u32 %v1880, 16
        %v1940 = vrot.slane %v1938, 7
        %v1941 = vshll.u32 %v1880, 16
        %v1943 = vor.u32 %v1940, %v1941
        %v1944 = vrot.slane %v1940, 4
        %v1961 = vsel %vm800, %v1887, %v1042
        %1962 = vst [vmem:[%s797] sm:$0xf] %v1961
        %v1963 = vld [vmem:[%s797 + $0x4] sm:$0x1]
        %v1964 = vsel %vm806, %v1888, %v1963
        %1965 = vst [vmem:[%s797 + $0x4] sm:$0x1] %v1964
        %v1966 = vld [vmem:[%s797 + $0x8] sm:$0xf]
        %v1967 = vsel %vm800, %v1895, %v1966
        %1968 = vst [vmem:[%s797 + $0x8] sm:$0xf] %v1967
        %v1969 = vld [vmem:[%s797 + $0xc] sm:$0x1]
        %v1970 = vsel %vm806, %v1896, %v1969
        %1971 = vst [vmem:[%s797 + $0xc] sm:$0x1] %v1970
        %v1972 = vld [vmem:[%s797 + $0x10] sm:$0xf]
        %v1973 = vsel %vm800, %v1903, %v1972
        %1974 = vst [vmem:[%s797 + $0x10] sm:$0xf] %v1973
        %v1975 = vld [vmem:[%s797 + $0x14] sm:$0x1]
        %v1976 = vsel %vm806, %v1904, %v1975
        %1977 = vst [vmem:[%s797 + $0x14] sm:$0x1] %v1976
        %v1978 = vld [vmem:[%s797 + $0x18] sm:$0xf]
        %v1979 = vsel %vm800, %v1911, %v1978
        %1980 = vst [vmem:[%s797 + $0x18] sm:$0xf] %v1979
        %v1981 = vld [vmem:[%s797 + $0x1c] sm:$0x1]
        %v1982 = vsel %vm806, %v1912, %v1981
        %1983 = vst [vmem:[%s797 + $0x1c] sm:$0x1] %v1982
        %v1984 = vld [vmem:[%s797 + $0x20] sm:$0xf]
        %v1985 = vsel %vm800, %v1919, %v1984
        %1986 = vst [vmem:[%s797 + $0x20] sm:$0xf] %v1985
        %v1987 = vld [vmem:[%s797 + $0x24] sm:$0x1]
        %v1988 = vsel %vm806, %v1920, %v1987
        %1989 = vst [vmem:[%s797 + $0x24] sm:$0x1] %v1988
        %v1990 = vld [vmem:[%s797 + $0x28] sm:$0xf]
        %v1991 = vsel %vm800, %v1927, %v1990
        %1992 = vst [vmem:[%s797 + $0x28] sm:$0xf] %v1991
        %v1993 = vld [vmem:[%s797 + $0x2c] sm:$0x1]
        %v1994 = vsel %vm806, %v1928, %v1993
        %1995 = vst [vmem:[%s797 + $0x2c] sm:$0x1] %v1994
        %v1996 = vld [vmem:[%s797 + $0x30] sm:$0xf]
        %v1997 = vsel %vm800, %v1935, %v1996
        %1998 = vst [vmem:[%s797 + $0x30] sm:$0xf] %v1997
        %v1999 = vld [vmem:[%s797 + $0x34] sm:$0x1]
        %v2000 = vsel %vm806, %v1936, %v1999
        %2001 = vst [vmem:[%s797 + $0x34] sm:$0x1] %v2000
        %v2002 = vld [vmem:[%s797 + $0x38] sm:$0xf]
        %v2003 = vsel %vm800, %v1943, %v2002
        %2004 = vst [vmem:[%s797 + $0x38] sm:$0xf] %v2003
        %v2005 = vld [vmem:[%s797 + $0x3c] sm:$0x1]
        %v2006 = vsel %vm806, %v1944, %v2005
        %2007 = vst [vmem:[%s797 + $0x3c] sm:$0x1] %v2006
        %v2008 = vld [vmem:[#allocation2] sm:$0xf]
        %v2009 = vld [vmem:[#allocation2 + $0x8] sm:$0xf]
        %v2010 = vld [vmem:[#allocation2 + $0x10] sm:$0xf]
        %v2011 = vld [vmem:[#allocation2 + $0x18] sm:$0xf]
        %v2012 = vld [vmem:[#allocation2 + $0x20] sm:$0xf]
        %v2013 = vld [vmem:[#allocation2 + $0x28] sm:$0xf]
        %v2014 = vld [vmem:[#allocation2 + $0x30] sm:$0xf]
        %v2015 = vld [vmem:[#allocation2 + $0x38] sm:$0xf]
        %v2016 = vld [vmem:[#allocation2 + $0x4] sm:$0x1]
        %v2017 = vld [vmem:[#allocation2 + $0xc] sm:$0x1]
        %v2018 = vld [vmem:[#allocation2 + $0x14] sm:$0x1]
        %v2019 = vld [vmem:[#allocation2 + $0x1c] sm:$0x1]
        %v2020 = vld [vmem:[#allocation2 + $0x24] sm:$0x1]
        %v2021 = vld [vmem:[#allocation2 + $0x2c] sm:$0x1]
        %v2022 = vld [vmem:[#allocation2 + $0x34] sm:$0x1]
        %v2023 = vld [vmem:[#allocation2 + $0x3c] sm:$0x1]
        %v2025 = vshrl.u32 %v2008, 16
        %v2027 = vrot.slane %v2025, 4
        %v2028 = vshll.u32 %v2008, 16
        %v2030 = vrot.slane %v2028, 5
        %v2031 = vor.u32 %v2027, %v2030
        %v2032 = vrot.slane %v2031, 4
        %v2034 = vshll.u32 %v2016, 16
        %v2036 = vrot.slane %v2034, 5
        %v2037 = vsel %vm870, %v2032, %v2036
        %v2039 = vshrl.u32 %v2009, 16
        %v2041 = vrot.slane %v2039, 4
        %v2042 = vshll.u32 %v2009, 16
        %v2044 = vrot.slane %v2042, 5
        %v2045 = vor.u32 %v2041, %v2044
        %v2046 = vrot.slane %v2045, 4
        %v2048 = vshll.u32 %v2017, 16
        %v2050 = vrot.slane %v2048, 5
        %v2051 = vsel %vm870, %v2046, %v2050
        %v2053 = vshrl.u32 %v2010, 16
        %v2055 = vrot.slane %v2053, 4
        %v2056 = vshll.u32 %v2010, 16
        %v2058 = vrot.slane %v2056, 5
        %v2059 = vor.u32 %v2055, %v2058
        %v2060 = vrot.slane %v2059, 4
        %v2062 = vshll.u32 %v2018, 16
        %v2064 = vrot.slane %v2062, 5
        %v2065 = vsel %vm870, %v2060, %v2064
        %v2067 = vshrl.u32 %v2011, 16
        %v2069 = vrot.slane %v2067, 4
        %v2070 = vshll.u32 %v2011, 16
        %v2072 = vrot.slane %v2070, 5
        %v2073 = vor.u32 %v2069, %v2072
        %v2074 = vrot.slane %v2073, 4
        %v2076 = vshll.u32 %v2019, 16
        %v2078 = vrot.slane %v2076, 5
        %v2079 = vsel %vm870, %v2074, %v2078
        %v2081 = vshrl.u32 %v2012, 16
        %v2083 = vrot.slane %v2081, 4
        %v2084 = vshll.u32 %v2012, 16
        %v2086 = vrot.slane %v2084, 5
        %v2087 = vor.u32 %v2083, %v2086
        %v2088 = vrot.slane %v2087, 4
        %v2090 = vshll.u32 %v2020, 16
        %v2092 = vrot.slane %v2090, 5
        %v2093 = vsel %vm870, %v2088, %v2092
        %v2095 = vshrl.u32 %v2013, 16
        %v2097 = vrot.slane %v2095, 4
        %v2098 = vshll.u32 %v2013, 16
        %v2100 = vrot.slane %v2098, 5
        %v2101 = vor.u32 %v2097, %v2100
        %v2102 = vrot.slane %v2101, 4
        %v2104 = vshll.u32 %v2021, 16
        %v2106 = vrot.slane %v2104, 5
        %v2107 = vsel %vm870, %v2102, %v2106
        %v2109 = vshrl.u32 %v2014, 16
        %v2111 = vrot.slane %v2109, 4
        %v2112 = vshll.u32 %v2014, 16
        %v2114 = vrot.slane %v2112, 5
        %v2115 = vor.u32 %v2111, %v2114
        %v2116 = vrot.slane %v2115, 4
        %v2118 = vshll.u32 %v2022, 16
        %v2120 = vrot.slane %v2118, 5
        %v2121 = vsel %vm870, %v2116, %v2120
        %v2123 = vshrl.u32 %v2015, 16
        %v2125 = vrot.slane %v2123, 4
        %v2126 = vshll.u32 %v2015, 16
        %v2128 = vrot.slane %v2126, 5
        %v2129 = vor.u32 %v2125, %v2128
        %v2130 = vrot.slane %v2129, 4
        %v2132 = vshll.u32 %v2023, 16
        %v2134 = vrot.slane %v2132, 5
        %v2135 = vsel %vm870, %v2130, %v2134
        %v2136 = vld [vmem:[#allocation2] sm:$0xe]
        %v2137 = vld [vmem:[#allocation2 + $0x8] sm:$0xe]
        %v2138 = vld [vmem:[#allocation2 + $0x10] sm:$0xe]
        %v2139 = vld [vmem:[#allocation2 + $0x18] sm:$0xe]
        %v2140 = vld [vmem:[#allocation2 + $0x20] sm:$0xe]
        %v2141 = vld [vmem:[#allocation2 + $0x28] sm:$0xe]
        %v2142 = vld [vmem:[#allocation2 + $0x30] sm:$0xe]
        %v2143 = vld [vmem:[#allocation2 + $0x38] sm:$0xe]
        %v2160 = vrot.slane %v2136, 5
        %v2161 = vrot.slane %v2160, 4
        %v2162 = vrot.slane %v2016, 5
        %v2163 = vsel %vm1009, %v2161, %v2162
        %v2164 = vrot.slane %v2137, 5
        %v2165 = vrot.slane %v2164, 4
        %v2166 = vrot.slane %v2017, 5
        %v2167 = vsel %vm1009, %v2165, %v2166
        %v2168 = vrot.slane %v2138, 5
        %v2169 = vrot.slane %v2168, 4
        %v2170 = vrot.slane %v2018, 5
        %v2171 = vsel %vm1009, %v2169, %v2170
        %v2172 = vrot.slane %v2139, 5
        %v2173 = vrot.slane %v2172, 4
        %v2174 = vrot.slane %v2019, 5
        %v2175 = vsel %vm1009, %v2173, %v2174
        %v2176 = vrot.slane %v2140, 5
        %v2177 = vrot.slane %v2176, 4
        %v2178 = vrot.slane %v2020, 5
        %v2179 = vsel %vm1009, %v2177, %v2178
        %v2180 = vrot.slane %v2141, 5
        %v2181 = vrot.slane %v2180, 4
        %v2182 = vrot.slane %v2021, 5
        %v2183 = vsel %vm1009, %v2181, %v2182
        %v2184 = vrot.slane %v2142, 5
        %v2185 = vrot.slane %v2184, 4
        %v2186 = vrot.slane %v2022, 5
        %v2187 = vsel %vm1009, %v2185, %v2186
        %v2188 = vrot.slane %v2143, 5
        %v2189 = vrot.slane %v2188, 4
        %v2190 = vrot.slane %v2023, 5
        %v2191 = vsel %vm1009, %v2189, %v2190
        %v2192 = vld [vmem:[%s797] sm:$0xf]
        %v2193 = vld [vmem:[%s797 + $0x8] sm:$0xf]
        %v2194 = vld [vmem:[%s797 + $0x10] sm:$0xf]
        %v2195 = vld [vmem:[%s797 + $0x18] sm:$0xf]
        %v2196 = vld [vmem:[%s797 + $0x20] sm:$0xf]
        %v2197 = vld [vmem:[%s797 + $0x28] sm:$0xf]
        %v2198 = vld [vmem:[%s797 + $0x30] sm:$0xf]
        %v2199 = vld [vmem:[%s797 + $0x38] sm:$0xf]
        %v2200 = vld [vmem:[%s797 + $0x4] sm:$0x1]
        %v2201 = vld [vmem:[%s797 + $0xc] sm:$0x1]
        %v2202 = vld [vmem:[%s797 + $0x14] sm:$0x1]
        %v2203 = vld [vmem:[%s797 + $0x1c] sm:$0x1]
        %v2204 = vld [vmem:[%s797 + $0x24] sm:$0x1]
        %v2205 = vld [vmem:[%s797 + $0x2c] sm:$0x1]
        %v2206 = vld [vmem:[%s797 + $0x34] sm:$0x1]
        %v2207 = vld [vmem:[%s797 + $0x3c] sm:$0x1]
        %v2209 = vshrl.u32 %v2192, 16
        %v2211 = vrot.slane %v2209, 4
        %v2212 = vshll.u32 %v2192, 16
        %v2214 = vrot.slane %v2212, 5
        %v2215 = vor.u32 %v2211, %v2214
        %v2216 = vrot.slane %v2215, 4
        %v2218 = vshll.u32 %v2200, 16
        %v2220 = vrot.slane %v2218, 5
        %v2221 = vsel %vm870, %v2216, %v2220
        %v2223 = vshrl.u32 %v2193, 16
        %v2225 = vrot.slane %v2223, 4
        %v2226 = vshll.u32 %v2193, 16
        %v2228 = vrot.slane %v2226, 5
        %v2229 = vor.u32 %v2225, %v2228
        %v2230 = vrot.slane %v2229, 4
        %v2232 = vshll.u32 %v2201, 16
        %v2234 = vrot.slane %v2232, 5
        %v2235 = vsel %vm870, %v2230, %v2234
        %v2237 = vshrl.u32 %v2194, 16
        %v2239 = vrot.slane %v2237, 4
        %v2240 = vshll.u32 %v2194, 16
        %v2242 = vrot.slane %v2240, 5
        %v2243 = vor.u32 %v2239, %v2242
        %v2244 = vrot.slane %v2243, 4
        %v2246 = vshll.u32 %v2202, 16
        %v2248 = vrot.slane %v2246, 5
        %v2249 = vsel %vm870, %v2244, %v2248
        %v2251 = vshrl.u32 %v2195, 16
        %v2253 = vrot.slane %v2251, 4
        %v2254 = vshll.u32 %v2195, 16
        %v2256 = vrot.slane %v2254, 5
        %v2257 = vor.u32 %v2253, %v2256
        %v2258 = vrot.slane %v2257, 4
        %v2260 = vshll.u32 %v2203, 16
        %v2262 = vrot.slane %v2260, 5
        %v2263 = vsel %vm870, %v2258, %v2262
        %v2265 = vshrl.u32 %v2196, 16
        %v2267 = vrot.slane %v2265, 4
        %v2268 = vshll.u32 %v2196, 16
        %v2270 = vrot.slane %v2268, 5
        %v2271 = vor.u32 %v2267, %v2270
        %v2272 = vrot.slane %v2271, 4
        %v2274 = vshll.u32 %v2204, 16
        %v2276 = vrot.slane %v2274, 5
        %v2277 = vsel %vm870, %v2272, %v2276
        %v2279 = vshrl.u32 %v2197, 16
        %v2281 = vrot.slane %v2279, 4
        %v2282 = vshll.u32 %v2197, 16
        %v2284 = vrot.slane %v2282, 5
        %v2285 = vor.u32 %v2281, %v2284
        %v2286 = vrot.slane %v2285, 4
        %v2288 = vshll.u32 %v2205, 16
        %v2290 = vrot.slane %v2288, 5
        %v2291 = vsel %vm870, %v2286, %v2290
        %v2293 = vshrl.u32 %v2198, 16
        %v2295 = vrot.slane %v2293, 4
        %v2296 = vshll.u32 %v2198, 16
        %v2298 = vrot.slane %v2296, 5
        %v2299 = vor.u32 %v2295, %v2298
        %v2300 = vrot.slane %v2299, 4
        %v2302 = vshll.u32 %v2206, 16
        %v2304 = vrot.slane %v2302, 5
        %v2305 = vsel %vm870, %v2300, %v2304
        %v2307 = vshrl.u32 %v2199, 16
        %v2309 = vrot.slane %v2307, 4
        %v2310 = vshll.u32 %v2199, 16
        %v2312 = vrot.slane %v2310, 5
        %v2313 = vor.u32 %v2309, %v2312
        %v2314 = vrot.slane %v2313, 4
        %v2316 = vshll.u32 %v2207, 16
        %v2318 = vrot.slane %v2316, 5
        %v2319 = vsel %vm870, %v2314, %v2318
        %v2320 = vld [vmem:[%s797] sm:$0xe]
        %v2321 = vld [vmem:[%s797 + $0x8] sm:$0xe]
        %v2322 = vld [vmem:[%s797 + $0x10] sm:$0xe]
        %v2323 = vld [vmem:[%s797 + $0x18] sm:$0xe]
        %v2324 = vld [vmem:[%s797 + $0x20] sm:$0xe]
        %v2325 = vld [vmem:[%s797 + $0x28] sm:$0xe]
        %v2326 = vld [vmem:[%s797 + $0x30] sm:$0xe]
        %v2327 = vld [vmem:[%s797 + $0x38] sm:$0xe]
        %v2344 = vrot.slane %v2320, 5
        %v2345 = vrot.slane %v2344, 4
        %v2346 = vrot.slane %v2200, 5
        %v2347 = vsel %vm1009, %v2345, %v2346
        %v2348 = vrot.slane %v2321, 5
        %v2349 = vrot.slane %v2348, 4
        %v2350 = vrot.slane %v2201, 5
        %v2351 = vsel %vm1009, %v2349, %v2350
        %v2352 = vrot.slane %v2322, 5
        %v2353 = vrot.slane %v2352, 4
        %v2354 = vrot.slane %v2202, 5
        %v2355 = vsel %vm1009, %v2353, %v2354
        %v2356 = vrot.slane %v2323, 5
        %v2357 = vrot.slane %v2356, 4
        %v2358 = vrot.slane %v2203, 5
        %v2359 = vsel %vm1009, %v2357, %v2358
        %v2360 = vrot.slane %v2324, 5
        %v2361 = vrot.slane %v2360, 4
        %v2362 = vrot.slane %v2204, 5
        %v2363 = vsel %vm1009, %v2361, %v2362
        %v2364 = vrot.slane %v2325, 5
        %v2365 = vrot.slane %v2364, 4
        %v2366 = vrot.slane %v2205, 5
        %v2367 = vsel %vm1009, %v2365, %v2366
        %v2368 = vrot.slane %v2326, 5
        %v2369 = vrot.slane %v2368, 4
        %v2370 = vrot.slane %v2206, 5
        %v2371 = vsel %vm1009, %v2369, %v2370
        %v2372 = vrot.slane %v2327, 5
        %v2373 = vrot.slane %v2372, 4
        %v2374 = vrot.slane %v2207, 5
        %v2375 = vsel %vm1009, %v2373, %v2374
        %v2376 = vld [vmem:[%s1226] sm:$0xf]
        %v2377 = vld [vmem:[%s1226 + $0x8] sm:$0xf]
        %v2378 = vld [vmem:[%s1226 + $0x10] sm:$0xf]
        %v2379 = vld [vmem:[%s1226 + $0x18] sm:$0xf]
        %v2380 = vld [vmem:[%s1226 + $0x20] sm:$0xf]
        %v2381 = vld [vmem:[%s1226 + $0x28] sm:$0xf]
        %v2382 = vld [vmem:[%s1226 + $0x30] sm:$0xf]
        %v2383 = vld [vmem:[%s1226 + $0x38] sm:$0xf]
        %v2384 = vld [vmem:[%s1226 + $0x4] sm:$0x1]
        %v2385 = vld [vmem:[%s1226 + $0xc] sm:$0x1]
        %v2386 = vld [vmem:[%s1226 + $0x14] sm:$0x1]
        %v2387 = vld [vmem:[%s1226 + $0x1c] sm:$0x1]
        %v2388 = vld [vmem:[%s1226 + $0x24] sm:$0x1]
        %v2389 = vld [vmem:[%s1226 + $0x2c] sm:$0x1]
        %v2390 = vld [vmem:[%s1226 + $0x34] sm:$0x1]
        %v2391 = vld [vmem:[%s1226 + $0x3c] sm:$0x1]
        %v2393 = vshrl.u32 %v2376, 16
        %v2395 = vrot.slane %v2393, 4
        %v2396 = vshll.u32 %v2376, 16
        %v2398 = vrot.slane %v2396, 5
        %v2399 = vor.u32 %v2395, %v2398
        %v2400 = vrot.slane %v2399, 4
        %v2402 = vshll.u32 %v2384, 16
        %v2404 = vrot.slane %v2402, 5
        %v2405 = vsel %vm870, %v2400, %v2404
        %v2407 = vshrl.u32 %v2377, 16
        %v2409 = vrot.slane %v2407, 4
        %v2410 = vshll.u32 %v2377, 16
        %v2412 = vrot.slane %v2410, 5
        %v2413 = vor.u32 %v2409, %v2412
        %v2414 = vrot.slane %v2413, 4
        %v2416 = vshll.u32 %v2385, 16
        %v2418 = vrot.slane %v2416, 5
        %v2419 = vsel %vm870, %v2414, %v2418
        %v2421 = vshrl.u32 %v2378, 16
        %v2423 = vrot.slane %v2421, 4
        %v2424 = vshll.u32 %v2378, 16
        %v2426 = vrot.slane %v2424, 5
        %v2427 = vor.u32 %v2423, %v2426
        %v2428 = vrot.slane %v2427, 4
        %v2430 = vshll.u32 %v2386, 16
        %v2432 = vrot.slane %v2430, 5
        %v2433 = vsel %vm870, %v2428, %v2432
        %v2435 = vshrl.u32 %v2379, 16
        %v2437 = vrot.slane %v2435, 4
        %v2438 = vshll.u32 %v2379, 16
        %v2440 = vrot.slane %v2438, 5
        %v2441 = vor.u32 %v2437, %v2440
        %v2442 = vrot.slane %v2441, 4
        %v2444 = vshll.u32 %v2387, 16
        %v2446 = vrot.slane %v2444, 5
        %v2447 = vsel %vm870, %v2442, %v2446
        %v2449 = vshrl.u32 %v2380, 16
        %v2451 = vrot.slane %v2449, 4
        %v2452 = vshll.u32 %v2380, 16
        %v2454 = vrot.slane %v2452, 5
        %v2455 = vor.u32 %v2451, %v2454
        %v2456 = vrot.slane %v2455, 4
        %v2458 = vshll.u32 %v2388, 16
        %v2460 = vrot.slane %v2458, 5
        %v2461 = vsel %vm870, %v2456, %v2460
        %v2463 = vshrl.u32 %v2381, 16
        %v2465 = vrot.slane %v2463, 4
        %v2466 = vshll.u32 %v2381, 16
        %v2468 = vrot.slane %v2466, 5
        %v2469 = vor.u32 %v2465, %v2468
        %v2470 = vrot.slane %v2469, 4
        %v2472 = vshll.u32 %v2389, 16
        %v2474 = vrot.slane %v2472, 5
        %v2475 = vsel %vm870, %v2470, %v2474
        %v2477 = vshrl.u32 %v2382, 16
        %v2479 = vrot.slane %v2477, 4
        %v2480 = vshll.u32 %v2382, 16
        %v2482 = vrot.slane %v2480, 5
        %v2483 = vor.u32 %v2479, %v2482
        %v2484 = vrot.slane %v2483, 4
        %v2486 = vshll.u32 %v2390, 16
        %v2488 = vrot.slane %v2486, 5
        %v2489 = vsel %vm870, %v2484, %v2488
        %v2491 = vshrl.u32 %v2383, 16
        %v2493 = vrot.slane %v2491, 4
        %v2494 = vshll.u32 %v2383, 16
        %v2496 = vrot.slane %v2494, 5
        %v2497 = vor.u32 %v2493, %v2496
        %v2498 = vrot.slane %v2497, 4
        %v2500 = vshll.u32 %v2391, 16
        %v2502 = vrot.slane %v2500, 5
        %v2503 = vsel %vm870, %v2498, %v2502
        %v2504 = vld [vmem:[%s1226] sm:$0xe]
        %v2505 = vld [vmem:[%s1226 + $0x8] sm:$0xe]
        %v2506 = vld [vmem:[%s1226 + $0x10] sm:$0xe]
        %v2507 = vld [vmem:[%s1226 + $0x18] sm:$0xe]
        %v2508 = vld [vmem:[%s1226 + $0x20] sm:$0xe]
        %v2509 = vld [vmem:[%s1226 + $0x28] sm:$0xe]
        %v2510 = vld [vmem:[%s1226 + $0x30] sm:$0xe]
        %v2511 = vld [vmem:[%s1226 + $0x38] sm:$0xe]
        %v2528 = vrot.slane %v2504, 5
        %v2529 = vrot.slane %v2528, 4
        %v2530 = vrot.slane %v2384, 5
        %v2531 = vsel %vm1009, %v2529, %v2530
        %v2532 = vrot.slane %v2505, 5
        %v2533 = vrot.slane %v2532, 4
        %v2534 = vrot.slane %v2385, 5
        %v2535 = vsel %vm1009, %v2533, %v2534
        %v2536 = vrot.slane %v2506, 5
        %v2537 = vrot.slane %v2536, 4
        %v2538 = vrot.slane %v2386, 5
        %v2539 = vsel %vm1009, %v2537, %v2538
        %v2540 = vrot.slane %v2507, 5
        %v2541 = vrot.slane %v2540, 4
        %v2542 = vrot.slane %v2387, 5
        %v2543 = vsel %vm1009, %v2541, %v2542
        %v2544 = vrot.slane %v2508, 5
        %v2545 = vrot.slane %v2544, 4
        %v2546 = vrot.slane %v2388, 5
        %v2547 = vsel %vm1009, %v2545, %v2546
        %v2548 = vrot.slane %v2509, 5
        %v2549 = vrot.slane %v2548, 4
        %v2550 = vrot.slane %v2389, 5
        %v2551 = vsel %vm1009, %v2549, %v2550
        %v2552 = vrot.slane %v2510, 5
        %v2553 = vrot.slane %v2552, 4
        %v2554 = vrot.slane %v2390, 5
        %v2555 = vsel %vm1009, %v2553, %v2554
        %v2556 = vrot.slane %v2511, 5
        %v2557 = vrot.slane %v2556, 4
        %v2558 = vrot.slane %v2391, 5
        %v2559 = vsel %vm1009, %v2557, %v2558
        %v2568 = vunpack.c.l.b16 %v2008
        %v2569 = vunpack.c.l.b16 %v2009
        %v2570 = vunpack.c.l.b16 %v2010
        %v2571 = vunpack.c.l.b16 %v2011
        %v2572 = vunpack.c.l.b16 %v2012
        %v2573 = vunpack.c.l.b16 %v2013
        %v2574 = vunpack.c.l.b16 %v2014
        %v2575 = vunpack.c.l.b16 %v2015
        %v2576 = vpack.c.b16 %v2569, %v2568
        %v2577 = vpack.c.b16 %v2571, %v2570
        %v2578 = vpack.c.b16 %v2573, %v2572
        %v2579 = vpack.c.b16 %v2575, %v2574
        %v2580 = vunpack.c.l.b16 %v2037
        %v2581 = vunpack.c.l.b16 %v2051
        %v2582 = vunpack.c.l.b16 %v2065
        %v2583 = vunpack.c.l.b16 %v2079
        %v2584 = vunpack.c.l.b16 %v2093
        %v2585 = vunpack.c.l.b16 %v2107
        %v2586 = vunpack.c.l.b16 %v2121
        %v2587 = vunpack.c.l.b16 %v2135
        %v2588 = vpack.c.b16 %v2581, %v2580
        %v2589 = vpack.c.b16 %v2583, %v2582
        %v2590 = vpack.c.b16 %v2585, %v2584
        %v2591 = vpack.c.b16 %v2587, %v2586
        %2592 = vrot.lane.b32.xlu0 %v2588, 4
        %v2593 = vpop.permute.xlu0 %2592
        %2594 = vrot.lane.b32.xlu0 %v2589, 4
        %v2595 = vpop.permute.xlu0 %2594
        %2596 = vrot.lane.b32.xlu0 %v2590, 4
        %v2597 = vpop.permute.xlu0 %2596
        %2598 = vrot.lane.b32.xlu0 %v2591, 4
        %v2599 = vpop.permute.xlu0 %2598
        %v2600 = vunpack.c.l.b16 %v2163
        %v2601 = vunpack.c.l.b16 %v2167
        %v2602 = vunpack.c.l.b16 %v2171
        %v2603 = vunpack.c.l.b16 %v2175
        %v2604 = vunpack.c.l.b16 %v2179
        %v2605 = vunpack.c.l.b16 %v2183
        %v2606 = vunpack.c.l.b16 %v2187
        %v2607 = vunpack.c.l.b16 %v2191
        %v2608 = vpack.c.b16 %v2601, %v2600
        %v2609 = vpack.c.b16 %v2603, %v2602
        %v2610 = vpack.c.b16 %v2605, %v2604
        %v2611 = vpack.c.b16 %v2607, %v2606
        %2612 = vrot.lane.b32.xlu0 %v2608, 8
        %v2613 = vpop.permute.xlu0 %2612
        %2614 = vrot.lane.b32.xlu0 %v2609, 8
        %v2615 = vpop.permute.xlu0 %2614
        %2616 = vrot.lane.b32.xlu0 %v2610, 8
        %v2617 = vpop.permute.xlu0 %2616
        %2618 = vrot.lane.b32.xlu0 %v2611, 8
        %v2619 = vpop.permute.xlu0 %2618
        %v2628 = vunpack.c.l.b16 %v2192
        %v2629 = vunpack.c.l.b16 %v2193
        %v2630 = vunpack.c.l.b16 %v2194
        %v2631 = vunpack.c.l.b16 %v2195
        %v2632 = vunpack.c.l.b16 %v2196
        %v2633 = vunpack.c.l.b16 %v2197
        %v2634 = vunpack.c.l.b16 %v2198
        %v2635 = vunpack.c.l.b16 %v2199
        %v2636 = vpack.c.b16 %v2629, %v2628
        %v2637 = vpack.c.b16 %v2631, %v2630
        %v2638 = vpack.c.b16 %v2633, %v2632
        %v2639 = vpack.c.b16 %v2635, %v2634
        %2640 = vrot.lane.b32.xlu0 %v2636, 12
        %v2641 = vpop.permute.xlu0 %2640
        %2642 = vrot.lane.b32.xlu0 %v2637, 12
        %v2643 = vpop.permute.xlu0 %2642
        %2644 = vrot.lane.b32.xlu0 %v2638, 12
        %v2645 = vpop.permute.xlu0 %2644
        %2646 = vrot.lane.b32.xlu0 %v2639, 12
        %v2647 = vpop.permute.xlu0 %2646
        %v2648 = vunpack.c.l.b16 %v2221
        %v2649 = vunpack.c.l.b16 %v2235
        %v2650 = vunpack.c.l.b16 %v2249
        %v2651 = vunpack.c.l.b16 %v2263
        %v2652 = vunpack.c.l.b16 %v2277
        %v2653 = vunpack.c.l.b16 %v2291
        %v2654 = vunpack.c.l.b16 %v2305
        %v2655 = vunpack.c.l.b16 %v2319
        %v2656 = vpack.c.b16 %v2649, %v2648
        %v2657 = vpack.c.b16 %v2651, %v2650
        %v2658 = vpack.c.b16 %v2653, %v2652
        %v2659 = vpack.c.b16 %v2655, %v2654
        %2660 = vrot.lane.b32.xlu0 %v2656, 16
        %v2661 = vpop.permute.xlu0 %2660
        %2662 = vrot.lane.b32.xlu0 %v2657, 16
        %v2663 = vpop.permute.xlu0 %2662
        %2664 = vrot.lane.b32.xlu0 %v2658, 16
        %v2665 = vpop.permute.xlu0 %2664
        %2666 = vrot.lane.b32.xlu0 %v2659, 16
        %v2667 = vpop.permute.xlu0 %2666
        %v2668 = vunpack.c.l.b16 %v2347
        %v2669 = vunpack.c.l.b16 %v2351
        %v2670 = vunpack.c.l.b16 %v2355
        %v2671 = vunpack.c.l.b16 %v2359
        %v2672 = vunpack.c.l.b16 %v2363
        %v2673 = vunpack.c.l.b16 %v2367
        %v2674 = vunpack.c.l.b16 %v2371
        %v2675 = vunpack.c.l.b16 %v2375
        %v2676 = vpack.c.b16 %v2669, %v2668
        %v2677 = vpack.c.b16 %v2671, %v2670
        %v2678 = vpack.c.b16 %v2673, %v2672
        %v2679 = vpack.c.b16 %v2675, %v2674
        %2680 = vrot.lane.b32.xlu0 %v2676, 20
        %v2681 = vpop.permute.xlu0 %2680
        %2682 = vrot.lane.b32.xlu0 %v2677, 20
        %v2683 = vpop.permute.xlu0 %2682
        %2684 = vrot.lane.b32.xlu0 %v2678, 20
        %v2685 = vpop.permute.xlu0 %2684
        %2686 = vrot.lane.b32.xlu0 %v2679, 20
        %v2687 = vpop.permute.xlu0 %2686
        %v2696 = vunpack.c.l.b16 %v2376
        %v2697 = vunpack.c.l.b16 %v2377
        %v2698 = vunpack.c.l.b16 %v2378
        %v2699 = vunpack.c.l.b16 %v2379
        %v2700 = vunpack.c.l.b16 %v2380
        %v2701 = vunpack.c.l.b16 %v2381
        %v2702 = vunpack.c.l.b16 %v2382
        %v2703 = vunpack.c.l.b16 %v2383
        %v2704 = vpack.c.b16 %v2697, %v2696
        %v2705 = vpack.c.b16 %v2699, %v2698
        %v2706 = vpack.c.b16 %v2701, %v2700
        %v2707 = vpack.c.b16 %v2703, %v2702
        %2708 = vrot.lane.b32.xlu0 %v2704, 24
        %v2709 = vpop.permute.xlu0 %2708
        %2710 = vrot.lane.b32.xlu0 %v2705, 24
        %v2711 = vpop.permute.xlu0 %2710
        %2712 = vrot.lane.b32.xlu0 %v2706, 24
        %v2713 = vpop.permute.xlu0 %2712
        %2714 = vrot.lane.b32.xlu0 %v2707, 24
        %v2715 = vpop.permute.xlu0 %2714
        %v2716 = vunpack.c.l.b16 %v2405
        %v2717 = vunpack.c.l.b16 %v2419
        %v2718 = vunpack.c.l.b16 %v2433
        %v2719 = vunpack.c.l.b16 %v2447
        %v2720 = vunpack.c.l.b16 %v2461
        %v2721 = vunpack.c.l.b16 %v2475
        %v2722 = vunpack.c.l.b16 %v2489
        %v2723 = vunpack.c.l.b16 %v2503
        %v2724 = vpack.c.b16 %v2717, %v2716
        %v2725 = vpack.c.b16 %v2719, %v2718
        %v2726 = vpack.c.b16 %v2721, %v2720
        %v2727 = vpack.c.b16 %v2723, %v2722
        %2728 = vrot.lane.b32.xlu0 %v2724, 28
        %v2729 = vpop.permute.xlu0 %2728
        %2730 = vrot.lane.b32.xlu0 %v2725, 28
        %v2731 = vpop.permute.xlu0 %2730
        %2732 = vrot.lane.b32.xlu0 %v2726, 28
        %v2733 = vpop.permute.xlu0 %2732
        %2734 = vrot.lane.b32.xlu0 %v2727, 28
        %v2735 = vpop.permute.xlu0 %2734
        %v2736 = vunpack.c.l.b16 %v2531
        %v2737 = vunpack.c.l.b16 %v2535
        %v2738 = vunpack.c.l.b16 %v2539
        %v2739 = vunpack.c.l.b16 %v2543
        %v2740 = vunpack.c.l.b16 %v2547
        %v2741 = vunpack.c.l.b16 %v2551
        %v2742 = vunpack.c.l.b16 %v2555
        %v2743 = vunpack.c.l.b16 %v2559
        %v2744 = vpack.c.b16 %v2737, %v2736
        %v2745 = vpack.c.b16 %v2739, %v2738
        %v2746 = vpack.c.b16 %v2741, %v2740
        %v2747 = vpack.c.b16 %v2743, %v2742
        %2748 = vrot.lane.b32.xlu0 %v2744, 32
        %v2749 = vpop.permute.xlu0 %2748
        %2750 = vrot.lane.b32.xlu0 %v2745, 32
        %v2751 = vpop.permute.xlu0 %2750
        %2752 = vrot.lane.b32.xlu0 %v2746, 32
        %v2753 = vpop.permute.xlu0 %2752
        %2754 = vrot.lane.b32.xlu0 %v2747, 32
        %v2755 = vpop.permute.xlu0 %2754
        %v2758 = vsel %vm1607, %v2576, %v2593
        %v2761 = vsel %vm1607, %v2577, %v2595
        %v2764 = vsel %vm1607, %v2578, %v2597
        %v2767 = vsel %vm1607, %v2579, %v2599
        %v2769 = vsel %vm1620, %v2758, %v2613
        %v2771 = vsel %vm1620, %v2761, %v2615
        %v2773 = vsel %vm1620, %v2764, %v2617
        %v2775 = vsel %vm1620, %v2767, %v2619
        %v2777 = vsel %vm1629, %v2769, %v2641
        %v2779 = vsel %vm1629, %v2771, %v2643
        %v2781 = vsel %vm1629, %v2773, %v2645
        %v2783 = vsel %vm1629, %v2775, %v2647
        %v2785 = vsel %vm1638, %v2777, %v2661
        %v2787 = vsel %vm1638, %v2779, %v2663
        %v2789 = vsel %vm1638, %v2781, %v2665
        %v2791 = vsel %vm1638, %v2783, %v2667
        %v2793 = vsel %vm1647, %v2785, %v2681
        %v2795 = vsel %vm1647, %v2787, %v2683
        %v2797 = vsel %vm1647, %v2789, %v2685
        %v2799 = vsel %vm1647, %v2791, %v2687
        %v2801 = vsel %vm1656, %v2793, %v2709
        %v2803 = vsel %vm1656, %v2795, %v2711
        %v2805 = vsel %vm1656, %v2797, %v2713
        %v2807 = vsel %vm1656, %v2799, %v2715
        %v2809 = vsel %vm1665, %v2801, %v2729
        %v2811 = vsel %vm1665, %v2803, %v2731
        %v2813 = vsel %vm1665, %v2805, %v2733
        %v2815 = vsel %vm1665, %v2807, %v2735
        %v2817 = vsel %vm1674, %v2809, %v2749
        %v2819 = vsel %vm1674, %v2811, %v2751
        %v2821 = vsel %vm1674, %v2813, %v2753
        %v2823 = vsel %vm1674, %v2815, %v2755
        %v2824 = vld [vmem:[#allocation14] sm:$0xf]
        %v2825 = vld [vmem:[#allocation14 + $0x4] sm:$0xf]
        %v2826 = vld [vmem:[#allocation14 + $0x8] sm:$0xf]
        %v2827 = vld [vmem:[#allocation14 + $0xc] sm:$0xf]
        %v2828 = vld [vmem:[#allocation14 + $0x10] sm:$0x3]
        %v2834 = vunpack.c.l.b16 %v2824
        %v2835 = vunpack.c.l.b16 %v2825
        %v2836 = vunpack.c.l.b16 %v2826
        %v2837 = vunpack.c.l.b16 %v2827
        %v2838 = vunpack.c.l.b16 %v2828
        %v2839 = vpack.c.b16 %v2835, %v2834
        %v2840 = vpack.c.b16 %v2837, %v2836
        %v2841 = vpack.c.b16 %v2838, %v2838
        %v2844 = vsel %vm1703, %v2817, 0
        %v2846 = vsel %vm1703, %v2819, 0
        %v2848 = vsel %vm1703, %v2821, 0
        %v2850 = vsel %vm1703, %v2823, 0
        %v2853 = vsel %vm1712, %v2841, 0
        %2855 = vmatprep.subr.bf16.mxu0 0
        %2856 = vmatpush1.bf16.msra.mxu0 %v2839
        %2857 = vmatprep.subr.bf16.mxu0 0
        %2858 = vmatpush1.bf16.msra.mxu0 %v2840
        %2859 = vmatprep.subr.bf16.mxu0 0
        %2860 = vmatpush1.bf16.msra.mxu0 %v2853
        %2861 = vmatprep.subr.bf16.mxu0 0
        %2862 = vmatpush1.bf16.msra.mxu0 0
        %2863 = vmatprep.subr.bf16.mxu0 0
        %2864 = vmatpush1.bf16.msra.mxu0 0
        %2865 = vmatprep.subr.bf16.mxu0 0
        %2866 = vmatpush1.bf16.msra.mxu0 0
        %2867 = vmatprep.subr.bf16.mxu0 0
        %2868 = vmatpush1.bf16.msra.mxu0 0
        %2869 = vmatprep.subr.bf16.mxu0 0
        %2870 = vmatpush1.bf16.msra.mxu0 0
        %2871 = vmatprep.subr.bf16.mxu0 0
        %2872 = vmatpush1.bf16.msra.mxu0 0
        %2873 = vmatprep.subr.bf16.mxu0 0
        %2874 = vmatpush1.bf16.msra.mxu0 0
        %2875 = vmatprep.subr.bf16.mxu0 0
        %2876 = vmatpush1.bf16.msra.mxu0 0
        %2877 = vmatprep.subr.bf16.mxu0 0
        %2878 = vmatpush1.bf16.msra.mxu0 0
        %2879 = vmatprep.subr.bf16.mxu0 0
        %2880 = vmatpush1.bf16.msra.mxu0 0
        %2881 = vmatprep.subr.bf16.mxu0 0
        %2882 = vmatpush1.bf16.msra.mxu0 0
        %2883 = vmatprep.subr.bf16.mxu0 0
        %2884 = vmatpush1.bf16.msra.mxu0 0
        %2885 = vmatprep.subr.bf16.mxu0 0
        %2886 = vmatpush1.bf16.msra.mxu0 0
        %2887 = vmatprep.mubr.bf16.mxu0 0
        %2888 = vmatmul.mubr.bf16.gmra.mrb[0].mxu0 %v2844
        %v2889 = vpop.f32.mrb[0].mxu0
        %v2890 = vadd.f32 0.0, %v2889
        %v2891 = vpop.f32.mrb[0].mxu0
        %v2892 = vpop.f32.mrb[0].mxu0
        %v2893 = vadd.f32 0.0, %v2892
        %v2894 = vpop.f32.mrb[0].mxu0
        %2895 = vmatprep.mubr.bf16.mxu0 0
        %2896 = vmatmul.mubr.bf16.gmra.mrb[0].mxu0 %v2846
        %v2897 = vpop.f32.mrb[0].mxu0
        %v2898 = vadd.f32 0.0, %v2897
        %v2899 = vpop.f32.mrb[0].mxu0
        %v2900 = vpop.f32.mrb[0].mxu0
        %v2901 = vadd.f32 0.0, %v2900
        %v2902 = vpop.f32.mrb[0].mxu0
        %2903 = vmatprep.mubr.bf16.mxu0 0
        %2904 = vmatmul.mubr.bf16.gmra.mrb[0].mxu0 %v2848
        %v2905 = vpop.f32.mrb[0].mxu0
        %v2906 = vadd.f32 0.0, %v2905
        %v2907 = vpop.f32.mrb[0].mxu0
        %v2908 = vpop.f32.mrb[0].mxu0
        %v2909 = vadd.f32 0.0, %v2908
        %v2910 = vpop.f32.mrb[0].mxu0
        %2911 = vmatprep.mubr.bf16.mxu0 0
        %2912 = vmatmul.mubr.bf16.gmra.mrb[0].mxu0 %v2850
        %v2913 = vpop.f32.mrb[0].mxu0
        %v2914 = vadd.f32 0.0, %v2913
        %v2915 = vpop.f32.mrb[0].mxu0
        %v2916 = vpop.f32.mrb[0].mxu0
        %v2917 = vadd.f32 0.0, %v2916
        %v2918 = vpop.f32.mrb[0].mxu0
        %2919 = vdwg.mxu0
        %v2920 = vadd.f32 %v1785, %v2890
        %v2921 = vadd.f32 %v1786, %v2893
        %v2922 = vadd.f32 %v1787, %v2898
        %v2923 = vadd.f32 %v1788, %v2901
        %v2924 = vadd.f32 %v1789, %v2906
        %v2925 = vadd.f32 %v1790, %v2909
        %v2926 = vadd.f32 %v1791, %v2914
        %v2927 = vadd.f32 %v1792, %v2917
        %v2928 = vld [vmem:[%s508] sm:$0xf]
        %v2929 = vld [vmem:[%s508 + $0x4] sm:$0xf]
        %v2930 = vld [vmem:[%s508 + $0x8] sm:$0xf]
        %v2931 = vld [vmem:[%s508 + $0xc] sm:$0xf]
        %v2932 = vld [vmem:[%s508 + $0x10] sm:$0xf]
        %v2933 = vld [vmem:[%s508 + $0x14] sm:$0xf]
        %v2934 = vld [vmem:[%s508 + $0x18] sm:$0xf]
        %v2935 = vld [vmem:[%s508 + $0x1c] sm:$0xf]
        %v2936 = vunpack.c.l.bf16 %v2928
        %v2937 = vunpack.c.l.bf16 %v2929
        %v2938 = vunpack.c.l.bf16 %v2930
        %v2939 = vunpack.c.l.bf16 %v2931
        %v2940 = vunpack.c.l.bf16 %v2932
        %v2941 = vunpack.c.l.bf16 %v2933
        %v2942 = vunpack.c.l.bf16 %v2934
        %v2943 = vunpack.c.l.bf16 %v2935
        %v2944 = vmul.f32 %v2936, %v637
        %v2945 = vmul.f32 %v2937, %v637
        %v2946 = vmul.f32 %v2938, %v637
        %v2947 = vmul.f32 %v2939, %v637
        %v2948 = vmul.f32 %v2940, %v637
        %v2949 = vmul.f32 %v2941, %v637
        %v2950 = vmul.f32 %v2942, %v637
        %v2951 = vmul.f32 %v2943, %v637
        %v2952 = vadd.f32 %v2944, %v651
        %v2953 = vadd.f32 %v2945, %v651
        %v2954 = vadd.f32 %v2946, %v651
        %v2955 = vadd.f32 %v2947, %v651
        %v2956 = vadd.f32 %v2948, %v651
        %v2957 = vadd.f32 %v2949, %v651
        %v2958 = vadd.f32 %v2950, %v651
        %v2959 = vadd.f32 %v2951, %v651
        %vm2960 = vcmp.ge.f32.partialorder %v2952, 0.0
        %vm2961 = vcmp.ge.f32.partialorder %v2953, 0.0
        %vm2962 = vcmp.ge.f32.partialorder %v2954, 0.0
        %vm2963 = vcmp.ge.f32.partialorder %v2955, 0.0
        %vm2964 = vcmp.ge.f32.partialorder %v2956, 0.0
        %vm2965 = vcmp.ge.f32.partialorder %v2957, 0.0
        %vm2966 = vcmp.ge.f32.partialorder %v2958, 0.0
        %vm2967 = vcmp.ge.f32.partialorder %v2959, 0.0
        %v2968 = vmul.f32 %v2952, 0.2
        %v2969 = vmul.f32 %v2953, 0.2
        %v2970 = vmul.f32 %v2954, 0.2
        %v2971 = vmul.f32 %v2955, 0.2
        %v2972 = vmul.f32 %v2956, 0.2
        %v2973 = vmul.f32 %v2957, 0.2
        %v2974 = vmul.f32 %v2958, 0.2
        %v2975 = vmul.f32 %v2959, 0.2
        %v2976 = vsel %vm2960, %v2952, %v2968
        %v2977 = vsel %vm2961, %v2953, %v2969
        %v2978 = vsel %vm2962, %v2954, %v2970
        %v2979 = vsel %vm2963, %v2955, %v2971
        %v2980 = vsel %vm2964, %v2956, %v2972
        %v2981 = vsel %vm2965, %v2957, %v2973
        %v2982 = vsel %vm2966, %v2958, %v2974
        %v2983 = vsel %vm2967, %v2959, %v2975
        %v2984 = vpack.c.bf16 %v2976, %v2976
        %v2985 = vpack.c.bf16 %v2977, %v2977
        %v2986 = vpack.c.bf16 %v2978, %v2978
        %v2987 = vpack.c.bf16 %v2979, %v2979
        %v2988 = vpack.c.bf16 %v2980, %v2980
        %v2989 = vpack.c.bf16 %v2981, %v2981
        %v2990 = vpack.c.bf16 %v2982, %v2982
        %v2991 = vpack.c.bf16 %v2983, %v2983
        %v3000 = vunpack.c.l.b16 %v2984
        %v3001 = vunpack.c.l.b16 %v2985
        %v3002 = vunpack.c.l.b16 %v2986
        %v3003 = vunpack.c.l.b16 %v2987
        %v3004 = vunpack.c.l.b16 %v2988
        %v3005 = vunpack.c.l.b16 %v2989
        %v3006 = vunpack.c.l.b16 %v2990
        %v3007 = vunpack.c.l.b16 %v2991
        %v3008 = vpack.c.b16 %v3000, %v3000
        %v3009 = vpack.c.b16 %v3001, %v3001
        %v3010 = vpack.c.b16 %v3002, %v3002
        %v3011 = vpack.c.b16 %v3003, %v3003
        %v3012 = vpack.c.b16 %v3004, %v3004
        %v3013 = vpack.c.b16 %v3005, %v3005
        %v3014 = vpack.c.b16 %v3006, %v3006
        %v3015 = vpack.c.b16 %v3007, %v3007
        %v3017 = vshrl.u32 %v3008, 16
        %v3019 = vrot.slane %v3017, 7
        %v3020 = vshll.u32 %v3008, 16
        %v3022 = vor.u32 %v3019, %v3020
        %v3023 = vrot.slane %v3019, 4
        %v3025 = vshrl.u32 %v3009, 16
        %v3027 = vrot.slane %v3025, 7
        %v3028 = vshll.u32 %v3009, 16
        %v3030 = vor.u32 %v3027, %v3028
        %v3031 = vrot.slane %v3027, 4
        %v3033 = vshrl.u32 %v3010, 16
        %v3035 = vrot.slane %v3033, 7
        %v3036 = vshll.u32 %v3010, 16
        %v3038 = vor.u32 %v3035, %v3036
        %v3039 = vrot.slane %v3035, 4
        %v3041 = vshrl.u32 %v3011, 16
        %v3043 = vrot.slane %v3041, 7
        %v3044 = vshll.u32 %v3011, 16
        %v3046 = vor.u32 %v3043, %v3044
        %v3047 = vrot.slane %v3043, 4
        %v3049 = vshrl.u32 %v3012, 16
        %v3051 = vrot.slane %v3049, 7
        %v3052 = vshll.u32 %v3012, 16
        %v3054 = vor.u32 %v3051, %v3052
        %v3055 = vrot.slane %v3051, 4
        %v3057 = vshrl.u32 %v3013, 16
        %v3059 = vrot.slane %v3057, 7
        %v3060 = vshll.u32 %v3013, 16
        %v3062 = vor.u32 %v3059, %v3060
        %v3063 = vrot.slane %v3059, 4
        %v3065 = vshrl.u32 %v3014, 16
        %v3067 = vrot.slane %v3065, 7
        %v3068 = vshll.u32 %v3014, 16
        %v3070 = vor.u32 %v3067, %v3068
        %v3071 = vrot.slane %v3067, 4
        %v3073 = vshrl.u32 %v3015, 16
        %v3075 = vrot.slane %v3073, 7
        %v3076 = vshll.u32 %v3015, 16
        %v3078 = vor.u32 %v3075, %v3076
        %v3079 = vrot.slane %v3075, 4
        %v3096 = vsel %vm800, %v3022, %v2192
        %3097 = vst [vmem:[%s797] sm:$0xf] %v3096
        %v3098 = vld [vmem:[%s797 + $0x4] sm:$0x1]
        %v3099 = vsel %vm806, %v3023, %v3098
        %3100 = vst [vmem:[%s797 + $0x4] sm:$0x1] %v3099
        %v3101 = vld [vmem:[%s797 + $0x8] sm:$0xf]
        %v3102 = vsel %vm800, %v3030, %v3101
        %3103 = vst [vmem:[%s797 + $0x8] sm:$0xf] %v3102
        %v3104 = vld [vmem:[%s797 + $0xc] sm:$0x1]
        %v3105 = vsel %vm806, %v3031, %v3104
        %3106 = vst [vmem:[%s797 + $0xc] sm:$0x1] %v3105
        %v3107 = vld [vmem:[%s797 + $0x10] sm:$0xf]
        %v3108 = vsel %vm800, %v3038, %v3107
        %3109 = vst [vmem:[%s797 + $0x10] sm:$0xf] %v3108
        %v3110 = vld [vmem:[%s797 + $0x14] sm:$0x1]
        %v3111 = vsel %vm806, %v3039, %v3110
        %3112 = vst [vmem:[%s797 + $0x14] sm:$0x1] %v3111
        %v3113 = vld [vmem:[%s797 + $0x18] sm:$0xf]
        %v3114 = vsel %vm800, %v3046, %v3113
        %3115 = vst [vmem:[%s797 + $0x18] sm:$0xf] %v3114
        %v3116 = vld [vmem:[%s797 + $0x1c] sm:$0x1]
        %v3117 = vsel %vm806, %v3047, %v3116
        %3118 = vst [vmem:[%s797 + $0x1c] sm:$0x1] %v3117
        %v3119 = vld [vmem:[%s797 + $0x20] sm:$0xf]
        %v3120 = vsel %vm800, %v3054, %v3119
        %3121 = vst [vmem:[%s797 + $0x20] sm:$0xf] %v3120
        %v3122 = vld [vmem:[%s797 + $0x24] sm:$0x1]
        %v3123 = vsel %vm806, %v3055, %v3122
        %3124 = vst [vmem:[%s797 + $0x24] sm:$0x1] %v3123
        %v3125 = vld [vmem:[%s797 + $0x28] sm:$0xf]
        %v3126 = vsel %vm800, %v3062, %v3125
        %3127 = vst [vmem:[%s797 + $0x28] sm:$0xf] %v3126
        %v3128 = vld [vmem:[%s797 + $0x2c] sm:$0x1]
        %v3129 = vsel %vm806, %v3063, %v3128
        %3130 = vst [vmem:[%s797 + $0x2c] sm:$0x1] %v3129
        %v3131 = vld [vmem:[%s797 + $0x30] sm:$0xf]
        %v3132 = vsel %vm800, %v3070, %v3131
        %3133 = vst [vmem:[%s797 + $0x30] sm:$0xf] %v3132
        %v3134 = vld [vmem:[%s797 + $0x34] sm:$0x1]
        %v3135 = vsel %vm806, %v3071, %v3134
        %3136 = vst [vmem:[%s797 + $0x34] sm:$0x1] %v3135
        %v3137 = vld [vmem:[%s797 + $0x38] sm:$0xf]
        %v3138 = vsel %vm800, %v3078, %v3137
        %3139 = vst [vmem:[%s797 + $0x38] sm:$0xf] %v3138
        %v3140 = vld [vmem:[%s797 + $0x3c] sm:$0x1]
        %v3141 = vsel %vm806, %v3079, %v3140
        %3142 = vst [vmem:[%s797 + $0x3c] sm:$0x1] %v3141
        %v3143 = vld [vmem:[#allocation2] sm:$0xf]
        %v3144 = vld [vmem:[#allocation2 + $0x8] sm:$0xf]
        %v3145 = vld [vmem:[#allocation2 + $0x10] sm:$0xf]
        %v3146 = vld [vmem:[#allocation2 + $0x18] sm:$0xf]
        %v3147 = vld [vmem:[#allocation2 + $0x20] sm:$0xf]
        %v3148 = vld [vmem:[#allocation2 + $0x28] sm:$0xf]
        %v3149 = vld [vmem:[#allocation2 + $0x30] sm:$0xf]
        %v3150 = vld [vmem:[#allocation2 + $0x38] sm:$0xf]
        %v3151 = vld [vmem:[#allocation2 + $0x4] sm:$0x1]
        %v3152 = vld [vmem:[#allocation2 + $0xc] sm:$0x1]
        %v3153 = vld [vmem:[#allocation2 + $0x14] sm:$0x1]
        %v3154 = vld [vmem:[#allocation2 + $0x1c] sm:$0x1]
        %v3155 = vld [vmem:[#allocation2 + $0x24] sm:$0x1]
        %v3156 = vld [vmem:[#allocation2 + $0x2c] sm:$0x1]
        %v3157 = vld [vmem:[#allocation2 + $0x34] sm:$0x1]
        %v3158 = vld [vmem:[#allocation2 + $0x3c] sm:$0x1]
        %v3160 = vshrl.u32 %v3143, 16
        %v3162 = vrot.slane %v3160, 4
        %v3163 = vshll.u32 %v3143, 16
        %v3165 = vrot.slane %v3163, 5
        %v3166 = vor.u32 %v3162, %v3165
        %v3167 = vrot.slane %v3166, 4
        %v3169 = vshll.u32 %v3151, 16
        %v3171 = vrot.slane %v3169, 5
        %v3172 = vsel %vm870, %v3167, %v3171
        %v3174 = vshrl.u32 %v3144, 16
        %v3176 = vrot.slane %v3174, 4
        %v3177 = vshll.u32 %v3144, 16
        %v3179 = vrot.slane %v3177, 5
        %v3180 = vor.u32 %v3176, %v3179
        %v3181 = vrot.slane %v3180, 4
        %v3183 = vshll.u32 %v3152, 16
        %v3185 = vrot.slane %v3183, 5
        %v3186 = vsel %vm870, %v3181, %v3185
        %v3188 = vshrl.u32 %v3145, 16
        %v3190 = vrot.slane %v3188, 4
        %v3191 = vshll.u32 %v3145, 16
        %v3193 = vrot.slane %v3191, 5
        %v3194 = vor.u32 %v3190, %v3193
        %v3195 = vrot.slane %v3194, 4
        %v3197 = vshll.u32 %v3153, 16
        %v3199 = vrot.slane %v3197, 5
        %v3200 = vsel %vm870, %v3195, %v3199
        %v3202 = vshrl.u32 %v3146, 16
        %v3204 = vrot.slane %v3202, 4
        %v3205 = vshll.u32 %v3146, 16
        %v3207 = vrot.slane %v3205, 5
        %v3208 = vor.u32 %v3204, %v3207
        %v3209 = vrot.slane %v3208, 4
        %v3211 = vshll.u32 %v3154, 16
        %v3213 = vrot.slane %v3211, 5
        %v3214 = vsel %vm870, %v3209, %v3213
        %v3216 = vshrl.u32 %v3147, 16
        %v3218 = vrot.slane %v3216, 4
        %v3219 = vshll.u32 %v3147, 16
        %v3221 = vrot.slane %v3219, 5
        %v3222 = vor.u32 %v3218, %v3221
        %v3223 = vrot.slane %v3222, 4
        %v3225 = vshll.u32 %v3155, 16
        %v3227 = vrot.slane %v3225, 5
        %v3228 = vsel %vm870, %v3223, %v3227
        %v3230 = vshrl.u32 %v3148, 16
        %v3232 = vrot.slane %v3230, 4
        %v3233 = vshll.u32 %v3148, 16
        %v3235 = vrot.slane %v3233, 5
        %v3236 = vor.u32 %v3232, %v3235
        %v3237 = vrot.slane %v3236, 4
        %v3239 = vshll.u32 %v3156, 16
        %v3241 = vrot.slane %v3239, 5
        %v3242 = vsel %vm870, %v3237, %v3241
        %v3244 = vshrl.u32 %v3149, 16
        %v3246 = vrot.slane %v3244, 4
        %v3247 = vshll.u32 %v3149, 16
        %v3249 = vrot.slane %v3247, 5
        %v3250 = vor.u32 %v3246, %v3249
        %v3251 = vrot.slane %v3250, 4
        %v3253 = vshll.u32 %v3157, 16
        %v3255 = vrot.slane %v3253, 5
        %v3256 = vsel %vm870, %v3251, %v3255
        %v3258 = vshrl.u32 %v3150, 16
        %v3260 = vrot.slane %v3258, 4
        %v3261 = vshll.u32 %v3150, 16
        %v3263 = vrot.slane %v3261, 5
        %v3264 = vor.u32 %v3260, %v3263
        %v3265 = vrot.slane %v3264, 4
        %v3267 = vshll.u32 %v3158, 16
        %v3269 = vrot.slane %v3267, 5
        %v3270 = vsel %vm870, %v3265, %v3269
        %v3271 = vld [vmem:[#allocation2] sm:$0xe]
        %v3272 = vld [vmem:[#allocation2 + $0x8] sm:$0xe]
        %v3273 = vld [vmem:[#allocation2 + $0x10] sm:$0xe]
        %v3274 = vld [vmem:[#allocation2 + $0x18] sm:$0xe]
        %v3275 = vld [vmem:[#allocation2 + $0x20] sm:$0xe]
        %v3276 = vld [vmem:[#allocation2 + $0x28] sm:$0xe]
        %v3277 = vld [vmem:[#allocation2 + $0x30] sm:$0xe]
        %v3278 = vld [vmem:[#allocation2 + $0x38] sm:$0xe]
        %v3295 = vrot.slane %v3271, 5
        %v3296 = vrot.slane %v3295, 4
        %v3297 = vrot.slane %v3151, 5
        %v3298 = vsel %vm1009, %v3296, %v3297
        %v3299 = vrot.slane %v3272, 5
        %v3300 = vrot.slane %v3299, 4
        %v3301 = vrot.slane %v3152, 5
        %v3302 = vsel %vm1009, %v3300, %v3301
        %v3303 = vrot.slane %v3273, 5
        %v3304 = vrot.slane %v3303, 4
        %v3305 = vrot.slane %v3153, 5
        %v3306 = vsel %vm1009, %v3304, %v3305
        %v3307 = vrot.slane %v3274, 5
        %v3308 = vrot.slane %v3307, 4
        %v3309 = vrot.slane %v3154, 5
        %v3310 = vsel %vm1009, %v3308, %v3309
        %v3311 = vrot.slane %v3275, 5
        %v3312 = vrot.slane %v3311, 4
        %v3313 = vrot.slane %v3155, 5
        %v3314 = vsel %vm1009, %v3312, %v3313
        %v3315 = vrot.slane %v3276, 5
        %v3316 = vrot.slane %v3315, 4
        %v3317 = vrot.slane %v3156, 5
        %v3318 = vsel %vm1009, %v3316, %v3317
        %v3319 = vrot.slane %v3277, 5
        %v3320 = vrot.slane %v3319, 4
        %v3321 = vrot.slane %v3157, 5
        %v3322 = vsel %vm1009, %v3320, %v3321
        %v3323 = vrot.slane %v3278, 5
        %v3324 = vrot.slane %v3323, 4
        %v3325 = vrot.slane %v3158, 5
        %v3326 = vsel %vm1009, %v3324, %v3325
        %v3327 = vld [vmem:[%s797] sm:$0xf]
        %v3328 = vld [vmem:[%s797 + $0x8] sm:$0xf]
        %v3329 = vld [vmem:[%s797 + $0x10] sm:$0xf]
        %v3330 = vld [vmem:[%s797 + $0x18] sm:$0xf]
        %v3331 = vld [vmem:[%s797 + $0x20] sm:$0xf]
        %v3332 = vld [vmem:[%s797 + $0x28] sm:$0xf]
        %v3333 = vld [vmem:[%s797 + $0x30] sm:$0xf]
        %v3334 = vld [vmem:[%s797 + $0x38] sm:$0xf]
        %v3335 = vld [vmem:[%s797 + $0x4] sm:$0x1]
        %v3336 = vld [vmem:[%s797 + $0xc] sm:$0x1]
        %v3337 = vld [vmem:[%s797 + $0x14] sm:$0x1]
        %v3338 = vld [vmem:[%s797 + $0x1c] sm:$0x1]
        %v3339 = vld [vmem:[%s797 + $0x24] sm:$0x1]
        %v3340 = vld [vmem:[%s797 + $0x2c] sm:$0x1]
        %v3341 = vld [vmem:[%s797 + $0x34] sm:$0x1]
        %v3342 = vld [vmem:[%s797 + $0x3c] sm:$0x1]
        %v3344 = vshrl.u32 %v3327, 16
        %v3346 = vrot.slane %v3344, 4
        %v3347 = vshll.u32 %v3327, 16
        %v3349 = vrot.slane %v3347, 5
        %v3350 = vor.u32 %v3346, %v3349
        %v3351 = vrot.slane %v3350, 4
        %v3353 = vshll.u32 %v3335, 16
        %v3355 = vrot.slane %v3353, 5
        %v3356 = vsel %vm870, %v3351, %v3355
        %v3358 = vshrl.u32 %v3328, 16
        %v3360 = vrot.slane %v3358, 4
        %v3361 = vshll.u32 %v3328, 16
        %v3363 = vrot.slane %v3361, 5
        %v3364 = vor.u32 %v3360, %v3363
        %v3365 = vrot.slane %v3364, 4
        %v3367 = vshll.u32 %v3336, 16
        %v3369 = vrot.slane %v3367, 5
        %v3370 = vsel %vm870, %v3365, %v3369
        %v3372 = vshrl.u32 %v3329, 16
        %v3374 = vrot.slane %v3372, 4
        %v3375 = vshll.u32 %v3329, 16
        %v3377 = vrot.slane %v3375, 5
        %v3378 = vor.u32 %v3374, %v3377
        %v3379 = vrot.slane %v3378, 4
        %v3381 = vshll.u32 %v3337, 16
        %v3383 = vrot.slane %v3381, 5
        %v3384 = vsel %vm870, %v3379, %v3383
        %v3386 = vshrl.u32 %v3330, 16
        %v3388 = vrot.slane %v3386, 4
        %v3389 = vshll.u32 %v3330, 16
        %v3391 = vrot.slane %v3389, 5
        %v3392 = vor.u32 %v3388, %v3391
        %v3393 = vrot.slane %v3392, 4
        %v3395 = vshll.u32 %v3338, 16
        %v3397 = vrot.slane %v3395, 5
        %v3398 = vsel %vm870, %v3393, %v3397
        %v3400 = vshrl.u32 %v3331, 16
        %v3402 = vrot.slane %v3400, 4
        %v3403 = vshll.u32 %v3331, 16
        %v3405 = vrot.slane %v3403, 5
        %v3406 = vor.u32 %v3402, %v3405
        %v3407 = vrot.slane %v3406, 4
        %v3409 = vshll.u32 %v3339, 16
        %v3411 = vrot.slane %v3409, 5
        %v3412 = vsel %vm870, %v3407, %v3411
        %v3414 = vshrl.u32 %v3332, 16
        %v3416 = vrot.slane %v3414, 4
        %v3417 = vshll.u32 %v3332, 16
        %v3419 = vrot.slane %v3417, 5
        %v3420 = vor.u32 %v3416, %v3419
        %v3421 = vrot.slane %v3420, 4
        %v3423 = vshll.u32 %v3340, 16
        %v3425 = vrot.slane %v3423, 5
        %v3426 = vsel %vm870, %v3421, %v3425
        %v3428 = vshrl.u32 %v3333, 16
        %v3430 = vrot.slane %v3428, 4
        %v3431 = vshll.u32 %v3333, 16
        %v3433 = vrot.slane %v3431, 5
        %v3434 = vor.u32 %v3430, %v3433
        %v3435 = vrot.slane %v3434, 4
        %v3437 = vshll.u32 %v3341, 16
        %v3439 = vrot.slane %v3437, 5
        %v3440 = vsel %vm870, %v3435, %v3439
        %v3442 = vshrl.u32 %v3334, 16
        %v3444 = vrot.slane %v3442, 4
        %v3445 = vshll.u32 %v3334, 16
        %v3447 = vrot.slane %v3445, 5
        %v3448 = vor.u32 %v3444, %v3447
        %v3449 = vrot.slane %v3448, 4
        %v3451 = vshll.u32 %v3342, 16
        %v3453 = vrot.slane %v3451, 5
        %v3454 = vsel %vm870, %v3449, %v3453
        %v3455 = vld [vmem:[%s797] sm:$0xe]
        %v3456 = vld [vmem:[%s797 + $0x8] sm:$0xe]
        %v3457 = vld [vmem:[%s797 + $0x10] sm:$0xe]
        %v3458 = vld [vmem:[%s797 + $0x18] sm:$0xe]
        %v3459 = vld [vmem:[%s797 + $0x20] sm:$0xe]
        %v3460 = vld [vmem:[%s797 + $0x28] sm:$0xe]
        %v3461 = vld [vmem:[%s797 + $0x30] sm:$0xe]
        %v3462 = vld [vmem:[%s797 + $0x38] sm:$0xe]
        %v3479 = vrot.slane %v3455, 5
        %v3480 = vrot.slane %v3479, 4
        %v3481 = vrot.slane %v3335, 5
        %v3482 = vsel %vm1009, %v3480, %v3481
        %v3483 = vrot.slane %v3456, 5
        %v3484 = vrot.slane %v3483, 4
        %v3485 = vrot.slane %v3336, 5
        %v3486 = vsel %vm1009, %v3484, %v3485
        %v3487 = vrot.slane %v3457, 5
        %v3488 = vrot.slane %v3487, 4
        %v3489 = vrot.slane %v3337, 5
        %v3490 = vsel %vm1009, %v3488, %v3489
        %v3491 = vrot.slane %v3458, 5
        %v3492 = vrot.slane %v3491, 4
        %v3493 = vrot.slane %v3338, 5
        %v3494 = vsel %vm1009, %v3492, %v3493
        %v3495 = vrot.slane %v3459, 5
        %v3496 = vrot.slane %v3495, 4
        %v3497 = vrot.slane %v3339, 5
        %v3498 = vsel %vm1009, %v3496, %v3497
        %v3499 = vrot.slane %v3460, 5
        %v3500 = vrot.slane %v3499, 4
        %v3501 = vrot.slane %v3340, 5
        %v3502 = vsel %vm1009, %v3500, %v3501
        %v3503 = vrot.slane %v3461, 5
        %v3504 = vrot.slane %v3503, 4
        %v3505 = vrot.slane %v3341, 5
        %v3506 = vsel %vm1009, %v3504, %v3505
        %v3507 = vrot.slane %v3462, 5
        %v3508 = vrot.slane %v3507, 4
        %v3509 = vrot.slane %v3342, 5
        %v3510 = vsel %vm1009, %v3508, %v3509
        %v3511 = vld [vmem:[%s1226] sm:$0xf]
        %v3512 = vld [vmem:[%s1226 + $0x8] sm:$0xf]
        %v3513 = vld [vmem:[%s1226 + $0x10] sm:$0xf]
        %v3514 = vld [vmem:[%s1226 + $0x18] sm:$0xf]
        %v3515 = vld [vmem:[%s1226 + $0x20] sm:$0xf]
        %v3516 = vld [vmem:[%s1226 + $0x28] sm:$0xf]
        %v3517 = vld [vmem:[%s1226 + $0x30] sm:$0xf]
        %v3518 = vld [vmem:[%s1226 + $0x38] sm:$0xf]
        %v3519 = vld [vmem:[%s1226 + $0x4] sm:$0x1]
        %v3520 = vld [vmem:[%s1226 + $0xc] sm:$0x1]
        %v3521 = vld [vmem:[%s1226 + $0x14] sm:$0x1]
        %v3522 = vld [vmem:[%s1226 + $0x1c] sm:$0x1]
        %v3523 = vld [vmem:[%s1226 + $0x24] sm:$0x1]
        %v3524 = vld [vmem:[%s1226 + $0x2c] sm:$0x1]
        %v3525 = vld [vmem:[%s1226 + $0x34] sm:$0x1]
        %v3526 = vld [vmem:[%s1226 + $0x3c] sm:$0x1]
        %v3528 = vshrl.u32 %v3511, 16
        %v3530 = vrot.slane %v3528, 4
        %v3531 = vshll.u32 %v3511, 16
        %v3533 = vrot.slane %v3531, 5
        %v3534 = vor.u32 %v3530, %v3533
        %v3535 = vrot.slane %v3534, 4
        %v3537 = vshll.u32 %v3519, 16
        %v3539 = vrot.slane %v3537, 5
        %v3540 = vsel %vm870, %v3535, %v3539
        %v3542 = vshrl.u32 %v3512, 16
        %v3544 = vrot.slane %v3542, 4
        %v3545 = vshll.u32 %v3512, 16
        %v3547 = vrot.slane %v3545, 5
        %v3548 = vor.u32 %v3544, %v3547
        %v3549 = vrot.slane %v3548, 4
        %v3551 = vshll.u32 %v3520, 16
        %v3553 = vrot.slane %v3551, 5
        %v3554 = vsel %vm870, %v3549, %v3553
        %v3556 = vshrl.u32 %v3513, 16
        %v3558 = vrot.slane %v3556, 4
        %v3559 = vshll.u32 %v3513, 16
        %v3561 = vrot.slane %v3559, 5
        %v3562 = vor.u32 %v3558, %v3561
        %v3563 = vrot.slane %v3562, 4
        %v3565 = vshll.u32 %v3521, 16
        %v3567 = vrot.slane %v3565, 5
        %v3568 = vsel %vm870, %v3563, %v3567
        %v3570 = vshrl.u32 %v3514, 16
        %v3572 = vrot.slane %v3570, 4
        %v3573 = vshll.u32 %v3514, 16
        %v3575 = vrot.slane %v3573, 5
        %v3576 = vor.u32 %v3572, %v3575
        %v3577 = vrot.slane %v3576, 4
        %v3579 = vshll.u32 %v3522, 16
        %v3581 = vrot.slane %v3579, 5
        %v3582 = vsel %vm870, %v3577, %v3581
        %v3584 = vshrl.u32 %v3515, 16
        %v3586 = vrot.slane %v3584, 4
        %v3587 = vshll.u32 %v3515, 16
        %v3589 = vrot.slane %v3587, 5
        %v3590 = vor.u32 %v3586, %v3589
        %v3591 = vrot.slane %v3590, 4
        %v3593 = vshll.u32 %v3523, 16
        %v3595 = vrot.slane %v3593, 5
        %v3596 = vsel %vm870, %v3591, %v3595
        %v3598 = vshrl.u32 %v3516, 16
        %v3600 = vrot.slane %v3598, 4
        %v3601 = vshll.u32 %v3516, 16
        %v3603 = vrot.slane %v3601, 5
        %v3604 = vor.u32 %v3600, %v3603
        %v3605 = vrot.slane %v3604, 4
        %v3607 = vshll.u32 %v3524, 16
        %v3609 = vrot.slane %v3607, 5
        %v3610 = vsel %vm870, %v3605, %v3609
        %v3612 = vshrl.u32 %v3517, 16
        %v3614 = vrot.slane %v3612, 4
        %v3615 = vshll.u32 %v3517, 16
        %v3617 = vrot.slane %v3615, 5
        %v3618 = vor.u32 %v3614, %v3617
        %v3619 = vrot.slane %v3618, 4
        %v3621 = vshll.u32 %v3525, 16
        %v3623 = vrot.slane %v3621, 5
        %v3624 = vsel %vm870, %v3619, %v3623
        %v3626 = vshrl.u32 %v3518, 16
        %v3628 = vrot.slane %v3626, 4
        %v3629 = vshll.u32 %v3518, 16
        %v3631 = vrot.slane %v3629, 5
        %v3632 = vor.u32 %v3628, %v3631
        %v3633 = vrot.slane %v3632, 4
        %v3635 = vshll.u32 %v3526, 16
        %v3637 = vrot.slane %v3635, 5
        %v3638 = vsel %vm870, %v3633, %v3637
        %v3639 = vld [vmem:[%s1226] sm:$0xe]
        %v3640 = vld [vmem:[%s1226 + $0x8] sm:$0xe]
        %v3641 = vld [vmem:[%s1226 + $0x10] sm:$0xe]
        %v3642 = vld [vmem:[%s1226 + $0x18] sm:$0xe]
        %v3643 = vld [vmem:[%s1226 + $0x20] sm:$0xe]
        %v3644 = vld [vmem:[%s1226 + $0x28] sm:$0xe]
        %v3645 = vld [vmem:[%s1226 + $0x30] sm:$0xe]
        %v3646 = vld [vmem:[%s1226 + $0x38] sm:$0xe]
        %v3663 = vrot.slane %v3639, 5
        %v3664 = vrot.slane %v3663, 4
        %v3665 = vrot.slane %v3519, 5
        %v3666 = vsel %vm1009, %v3664, %v3665
        %v3667 = vrot.slane %v3640, 5
        %v3668 = vrot.slane %v3667, 4
        %v3669 = vrot.slane %v3520, 5
        %v3670 = vsel %vm1009, %v3668, %v3669
        %v3671 = vrot.slane %v3641, 5
        %v3672 = vrot.slane %v3671, 4
        %v3673 = vrot.slane %v3521, 5
        %v3674 = vsel %vm1009, %v3672, %v3673
        %v3675 = vrot.slane %v3642, 5
        %v3676 = vrot.slane %v3675, 4
        %v3677 = vrot.slane %v3522, 5
        %v3678 = vsel %vm1009, %v3676, %v3677
        %v3679 = vrot.slane %v3643, 5
        %v3680 = vrot.slane %v3679, 4
        %v3681 = vrot.slane %v3523, 5
        %v3682 = vsel %vm1009, %v3680, %v3681
        %v3683 = vrot.slane %v3644, 5
        %v3684 = vrot.slane %v3683, 4
        %v3685 = vrot.slane %v3524, 5
        %v3686 = vsel %vm1009, %v3684, %v3685
        %v3687 = vrot.slane %v3645, 5
        %v3688 = vrot.slane %v3687, 4
        %v3689 = vrot.slane %v3525, 5
        %v3690 = vsel %vm1009, %v3688, %v3689
        %v3691 = vrot.slane %v3646, 5
        %v3692 = vrot.slane %v3691, 4
        %v3693 = vrot.slane %v3526, 5
        %v3694 = vsel %vm1009, %v3692, %v3693
        %v3703 = vunpack.c.l.b16 %v3143
        %v3704 = vunpack.c.l.b16 %v3144
        %v3705 = vunpack.c.l.b16 %v3145
        %v3706 = vunpack.c.l.b16 %v3146
        %v3707 = vunpack.c.l.b16 %v3147
        %v3708 = vunpack.c.l.b16 %v3148
        %v3709 = vunpack.c.l.b16 %v3149
        %v3710 = vunpack.c.l.b16 %v3150
        %v3711 = vpack.c.b16 %v3704, %v3703
        %v3712 = vpack.c.b16 %v3706, %v3705
        %v3713 = vpack.c.b16 %v3708, %v3707
        %v3714 = vpack.c.b16 %v3710, %v3709
        %v3715 = vunpack.c.l.b16 %v3172
        %v3716 = vunpack.c.l.b16 %v3186
        %v3717 = vunpack.c.l.b16 %v3200
        %v3718 = vunpack.c.l.b16 %v3214
        %v3719 = vunpack.c.l.b16 %v3228
        %v3720 = vunpack.c.l.b16 %v3242
        %v3721 = vunpack.c.l.b16 %v3256
        %v3722 = vunpack.c.l.b16 %v3270
        %v3723 = vpack.c.b16 %v3716, %v3715
        %v3724 = vpack.c.b16 %v3718, %v3717
        %v3725 = vpack.c.b16 %v3720, %v3719
        %v3726 = vpack.c.b16 %v3722, %v3721
        %3727 = vrot.lane.b32.xlu0 %v3723, 4
        %v3728 = vpop.permute.xlu0 %3727
        %3729 = vrot.lane.b32.xlu0 %v3724, 4
        %v3730 = vpop.permute.xlu0 %3729
        %3731 = vrot.lane.b32.xlu0 %v3725, 4
        %v3732 = vpop.permute.xlu0 %3731
        %3733 = vrot.lane.b32.xlu0 %v3726, 4
        %v3734 = vpop.permute.xlu0 %3733
        %v3735 = vunpack.c.l.b16 %v3298
        %v3736 = vunpack.c.l.b16 %v3302
        %v3737 = vunpack.c.l.b16 %v3306
        %v3738 = vunpack.c.l.b16 %v3310
        %v3739 = vunpack.c.l.b16 %v3314
        %v3740 = vunpack.c.l.b16 %v3318
        %v3741 = vunpack.c.l.b16 %v3322
        %v3742 = vunpack.c.l.b16 %v3326
        %v3743 = vpack.c.b16 %v3736, %v3735
        %v3744 = vpack.c.b16 %v3738, %v3737
        %v3745 = vpack.c.b16 %v3740, %v3739
        %v3746 = vpack.c.b16 %v3742, %v3741
        %3747 = vrot.lane.b32.xlu0 %v3743, 8
        %v3748 = vpop.permute.xlu0 %3747
        %3749 = vrot.lane.b32.xlu0 %v3744, 8
        %v3750 = vpop.permute.xlu0 %3749
        %3751 = vrot.lane.b32.xlu0 %v3745, 8
        %v3752 = vpop.permute.xlu0 %3751
        %3753 = vrot.lane.b32.xlu0 %v3746, 8
        %v3754 = vpop.permute.xlu0 %3753
        %v3763 = vunpack.c.l.b16 %v3327
        %v3764 = vunpack.c.l.b16 %v3328
        %v3765 = vunpack.c.l.b16 %v3329
        %v3766 = vunpack.c.l.b16 %v3330
        %v3767 = vunpack.c.l.b16 %v3331
        %v3768 = vunpack.c.l.b16 %v3332
        %v3769 = vunpack.c.l.b16 %v3333
        %v3770 = vunpack.c.l.b16 %v3334
        %v3771 = vpack.c.b16 %v3764, %v3763
        %v3772 = vpack.c.b16 %v3766, %v3765
        %v3773 = vpack.c.b16 %v3768, %v3767
        %v3774 = vpack.c.b16 %v3770, %v3769
        %3775 = vrot.lane.b32.xlu0 %v3771, 12
        %v3776 = vpop.permute.xlu0 %3775
        %3777 = vrot.lane.b32.xlu0 %v3772, 12
        %v3778 = vpop.permute.xlu0 %3777
        %3779 = vrot.lane.b32.xlu0 %v3773, 12
        %v3780 = vpop.permute.xlu0 %3779
        %3781 = vrot.lane.b32.xlu0 %v3774, 12
        %v3782 = vpop.permute.xlu0 %3781
        %v3783 = vunpack.c.l.b16 %v3356
        %v3784 = vunpack.c.l.b16 %v3370
        %v3785 = vunpack.c.l.b16 %v3384
        %v3786 = vunpack.c.l.b16 %v3398
        %v3787 = vunpack.c.l.b16 %v3412
        %v3788 = vunpack.c.l.b16 %v3426
        %v3789 = vunpack.c.l.b16 %v3440
        %v3790 = vunpack.c.l.b16 %v3454
        %v3791 = vpack.c.b16 %v3784, %v3783
        %v3792 = vpack.c.b16 %v3786, %v3785
        %v3793 = vpack.c.b16 %v3788, %v3787
        %v3794 = vpack.c.b16 %v3790, %v3789
        %3795 = vrot.lane.b32.xlu0 %v3791, 16
        %v3796 = vpop.permute.xlu0 %3795
        %3797 = vrot.lane.b32.xlu0 %v3792, 16
        %v3798 = vpop.permute.xlu0 %3797
        %3799 = vrot.lane.b32.xlu0 %v3793, 16
        %v3800 = vpop.permute.xlu0 %3799
        %3801 = vrot.lane.b32.xlu0 %v3794, 16
        %v3802 = vpop.permute.xlu0 %3801
        %v3803 = vunpack.c.l.b16 %v3482
        %v3804 = vunpack.c.l.b16 %v3486
        %v3805 = vunpack.c.l.b16 %v3490
        %v3806 = vunpack.c.l.b16 %v3494
        %v3807 = vunpack.c.l.b16 %v3498
        %v3808 = vunpack.c.l.b16 %v3502
        %v3809 = vunpack.c.l.b16 %v3506
        %v3810 = vunpack.c.l.b16 %v3510
        %v3811 = vpack.c.b16 %v3804, %v3803
        %v3812 = vpack.c.b16 %v3806, %v3805
        %v3813 = vpack.c.b16 %v3808, %v3807
        %v3814 = vpack.c.b16 %v3810, %v3809
        %3815 = vrot.lane.b32.xlu0 %v3811, 20
        %v3816 = vpop.permute.xlu0 %3815
        %3817 = vrot.lane.b32.xlu0 %v3812, 20
        %v3818 = vpop.permute.xlu0 %3817
        %3819 = vrot.lane.b32.xlu0 %v3813, 20
        %v3820 = vpop.permute.xlu0 %3819
        %3821 = vrot.lane.b32.xlu0 %v3814, 20
        %v3822 = vpop.permute.xlu0 %3821
        %v3831 = vunpack.c.l.b16 %v3511
        %v3832 = vunpack.c.l.b16 %v3512
        %v3833 = vunpack.c.l.b16 %v3513
        %v3834 = vunpack.c.l.b16 %v3514
        %v3835 = vunpack.c.l.b16 %v3515
        %v3836 = vunpack.c.l.b16 %v3516
        %v3837 = vunpack.c.l.b16 %v3517
        %v3838 = vunpack.c.l.b16 %v3518
        %v3839 = vpack.c.b16 %v3832, %v3831
        %v3840 = vpack.c.b16 %v3834, %v3833
        %v3841 = vpack.c.b16 %v3836, %v3835
        %v3842 = vpack.c.b16 %v3838, %v3837
        %3843 = vrot.lane.b32.xlu0 %v3839, 24
        %v3844 = vpop.permute.xlu0 %3843
        %3845 = vrot.lane.b32.xlu0 %v3840, 24
        %v3846 = vpop.permute.xlu0 %3845
        %3847 = vrot.lane.b32.xlu0 %v3841, 24
        %v3848 = vpop.permute.xlu0 %3847
        %3849 = vrot.lane.b32.xlu0 %v3842, 24
        %v3850 = vpop.permute.xlu0 %3849
        %v3851 = vunpack.c.l.b16 %v3540
        %v3852 = vunpack.c.l.b16 %v3554
        %v3853 = vunpack.c.l.b16 %v3568
        %v3854 = vunpack.c.l.b16 %v3582
        %v3855 = vunpack.c.l.b16 %v3596
        %v3856 = vunpack.c.l.b16 %v3610
        %v3857 = vunpack.c.l.b16 %v3624
        %v3858 = vunpack.c.l.b16 %v3638
        %v3859 = vpack.c.b16 %v3852, %v3851
        %v3860 = vpack.c.b16 %v3854, %v3853
        %v3861 = vpack.c.b16 %v3856, %v3855
        %v3862 = vpack.c.b16 %v3858, %v3857
        %3863 = vrot.lane.b32.xlu0 %v3859, 28
        %v3864 = vpop.permute.xlu0 %3863
        %3865 = vrot.lane.b32.xlu0 %v3860, 28
        %v3866 = vpop.permute.xlu0 %3865
        %3867 = vrot.lane.b32.xlu0 %v3861, 28
        %v3868 = vpop.permute.xlu0 %3867
        %3869 = vrot.lane.b32.xlu0 %v3862, 28
        %v3870 = vpop.permute.xlu0 %3869
        %v3871 = vunpack.c.l.b16 %v3666
        %v3872 = vunpack.c.l.b16 %v3670
        %v3873 = vunpack.c.l.b16 %v3674
        %v3874 = vunpack.c.l.b16 %v3678
        %v3875 = vunpack.c.l.b16 %v3682
        %v3876 = vunpack.c.l.b16 %v3686
        %v3877 = vunpack.c.l.b16 %v3690
        %v3878 = vunpack.c.l.b16 %v3694
        %v3879 = vpack.c.b16 %v3872, %v3871
        %v3880 = vpack.c.b16 %v3874, %v3873
        %v3881 = vpack.c.b16 %v3876, %v3875
        %v3882 = vpack.c.b16 %v3878, %v3877
        %3883 = vrot.lane.b32.xlu0 %v3879, 32
        %v3884 = vpop.permute.xlu0 %3883
        %3885 = vrot.lane.b32.xlu0 %v3880, 32
        %v3886 = vpop.permute.xlu0 %3885
        %3887 = vrot.lane.b32.xlu0 %v3881, 32
        %v3888 = vpop.permute.xlu0 %3887
        %3889 = vrot.lane.b32.xlu0 %v3882, 32
        %v3890 = vpop.permute.xlu0 %3889
        %v3893 = vsel %vm1607, %v3711, %v3728
        %v3896 = vsel %vm1607, %v3712, %v3730
        %v3899 = vsel %vm1607, %v3713, %v3732
        %v3902 = vsel %vm1607, %v3714, %v3734
        %v3904 = vsel %vm1620, %v3893, %v3748
        %v3906 = vsel %vm1620, %v3896, %v3750
        %v3908 = vsel %vm1620, %v3899, %v3752
        %v3910 = vsel %vm1620, %v3902, %v3754
        %v3912 = vsel %vm1629, %v3904, %v3776
        %v3914 = vsel %vm1629, %v3906, %v3778
        %v3916 = vsel %vm1629, %v3908, %v3780
        %v3918 = vsel %vm1629, %v3910, %v3782
        %v3920 = vsel %vm1638, %v3912, %v3796
        %v3922 = vsel %vm1638, %v3914, %v3798
        %v3924 = vsel %vm1638, %v3916, %v3800
        %v3926 = vsel %vm1638, %v3918, %v3802
        %v3928 = vsel %vm1647, %v3920, %v3816
        %v3930 = vsel %vm1647, %v3922, %v3818
        %v3932 = vsel %vm1647, %v3924, %v3820
        %v3934 = vsel %vm1647, %v3926, %v3822
        %v3936 = vsel %vm1656, %v3928, %v3844
        %v3938 = vsel %vm1656, %v3930, %v3846
        %v3940 = vsel %vm1656, %v3932, %v3848
        %v3942 = vsel %vm1656, %v3934, %v3850
        %v3944 = vsel %vm1665, %v3936, %v3864
        %v3946 = vsel %vm1665, %v3938, %v3866
        %v3948 = vsel %vm1665, %v3940, %v3868
        %v3950 = vsel %vm1665, %v3942, %v3870
        %v3952 = vsel %vm1674, %v3944, %v3884
        %v3954 = vsel %vm1674, %v3946, %v3886
        %v3956 = vsel %vm1674, %v3948, %v3888
        %v3958 = vsel %vm1674, %v3950, %v3890
        %v3959 = vld [vmem:[#allocation15] sm:$0xf]
        %v3960 = vld [vmem:[#allocation15 + $0x4] sm:$0xf]
        %v3961 = vld [vmem:[#allocation15 + $0x8] sm:$0xf]
        %v3962 = vld [vmem:[#allocation15 + $0xc] sm:$0xf]
        %v3963 = vld [vmem:[#allocation15 + $0x10] sm:$0x3]
        %v3969 = vunpack.c.l.b16 %v3959
        %v3970 = vunpack.c.l.b16 %v3960
        %v3971 = vunpack.c.l.b16 %v3961
        %v3972 = vunpack.c.l.b16 %v3962
        %v3973 = vunpack.c.l.b16 %v3963
        %v3974 = vpack.c.b16 %v3970, %v3969
        %v3975 = vpack.c.b16 %v3972, %v3971
        %v3976 = vpack.c.b16 %v3973, %v3973
        %v3979 = vsel %vm1703, %v3952, 0
        %v3981 = vsel %vm1703, %v3954, 0
        %v3983 = vsel %vm1703, %v3956, 0
        %v3985 = vsel %vm1703, %v3958, 0
        %v3988 = vsel %vm1712, %v3976, 0
        %3990 = vmatprep.subr.bf16.mxu0 0
        %3991 = vmatpush1.bf16.msra.mxu0 %v3974
        %3992 = vmatprep.subr.bf16.mxu0 0
        %3993 = vmatpush1.bf16.msra.mxu0 %v3975
        %3994 = vmatprep.subr.bf16.mxu0 0
        %3995 = vmatpush1.bf16.msra.mxu0 %v3988
        %3996 = vmatprep.subr.bf16.mxu0 0
        %3997 = vmatpush1.bf16.msra.mxu0 0
        %3998 = vmatprep.subr.bf16.mxu0 0
        %3999 = vmatpush1.bf16.msra.mxu0 0
        %4000 = vmatprep.subr.bf16.mxu0 0
        %4001 = vmatpush1.bf16.msra.mxu0 0
        %4002 = vmatprep.subr.bf16.mxu0 0
        %4003 = vmatpush1.bf16.msra.mxu0 0
        %4004 = vmatprep.subr.bf16.mxu0 0
        %4005 = vmatpush1.bf16.msra.mxu0 0
        %4006 = vmatprep.subr.bf16.mxu0 0
        %4007 = vmatpush1.bf16.msra.mxu0 0
        %4008 = vmatprep.subr.bf16.mxu0 0
        %4009 = vmatpush1.bf16.msra.mxu0 0
        %4010 = vmatprep.subr.bf16.mxu0 0
        %4011 = vmatpush1.bf16.msra.mxu0 0
        %4012 = vmatprep.subr.bf16.mxu0 0
        %4013 = vmatpush1.bf16.msra.mxu0 0
        %4014 = vmatprep.subr.bf16.mxu0 0
        %4015 = vmatpush1.bf16.msra.mxu0 0
        %4016 = vmatprep.subr.bf16.mxu0 0
        %4017 = vmatpush1.bf16.msra.mxu0 0
        %4018 = vmatprep.subr.bf16.mxu0 0
        %4019 = vmatpush1.bf16.msra.mxu0 0
        %4020 = vmatprep.subr.bf16.mxu0 0
        %4021 = vmatpush1.bf16.msra.mxu0 0
        %4022 = vmatprep.mubr.bf16.mxu0 0
        %4023 = vmatmul.mubr.bf16.gmra.mrb[0].mxu0 %v3979
        %v4024 = vpop.f32.mrb[0].mxu0
        %v4025 = vadd.f32 0.0, %v4024
        %v4026 = vpop.f32.mrb[0].mxu0
        %v4027 = vpop.f32.mrb[0].mxu0
        %v4028 = vadd.f32 0.0, %v4027
        %v4029 = vpop.f32.mrb[0].mxu0
        %4030 = vmatprep.mubr.bf16.mxu0 0
        %4031 = vmatmul.mubr.bf16.gmra.mrb[0].mxu0 %v3981
        %v4032 = vpop.f32.mrb[0].mxu0
        %v4033 = vadd.f32 0.0, %v4032
        %v4034 = vpop.f32.mrb[0].mxu0
        %v4035 = vpop.f32.mrb[0].mxu0
        %v4036 = vadd.f32 0.0, %v4035
        %v4037 = vpop.f32.mrb[0].mxu0
        %4038 = vmatprep.mubr.bf16.mxu0 0
        %4039 = vmatmul.mubr.bf16.gmra.mrb[0].mxu0 %v3983
        %v4040 = vpop.f32.mrb[0].mxu0
        %v4041 = vadd.f32 0.0, %v4040
        %v4042 = vpop.f32.mrb[0].mxu0
        %v4043 = vpop.f32.mrb[0].mxu0
        %v4044 = vadd.f32 0.0, %v4043
        %v4045 = vpop.f32.mrb[0].mxu0
        %4046 = vmatprep.mubr.bf16.mxu0 0
        %4047 = vmatmul.mubr.bf16.gmra.mrb[0].mxu0 %v3985
        %v4048 = vpop.f32.mrb[0].mxu0
        %v4049 = vadd.f32 0.0, %v4048
        %v4050 = vpop.f32.mrb[0].mxu0
        %v4051 = vpop.f32.mrb[0].mxu0
        %v4052 = vadd.f32 0.0, %v4051
        %v4053 = vpop.f32.mrb[0].mxu0
        %4054 = vdwg.mxu0
        %p4055 = scmp.lt.s32.totalorder %s41, 3
        %s4056 = scalar_select %p4055, 1, 0
        %v4057 = vstv %s4056
        %vm4058 = vcmp.eq.s32.totalorder %v4057, 1
        %v4059 = vsel %vm4058, %v4025, 0.0
        %v4060 = vsel %vm4058, %v4028, 0.0
        %v4061 = vsel %vm4058, %v4033, 0.0
        %v4062 = vsel %vm4058, %v4036, 0.0
        %v4063 = vsel %vm4058, %v4041, 0.0
        %v4064 = vsel %vm4058, %v4044, 0.0
        %v4065 = vsel %vm4058, %v4049, 0.0
        %v4066 = vsel %vm4058, %v4052, 0.0
        %v4067 = vadd.f32 %v2920, %v4059
        %v4068 = vadd.f32 %v2921, %v4060
        %v4069 = vadd.f32 %v2922, %v4061
        %v4070 = vadd.f32 %v2923, %v4062
        %v4071 = vadd.f32 %v2924, %v4063
        %v4072 = vadd.f32 %v2925, %v4064
        %v4073 = vadd.f32 %v2926, %v4065
        %v4074 = vadd.f32 %v2927, %v4066
        %v4075 = vpack.c.bf16 %v4068, %v4067
        %v4076 = vpack.c.bf16 %v4070, %v4069
        %v4077 = vpack.c.bf16 %v4072, %v4071
        %v4078 = vpack.c.bf16 %v4074, %v4073
        %v4083 = vunpack.c.l.b16 %v4075
        %v4084 = vunpack.c.h.b16 %v4075
        %v4085 = vunpack.c.l.b16 %v4076
        %v4086 = vunpack.c.h.b16 %v4076
        %v4087 = vunpack.c.l.b16 %v4077
        %v4088 = vunpack.c.h.b16 %v4077
        %v4089 = vunpack.c.l.b16 %v4078
        %v4090 = vunpack.c.h.b16 %v4078
        %v4091 = vpack.c.b16 %v4083, %v4083
        %v4092 = vpack.c.b16 %v4084, %v4084
        %v4093 = vpack.c.b16 %v4085, %v4085
        %v4094 = vpack.c.b16 %v4086, %v4086
        %v4095 = vpack.c.b16 %v4087, %v4087
        %v4096 = vpack.c.b16 %v4088, %v4088
        %v4097 = vpack.c.b16 %v4089, %v4089
        %v4098 = vpack.c.b16 %v4090, %v4090
        %vm4107 = vcmask 60416
        %4108 = vst.msk [vmem:[%s570] sm:$0xf] %vm4107, %v4091
        %4109 = vst.msk [vmem:[%s570 + $0x4] sm:$0xf] %vm4107, %v4092
        %4110 = vst.msk [vmem:[%s570 + $0x8] sm:$0xf] %vm4107, %v4093
        %4111 = vst.msk [vmem:[%s570 + $0xc] sm:$0xf] %vm4107, %v4094
        %4112 = vst.msk [vmem:[%s570 + $0x10] sm:$0xf] %vm4107, %v4095
        %4113 = vst.msk [vmem:[%s570 + $0x14] sm:$0xf] %vm4107, %v4096
        %4114 = vst.msk [vmem:[%s570 + $0x18] sm:$0xf] %vm4107, %v4097
        %4115 = vst.msk [vmem:[%s570 + $0x1c] sm:$0xf] %vm4107, %v4098
        %v4116 = vsel %vm1620, %v4067, 0.0
        %v4117 = vsel %vm1620, %v4068, 0.0
        %v4118 = vadd.f32 %v4116, %v4117
        %v4119 = vsel %vm1620, %v4069, 0.0
        %v4120 = vadd.f32 %v4118, %v4119
        %v4121 = vsel %vm1620, %v4070, 0.0
        %v4122 = vadd.f32 %v4120, %v4121
        %v4123 = vsel %vm1620, %v4071, 0.0
        %v4124 = vadd.f32 %v4122, %v4123
        %v4125 = vsel %vm1620, %v4072, 0.0
        %v4126 = vadd.f32 %v4124, %v4125
        %v4127 = vsel %vm1620, %v4073, 0.0
        %v4128 = vadd.f32 %v4126, %v4127
        %v4129 = vsel %vm1620, %v4074, 0.0
        %v4130 = vadd.f32 %v4128, %v4129
        %v4131 = vrot.slane %v4130, 4
        %v4132 = vadd.f32 %v4130, %v4131
        %v4133 = vrot.slane %v4132, 2
        %v4134 = vadd.f32 %v4132, %v4133
        %v4135 = vrot.slane %v4134, 1
        %v4136 = vadd.f32 %v4134, %v4135
        %v4137 = vmul.f32 %v4067, %v4067
        %v4138 = vmul.f32 %v4068, %v4068
        %v4139 = vmul.f32 %v4069, %v4069
        %v4140 = vmul.f32 %v4070, %v4070
        %v4141 = vmul.f32 %v4071, %v4071
        %v4142 = vmul.f32 %v4072, %v4072
        %v4143 = vmul.f32 %v4073, %v4073
        %v4144 = vmul.f32 %v4074, %v4074
        %v4145 = vsel %vm1620, %v4137, 0.0
        %v4146 = vsel %vm1620, %v4138, 0.0
        %v4147 = vadd.f32 %v4145, %v4146
        %v4148 = vsel %vm1620, %v4139, 0.0
        %v4149 = vadd.f32 %v4147, %v4148
        %v4150 = vsel %vm1620, %v4140, 0.0
        %v4151 = vadd.f32 %v4149, %v4150
        %v4152 = vsel %vm1620, %v4141, 0.0
        %v4153 = vadd.f32 %v4151, %v4152
        %v4154 = vsel %vm1620, %v4142, 0.0
        %v4155 = vadd.f32 %v4153, %v4154
        %v4156 = vsel %vm1620, %v4143, 0.0
        %v4157 = vadd.f32 %v4155, %v4156
        %v4158 = vsel %vm1620, %v4144, 0.0
        %v4159 = vadd.f32 %v4157, %v4158
        %v4160 = vrot.slane %v4159, 4
        %v4161 = vadd.f32 %v4159, %v4160
        %v4162 = vrot.slane %v4161, 2
        %v4163 = vadd.f32 %v4161, %v4162
        %v4164 = vrot.slane %v4163, 1
        %v4165 = vadd.f32 %v4163, %v4164
        %vm4166 = vcmask 1040384
        %v4167 = vsel %vm4166, %v4136, %v4165
        %vm4168 = vcmask 58368
        %4169 = vst.msk [vmem:[%s577] sm:$0x3] %vm4168, %v4167
        %s4170 = sand.u32 %s275, 1
        %s4171 = scalar_lea.sflag [#allocation5], %s4170
        %s4172 = sand.u32 %s275, 1
        %s4173 = smul.addr %s4172, 32
        %s4174 = scalar_lea.vmem [#allocation17], %s4173
        %s4175 = sand.u32 %s303, 1
        %s4176 = scalar_lea.sflag [#allocation19], %s4175
        %s4177 = sand.u32 %s303, 1
        %s4178 = smul.addr %s4177, 2
        %s4179 = scalar_lea.vmem [#allocation18], %s4178
        // Predicated region
        $region85: #{res_block_down.4} parent=51 // pred_check
          %p4180 = pneg %p285
        $region86: #{res_block_down.4} parent=51 // pred_check_branch
          %4182 = sbr.rel (%p4180) target = $region88
        $region87: #{res_block_down.4} parent=51 // pred_region
          %s4184 = ssub.s32 512, 512
          %4185 = vsyncadd %s4171, %s4184
          %s4186 = smul.addr %s41, 8
          %s4187 = smul.addr %s40, 32
          %s4188 = sadd.s32 %s4186, %s4187
          %s4189 = smul.addr %s4188, 64
          %s4190 = scalar_lea.hbm %s8, %s4189
          %s4191 = sshll.u32 %s4174, 4
          %s4192 = int_to_ptr.vmem [resolvable:$true] %s4191
          %4197 = dma.vmem_to_hbm [thread:$0]  %s4192, 512, %s4190, %s4171, 64, 64, 4
        $region88: #{res_block_down.4} parent=51 // pred_fallthru
          _
        // Predicated region
        $region89: #{res_block_down.4} parent=51 // pred_check
          %p4198 = pneg %p313
        $region90: #{res_block_down.4} parent=51 // pred_check_branch
          %4200 = sbr.rel (%p4198) target = $region92
        $region91: #{res_block_down.4} parent=51 // pred_region
          %s4202 = ssub.s32 32, 32
          %4203 = vsyncadd %s4176, %s4202
          %s4204 = smul.addr %s40, 4
          %s4205 = sadd.s32 %s41, %s4204
          %s4206 = smul.addr %s4205, 32
          %s4207 = scalar_lea.hbm %s9, %s4206
          %s4209 = sshll.u32 %s4179, 4
          %s4210 = int_to_ptr.vmem [resolvable:$true] %s4209
          %4212 = dma.vmem_to_hbm [thread:$0]  %s4210, 32, %s4207, %s4176
        $region92: #{res_block_down.4} parent=51 // pred_fallthru
          _
      $region52: #{res_block_down.4} parent=5 // pred_fallthru
        _
      %p4213 = scmp.le.s32.totalorder 2, %s31
      // Predicated region
      $region93: #{res_block_down.4} parent=5 // pred_check
        %p4214 = pneg %p4213
      $region94: #{res_block_down.4} parent=5 // pred_check_branch
        %4216 = sbr.rel (%p4214) target = $region96
      $region95: #{res_block_down.4} parent=5 // pred_region
        %s4217 = ssub.s32 %s31, 2
        // Predicated region
        $region97: #{res_block_down.4} parent=95 // pred_check
          %p4218 = pneg %p291
        $region98: #{res_block_down.4} parent=95 // pred_check_branch
          %4220 = sbr.rel (%p4218) target = $region100
        $region99: #{res_block_down.4} parent=95 // pred_region
          %s4221 = sand.u32 %s276, 1
          %s4222 = scalar_lea.sflag [#allocation5], %s4221
          %s4223 = sand.u32 %s276, 1
          %s4224 = smul.addr %s4223, 32
          %s4225 = scalar_lea.vmem [#allocation17], %s4224
          %4226 = dma.done %s4222, 512
        $region100: #{res_block_down.4} parent=95 // pred_fallthru
          _
        // Predicated region
        $region101: #{res_block_down.4} parent=95 // pred_check
          %p4227 = pneg %p319
        $region102: #{res_block_down.4} parent=95 // pred_check_branch
          %4229 = sbr.rel (%p4227) target = $region104
        $region103: #{res_block_down.4} parent=95 // pred_region
          %s4230 = sand.u32 %s304, 1
          %s4231 = scalar_lea.sflag [#allocation19], %s4230
          %s4232 = sand.u32 %s304, 1
          %s4233 = smul.addr %s4232, 2
          %s4234 = scalar_lea.vmem [#allocation18], %s4233
          %4235 = dma.done %s4231, 32
        $region104: #{res_block_down.4} parent=95 // pred_fallthru
          _
      $region96: #{res_block_down.4} parent=5 // pred_fallthru
        _
    $region6: #{res_block_down.4} parent=1 // loop_footer
      %s35 = sadd.s32 1, %s31
    $region7: #{res_block_down.4} parent=1 // loop_footer_branch
      %30 = sbr.rel target = $region3
    $region8: #{res_block_down.4} parent=1 // loop_exit
      _
    %4236 = vsyncpa [#allocation4], 1
    %s4237 = scalar_lea.sflag [#allocation4], 1
    %4238 = vsyncpa %s4237, 1
    %4239 = vsyncpa [#allocation7], 1
    %s4240 = scalar_lea.sflag [#allocation7], 1
    %4241 = vsyncpa %s4240, 1
    %4242 = vsyncpa [#allocation10], 1
    %4243 = vsyncpa [#allocation13], 1
    %4244 = vsyncpa [#allocation16], 1
    %4245 = vsyncpa [#allocation5], 1
    %s4246 = scalar_lea.sflag [#allocation5], 1
    %4247 = vsyncpa %s4246, 1
    %4248 = vsyncpa [#allocation19], 1
    %s4249 = scalar_lea.sflag [#allocation19], 1
    %4250 = vsyncpa %s4249, 1

</llo_original>
